<compile_context>
chip_gen: v6e
topology: v6e:2x2x1
jax: 0.10.0
libtpu: 0.0.40
codegen_flags: <defaults>
</compile_context>

<pallas_src>
import jax
import jax.numpy as jnp
from jax import lax
from jax.experimental import pallas as pl
from jax.experimental.pallas import tpu as pltpu


# ----------------------------------------------------------------------------
# Fused encoder kernel: L layers x (fwd + bwd) GRU, everything in VMEM.
# ----------------------------------------------------------------------------
def _encoder_kernel(x_ref, w_ih_ref, b_ih_ref, w_hh_ref, b_hh_ref,
                    out_ref, hid_ref,
                    cat_ref, of_ref, ob_ref, gif_ref, gib_ref,
                    hf_ref, hb_ref):
    L = w_ih_ref.shape[0]
    Hp = w_hh_ref.shape[2]
    Bp = hid_ref.shape[1]
    T = x_ref.shape[0] // Bp

    def gru_gate(gi, gh, h_prev):
        # Gate boundaries sit on 128-lane tile edges (Hp multiple of 128).
        r = jax.nn.sigmoid(gi[:, 0:Hp] + gh[:, 0:Hp])
        z = jax.nn.sigmoid(gi[:, Hp:2 * Hp] + gh[:, Hp:2 * Hp])
        n = jnp.tanh(gi[:, 2 * Hp:3 * Hp] + r * gh[:, 2 * Hp:3 * Hp])
        return (1.0 - z) * n + z * h_prev

    if L > 1:
        cat_ref[...] = jnp.zeros_like(cat_ref)

    for l in range(L):
        in_flat = x_ref[...] if l == 0 else cat_ref[...]

        # Input projections for the WHOLE sequence: one big MXU matmul per
        # direction (M = T*Bp), hoisted out of the latency-bound recurrence.
        gif_ref[...] = (jnp.dot(in_flat, w_ih_ref[l, 0],
                                preferred_element_type=jnp.float32)
                        + b_ih_ref[l, 0])
        gib_ref[...] = (jnp.dot(in_flat, w_ih_ref[l, 1],
                                preferred_element_type=jnp.float32)
                        + b_ih_ref[l, 1])

        w_hh_f = w_hh_ref[l, 0]
        w_hh_b = w_hh_ref[l, 1]
        b_hh_f = b_hh_ref[l, 0]
        b_hh_b = b_hh_ref[l, 1]

        hf_ref[...] = jnp.zeros_like(hf_ref)
        hb_ref[...] = jnp.zeros_like(hb_ref)

        def body(t, carry):
            tb = T - 1 - t
            rf = pl.multiple_of(t * Bp, Bp)
            rb = pl.multiple_of(tb * Bp, Bp)
            h_f = hf_ref[...]
            h_b = hb_ref[...]
            gh_f = jnp.dot(h_f, w_hh_f,
                           preferred_element_type=jnp.float32) + b_hh_f
            gh_b = jnp.dot(h_b, w_hh_b,
                           preferred_element_type=jnp.float32) + b_hh_b
            h_f = gru_gate(gif_ref[pl.ds(rf, Bp), :], gh_f, h_f)
            h_b = gru_gate(gib_ref[pl.ds(rb, Bp), :], gh_b, h_b)
            hf_ref[...] = h_f
            hb_ref[...] = h_b
            of_ref[pl.ds(rf, Bp), :] = h_f
            ob_ref[pl.ds(rb, Bp), :] = h_b   # already in forward time-order
            return carry

        lax.fori_loop(0, T, body, 0, unroll=(T <= 32))

        hid_ref[2 * l] = hf_ref[...]
        hid_ref[2 * l + 1] = hb_ref[...]

        if l + 1 < L:
            # Next-layer input = [fwd | bwd] along lanes (tile-aligned stores).
            cat_ref[:, 0:Hp] = of_ref[...]
            cat_ref[:, Hp:2 * Hp] = ob_ref[...]

    # Final encoder output: fwd + bwd sum of the last layer.
    out_ref[...] = of_ref[...] + ob_ref[...]


# ----------------------------------------------------------------------------
# Weight packing: PyTorch layout -> padded, lane-aligned blocks.
# ----------------------------------------------------------------------------
def _round_up(x, m):
    return ((x + m - 1) // m) * m


def _pack_gate_cols(w, H, Hp):
    """(rows, 3H) -> (rows, 3*Hp): each gate block padded to Hp lanes."""
    rows = w.shape[0]
    w3 = w.reshape(rows, 3, H)
    w3 = jnp.pad(w3, ((0, 0), (0, 0), (0, Hp - H)))
    return w3.reshape(rows, 3 * Hp)


def _prep_encoder_weights(layers, H, Hp, in_p):
    L = len(layers)
    w_ih, b_ih, w_hh, b_hh = [], [], [], []
    for l in range(L):
        wi_l, bi_l, wh_l, bh_l = [], [], [], []
        for d in range(2):
            p = layers[l][d]
            wt = jnp.asarray(p["w_ih"], jnp.float32).T           # (in_dim, 3H)
            wt = _pack_gate_cols(wt, H, Hp)                      # (in_dim, 3Hp)
            if l == 0:
                wt = jnp.pad(wt, ((0, in_p - wt.shape[0]), (0, 0)))
            else:
                # rows 0:H act on the fwd half, rows H:2H on the bwd half of
                # the concatenated (padded) layer input.
                top = jnp.pad(wt[:H], ((0, Hp - H), (0, 0)))
                bot = jnp.pad(wt[H:], ((0, Hp - H), (0, 0)))
                wt = jnp.concatenate([top, bot], axis=0)         # (2Hp, 3Hp)
                wt = jnp.pad(wt, ((0, in_p - 2 * Hp), (0, 0)))
            wi_l.append(wt)

            wh = jnp.asarray(p["w_hh"], jnp.float32).T           # (H, 3H)
            wh = _pack_gate_cols(wh, H, Hp)
            wh = jnp.pad(wh, ((0, Hp - H), (0, 0)))              # (Hp, 3Hp)
            wh_l.append(wh)

            bi_l.append(_pack_gate_cols(
                jnp.asarray(p["b_ih"], jnp.float32)[None, :], H, Hp))
            bh_l.append(_pack_gate_cols(
                jnp.asarray(p["b_hh"], jnp.float32)[None, :], H, Hp))
        w_ih.append(jnp.stack(wi_l))
        b_ih.append(jnp.stack(bi_l))
        w_hh.append(jnp.stack(wh_l))
        b_hh.append(jnp.stack(bh_l))
    return (jnp.stack(w_ih), jnp.stack(b_ih),
            jnp.stack(w_hh), jnp.stack(b_hh))


# ----------------------------------------------------------------------------
# Encoder forward: embedding (plain-JAX gather glue) + fused GRU kernel.
# ----------------------------------------------------------------------------
def init_encoder_params(key, vocab_size, hidden_size, embed_dim, layer_size):
    params = {}
    k_embed, key = jax.random.split(key)
    params["embed"] = jax.random.normal(k_embed, (vocab_size, embed_dim),
                                        jnp.float32)
    bound = 1.0 / jnp.sqrt(hidden_size)
    layers = []
    for layer in range(layer_size):
        in_dim = embed_dim if layer == 0 else 2 * hidden_size
        dirs = []
        for _ in range(2):  # fwd, bwd
            key, k1, k2, k3, k4 = jax.random.split(key, 5)
            dirs.append(dict(
                w_ih=jax.random.uniform(k1, (3 * hidden_size, in_dim),
                                        jnp.float32, -bound, bound),
                w_hh=jax.random.uniform(k2, (3 * hidden_size, hidden_size),
                                        jnp.float32, -bound, bound),
                b_ih=jax.random.uniform(k3, (3 * hidden_size,),
                                        jnp.float32, -bound, bound),
                b_hh=jax.random.uniform(k4, (3 * hidden_size,),
                                        jnp.float32, -bound, bound),
            ))
        layers.append(dirs)
    params["layers"] = layers
    return params


def encoder_forward(params, x):
    """x: (T, B) int32 token ids.

    Returns:
      out:    (T, B, H)   = fwd + bwd sum of last layer
      hidden: (2*L, B, H) ordered l0_fwd, l0_bwd, l1_fwd, ...
    """
    layers = params["layers"]
    L = len(layers)
    T, B = x.shape
    E = params["embed"].shape[1]
    H = layers[0][0]["w_hh"].shape[1]

    Hp = max(_round_up(H, 128), 128)      # each gate on whole 128-lane tiles
    Bp = max(_round_up(B, 8), 8)          # batch fills 8 sublanes
    in_p = max(2 * Hp, _round_up(E, 128))  # unified padded input width

    # Embedding lookup (plain-JAX gather glue), padded + flattened so the
    # kernel sees a lane/sublane-aligned (T*Bp, in_p) slab.
    emb = jnp.asarray(params["embed"], jnp.float32)[x]          # (T, B, E)
    x_pad = jnp.pad(emb, ((0, 0), (0, Bp - B), (0, in_p - E)))
    x_flat = x_pad.reshape(T * Bp, in_p)

    w_ih_all, b_ih_all, w_hh_all, b_hh_all = _prep_encoder_weights(
        layers, H, Hp, in_p)

    # TODO(synk): PyTorch applies dropout(p=drop) between layers in training
    # mode; eval-mode semantics (no dropout) implemented here.
    out_flat, hid = pl.pallas_call(
        _encoder_kernel,
        out_shape=(
            jax.ShapeDtypeStruct((T * Bp, Hp), jnp.float32),
            jax.ShapeDtypeStruct((2 * L, Bp, Hp), jnp.float32),
        ),
        in_specs=[pl.BlockSpec(memory_space=pltpu.MemorySpace.VMEM)] * 5,
        out_specs=(
            pl.BlockSpec(memory_space=pltpu.MemorySpace.VMEM),
            pl.BlockSpec(memory_space=pltpu.MemorySpace.VMEM),
        ),
        scratch_shapes=[
            pltpu.VMEM((T * Bp, in_p), jnp.float32),     # next-layer input
            pltpu.VMEM((T * Bp, Hp), jnp.float32),       # fwd outputs
            pltpu.VMEM((T * Bp, Hp), jnp.float32),       # bwd outputs
            pltpu.VMEM((T * Bp, 3 * Hp), jnp.float32),   # fwd input gates
            pltpu.VMEM((T * Bp, 3 * Hp), jnp.float32),   # bwd input gates
            pltpu.VMEM((Bp, Hp), jnp.float32),           # h fwd
            pltpu.VMEM((Bp, Hp), jnp.float32),           # h bwd
        ],
    )(x_flat, w_ih_all, b_ih_all, w_hh_all, b_hh_all)

    out = out_flat.reshape(T, Bp, Hp)[:, :B, :H]
    hidden = hid[:, :B, :H]
    return out, hidden


# ----------------------------------------------------------------------------
# Pure-JAX reference (lax.scan GRU) for correctness checking.
# ----------------------------------------------------------------------------
def _ref_gru_layer(x, w_ih, w_hh, b_ih, b_hh):
    H = w_hh.shape[1]
    B = x.shape[1]

    def step(h_prev, x_t):
        gi = x_t @ w_ih.T + b_ih
        gh = h_prev @ w_hh.T + b_hh
        r = jax.nn.sigmoid(gi[:, :H] + gh[:, :H])
        z = jax.nn.sigmoid(gi[:, H:2 * H] + gh[:, H:2 * H])
        n = jnp.tanh(gi[:, 2 * H:] + r * gh[:, 2 * H:])
        h = (1.0 - z) * n + z * h_prev
        return h, h

    h0 = jnp.zeros((B, H), jnp.float32)
    h_n, out = lax.scan(step, h0, x)
    return out, h_n


def _ref_encoder(params, x):
    h_in = params["embed"][x]
    hiddens = []
    out_cat = None
    for dirs in params["layers"]:
        fwd_p, bwd_p = dirs
        out_f, h_f = _ref_gru_layer(h_in, fwd_p["w_ih"], fwd_p["w_hh"],
                                    fwd_p["b_ih"], fwd_p["b_hh"])
        out_b_rev, h_b = _ref_gru_layer(h_in[::-1], bwd_p["w_ih"],
                                        bwd_p["w_hh"], bwd_p["b_ih"],
                                        bwd_p["b_hh"])
        out_cat = jnp.concatenate([out_f, out_b_rev[::-1]], axis=-1)
        hiddens.extend([h_f, h_b])
        h_in = out_cat
    H = hiddens[0].shape[-1]
    return out_cat[:, :, :H] + out_cat[:, :, H:], jnp.stack(hiddens, 0)


if __name__ == "__main__":
    vocab_size = 50
    hidden_size = 32
    embed_dim = 16
    layer_size = 2
    seq_len = 8
    batch = 2

    key = jax.random.PRNGKey(0)
    k_params, k_x = jax.random.split(key)
    params = init_encoder_params(k_params, vocab_size, hidden_size,
                                 embed_dim, layer_size)
    x = jax.random.randint(k_x, (seq_len, batch), 0, vocab_size, jnp.int32)

    out, hidden = encoder_forward(params, x)
    out = jax.block_until_ready(out)
    hidden = jax.block_until_ready(hidden)

    assert out.shape == (seq_len, batch, hidden_size)
    assert hidden.shape == (2 * layer_size, batch, hidden_size)

    ref_out, ref_hidden = _ref_encoder(params, x)
    assert jnp.allclose(out, ref_out, atol=1e-4, rtol=1e-4)
    assert jnp.allclose(hidden, ref_hidden, atol=1e-4, rtol=1e-4)

    print("KERNEL_OK")
</pallas_src>

<mosaic_0001>
module attributes {stable_mosaic.version = 11 : i64} {
  func.func @_encoder_kernel(%arg0: memref<64x256xf32, #tpu.memory_space<vmem>>, %arg1: memref<2x2x256x384xf32, #tpu.memory_space<vmem>>, %arg2: memref<2x2x1x384xf32, #tpu.memory_space<vmem>>, %arg3: memref<2x2x128x384xf32, #tpu.memory_space<vmem>>, %arg4: memref<2x2x1x384xf32, #tpu.memory_space<vmem>>, %arg5: memref<64x128xf32, #tpu.memory_space<vmem>>, %arg6: memref<4x8x128xf32, #tpu.memory_space<vmem>>, %arg7: memref<64x256xf32, #tpu.memory_space<vmem>>, %arg8: memref<64x128xf32, #tpu.memory_space<vmem>>, %arg9: memref<64x128xf32, #tpu.memory_space<vmem>>, %arg10: memref<64x384xf32, #tpu.memory_space<vmem>>, %arg11: memref<64x384xf32, #tpu.memory_space<vmem>>, %arg12: memref<8x128xf32, #tpu.memory_space<vmem>>, %arg13: memref<8x128xf32, #tpu.memory_space<vmem>>) attributes {dimension_semantics = [], scalar_prefetch = 0 : i64, scratch_operands = 7 : i64, tpu.core_type = #tpu.core_type<tc>} {
    %cst = arith.constant 0.000000e+00 : f32
    %0 = vector.broadcast %cst : f32 to vector<64x256xf32>
    %c0 = arith.constant 0 : index
    %c0_0 = arith.constant 0 : index
    %1 = vector.load %arg7[%c0, %c0_0] : memref<64x256xf32, #tpu.memory_space<vmem>>, vector<64x256xf32>
    tpu.vector_store %arg7[%c0, %c0_0], %0 {strides = array<i32>} : memref<64x256xf32, #tpu.memory_space<vmem>>, vector<64x256xf32>,
    %c0_1 = arith.constant 0 : index
    %c0_2 = arith.constant 0 : index
    %2 = vector.load %arg0[%c0_1, %c0_2] : memref<64x256xf32, #tpu.memory_space<vmem>>, vector<64x256xf32>
    %c0_3 = arith.constant 0 : index
    %c0_4 = arith.constant 0 : index
    %c0_5 = arith.constant 0 : index
    %c0_6 = arith.constant 0 : index
    %3 = vector.load %arg1[%c0_3, %c0_4, %c0_5, %c0_6] : memref<2x2x256x384xf32, #tpu.memory_space<vmem>>, vector<1x1x256x384xf32>
    %4 = vector.shape_cast %3 : vector<1x1x256x384xf32> to vector<256x384xf32>
    %cst_7 = arith.constant dense<0.000000e+00> : vector<64x384xf32>
    %5 = tpu.matmul %2, %4, %cst_7 {dimension_numbers = #tpu.dot_dimension_numbers<[1], [0], [0], [1], [0, 0, 1, 1], [], []>} : vector<64x256xf32>, vector<256x384xf32>, vector<64x384xf32> -> vector<64x384xf32>
    %c0_8 = arith.constant 0 : index
    %c0_9 = arith.constant 0 : index
    %c0_10 = arith.constant 0 : index
    %c0_11 = arith.constant 0 : index
    %6 = vector.load %arg2[%c0_8, %c0_9, %c0_10, %c0_11] : memref<2x2x1x384xf32, #tpu.memory_space<vmem>>, vector<1x1x1x384xf32>
    %7 = vector.shape_cast %6 : vector<1x1x1x384xf32> to vector<1x384xf32>
    %8 = vector.broadcast %7 : vector<1x384xf32> to vector<64x384xf32>
    %9 = arith.addf %5, %8 : vector<64x384xf32>
    %c0_12 = arith.constant 0 : index
    %c0_13 = arith.constant 0 : index
    %10 = vector.load %arg10[%c0_12, %c0_13] : memref<64x384xf32, #tpu.memory_space<vmem>>, vector<64x384xf32>
    tpu.vector_store %arg10[%c0_12, %c0_13], %9 {strides = array<i32>} : memref<64x384xf32, #tpu.memory_space<vmem>>, vector<64x384xf32>,
    %c0_14 = arith.constant 0 : index
    %c1 = arith.constant 1 : index
    %c0_15 = arith.constant 0 : index
    %c0_16 = arith.constant 0 : index
    %11 = vector.load %arg1[%c0_14, %c1, %c0_15, %c0_16] : memref<2x2x256x384xf32, #tpu.memory_space<vmem>>, vector<1x1x256x384xf32>
    %12 = vector.shape_cast %11 : vector<1x1x256x384xf32> to vector<256x384xf32>
    %cst_17 = arith.constant dense<0.000000e+00> : vector<64x384xf32>
    %13 = tpu.matmul %2, %12, %cst_17 {dimension_numbers = #tpu.dot_dimension_numbers<[1], [0], [0], [1], [0, 0, 1, 1], [], []>} : vector<64x256xf32>, vector<256x384xf32>, vector<64x384xf32> -> vector<64x384xf32>
    %c0_18 = arith.constant 0 : index
    %c1_19 = arith.constant 1 : index
    %c0_20 = arith.constant 0 : index
    %c0_21 = arith.constant 0 : index
    %14 = vector.load %arg2[%c0_18, %c1_19, %c0_20, %c0_21] : memref<2x2x1x384xf32, #tpu.memory_space<vmem>>, vector<1x1x1x384xf32>
    %15 = vector.shape_cast %14 : vector<1x1x1x384xf32> to vector<1x384xf32>
    %16 = vector.broadcast %15 : vector<1x384xf32> to vector<64x384xf32>
    %17 = arith.addf %13, %16 : vector<64x384xf32>
    %c0_22 = arith.constant 0 : index
    %c0_23 = arith.constant 0 : index
    %18 = vector.load %arg11[%c0_22, %c0_23] : memref<64x384xf32, #tpu.memory_space<vmem>>, vector<64x384xf32>
    tpu.vector_store %arg11[%c0_22, %c0_23], %17 {strides = array<i32>} : memref<64x384xf32, #tpu.memory_space<vmem>>, vector<64x384xf32>,
    %c0_24 = arith.constant 0 : index
    %c0_25 = arith.constant 0 : index
    %c0_26 = arith.constant 0 : index
    %c0_27 = arith.constant 0 : index
    %19 = vector.load %arg3[%c0_24, %c0_25, %c0_26, %c0_27] : memref<2x2x128x384xf32, #tpu.memory_space<vmem>>, vector<1x1x128x384xf32>
    %20 = vector.shape_cast %19 : vector<1x1x128x384xf32> to vector<128x384xf32>
    %c0_28 = arith.constant 0 : index
    %c1_29 = arith.constant 1 : index
    %c0_30 = arith.constant 0 : index
    %c0_31 = arith.constant 0 : index
    %21 = vector.load %arg3[%c0_28, %c1_29, %c0_30, %c0_31] : memref<2x2x128x384xf32, #tpu.memory_space<vmem>>, vector<1x1x128x384xf32>
    %22 = vector.shape_cast %21 : vector<1x1x128x384xf32> to vector<128x384xf32>
    %c0_32 = arith.constant 0 : index
    %c0_33 = arith.constant 0 : index
    %c0_34 = arith.constant 0 : index
    %c0_35 = arith.constant 0 : index
    %23 = vector.load %arg4[%c0_32, %c0_33, %c0_34, %c0_35] : memref<2x2x1x384xf32, #tpu.memory_space<vmem>>, vector<1x1x1x384xf32>
    %24 = vector.shape_cast %23 : vector<1x1x1x384xf32> to vector<1x384xf32>
    %c0_36 = arith.constant 0 : index
    %c1_37 = arith.constant 1 : index
    %c0_38 = arith.constant 0 : index
    %c0_39 = arith.constant 0 : index
    %25 = vector.load %arg4[%c0_36, %c1_37, %c0_38, %c0_39] : memref<2x2x1x384xf32, #tpu.memory_space<vmem>>, vector<1x1x1x384xf32>
    %26 = vector.shape_cast %25 : vector<1x1x1x384xf32> to vector<1x384xf32>
    %cst_40 = arith.constant 0.000000e+00 : f32
    %27 = vector.broadcast %cst_40 : f32 to vector<8x128xf32>
    %c0_41 = arith.constant 0 : index
    %c0_42 = arith.constant 0 : index
    %28 = vector.load %arg12[%c0_41, %c0_42] : memref<8x128xf32, #tpu.memory_space<vmem>>, vector<8x128xf32>
    tpu.vector_store %arg12[%c0_41, %c0_42], %27 {strides = array<i32>} : memref<8x128xf32, #tpu.memory_space<vmem>>, vector<8x128xf32>,
    %cst_43 = arith.constant 0.000000e+00 : f32
    %29 = vector.broadcast %cst_43 : f32 to vector<8x128xf32>
    %c0_44 = arith.constant 0 : index
    %c0_45 = arith.constant 0 : index
    %30 = vector.load %arg13[%c0_44, %c0_45] : memref<8x128xf32, #tpu.memory_space<vmem>>, vector<8x128xf32>
    tpu.vector_store %arg13[%c0_44, %c0_45], %29 {strides = array<i32>} : memref<8x128xf32, #tpu.memory_space<vmem>>, vector<8x128xf32>,
    %c0_i32 = arith.constant 0 : i32
    %c7_i32 = arith.constant 7 : i32
    %31 = arith.subi %c7_i32, %c0_i32 : i32
    %c8_i32 = arith.constant 8 : i32
    %32 = arith.muli %c0_i32, %c8_i32 : i32
    %33 = tpu.assume_multiple %32, 8 : i32
    %c8_i32_46 = arith.constant 8 : i32
    %34 = arith.muli %31, %c8_i32_46 : i32
    %35 = tpu.assume_multiple %34, 8 : i32
    %c0_47 = arith.constant 0 : index
    %c0_48 = arith.constant 0 : index
    %36 = vector.load %arg12[%c0_47, %c0_48] : memref<8x128xf32, #tpu.memory_space<vmem>>, vector<8x128xf32>
    %c0_49 = arith.constant 0 : index
    %c0_50 = arith.constant 0 : index
    %37 = vector.load %arg13[%c0_49, %c0_50] : memref<8x128xf32, #tpu.memory_space<vmem>>, vector<8x128xf32>
    %cst_51 = arith.constant dense<0.000000e+00> : vector<8x384xf32>
    %38 = tpu.matmul %36, %20, %cst_51 {dimension_numbers = #tpu.dot_dimension_numbers<[1], [0], [0], [1], [0, 0, 1, 1], [], []>} : vector<8x128xf32>, vector<128x384xf32>, vector<8x384xf32> -> vector<8x384xf32>
    %39 = vector.broadcast %24 : vector<1x384xf32> to vector<8x384xf32>
    %40 = arith.addf %38, %39 : vector<8x384xf32>
    %cst_52 = arith.constant dense<0.000000e+00> : vector<8x384xf32>
    %41 = tpu.matmul %37, %22, %cst_52 {dimension_numbers = #tpu.dot_dimension_numbers<[1], [0], [0], [1], [0, 0, 1, 1], [], []>} : vector<8x128xf32>, vector<128x384xf32>, vector<8x384xf32> -> vector<8x384xf32>
    %42 = vector.broadcast %26 : vector<1x384xf32> to vector<8x384xf32>
    %43 = arith.addf %41, %42 : vector<8x384xf32>
    %44 = arith.index_cast %33 : i32 to index
    %c0_53 = arith.constant 0 : index
    %45 = vector.load %arg10[%44, %c0_53] : memref<64x384xf32, #tpu.memory_space<vmem>>, vector<8x384xf32>
    %46 = vector.extract_strided_slice %45 {offsets = [0, 0], sizes = [8, 128], strides = [1, 1]} : vector<8x384xf32> to vector<8x128xf32>
    %47 = vector.extract_strided_slice %40 {offsets = [0, 0], sizes = [8, 128], strides = [1, 1]} : vector<8x384xf32> to vector<8x128xf32>
    %48 = arith.addf %46, %47 : vector<8x128xf32>
    %49 = arith.negf %48 : vector<8x128xf32>
    %50 = math.exp %49 : vector<8x128xf32>
    %cst_54 = arith.constant 1.000000e+00 : f32
    %51 = vector.broadcast %cst_54 : f32 to vector<8x128xf32>
    %52 = arith.addf %51, %50 : vector<8x128xf32>
    %53 = arith.divf %51, %52 : vector<8x128xf32>
    %54 = vector.extract_strided_slice %45 {offsets = [0, 128], sizes = [8, 128], strides = [1, 1]} : vector<8x384xf32> to vector<8x128xf32>
    %55 = vector.extract_strided_slice %40 {offsets = [0, 128], sizes = [8, 128], strides = [1, 1]} : vector<8x384xf32> to vector<8x128xf32>
    %56 = arith.addf %54, %55 : vector<8x128xf32>
    %57 = arith.negf %56 : vector<8x128xf32>
    %58 = math.exp %57 : vector<8x128xf32>
    %cst_55 = arith.constant 1.000000e+00 : f32
    %59 = vector.broadcast %cst_55 : f32 to vector<8x128xf32>
    %60 = arith.addf %59, %58 : vector<8x128xf32>
    %61 = arith.divf %59, %60 : vector<8x128xf32>
    %62 = vector.extract_strided_slice %45 {offsets = [0, 256], sizes = [8, 128], strides = [1, 1]} : vector<8x384xf32> to vector<8x128xf32>
    %63 = vector.extract_strided_slice %40 {offsets = [0, 256], sizes = [8, 128], strides = [1, 1]} : vector<8x384xf32> to vector<8x128xf32>
    %64 = arith.mulf %53, %63 : vector<8x128xf32>
    %65 = arith.addf %62, %64 : vector<8x128xf32>
    %66 = math.tanh %65 : vector<8x128xf32>
    %cst_56 = arith.constant 1.000000e+00 : f32
    %67 = vector.broadcast %cst_56 : f32 to vector<8x128xf32>
    %68 = arith.subf %67, %61 : vector<8x128xf32>
    %69 = arith.mulf %68, %66 : vector<8x128xf32>
    %70 = arith.mulf %61, %36 : vector<8x128xf32>
    %71 = arith.addf %69, %70 : vector<8x128xf32>
    %72 = arith.index_cast %35 : i32 to index
    %c0_57 = arith.constant 0 : index
    %73 = vector.load %arg11[%72, %c0_57] : memref<64x384xf32, #tpu.memory_space<vmem>>, vector<8x384xf32>
    %74 = vector.extract_strided_slice %73 {offsets = [0, 0], sizes = [8, 128], strides = [1, 1]} : vector<8x384xf32> to vector<8x128xf32>
    %75 = vector.extract_strided_slice %43 {offsets = [0, 0], sizes = [8, 128], strides = [1, 1]} : vector<8x384xf32> to vector<8x128xf32>
    %76 = arith.addf %74, %75 : vector<8x128xf32>
    %77 = arith.negf %76 : vector<8x128xf32>
    %78 = math.exp %77 : vector<8x128xf32>
    %cst_58 = arith.constant 1.000000e+00 : f32
    %79 = vector.broadcast %cst_58 : f32 to vector<8x128xf32>
    %80 = arith.addf %79, %78 : vector<8x128xf32>
    %81 = arith.divf %79, %80 : vector<8x128xf32>
    %82 = vector.extract_strided_slice %73 {offsets = [0, 128], sizes = [8, 128], strides = [1, 1]} : vector<8x384xf32> to vector<8x128xf32>
    %83 = vector.extract_strided_slice %43 {offsets = [0, 128], sizes = [8, 128], strides = [1, 1]} : vector<8x384xf32> to vector<8x128xf32>
    %84 = arith.addf %82, %83 : vector<8x128xf32>
    %85 = arith.negf %84 : vector<8x128xf32>
    %86 = math.exp %85 : vector<8x128xf32>
    %cst_59 = arith.constant 1.000000e+00 : f32
    %87 = vector.broadcast %cst_59 : f32 to vector<8x128xf32>
    %88 = arith.addf %87, %86 : vector<8x128xf32>
    %89 = arith.divf %87, %88 : vector<8x128xf32>
    %90 = vector.extract_strided_slice %73 {offsets = [0, 256], sizes = [8, 128], strides = [1, 1]} : vector<8x384xf32> to vector<8x128xf32>
    %91 = vector.extract_strided_slice %43 {offsets = [0, 256], sizes = [8, 128], strides = [1, 1]} : vector<8x384xf32> to vector<8x128xf32>
    %92 = arith.mulf %81, %91 : vector<8x128xf32>
    %93 = arith.addf %90, %92 : vector<8x128xf32>
    %94 = math.tanh %93 : vector<8x128xf32>
    %cst_60 = arith.constant 1.000000e+00 : f32
    %95 = vector.broadcast %cst_60 : f32 to vector<8x128xf32>
    %96 = arith.subf %95, %89 : vector<8x128xf32>
    %97 = arith.mulf %96, %94 : vector<8x128xf32>
    %98 = arith.mulf %89, %37 : vector<8x128xf32>
    %99 = arith.addf %97, %98 : vector<8x128xf32>
    %c0_61 = arith.constant 0 : index
    %c0_62 = arith.constant 0 : index
    %100 = vector.load %arg12[%c0_61, %c0_62] : memref<8x128xf32, #tpu.memory_space<vmem>>, vector<8x128xf32>
    tpu.vector_store %arg12[%c0_61, %c0_62], %71 {strides = array<i32>} : memref<8x128xf32, #tpu.memory_space<vmem>>, vector<8x128xf32>,
    %c0_63 = arith.constant 0 : index
    %c0_64 = arith.constant 0 : index
    %101 = vector.load %arg13[%c0_63, %c0_64] : memref<8x128xf32, #tpu.memory_space<vmem>>, vector<8x128xf32>
    tpu.vector_store %arg13[%c0_63, %c0_64], %99 {strides = array<i32>} : memref<8x128xf32, #tpu.memory_space<vmem>>, vector<8x128xf32>,
    %102 = arith.index_cast %33 : i32 to index
    %c0_65 = arith.constant 0 : index
    %103 = vector.load %arg8[%102, %c0_65] : memref<64x128xf32, #tpu.memory_space<vmem>>, vector<8x128xf32>
    tpu.vector_store %arg8[%102, %c0_65], %71 {strides = array<i32>} : memref<64x128xf32, #tpu.memory_space<vmem>>, vector<8x128xf32>,
    %104 = arith.index_cast %35 : i32 to index
    %c0_66 = arith.constant 0 : index
    %105 = vector.load %arg9[%104, %c0_66] : memref<64x128xf32, #tpu.memory_space<vmem>>, vector<8x128xf32>
    tpu.vector_store %arg9[%104, %c0_66], %99 {strides = array<i32>} : memref<64x128xf32, #tpu.memory_space<vmem>>, vector<8x128xf32>,
    %c1_i32 = arith.constant 1 : i32
    %c7_i32_67 = arith.constant 7 : i32
    %106 = arith.subi %c7_i32_67, %c1_i32 : i32
    %c8_i32_68 = arith.constant 8 : i32
    %107 = arith.muli %c1_i32, %c8_i32_68 : i32
    %108 = tpu.assume_multiple %107, 8 : i32
    %c8_i32_69 = arith.constant 8 : i32
    %109 = arith.muli %106, %c8_i32_69 : i32
    %110 = tpu.assume_multiple %109, 8 : i32
    %c0_70 = arith.constant 0 : index
    %c0_71 = arith.constant 0 : index
    %111 = vector.load %arg12[%c0_70, %c0_71] : memref<8x128xf32, #tpu.memory_space<vmem>>, vector<8x128xf32>
    %c0_72 = arith.constant 0 : index
    %c0_73 = arith.constant 0 : index
    %112 = vector.load %arg13[%c0_72, %c0_73] : memref<8x128xf32, #tpu.memory_space<vmem>>, vector<8x128xf32>
    %cst_74 = arith.constant dense<0.000000e+00> : vector<8x384xf32>
    %113 = tpu.matmul %111, %20, %cst_74 {dimension_numbers = #tpu.dot_dimension_numbers<[1], [0], [0], [1], [0, 0, 1, 1], [], []>} : vector<8x128xf32>, vector<128x384xf32>, vector<8x384xf32> -> vector<8x384xf32>
    %114 = vector.broadcast %24 : vector<1x384xf32> to vector<8x384xf32>
    %115 = arith.addf %113, %114 : vector<8x384xf32>
    %cst_75 = arith.constant dense<0.000000e+00> : vector<8x384xf32>
    %116 = tpu.matmul %112, %22, %cst_75 {dimension_numbers = #tpu.dot_dimension_numbers<[1], [0], [0], [1], [0, 0, 1, 1], [], []>} : vector<8x128xf32>, vector<128x384xf32>, vector<8x384xf32> -> vector<8x384xf32>
    %117 = vector.broadcast %26 : vector<1x384xf32> to vector<8x384xf32>
    %118 = arith.addf %116, %117 : vector<8x384xf32>
    %119 = arith.index_cast %108 : i32 to index
    %c0_76 = arith.constant 0 : index
    %120 = vector.load %arg10[%119, %c0_76] : memref<64x384xf32, #tpu.memory_space<vmem>>, vector<8x384xf32>
    %121 = vector.extract_strided_slice %120 {offsets = [0, 0], sizes = [8, 128], strides = [1, 1]} : vector<8x384xf32> to vector<8x128xf32>
    %122 = vector.extract_strided_slice %115 {offsets = [0, 0], sizes = [8, 128], strides = [1, 1]} : vector<8x384xf32> to vector<8x128xf32>
    %123 = arith.addf %121, %122 : vector<8x128xf32>
    %124 = arith.negf %123 : vector<8x128xf32>
    %125 = math.exp %124 : vector<8x128xf32>
    %cst_77 = arith.constant 1.000000e+00 : f32
    %126 = vector.broadcast %cst_77 : f32 to vector<8x128xf32>
    %127 = arith.addf %126, %125 : vector<8x128xf32>
    %128 = arith.divf %126, %127 : vector<8x128xf32>
    %129 = vector.extract_strided_slice %120 {offsets = [0, 128], sizes = [8, 128], strides = [1, 1]} : vector<8x384xf32> to vector<8x128xf32>
    %130 = vector.extract_strided_slice %115 {offsets = [0, 128], sizes = [8, 128], strides = [1, 1]} : vector<8x384xf32> to vector<8x128xf32>
    %131 = arith.addf %129, %130 : vector<8x128xf32>
    %132 = arith.negf %131 : vector<8x128xf32>
    %133 = math.exp %132 : vector<8x128xf32>
    %cst_78 = arith.constant 1.000000e+00 : f32
    %134 = vector.broadcast %cst_78 : f32 to vector<8x128xf32>
    %135 = arith.addf %134, %133 : vector<8x128xf32>
    %136 = arith.divf %134, %135 : vector<8x128xf32>
    %137 = vector.extract_strided_slice %120 {offsets = [0, 256], sizes = [8, 128], strides = [1, 1]} : vector<8x384xf32> to vector<8x128xf32>
    %138 = vector.extract_strided_slice %115 {offsets = [0, 256], sizes = [8, 128], strides = [1, 1]} : vector<8x384xf32> to vector<8x128xf32>
    %139 = arith.mulf %128, %138 : vector<8x128xf32>
    %140 = arith.addf %137, %139 : vector<8x128xf32>
    %141 = math.tanh %140 : vector<8x128xf32>
    %cst_79 = arith.constant 1.000000e+00 : f32
    %142 = vector.broadcast %cst_79 : f32 to vector<8x128xf32>
    %143 = arith.subf %142, %136 : vector<8x128xf32>
    %144 = arith.mulf %143, %141 : vector<8x128xf32>
    %145 = arith.mulf %136, %111 : vector<8x128xf32>
    %146 = arith.addf %144, %145 : vector<8x128xf32>
    %147 = arith.index_cast %110 : i32 to index
    %c0_80 = arith.constant 0 : index
    %148 = vector.load %arg11[%147, %c0_80] : memref<64x384xf32, #tpu.memory_space<vmem>>, vector<8x384xf32>
    %149 = vector.extract_strided_slice %148 {offsets = [0, 0], sizes = [8, 128], strides = [1, 1]} : vector<8x384xf32> to vector<8x128xf32>
    %150 = vector.extract_strided_slice %118 {offsets = [0, 0], sizes = [8, 128], strides = [1, 1]} : vector<8x384xf32> to vector<8x128xf32>
    %151 = arith.addf %149, %150 : vector<8x128xf32>
    %152 = arith.negf %151 : vector<8x128xf32>
    %153 = math.exp %152 : vector<8x128xf32>
    %cst_81 = arith.constant 1.000000e+00 : f32
    %154 = vector.broadcast %cst_81 : f32 to vector<8x128xf32>
    %155 = arith.addf %154, %153 : vector<8x128xf32>
    %156 = arith.divf %154, %155 : vector<8x128xf32>
    %157 = vector.extract_strided_slice %148 {offsets = [0, 128], sizes = [8, 128], strides = [1, 1]} : vector<8x384xf32> to vector<8x128xf32>
    %158 = vector.extract_strided_slice %118 {offsets = [0, 128], sizes = [8, 128], strides = [1, 1]} : vector<8x384xf32> to vector<8x128xf32>
    %159 = arith.addf %157, %158 : vector<8x128xf32>
    %160 = arith.negf %159 : vector<8x128xf32>
    %161 = math.exp %160 : vector<8x128xf32>
    %cst_82 = arith.constant 1.000000e+00 : f32
    %162 = vector.broadcast %cst_82 : f32 to vector<8x128xf32>
    %163 = arith.addf %162, %161 : vector<8x128xf32>
    %164 = arith.divf %162, %163 : vector<8x128xf32>
    %165 = vector.extract_strided_slice %148 {offsets = [0, 256], sizes = [8, 128], strides = [1, 1]} : vector<8x384xf32> to vector<8x128xf32>
    %166 = vector.extract_strided_slice %118 {offsets = [0, 256], sizes = [8, 128], strides = [1, 1]} : vector<8x384xf32> to vector<8x128xf32>
    %167 = arith.mulf %156, %166 : vector<8x128xf32>
    %168 = arith.addf %165, %167 : vector<8x128xf32>
    %169 = math.tanh %168 : vector<8x128xf32>
    %cst_83 = arith.constant 1.000000e+00 : f32
    %170 = vector.broadcast %cst_83 : f32 to vector<8x128xf32>
    %171 = arith.subf %170, %164 : vector<8x128xf32>
    %172 = arith.mulf %171, %169 : vector<8x128xf32>
    %173 = arith.mulf %164, %112 : vector<8x128xf32>
    %174 = arith.addf %172, %173 : vector<8x128xf32>
    %c0_84 = arith.constant 0 : index
    %c0_85 = arith.constant 0 : index
    %175 = vector.load %arg12[%c0_84, %c0_85] : memref<8x128xf32, #tpu.memory_space<vmem>>, vector<8x128xf32>
    tpu.vector_store %arg12[%c0_84, %c0_85], %146 {strides = array<i32>} : memref<8x128xf32, #tpu.memory_space<vmem>>, vector<8x128xf32>,
    %c0_86 = arith.constant 0 : index
    %c0_87 = arith.constant 0 : index
    %176 = vector.load %arg13[%c0_86, %c0_87] : memref<8x128xf32, #tpu.memory_space<vmem>>, vector<8x128xf32>
    tpu.vector_store %arg13[%c0_86, %c0_87], %174 {strides = array<i32>} : memref<8x128xf32, #tpu.memory_space<vmem>>, vector<8x128xf32>,
    %177 = arith.index_cast %108 : i32 to index
    %c0_88 = arith.constant 0 : index
    %178 = vector.load %arg8[%177, %c0_88] : memref<64x128xf32, #tpu.memory_space<vmem>>, vector<8x128xf32>
    tpu.vector_store %arg8[%177, %c0_88], %146 {strides = array<i32>} : memref<64x128xf32, #tpu.memory_space<vmem>>, vector<8x128xf32>,
    %179 = arith.index_cast %110 : i32 to index
    %c0_89 = arith.constant 0 : index
    %180 = vector.load %arg9[%179, %c0_89] : memref<64x128xf32, #tpu.memory_space<vmem>>, vector<8x128xf32>
    tpu.vector_store %arg9[%179, %c0_89], %174 {strides = array<i32>} : memref<64x128xf32, #tpu.memory_space<vmem>>, vector<8x128xf32>,
    %c2_i32 = arith.constant 2 : i32
    %c7_i32_90 = arith.constant 7 : i32
    %181 = arith.subi %c7_i32_90, %c2_i32 : i32
    %c8_i32_91 = arith.constant 8 : i32
    %182 = arith.muli %c2_i32, %c8_i32_91 : i32
    %183 = tpu.assume_multiple %182, 8 : i32
    %c8_i32_92 = arith.constant 8 : i32
    %184 = arith.muli %181, %c8_i32_92 : i32
    %185 = tpu.assume_multiple %184, 8 : i32
    %c0_93 = arith.constant 0 : index
    %c0_94 = arith.constant 0 : index
    %186 = vector.load %arg12[%c0_93, %c0_94] : memref<8x128xf32, #tpu.memory_space<vmem>>, vector<8x128xf32>
    %c0_95 = arith.constant 0 : index
    %c0_96 = arith.constant 0 : index
    %187 = vector.load %arg13[%c0_95, %c0_96] : memref<8x128xf32, #tpu.memory_space<vmem>>, vector<8x128xf32>
    %cst_97 = arith.constant dense<0.000000e+00> : vector<8x384xf32>
    %188 = tpu.matmul %186, %20, %cst_97 {dimension_numbers = #tpu.dot_dimension_numbers<[1], [0], [0], [1], [0, 0, 1, 1], [], []>} : vector<8x128xf32>, vector<128x384xf32>, vector<8x384xf32> -> vector<8x384xf32>
    %189 = vector.broadcast %24 : vector<1x384xf32> to vector<8x384xf32>
    %190 = arith.addf %188, %189 : vector<8x384xf32>
    %cst_98 = arith.constant dense<0.000000e+00> : vector<8x384xf32>
    %191 = tpu.matmul %187, %22, %cst_98 {dimension_numbers = #tpu.dot_dimension_numbers<[1], [0], [0], [1], [0, 0, 1, 1], [], []>} : vector<8x128xf32>, vector<128x384xf32>, vector<8x384xf32> -> vector<8x384xf32>
    %192 = vector.broadcast %26 : vector<1x384xf32> to vector<8x384xf32>
    %193 = arith.addf %191, %192 : vector<8x384xf32>
    %194 = arith.index_cast %183 : i32 to index
    %c0_99 = arith.constant 0 : index
    %195 = vector.load %arg10[%194, %c0_99] : memref<64x384xf32, #tpu.memory_space<vmem>>, vector<8x384xf32>
    %196 = vector.extract_strided_slice %195 {offsets = [0, 0], sizes = [8, 128], strides = [1, 1]} : vector<8x384xf32> to vector<8x128xf32>
    %197 = vector.extract_strided_slice %190 {offsets = [0, 0], sizes = [8, 128], strides = [1, 1]} : vector<8x384xf32> to vector<8x128xf32>
    %198 = arith.addf %196, %197 : vector<8x128xf32>
    %199 = arith.negf %198 : vector<8x128xf32>
    %200 = math.exp %199 : vector<8x128xf32>
    %cst_100 = arith.constant 1.000000e+00 : f32
    %201 = vector.broadcast %cst_100 : f32 to vector<8x128xf32>
    %202 = arith.addf %201, %200 : vector<8x128xf32>
    %203 = arith.divf %201, %202 : vector<8x128xf32>
    %204 = vector.extract_strided_slice %195 {offsets = [0, 128], sizes = [8, 128], strides = [1, 1]} : vector<8x384xf32> to vector<8x128xf32>
    %205 = vector.extract_strided_slice %190 {offsets = [0, 128], sizes = [8, 128], strides = [1, 1]} : vector<8x384xf32> to vector<8x128xf32>
    %206 = arith.addf %204, %205 : vector<8x128xf32>
    %207 = arith.negf %206 : vector<8x128xf32>
    %208 = math.exp %207 : vector<8x128xf32>
    %cst_101 = arith.constant 1.000000e+00 : f32
    %209 = vector.broadcast %cst_101 : f32 to vector<8x128xf32>
    %210 = arith.addf %209, %208 : vector<8x128xf32>
    %211 = arith.divf %209, %210 : vector<8x128xf32>
    %212 = vector.extract_strided_slice %195 {offsets = [0, 256], sizes = [8, 128], strides = [1, 1]} : vector<8x384xf32> to vector<8x128xf32>
    %213 = vector.extract_strided_slice %190 {offsets = [0, 256], sizes = [8, 128], strides = [1, 1]} : vector<8x384xf32> to vector<8x128xf32>
    %214 = arith.mulf %203, %213 : vector<8x128xf32>
    %215 = arith.addf %212, %214 : vector<8x128xf32>
    %216 = math.tanh %215 : vector<8x128xf32>
    %cst_102 = arith.constant 1.000000e+00 : f32
    %217 = vector.broadcast %cst_102 : f32 to vector<8x128xf32>
    %218 = arith.subf %217, %211 : vector<8x128xf32>
    %219 = arith.mulf %218, %216 : vector<8x128xf32>
    %220 = arith.mulf %211, %186 : vector<8x128xf32>
    %221 = arith.addf %219, %220 : vector<8x128xf32>
    %222 = arith.index_cast %185 : i32 to index
    %c0_103 = arith.constant 0 : index
    %223 = vector.load %arg11[%222, %c0_103] : memref<64x384xf32, #tpu.memory_space<vmem>>, vector<8x384xf32>
    %224 = vector.extract_strided_slice %223 {offsets = [0, 0], sizes = [8, 128], strides = [1, 1]} : vector<8x384xf32> to vector<8x128xf32>
    %225 = vector.extract_strided_slice %193 {offsets = [0, 0], sizes = [8, 128], strides = [1, 1]} : vector<8x384xf32> to vector<8x128xf32>
    %226 = arith.addf %224, %225 : vector<8x128xf32>
    %227 = arith.negf %226 : vector<8x128xf32>
    %228 = math.exp %227 : vector<8x128xf32>
    %cst_104 = arith.constant 1.000000e+00 : f32
    %229 = vector.broadcast %cst_104 : f32 to vector<8x128xf32>
    %230 = arith.addf %229, %228 : vector<8x128xf32>
    %231 = arith.divf %229, %230 : vector<8x128xf32>
    %232 = vector.extract_strided_slice %223 {offsets = [0, 128], sizes = [8, 128], strides = [1, 1]} : vector<8x384xf32> to vector<8x128xf32>
    %233 = vector.extract_strided_slice %193 {offsets = [0, 128], sizes = [8, 128], strides = [1, 1]} : vector<8x384xf32> to vector<8x128xf32>
    %234 = arith.addf %232, %233 : vector<8x128xf32>
    %235 = arith.negf %234 : vector<8x128xf32>
    %236 = math.exp %235 : vector<8x128xf32>
    %cst_105 = arith.constant 1.000000e+00 : f32
    %237 = vector.broadcast %cst_105 : f32 to vector<8x128xf32>
    %238 = arith.addf %237, %236 : vector<8x128xf32>
    %239 = arith.divf %237, %238 : vector<8x128xf32>
    %240 = vector.extract_strided_slice %223 {offsets = [0, 256], sizes = [8, 128], strides = [1, 1]} : vector<8x384xf32> to vector<8x128xf32>
    %241 = vector.extract_strided_slice %193 {offsets = [0, 256], sizes = [8, 128], strides = [1, 1]} : vector<8x384xf32> to vector<8x128xf32>
    %242 = arith.mulf %231, %241 : vector<8x128xf32>
    %243 = arith.addf %240, %242 : vector<8x128xf32>
    %244 = math.tanh %243 : vector<8x128xf32>
    %cst_106 = arith.constant 1.000000e+00 : f32
    %245 = vector.broadcast %cst_106 : f32 to vector<8x128xf32>
    %246 = arith.subf %245, %239 : vector<8x128xf32>
    %247 = arith.mulf %246, %244 : vector<8x128xf32>
    %248 = arith.mulf %239, %187 : vector<8x128xf32>
    %249 = arith.addf %247, %248 : vector<8x128xf32>
    %c0_107 = arith.constant 0 : index
    %c0_108 = arith.constant 0 : index
    %250 = vector.load %arg12[%c0_107, %c0_108] : memref<8x128xf32, #tpu.memory_space<vmem>>, vector<8x128xf32>
    tpu.vector_store %arg12[%c0_107, %c0_108], %221 {strides = array<i32>} : memref<8x128xf32, #tpu.memory_space<vmem>>, vector<8x128xf32>,
    %c0_109 = arith.constant 0 : index
    %c0_110 = arith.constant 0 : index
    %251 = vector.load %arg13[%c0_109, %c0_110] : memref<8x128xf32, #tpu.memory_space<vmem>>, vector<8x128xf32>
    tpu.vector_store %arg13[%c0_109, %c0_110], %249 {strides = array<i32>} : memref<8x128xf32, #tpu.memory_space<vmem>>, vector<8x128xf32>,
    %252 = arith.index_cast %183 : i32 to index
    %c0_111 = arith.constant 0 : index
    %253 = vector.load %arg8[%252, %c0_111] : memref<64x128xf32, #tpu.memory_space<vmem>>, vector<8x128xf32>
    tpu.vector_store %arg8[%252, %c0_111], %221 {strides = array<i32>} : memref<64x128xf32, #tpu.memory_space<vmem>>, vector<8x128xf32>,
    %254 = arith.index_cast %185 : i32 to index
    %c0_112 = arith.constant 0 : index
    %255 = vector.load %arg9[%254, %c0_112] : memref<64x128xf32, #tpu.memory_space<vmem>>, vector<8x128xf32>
    tpu.vector_store %arg9[%254, %c0_112], %249 {strides = array<i32>} : memref<64x128xf32, #tpu.memory_space<vmem>>, vector<8x128xf32>,
    %c3_i32 = arith.constant 3 : i32
    %c7_i32_113 = arith.constant 7 : i32
    %256 = arith.subi %c7_i32_113, %c3_i32 : i32
    %c8_i32_114 = arith.constant 8 : i32
    %257 = arith.muli %c3_i32, %c8_i32_114 : i32
    %258 = tpu.assume_multiple %257, 8 : i32
    %c8_i32_115 = arith.constant 8 : i32
    %259 = arith.muli %256, %c8_i32_115 : i32
    %260 = tpu.assume_multiple %259, 8 : i32
    %c0_116 = arith.constant 0 : index
    %c0_117 = arith.constant 0 : index
    %261 = vector.load %arg12[%c0_116, %c0_117] : memref<8x128xf32, #tpu.memory_space<vmem>>, vector<8x128xf32>
    %c0_118 = arith.constant 0 : index
    %c0_119 = arith.constant 0 : index
    %262 = vector.load %arg13[%c0_118, %c0_119] : memref<8x128xf32, #tpu.memory_space<vmem>>, vector<8x128xf32>
    %cst_120 = arith.constant dense<0.000000e+00> : vector<8x384xf32>
    %263 = tpu.matmul %261, %20, %cst_120 {dimension_numbers = #tpu.dot_dimension_numbers<[1], [0], [0], [1], [0, 0, 1, 1], [], []>} : vector<8x128xf32>, vector<128x384xf32>, vector<8x384xf32> -> vector<8x384xf32>
    %264 = vector.broadcast %24 : vector<1x384xf32> to vector<8x384xf32>
    %265 = arith.addf %263, %264 : vector<8x384xf32>
    %cst_121 = arith.constant dense<0.000000e+00> : vector<8x384xf32>
    %266 = tpu.matmul %262, %22, %cst_121 {dimension_numbers = #tpu.dot_dimension_numbers<[1], [0], [0], [1], [0, 0, 1, 1], [], []>} : vector<8x128xf32>, vector<128x384xf32>, vector<8x384xf32> -> vector<8x384xf32>
    %267 = vector.broadcast %26 : vector<1x384xf32> to vector<8x384xf32>
    %268 = arith.addf %266, %267 : vector<8x384xf32>
    %269 = arith.index_cast %258 : i32 to index
    %c0_122 = arith.constant 0 : index
    %270 = vector.load %arg10[%269, %c0_122] : memref<64x384xf32, #tpu.memory_space<vmem>>, vector<8x384xf32>
    %271 = vector.extract_strided_slice %270 {offsets = [0, 0], sizes = [8, 128], strides = [1, 1]} : vector<8x384xf32> to vector<8x128xf32>
    %272 = vector.extract_strided_slice %265 {offsets = [0, 0], sizes = [8, 128], strides = [1, 1]} : vector<8x384xf32> to vector<8x128xf32>
    %273 = arith.addf %271, %272 : vector<8x128xf32>
    %274 = arith.negf %273 : vector<8x128xf32>
    %275 = math.exp %274 : vector<8x128xf32>
    %cst_123 = arith.constant 1.000000e+00 : f32
    %276 = vector.broadcast %cst_123 : f32 to vector<8x128xf32>
    %277 = arith.addf %276, %275 : vector<8x128xf32>
    %278 = arith.divf %276, %277 : vector<8x128xf32>
    %279 = vector.extract_strided_slice %270 {offsets = [0, 128], sizes = [8, 128], strides = [1, 1]} : vector<8x384xf32> to vector<8x128xf32>
    %280 = vector.extract_strided_slice %265 {offsets = [0, 128], sizes = [8, 128], strides = [1, 1]} : vector<8x384xf32> to vector<8x128xf32>
    %281 = arith.addf %279, %280 : vector<8x128xf32>
    %282 = arith.negf %281 : vector<8x128xf32>
    %283 = math.exp %282 : vector<8x128xf32>
    %cst_124 = arith.constant 1.000000e+00 : f32
    %284 = vector.broadcast %cst_124 : f32 to vector<8x128xf32>
    %285 = arith.addf %284, %283 : vector<8x128xf32>
    %286 = arith.divf %284, %285 : vector<8x128xf32>
    %287 = vector.extract_strided_slice %270 {offsets = [0, 256], sizes = [8, 128], strides = [1, 1]} : vector<8x384xf32> to vector<8x128xf32>
    %288 = vector.extract_strided_slice %265 {offsets = [0, 256], sizes = [8, 128], strides = [1, 1]} : vector<8x384xf32> to vector<8x128xf32>
    %289 = arith.mulf %278, %288 : vector<8x128xf32>
    %290 = arith.addf %287, %289 : vector<8x128xf32>
    %291 = math.tanh %290 : vector<8x128xf32>
    %cst_125 = arith.constant 1.000000e+00 : f32
    %292 = vector.broadcast %cst_125 : f32 to vector<8x128xf32>
    %293 = arith.subf %292, %286 : vector<8x128xf32>
    %294 = arith.mulf %293, %291 : vector<8x128xf32>
    %295 = arith.mulf %286, %261 : vector<8x128xf32>
    %296 = arith.addf %294, %295 : vector<8x128xf32>
    %297 = arith.index_cast %260 : i32 to index
    %c0_126 = arith.constant 0 : index
    %298 = vector.load %arg11[%297, %c0_126] : memref<64x384xf32, #tpu.memory_space<vmem>>, vector<8x384xf32>
    %299 = vector.extract_strided_slice %298 {offsets = [0, 0], sizes = [8, 128], strides = [1, 1]} : vector<8x384xf32> to vector<8x128xf32>
    %300 = vector.extract_strided_slice %268 {offsets = [0, 0], sizes = [8, 128], strides = [1, 1]} : vector<8x384xf32> to vector<8x128xf32>
    %301 = arith.addf %299, %300 : vector<8x128xf32>
    %302 = arith.negf %301 : vector<8x128xf32>
    %303 = math.exp %302 : vector<8x128xf32>
    %cst_127 = arith.constant 1.000000e+00 : f32
    %304 = vector.broadcast %cst_127 : f32 to vector<8x128xf32>
    %305 = arith.addf %304, %303 : vector<8x128xf32>
    %306 = arith.divf %304, %305 : vector<8x128xf32>
    %307 = vector.extract_strided_slice %298 {offsets = [0, 128], sizes = [8, 128], strides = [1, 1]} : vector<8x384xf32> to vector<8x128xf32>
    %308 = vector.extract_strided_slice %268 {offsets = [0, 128], sizes = [8, 128], strides = [1, 1]} : vector<8x384xf32> to vector<8x128xf32>
    %309 = arith.addf %307, %308 : vector<8x128xf32>
    %310 = arith.negf %309 : vector<8x128xf32>
    %311 = math.exp %310 : vector<8x128xf32>
    %cst_128 = arith.constant 1.000000e+00 : f32
    %312 = vector.broadcast %cst_128 : f32 to vector<8x128xf32>
    %313 = arith.addf %312, %311 : vector<8x128xf32>
    %314 = arith.divf %312, %313 : vector<8x128xf32>
    %315 = vector.extract_strided_slice %298 {offsets = [0, 256], sizes = [8, 128], strides = [1, 1]} : vector<8x384xf32> to vector<8x128xf32>
    %316 = vector.extract_strided_slice %268 {offsets = [0, 256], sizes = [8, 128], strides = [1, 1]} : vector<8x384xf32> to vector<8x128xf32>
    %317 = arith.mulf %306, %316 : vector<8x128xf32>
    %318 = arith.addf %315, %317 : vector<8x128xf32>
    %319 = math.tanh %318 : vector<8x128xf32>
    %cst_129 = arith.constant 1.000000e+00 : f32
    %320 = vector.broadcast %cst_129 : f32 to vector<8x128xf32>
    %321 = arith.subf %320, %314 : vector<8x128xf32>
    %322 = arith.mulf %321, %319 : vector<8x128xf32>
    %323 = arith.mulf %314, %262 : vector<8x128xf32>
    %324 = arith.addf %322, %323 : vector<8x128xf32>
    %c0_130 = arith.constant 0 : index
    %c0_131 = arith.constant 0 : index
    %325 = vector.load %arg12[%c0_130, %c0_131] : memref<8x128xf32, #tpu.memory_space<vmem>>, vector<8x128xf32>
    tpu.vector_store %arg12[%c0_130, %c0_131], %296 {strides = array<i32>} : memref<8x128xf32, #tpu.memory_space<vmem>>, vector<8x128xf32>,
    %c0_132 = arith.constant 0 : index
    %c0_133 = arith.constant 0 : index
    %326 = vector.load %arg13[%c0_132, %c0_133] : memref<8x128xf32, #tpu.memory_space<vmem>>, vector<8x128xf32>
    tpu.vector_store %arg13[%c0_132, %c0_133], %324 {strides = array<i32>} : memref<8x128xf32, #tpu.memory_space<vmem>>, vector<8x128xf32>,
    %327 = arith.index_cast %258 : i32 to index
    %c0_134 = arith.constant 0 : index
    %328 = vector.load %arg8[%327, %c0_134] : memref<64x128xf32, #tpu.memory_space<vmem>>, vector<8x128xf32>
    tpu.vector_store %arg8[%327, %c0_134], %296 {strides = array<i32>} : memref<64x128xf32, #tpu.memory_space<vmem>>, vector<8x128xf32>,
    %329 = arith.index_cast %260 : i32 to index
    %c0_135 = arith.constant 0 : index
    %330 = vector.load %arg9[%329, %c0_135] : memref<64x128xf32, #tpu.memory_space<vmem>>, vector<8x128xf32>
    tpu.vector_store %arg9[%329, %c0_135], %324 {strides = array<i32>} : memref<64x128xf32, #tpu.memory_space<vmem>>, vector<8x128xf32>,
    %c4_i32 = arith.constant 4 : i32
    %c7_i32_136 = arith.constant 7 : i32
    %331 = arith.subi %c7_i32_136, %c4_i32 : i32
    %c8_i32_137 = arith.constant 8 : i32
    %332 = arith.muli %c4_i32, %c8_i32_137 : i32
    %333 = tpu.assume_multiple %332, 8 : i32
    %c8_i32_138 = arith.constant 8 : i32
    %334 = arith.muli %331, %c8_i32_138 : i32
    %335 = tpu.assume_multiple %334, 8 : i32
    %c0_139 = arith.constant 0 : index
    %c0_140 = arith.constant 0 : index
    %336 = vector.load %arg12[%c0_139, %c0_140] : memref<8x128xf32, #tpu.memory_space<vmem>>, vector<8x128xf32>
    %c0_141 = arith.constant 0 : index
    %c0_142 = arith.constant 0 : index
    %337 = vector.load %arg13[%c0_141, %c0_142] : memref<8x128xf32, #tpu.memory_space<vmem>>, vector<8x128xf32>
    %cst_143 = arith.constant dense<0.000000e+00> : vector<8x384xf32>
    %338 = tpu.matmul %336, %20, %cst_143 {dimension_numbers = #tpu.dot_dimension_numbers<[1], [0], [0], [1], [0, 0, 1, 1], [], []>} : vector<8x128xf32>, vector<128x384xf32>, vector<8x384xf32> -> vector<8x384xf32>
    %339 = vector.broadcast %24 : vector<1x384xf32> to vector<8x384xf32>
    %340 = arith.addf %338, %339 : vector<8x384xf32>
    %cst_144 = arith.constant dense<0.000000e+00> : vector<8x384xf32>
    %341 = tpu.matmul %337, %22, %cst_144 {dimension_numbers = #tpu.dot_dimension_numbers<[1], [0], [0], [1], [0, 0, 1, 1], [], []>} : vector<8x128xf32>, vector<128x384xf32>, vector<8x384xf32> -> vector<8x384xf32>
    %342 = vector.broadcast %26 : vector<1x384xf32> to vector<8x384xf32>
    %343 = arith.addf %341, %342 : vector<8x384xf32>
    %344 = arith.index_cast %333 : i32 to index
    %c0_145 = arith.constant 0 : index
    %345 = vector.load %arg10[%344, %c0_145] : memref<64x384xf32, #tpu.memory_space<vmem>>, vector<8x384xf32>
    %346 = vector.extract_strided_slice %345 {offsets = [0, 0], sizes = [8, 128], strides = [1, 1]} : vector<8x384xf32> to vector<8x128xf32>
    %347 = vector.extract_strided_slice %340 {offsets = [0, 0], sizes = [8, 128], strides = [1, 1]} : vector<8x384xf32> to vector<8x128xf32>
    %348 = arith.addf %346, %347 : vector<8x128xf32>
    %349 = arith.negf %348 : vector<8x128xf32>
    %350 = math.exp %349 : vector<8x128xf32>
    %cst_146 = arith.constant 1.000000e+00 : f32
    %351 = vector.broadcast %cst_146 : f32 to vector<8x128xf32>
    %352 = arith.addf %351, %350 : vector<8x128xf32>
    %353 = arith.divf %351, %352 : vector<8x128xf32>
    %354 = vector.extract_strided_slice %345 {offsets = [0, 128], sizes = [8, 128], strides = [1, 1]} : vector<8x384xf32> to vector<8x128xf32>
    %355 = vector.extract_strided_slice %340 {offsets = [0, 128], sizes = [8, 128], strides = [1, 1]} : vector<8x384xf32> to vector<8x128xf32>
    %356 = arith.addf %354, %355 : vector<8x128xf32>
    %357 = arith.negf %356 : vector<8x128xf32>
    %358 = math.exp %357 : vector<8x128xf32>
    %cst_147 = arith.constant 1.000000e+00 : f32
    %359 = vector.broadcast %cst_147 : f32 to vector<8x128xf32>
    %360 = arith.addf %359, %358 : vector<8x128xf32>
    %361 = arith.divf %359, %360 : vector<8x128xf32>
    %362 = vector.extract_strided_slice %345 {offsets = [0, 256], sizes = [8, 128], strides = [1, 1]} : vector<8x384xf32> to vector<8x128xf32>
    %363 = vector.extract_strided_slice %340 {offsets = [0, 256], sizes = [8, 128], strides = [1, 1]} : vector<8x384xf32> to vector<8x128xf32>
    %364 = arith.mulf %353, %363 : vector<8x128xf32>
    %365 = arith.addf %362, %364 : vector<8x128xf32>
    %366 = math.tanh %365 : vector<8x128xf32>
    %cst_148 = arith.constant 1.000000e+00 : f32
    %367 = vector.broadcast %cst_148 : f32 to vector<8x128xf32>
    %368 = arith.subf %367, %361 : vector<8x128xf32>
    %369 = arith.mulf %368, %366 : vector<8x128xf32>
    %370 = arith.mulf %361, %336 : vector<8x128xf32>
    %371 = arith.addf %369, %370 : vector<8x128xf32>
    %372 = arith.index_cast %335 : i32 to index
    %c0_149 = arith.constant 0 : index
    %373 = vector.load %arg11[%372, %c0_149] : memref<64x384xf32, #tpu.memory_space<vmem>>, vector<8x384xf32>
    %374 = vector.extract_strided_slice %373 {offsets = [0, 0], sizes = [8, 128], strides = [1, 1]} : vector<8x384xf32> to vector<8x128xf32>
    %375 = vector.extract_strided_slice %343 {offsets = [0, 0], sizes = [8, 128], strides = [1, 1]} : vector<8x384xf32> to vector<8x128xf32>
    %376 = arith.addf %374, %375 : vector<8x128xf32>
    %377 = arith.negf %376 : vector<8x128xf32>
    %378 = math.exp %377 : vector<8x128xf32>
    %cst_150 = arith.constant 1.000000e+00 : f32
    %379 = vector.broadcast %cst_150 : f32 to vector<8x128xf32>
    %380 = arith.addf %379, %378 : vector<8x128xf32>
    %381 = arith.divf %379, %380 : vector<8x128xf32>
    %382 = vector.extract_strided_slice %373 {offsets = [0, 128], sizes = [8, 128], strides = [1, 1]} : vector<8x384xf32> to vector<8x128xf32>
    %383 = vector.extract_strided_slice %343 {offsets = [0, 128], sizes = [8, 128], strides = [1, 1]} : vector<8x384xf32> to vector<8x128xf32>
    %384 = arith.addf %382, %383 : vector<8x128xf32>
    %385 = arith.negf %384 : vector<8x128xf32>
    %386 = math.exp %385 : vector<8x128xf32>
    %cst_151 = arith.constant 1.000000e+00 : f32
    %387 = vector.broadcast %cst_151 : f32 to vector<8x128xf32>
    %388 = arith.addf %387, %386 : vector<8x128xf32>
    %389 = arith.divf %387, %388 : vector<8x128xf32>
    %390 = vector.extract_strided_slice %373 {offsets = [0, 256], sizes = [8, 128], strides = [1, 1]} : vector<8x384xf32> to vector<8x128xf32>
    %391 = vector.extract_strided_slice %343 {offsets = [0, 256], sizes = [8, 128], strides = [1, 1]} : vector<8x384xf32> to vector<8x128xf32>
    %392 = arith.mulf %381, %391 : vector<8x128xf32>
    %393 = arith.addf %390, %392 : vector<8x128xf32>
    %394 = math.tanh %393 : vector<8x128xf32>
    %cst_152 = arith.constant 1.000000e+00 : f32
    %395 = vector.broadcast %cst_152 : f32 to vector<8x128xf32>
    %396 = arith.subf %395, %389 : vector<8x128xf32>
    %397 = arith.mulf %396, %394 : vector<8x128xf32>
    %398 = arith.mulf %389, %337 : vector<8x128xf32>
    %399 = arith.addf %397, %398 : vector<8x128xf32>
    %c0_153 = arith.constant 0 : index
    %c0_154 = arith.constant 0 : index
    %400 = vector.load %arg12[%c0_153, %c0_154] : memref<8x128xf32, #tpu.memory_space<vmem>>, vector<8x128xf32>
    tpu.vector_store %arg12[%c0_153, %c0_154], %371 {strides = array<i32>} : memref<8x128xf32, #tpu.memory_space<vmem>>, vector<8x128xf32>,
    %c0_155 = arith.constant 0 : index
    %c0_156 = arith.constant 0 : index
    %401 = vector.load %arg13[%c0_155, %c0_156] : memref<8x128xf32, #tpu.memory_space<vmem>>, vector<8x128xf32>
    tpu.vector_store %arg13[%c0_155, %c0_156], %399 {strides = array<i32>} : memref<8x128xf32, #tpu.memory_space<vmem>>, vector<8x128xf32>,
    %402 = arith.index_cast %333 : i32 to index
    %c0_157 = arith.constant 0 : index
    %403 = vector.load %arg8[%402, %c0_157] : memref<64x128xf32, #tpu.memory_space<vmem>>, vector<8x128xf32>
    tpu.vector_store %arg8[%402, %c0_157], %371 {strides = array<i32>} : memref<64x128xf32, #tpu.memory_space<vmem>>, vector<8x128xf32>,
    %404 = arith.index_cast %335 : i32 to index
    %c0_158 = arith.constant 0 : index
    %405 = vector.load %arg9[%404, %c0_158] : memref<64x128xf32, #tpu.memory_space<vmem>>, vector<8x128xf32>
    tpu.vector_store %arg9[%404, %c0_158], %399 {strides = array<i32>} : memref<64x128xf32, #tpu.memory_space<vmem>>, vector<8x128xf32>,
    %c5_i32 = arith.constant 5 : i32
    %c7_i32_159 = arith.constant 7 : i32
    %406 = arith.subi %c7_i32_159, %c5_i32 : i32
    %c8_i32_160 = arith.constant 8 : i32
    %407 = arith.muli %c5_i32, %c8_i32_160 : i32
    %408 = tpu.assume_multiple %407, 8 : i32
    %c8_i32_161 = arith.constant 8 : i32
    %409 = arith.muli %406, %c8_i32_161 : i32
    %410 = tpu.assume_multiple %409, 8 : i32
    %c0_162 = arith.constant 0 : index
    %c0_163 = arith.constant 0 : index
    %411 = vector.load %arg12[%c0_162, %c0_163] : memref<8x128xf32, #tpu.memory_space<vmem>>, vector<8x128xf32>
    %c0_164 = arith.constant 0 : index
    %c0_165 = arith.constant 0 : index
    %412 = vector.load %arg13[%c0_164, %c0_165] : memref<8x128xf32, #tpu.memory_space<vmem>>, vector<8x128xf32>
    %cst_166 = arith.constant dense<0.000000e+00> : vector<8x384xf32>
    %413 = tpu.matmul %411, %20, %cst_166 {dimension_numbers = #tpu.dot_dimension_numbers<[1], [0], [0], [1], [0, 0, 1, 1], [], []>} : vector<8x128xf32>, vector<128x384xf32>, vector<8x384xf32> -> vector<8x384xf32>
    %414 = vector.broadcast %24 : vector<1x384xf32> to vector<8x384xf32>
    %415 = arith.addf %413, %414 : vector<8x384xf32>
    %cst_167 = arith.constant dense<0.000000e+00> : vector<8x384xf32>
    %416 = tpu.matmul %412, %22, %cst_167 {dimension_numbers = #tpu.dot_dimension_numbers<[1], [0], [0], [1], [0, 0, 1, 1], [], []>} : vector<8x128xf32>, vector<128x384xf32>, vector<8x384xf32> -> vector<8x384xf32>
    %417 = vector.broadcast %26 : vector<1x384xf32> to vector<8x384xf32>
    %418 = arith.addf %416, %417 : vector<8x384xf32>
    %419 = arith.index_cast %408 : i32 to index
    %c0_168 = arith.constant 0 : index
    %420 = vector.load %arg10[%419, %c0_168] : memref<64x384xf32, #tpu.memory_space<vmem>>, vector<8x384xf32>
    %421 = vector.extract_strided_slice %420 {offsets = [0, 0], sizes = [8, 128], strides = [1, 1]} : vector<8x384xf32> to vector<8x128xf32>
    %422 = vector.extract_strided_slice %415 {offsets = [0, 0], sizes = [8, 128], strides = [1, 1]} : vector<8x384xf32> to vector<8x128xf32>
    %423 = arith.addf %421, %422 : vector<8x128xf32>
    %424 = arith.negf %423 : vector<8x128xf32>
    %425 = math.exp %424 : vector<8x128xf32>
    %cst_169 = arith.constant 1.000000e+00 : f32
    %426 = vector.broadcast %cst_169 : f32 to vector<8x128xf32>
    %427 = arith.addf %426, %425 : vector<8x128xf32>
    %428 = arith.divf %426, %427 : vector<8x128xf32>
    %429 = vector.extract_strided_slice %420 {offsets = [0, 128], sizes = [8, 128], strides = [1, 1]} : vector<8x384xf32> to vector<8x128xf32>
    %430 = vector.extract_strided_slice %415 {offsets = [0, 128], sizes = [8, 128], strides = [1, 1]} : vector<8x384xf32> to vector<8x128xf32>
    %431 = arith.addf %429, %430 : vector<8x128xf32>
    %432 = arith.negf %431 : vector<8x128xf32>
    %433 = math.exp %432 : vector<8x128xf32>
    %cst_170 = arith.constant 1.000000e+00 : f32
    %434 = vector.broadcast %cst_170 : f32 to vector<8x128xf32>
    %435 = arith.addf %434, %433 : vector<8x128xf32>
    %436 = arith.divf %434, %435 : vector<8x128xf32>
    %437 = vector.extract_strided_slice %420 {offsets = [0, 256], sizes = [8, 128], strides = [1, 1]} : vector<8x384xf32> to vector<8x128xf32>
    %438 = vector.extract_strided_slice %415 {offsets = [0, 256], sizes = [8, 128], strides = [1, 1]} : vector<8x384xf32> to vector<8x128xf32>
    %439 = arith.mulf %428, %438 : vector<8x128xf32>
    %440 = arith.addf %437, %439 : vector<8x128xf32>
    %441 = math.tanh %440 : vector<8x128xf32>
    %cst_171 = arith.constant 1.000000e+00 : f32
    %442 = vector.broadcast %cst_171 : f32 to vector<8x128xf32>
    %443 = arith.subf %442, %436 : vector<8x128xf32>
    %444 = arith.mulf %443, %441 : vector<8x128xf32>
    %445 = arith.mulf %436, %411 : vector<8x128xf32>
    %446 = arith.addf %444, %445 : vector<8x128xf32>
    %447 = arith.index_cast %410 : i32 to index
    %c0_172 = arith.constant 0 : index
    %448 = vector.load %arg11[%447, %c0_172] : memref<64x384xf32, #tpu.memory_space<vmem>>, vector<8x384xf32>
    %449 = vector.extract_strided_slice %448 {offsets = [0, 0], sizes = [8, 128], strides = [1, 1]} : vector<8x384xf32> to vector<8x128xf32>
    %450 = vector.extract_strided_slice %418 {offsets = [0, 0], sizes = [8, 128], strides = [1, 1]} : vector<8x384xf32> to vector<8x128xf32>
    %451 = arith.addf %449, %450 : vector<8x128xf32>
    %452 = arith.negf %451 : vector<8x128xf32>
    %453 = math.exp %452 : vector<8x128xf32>
    %cst_173 = arith.constant 1.000000e+00 : f32
    %454 = vector.broadcast %cst_173 : f32 to vector<8x128xf32>
    %455 = arith.addf %454, %453 : vector<8x128xf32>
    %456 = arith.divf %454, %455 : vector<8x128xf32>
    %457 = vector.extract_strided_slice %448 {offsets = [0, 128], sizes = [8, 128], strides = [1, 1]} : vector<8x384xf32> to vector<8x128xf32>
    %458 = vector.extract_strided_slice %418 {offsets = [0, 128], sizes = [8, 128], strides = [1, 1]} : vector<8x384xf32> to vector<8x128xf32>
    %459 = arith.addf %457, %458 : vector<8x128xf32>
    %460 = arith.negf %459 : vector<8x128xf32>
    %461 = math.exp %460 : vector<8x128xf32>
    %cst_174 = arith.constant 1.000000e+00 : f32
    %462 = vector.broadcast %cst_174 : f32 to vector<8x128xf32>
    %463 = arith.addf %462, %461 : vector<8x128xf32>
    %464 = arith.divf %462, %463 : vector<8x128xf32>
    %465 = vector.extract_strided_slice %448 {offsets = [0, 256], sizes = [8, 128], strides = [1, 1]} : vector<8x384xf32> to vector<8x128xf32>
    %466 = vector.extract_strided_slice %418 {offsets = [0, 256], sizes = [8, 128], strides = [1, 1]} : vector<8x384xf32> to vector<8x128xf32>
    %467 = arith.mulf %456, %466 : vector<8x128xf32>
    %468 = arith.addf %465, %467 : vector<8x128xf32>
    %469 = math.tanh %468 : vector<8x128xf32>
    %cst_175 = arith.constant 1.000000e+00 : f32
    %470 = vector.broadcast %cst_175 : f32 to vector<8x128xf32>
    %471 = arith.subf %470, %464 : vector<8x128xf32>
    %472 = arith.mulf %471, %469 : vector<8x128xf32>
    %473 = arith.mulf %464, %412 : vector<8x128xf32>
    %474 = arith.addf %472, %473 : vector<8x128xf32>
    %c0_176 = arith.constant 0 : index
    %c0_177 = arith.constant 0 : index
    %475 = vector.load %arg12[%c0_176, %c0_177] : memref<8x128xf32, #tpu.memory_space<vmem>>, vector<8x128xf32>
    tpu.vector_store %arg12[%c0_176, %c0_177], %446 {strides = array<i32>} : memref<8x128xf32, #tpu.memory_space<vmem>>, vector<8x128xf32>,
    %c0_178 = arith.constant 0 : index
    %c0_179 = arith.constant 0 : index
    %476 = vector.load %arg13[%c0_178, %c0_179] : memref<8x128xf32, #tpu.memory_space<vmem>>, vector<8x128xf32>
    tpu.vector_store %arg13[%c0_178, %c0_179], %474 {strides = array<i32>} : memref<8x128xf32, #tpu.memory_space<vmem>>, vector<8x128xf32>,
    %477 = arith.index_cast %408 : i32 to index
    %c0_180 = arith.constant 0 : index
    %478 = vector.load %arg8[%477, %c0_180] : memref<64x128xf32, #tpu.memory_space<vmem>>, vector<8x128xf32>
    tpu.vector_store %arg8[%477, %c0_180], %446 {strides = array<i32>} : memref<64x128xf32, #tpu.memory_space<vmem>>, vector<8x128xf32>,
    %479 = arith.index_cast %410 : i32 to index
    %c0_181 = arith.constant 0 : index
    %480 = vector.load %arg9[%479, %c0_181] : memref<64x128xf32, #tpu.memory_space<vmem>>, vector<8x128xf32>
    tpu.vector_store %arg9[%479, %c0_181], %474 {strides = array<i32>} : memref<64x128xf32, #tpu.memory_space<vmem>>, vector<8x128xf32>,
    %c6_i32 = arith.constant 6 : i32
    %c7_i32_182 = arith.constant 7 : i32
    %481 = arith.subi %c7_i32_182, %c6_i32 : i32
    %c8_i32_183 = arith.constant 8 : i32
    %482 = arith.muli %c6_i32, %c8_i32_183 : i32
    %483 = tpu.assume_multiple %482, 8 : i32
    %c8_i32_184 = arith.constant 8 : i32
    %484 = arith.muli %481, %c8_i32_184 : i32
    %485 = tpu.assume_multiple %484, 8 : i32
    %c0_185 = arith.constant 0 : index
    %c0_186 = arith.constant 0 : index
    %486 = vector.load %arg12[%c0_185, %c0_186] : memref<8x128xf32, #tpu.memory_space<vmem>>, vector<8x128xf32>
    %c0_187 = arith.constant 0 : index
    %c0_188 = arith.constant 0 : index
    %487 = vector.load %arg13[%c0_187, %c0_188] : memref<8x128xf32, #tpu.memory_space<vmem>>, vector<8x128xf32>
    %cst_189 = arith.constant dense<0.000000e+00> : vector<8x384xf32>
    %488 = tpu.matmul %486, %20, %cst_189 {dimension_numbers = #tpu.dot_dimension_numbers<[1], [0], [0], [1], [0, 0, 1, 1], [], []>} : vector<8x128xf32>, vector<128x384xf32>, vector<8x384xf32> -> vector<8x384xf32>
    %489 = vector.broadcast %24 : vector<1x384xf32> to vector<8x384xf32>
    %490 = arith.addf %488, %489 : vector<8x384xf32>
    %cst_190 = arith.constant dense<0.000000e+00> : vector<8x384xf32>
    %491 = tpu.matmul %487, %22, %cst_190 {dimension_numbers = #tpu.dot_dimension_numbers<[1], [0], [0], [1], [0, 0, 1, 1], [], []>} : vector<8x128xf32>, vector<128x384xf32>, vector<8x384xf32> -> vector<8x384xf32>
    %492 = vector.broadcast %26 : vector<1x384xf32> to vector<8x384xf32>
    %493 = arith.addf %491, %492 : vector<8x384xf32>
    %494 = arith.index_cast %483 : i32 to index
    %c0_191 = arith.constant 0 : index
    %495 = vector.load %arg10[%494, %c0_191] : memref<64x384xf32, #tpu.memory_space<vmem>>, vector<8x384xf32>
    %496 = vector.extract_strided_slice %495 {offsets = [0, 0], sizes = [8, 128], strides = [1, 1]} : vector<8x384xf32> to vector<8x128xf32>
    %497 = vector.extract_strided_slice %490 {offsets = [0, 0], sizes = [8, 128], strides = [1, 1]} : vector<8x384xf32> to vector<8x128xf32>
    %498 = arith.addf %496, %497 : vector<8x128xf32>
    %499 = arith.negf %498 : vector<8x128xf32>
    %500 = math.exp %499 : vector<8x128xf32>
    %cst_192 = arith.constant 1.000000e+00 : f32
    %501 = vector.broadcast %cst_192 : f32 to vector<8x128xf32>
    %502 = arith.addf %501, %500 : vector<8x128xf32>
    %503 = arith.divf %501, %502 : vector<8x128xf32>
    %504 = vector.extract_strided_slice %495 {offsets = [0, 128], sizes = [8, 128], strides = [1, 1]} : vector<8x384xf32> to vector<8x128xf32>
    %505 = vector.extract_strided_slice %490 {offsets = [0, 128], sizes = [8, 128], strides = [1, 1]} : vector<8x384xf32> to vector<8x128xf32>
    %506 = arith.addf %504, %505 : vector<8x128xf32>
    %507 = arith.negf %506 : vector<8x128xf32>
    %508 = math.exp %507 : vector<8x128xf32>
    %cst_193 = arith.constant 1.000000e+00 : f32
    %509 = vector.broadcast %cst_193 : f32 to vector<8x128xf32>
    %510 = arith.addf %509, %508 : vector<8x128xf32>
    %511 = arith.divf %509, %510 : vector<8x128xf32>
    %512 = vector.extract_strided_slice %495 {offsets = [0, 256], sizes = [8, 128], strides = [1, 1]} : vector<8x384xf32> to vector<8x128xf32>
    %513 = vector.extract_strided_slice %490 {offsets = [0, 256], sizes = [8, 128], strides = [1, 1]} : vector<8x384xf32> to vector<8x128xf32>
    %514 = arith.mulf %503, %513 : vector<8x128xf32>
    %515 = arith.addf %512, %514 : vector<8x128xf32>
    %516 = math.tanh %515 : vector<8x128xf32>
    %cst_194 = arith.constant 1.000000e+00 : f32
    %517 = vector.broadcast %cst_194 : f32 to vector<8x128xf32>
    %518 = arith.subf %517, %511 : vector<8x128xf32>
    %519 = arith.mulf %518, %516 : vector<8x128xf32>
    %520 = arith.mulf %511, %486 : vector<8x128xf32>
    %521 = arith.addf %519, %520 : vector<8x128xf32>
    %522 = arith.index_cast %485 : i32 to index
    %c0_195 = arith.constant 0 : index
    %523 = vector.load %arg11[%522, %c0_195] : memref<64x384xf32, #tpu.memory_space<vmem>>, vector<8x384xf32>
    %524 = vector.extract_strided_slice %523 {offsets = [0, 0], sizes = [8, 128], strides = [1, 1]} : vector<8x384xf32> to vector<8x128xf32>
    %525 = vector.extract_strided_slice %493 {offsets = [0, 0], sizes = [8, 128], strides = [1, 1]} : vector<8x384xf32> to vector<8x128xf32>
    %526 = arith.addf %524, %525 : vector<8x128xf32>
    %527 = arith.negf %526 : vector<8x128xf32>
    %528 = math.exp %527 : vector<8x128xf32>
    %cst_196 = arith.constant 1.000000e+00 : f32
    %529 = vector.broadcast %cst_196 : f32 to vector<8x128xf32>
    %530 = arith.addf %529, %528 : vector<8x128xf32>
    %531 = arith.divf %529, %530 : vector<8x128xf32>
    %532 = vector.extract_strided_slice %523 {offsets = [0, 128], sizes = [8, 128], strides = [1, 1]} : vector<8x384xf32> to vector<8x128xf32>
    %533 = vector.extract_strided_slice %493 {offsets = [0, 128], sizes = [8, 128], strides = [1, 1]} : vector<8x384xf32> to vector<8x128xf32>
    %534 = arith.addf %532, %533 : vector<8x128xf32>
    %535 = arith.negf %534 : vector<8x128xf32>
    %536 = math.exp %535 : vector<8x128xf32>
    %cst_197 = arith.constant 1.000000e+00 : f32
    %537 = vector.broadcast %cst_197 : f32 to vector<8x128xf32>
    %538 = arith.addf %537, %536 : vector<8x128xf32>
    %539 = arith.divf %537, %538 : vector<8x128xf32>
    %540 = vector.extract_strided_slice %523 {offsets = [0, 256], sizes = [8, 128], strides = [1, 1]} : vector<8x384xf32> to vector<8x128xf32>
    %541 = vector.extract_strided_slice %493 {offsets = [0, 256], sizes = [8, 128], strides = [1, 1]} : vector<8x384xf32> to vector<8x128xf32>
    %542 = arith.mulf %531, %541 : vector<8x128xf32>
    %543 = arith.addf %540, %542 : vector<8x128xf32>
    %544 = math.tanh %543 : vector<8x128xf32>
    %cst_198 = arith.constant 1.000000e+00 : f32
    %545 = vector.broadcast %cst_198 : f32 to vector<8x128xf32>
    %546 = arith.subf %545, %539 : vector<8x128xf32>
    %547 = arith.mulf %546, %544 : vector<8x128xf32>
    %548 = arith.mulf %539, %487 : vector<8x128xf32>
    %549 = arith.addf %547, %548 : vector<8x128xf32>
    %c0_199 = arith.constant 0 : index
    %c0_200 = arith.constant 0 : index
    %550 = vector.load %arg12[%c0_199, %c0_200] : memref<8x128xf32, #tpu.memory_space<vmem>>, vector<8x128xf32>
    tpu.vector_store %arg12[%c0_199, %c0_200], %521 {strides = array<i32>} : memref<8x128xf32, #tpu.memory_space<vmem>>, vector<8x128xf32>,
    %c0_201 = arith.constant 0 : index
    %c0_202 = arith.constant 0 : index
    %551 = vector.load %arg13[%c0_201, %c0_202] : memref<8x128xf32, #tpu.memory_space<vmem>>, vector<8x128xf32>
    tpu.vector_store %arg13[%c0_201, %c0_202], %549 {strides = array<i32>} : memref<8x128xf32, #tpu.memory_space<vmem>>, vector<8x128xf32>,
    %552 = arith.index_cast %483 : i32 to index
    %c0_203 = arith.constant 0 : index
    %553 = vector.load %arg8[%552, %c0_203] : memref<64x128xf32, #tpu.memory_space<vmem>>, vector<8x128xf32>
    tpu.vector_store %arg8[%552, %c0_203], %521 {strides = array<i32>} : memref<64x128xf32, #tpu.memory_space<vmem>>, vector<8x128xf32>,
    %554 = arith.index_cast %485 : i32 to index
    %c0_204 = arith.constant 0 : index
    %555 = vector.load %arg9[%554, %c0_204] : memref<64x128xf32, #tpu.memory_space<vmem>>, vector<8x128xf32>
    tpu.vector_store %arg9[%554, %c0_204], %549 {strides = array<i32>} : memref<64x128xf32, #tpu.memory_space<vmem>>, vector<8x128xf32>,
    %c7_i32_205 = arith.constant 7 : i32
    %c7_i32_206 = arith.constant 7 : i32
    %556 = arith.subi %c7_i32_206, %c7_i32_205 : i32
    %c8_i32_207 = arith.constant 8 : i32
    %557 = arith.muli %c7_i32_205, %c8_i32_207 : i32
    %558 = tpu.assume_multiple %557, 8 : i32
    %c8_i32_208 = arith.constant 8 : i32
    %559 = arith.muli %556, %c8_i32_208 : i32
    %560 = tpu.assume_multiple %559, 8 : i32
    %c0_209 = arith.constant 0 : index
    %c0_210 = arith.constant 0 : index
    %561 = vector.load %arg12[%c0_209, %c0_210] : memref<8x128xf32, #tpu.memory_space<vmem>>, vector<8x128xf32>
    %c0_211 = arith.constant 0 : index
    %c0_212 = arith.constant 0 : index
    %562 = vector.load %arg13[%c0_211, %c0_212] : memref<8x128xf32, #tpu.memory_space<vmem>>, vector<8x128xf32>
    %cst_213 = arith.constant dense<0.000000e+00> : vector<8x384xf32>
    %563 = tpu.matmul %561, %20, %cst_213 {dimension_numbers = #tpu.dot_dimension_numbers<[1], [0], [0], [1], [0, 0, 1, 1], [], []>} : vector<8x128xf32>, vector<128x384xf32>, vector<8x384xf32> -> vector<8x384xf32>
    %564 = vector.broadcast %24 : vector<1x384xf32> to vector<8x384xf32>
    %565 = arith.addf %563, %564 : vector<8x384xf32>
    %cst_214 = arith.constant dense<0.000000e+00> : vector<8x384xf32>
    %566 = tpu.matmul %562, %22, %cst_214 {dimension_numbers = #tpu.dot_dimension_numbers<[1], [0], [0], [1], [0, 0, 1, 1], [], []>} : vector<8x128xf32>, vector<128x384xf32>, vector<8x384xf32> -> vector<8x384xf32>
    %567 = vector.broadcast %26 : vector<1x384xf32> to vector<8x384xf32>
    %568 = arith.addf %566, %567 : vector<8x384xf32>
    %569 = arith.index_cast %558 : i32 to index
    %c0_215 = arith.constant 0 : index
    %570 = vector.load %arg10[%569, %c0_215] : memref<64x384xf32, #tpu.memory_space<vmem>>, vector<8x384xf32>
    %571 = vector.extract_strided_slice %570 {offsets = [0, 0], sizes = [8, 128], strides = [1, 1]} : vector<8x384xf32> to vector<8x128xf32>
    %572 = vector.extract_strided_slice %565 {offsets = [0, 0], sizes = [8, 128], strides = [1, 1]} : vector<8x384xf32> to vector<8x128xf32>
    %573 = arith.addf %571, %572 : vector<8x128xf32>
    %574 = arith.negf %573 : vector<8x128xf32>
    %575 = math.exp %574 : vector<8x128xf32>
    %cst_216 = arith.constant 1.000000e+00 : f32
    %576 = vector.broadcast %cst_216 : f32 to vector<8x128xf32>
    %577 = arith.addf %576, %575 : vector<8x128xf32>
    %578 = arith.divf %576, %577 : vector<8x128xf32>
    %579 = vector.extract_strided_slice %570 {offsets = [0, 128], sizes = [8, 128], strides = [1, 1]} : vector<8x384xf32> to vector<8x128xf32>
    %580 = vector.extract_strided_slice %565 {offsets = [0, 128], sizes = [8, 128], strides = [1, 1]} : vector<8x384xf32> to vector<8x128xf32>
    %581 = arith.addf %579, %580 : vector<8x128xf32>
    %582 = arith.negf %581 : vector<8x128xf32>
    %583 = math.exp %582 : vector<8x128xf32>
    %cst_217 = arith.constant 1.000000e+00 : f32
    %584 = vector.broadcast %cst_217 : f32 to vector<8x128xf32>
    %585 = arith.addf %584, %583 : vector<8x128xf32>
    %586 = arith.divf %584, %585 : vector<8x128xf32>
    %587 = vector.extract_strided_slice %570 {offsets = [0, 256], sizes = [8, 128], strides = [1, 1]} : vector<8x384xf32> to vector<8x128xf32>
    %588 = vector.extract_strided_slice %565 {offsets = [0, 256], sizes = [8, 128], strides = [1, 1]} : vector<8x384xf32> to vector<8x128xf32>
    %589 = arith.mulf %578, %588 : vector<8x128xf32>
    %590 = arith.addf %587, %589 : vector<8x128xf32>
    %591 = math.tanh %590 : vector<8x128xf32>
    %cst_218 = arith.constant 1.000000e+00 : f32
    %592 = vector.broadcast %cst_218 : f32 to vector<8x128xf32>
    %593 = arith.subf %592, %586 : vector<8x128xf32>
    %594 = arith.mulf %593, %591 : vector<8x128xf32>
    %595 = arith.mulf %586, %561 : vector<8x128xf32>
    %596 = arith.addf %594, %595 : vector<8x128xf32>
    %597 = arith.index_cast %560 : i32 to index
    %c0_219 = arith.constant 0 : index
    %598 = vector.load %arg11[%597, %c0_219] : memref<64x384xf32, #tpu.memory_space<vmem>>, vector<8x384xf32>
    %599 = vector.extract_strided_slice %598 {offsets = [0, 0], sizes = [8, 128], strides = [1, 1]} : vector<8x384xf32> to vector<8x128xf32>
    %600 = vector.extract_strided_slice %568 {offsets = [0, 0], sizes = [8, 128], strides = [1, 1]} : vector<8x384xf32> to vector<8x128xf32>
    %601 = arith.addf %599, %600 : vector<8x128xf32>
    %602 = arith.negf %601 : vector<8x128xf32>
    %603 = math.exp %602 : vector<8x128xf32>
    %cst_220 = arith.constant 1.000000e+00 : f32
    %604 = vector.broadcast %cst_220 : f32 to vector<8x128xf32>
    %605 = arith.addf %604, %603 : vector<8x128xf32>
    %606 = arith.divf %604, %605 : vector<8x128xf32>
    %607 = vector.extract_strided_slice %598 {offsets = [0, 128], sizes = [8, 128], strides = [1, 1]} : vector<8x384xf32> to vector<8x128xf32>
    %608 = vector.extract_strided_slice %568 {offsets = [0, 128], sizes = [8, 128], strides = [1, 1]} : vector<8x384xf32> to vector<8x128xf32>
    %609 = arith.addf %607, %608 : vector<8x128xf32>
    %610 = arith.negf %609 : vector<8x128xf32>
    %611 = math.exp %610 : vector<8x128xf32>
    %cst_221 = arith.constant 1.000000e+00 : f32
    %612 = vector.broadcast %cst_221 : f32 to vector<8x128xf32>
    %613 = arith.addf %612, %611 : vector<8x128xf32>
    %614 = arith.divf %612, %613 : vector<8x128xf32>
    %615 = vector.extract_strided_slice %598 {offsets = [0, 256], sizes = [8, 128], strides = [1, 1]} : vector<8x384xf32> to vector<8x128xf32>
    %616 = vector.extract_strided_slice %568 {offsets = [0, 256], sizes = [8, 128], strides = [1, 1]} : vector<8x384xf32> to vector<8x128xf32>
    %617 = arith.mulf %606, %616 : vector<8x128xf32>
    %618 = arith.addf %615, %617 : vector<8x128xf32>
    %619 = math.tanh %618 : vector<8x128xf32>
    %cst_222 = arith.constant 1.000000e+00 : f32
    %620 = vector.broadcast %cst_222 : f32 to vector<8x128xf32>
    %621 = arith.subf %620, %614 : vector<8x128xf32>
    %622 = arith.mulf %621, %619 : vector<8x128xf32>
    %623 = arith.mulf %614, %562 : vector<8x128xf32>
    %624 = arith.addf %622, %623 : vector<8x128xf32>
    %c0_223 = arith.constant 0 : index
    %c0_224 = arith.constant 0 : index
    %625 = vector.load %arg12[%c0_223, %c0_224] : memref<8x128xf32, #tpu.memory_space<vmem>>, vector<8x128xf32>
    tpu.vector_store %arg12[%c0_223, %c0_224], %596 {strides = array<i32>} : memref<8x128xf32, #tpu.memory_space<vmem>>, vector<8x128xf32>,
    %c0_225 = arith.constant 0 : index
    %c0_226 = arith.constant 0 : index
    %626 = vector.load %arg13[%c0_225, %c0_226] : memref<8x128xf32, #tpu.memory_space<vmem>>, vector<8x128xf32>
    tpu.vector_store %arg13[%c0_225, %c0_226], %624 {strides = array<i32>} : memref<8x128xf32, #tpu.memory_space<vmem>>, vector<8x128xf32>,
    %627 = arith.index_cast %558 : i32 to index
    %c0_227 = arith.constant 0 : index
    %628 = vector.load %arg8[%627, %c0_227] : memref<64x128xf32, #tpu.memory_space<vmem>>, vector<8x128xf32>
    tpu.vector_store %arg8[%627, %c0_227], %596 {strides = array<i32>} : memref<64x128xf32, #tpu.memory_space<vmem>>, vector<8x128xf32>,
    %629 = arith.index_cast %560 : i32 to index
    %c0_228 = arith.constant 0 : index
    %630 = vector.load %arg9[%629, %c0_228] : memref<64x128xf32, #tpu.memory_space<vmem>>, vector<8x128xf32>
    tpu.vector_store %arg9[%629, %c0_228], %624 {strides = array<i32>} : memref<64x128xf32, #tpu.memory_space<vmem>>, vector<8x128xf32>,
    %c8_i32_229 = arith.constant 8 : i32
    %c0_230 = arith.constant 0 : index
    %c0_231 = arith.constant 0 : index
    %631 = vector.load %arg12[%c0_230, %c0_231] : memref<8x128xf32, #tpu.memory_space<vmem>>, vector<8x128xf32>
    %c0_232 = arith.constant 0 : index
    %c0_233 = arith.constant 0 : index
    %c0_234 = arith.constant 0 : index
    %632 = vector.load %arg6[%c0_232, %c0_233, %c0_234] : memref<4x8x128xf32, #tpu.memory_space<vmem>>, vector<1x8x128xf32>
    %633 = vector.shape_cast %632 : vector<1x8x128xf32> to vector<8x128xf32>
    %634 = vector.shape_cast %631 : vector<8x128xf32> to vector<1x8x128xf32>
    tpu.vector_store %arg6[%c0_232, %c0_233, %c0_234], %634 {strides = array<i32>} : memref<4x8x128xf32, #tpu.memory_space<vmem>>, vector<1x8x128xf32>,
    %c0_235 = arith.constant 0 : index
    %c0_236 = arith.constant 0 : index
    %635 = vector.load %arg13[%c0_235, %c0_236] : memref<8x128xf32, #tpu.memory_space<vmem>>, vector<8x128xf32>
    %c1_237 = arith.constant 1 : index
    %c0_238 = arith.constant 0 : index
    %c0_239 = arith.constant 0 : index
    %636 = vector.load %arg6[%c1_237, %c0_238, %c0_239] : memref<4x8x128xf32, #tpu.memory_space<vmem>>, vector<1x8x128xf32>
    %637 = vector.shape_cast %636 : vector<1x8x128xf32> to vector<8x128xf32>
    %638 = vector.shape_cast %635 : vector<8x128xf32> to vector<1x8x128xf32>
    tpu.vector_store %arg6[%c1_237, %c0_238, %c0_239], %638 {strides = array<i32>} : memref<4x8x128xf32, #tpu.memory_space<vmem>>, vector<1x8x128xf32>,
    %c0_240 = arith.constant 0 : index
    %c0_241 = arith.constant 0 : index
    %639 = vector.load %arg8[%c0_240, %c0_241] : memref<64x128xf32, #tpu.memory_space<vmem>>, vector<64x128xf32>
    %c0_242 = arith.constant 0 : index
    %c0_243 = arith.constant 0 : index
    %640 = vector.load %arg7[%c0_242, %c0_243] : memref<64x256xf32, #tpu.memory_space<vmem>>, vector<64x128xf32>
    tpu.vector_store %arg7[%c0_242, %c0_243], %639 {strides = array<i32>} : memref<64x256xf32, #tpu.memory_space<vmem>>, vector<64x128xf32>,
    %c0_244 = arith.constant 0 : index
    %c0_245 = arith.constant 0 : index
    %641 = vector.load %arg9[%c0_244, %c0_245] : memref<64x128xf32, #tpu.memory_space<vmem>>, vector<64x128xf32>
    %c0_246 = arith.constant 0 : index
    %c128 = arith.constant 128 : index
    %642 = vector.load %arg7[%c0_246, %c128] : memref<64x256xf32, #tpu.memory_space<vmem>>, vector<64x128xf32>
    tpu.vector_store %arg7[%c0_246, %c128], %641 {strides = array<i32>} : memref<64x256xf32, #tpu.memory_space<vmem>>, vector<64x128xf32>,
    %c0_247 = arith.constant 0 : index
    %c0_248 = arith.constant 0 : index
    %643 = vector.load %arg7[%c0_247, %c0_248] : memref<64x256xf32, #tpu.memory_space<vmem>>, vector<64x256xf32>
    %c1_249 = arith.constant 1 : index
    %c0_250 = arith.constant 0 : index
    %c0_251 = arith.constant 0 : index
    %c0_252 = arith.constant 0 : index
    %644 = vector.load %arg1[%c1_249, %c0_250, %c0_251, %c0_252] : memref<2x2x256x384xf32, #tpu.memory_space<vmem>>, vector<1x1x256x384xf32>
    %645 = vector.shape_cast %644 : vector<1x1x256x384xf32> to vector<256x384xf32>
    %cst_253 = arith.constant dense<0.000000e+00> : vector<64x384xf32>
    %646 = tpu.matmul %643, %645, %cst_253 {dimension_numbers = #tpu.dot_dimension_numbers<[1], [0], [0], [1], [0, 0, 1, 1], [], []>} : vector<64x256xf32>, vector<256x384xf32>, vector<64x384xf32> -> vector<64x384xf32>
    %c1_254 = arith.constant 1 : index
    %c0_255 = arith.constant 0 : index
    %c0_256 = arith.constant 0 : index
    %c0_257 = arith.constant 0 : index
    %647 = vector.load %arg2[%c1_254, %c0_255, %c0_256, %c0_257] : memref<2x2x1x384xf32, #tpu.memory_space<vmem>>, vector<1x1x1x384xf32>
    %648 = vector.shape_cast %647 : vector<1x1x1x384xf32> to vector<1x384xf32>
    %649 = vector.broadcast %648 : vector<1x384xf32> to vector<64x384xf32>
    %650 = arith.addf %646, %649 : vector<64x384xf32>
    %c0_258 = arith.constant 0 : index
    %c0_259 = arith.constant 0 : index
    %651 = vector.load %arg10[%c0_258, %c0_259] : memref<64x384xf32, #tpu.memory_space<vmem>>, vector<64x384xf32>
    tpu.vector_store %arg10[%c0_258, %c0_259], %650 {strides = array<i32>} : memref<64x384xf32, #tpu.memory_space<vmem>>, vector<64x384xf32>,
    %c1_260 = arith.constant 1 : index
    %c1_261 = arith.constant 1 : index
    %c0_262 = arith.constant 0 : index
    %c0_263 = arith.constant 0 : index
    %652 = vector.load %arg1[%c1_260, %c1_261, %c0_262, %c0_263] : memref<2x2x256x384xf32, #tpu.memory_space<vmem>>, vector<1x1x256x384xf32>
    %653 = vector.shape_cast %652 : vector<1x1x256x384xf32> to vector<256x384xf32>
    %cst_264 = arith.constant dense<0.000000e+00> : vector<64x384xf32>
    %654 = tpu.matmul %643, %653, %cst_264 {dimension_numbers = #tpu.dot_dimension_numbers<[1], [0], [0], [1], [0, 0, 1, 1], [], []>} : vector<64x256xf32>, vector<256x384xf32>, vector<64x384xf32> -> vector<64x384xf32>
    %c1_265 = arith.constant 1 : index
    %c1_266 = arith.constant 1 : index
    %c0_267 = arith.constant 0 : index
    %c0_268 = arith.constant 0 : index
    %655 = vector.load %arg2[%c1_265, %c1_266, %c0_267, %c0_268] : memref<2x2x1x384xf32, #tpu.memory_space<vmem>>, vector<1x1x1x384xf32>
    %656 = vector.shape_cast %655 : vector<1x1x1x384xf32> to vector<1x384xf32>
    %657 = vector.broadcast %656 : vector<1x384xf32> to vector<64x384xf32>
    %658 = arith.addf %654, %657 : vector<64x384xf32>
    %c0_269 = arith.constant 0 : index
    %c0_270 = arith.constant 0 : index
    %659 = vector.load %arg11[%c0_269, %c0_270] : memref<64x384xf32, #tpu.memory_space<vmem>>, vector<64x384xf32>
    tpu.vector_store %arg11[%c0_269, %c0_270], %658 {strides = array<i32>} : memref<64x384xf32, #tpu.memory_space<vmem>>, vector<64x384xf32>,
    %c1_271 = arith.constant 1 : index
    %c0_272 = arith.constant 0 : index
    %c0_273 = arith.constant 0 : index
    %c0_274 = arith.constant 0 : index
    %660 = vector.load %arg3[%c1_271, %c0_272, %c0_273, %c0_274] : memref<2x2x128x384xf32, #tpu.memory_space<vmem>>, vector<1x1x128x384xf32>
    %661 = vector.shape_cast %660 : vector<1x1x128x384xf32> to vector<128x384xf32>
    %c1_275 = arith.constant 1 : index
    %c1_276 = arith.constant 1 : index
    %c0_277 = arith.constant 0 : index
    %c0_278 = arith.constant 0 : index
    %662 = vector.load %arg3[%c1_275, %c1_276, %c0_277, %c0_278] : memref<2x2x128x384xf32, #tpu.memory_space<vmem>>, vector<1x1x128x384xf32>
    %663 = vector.shape_cast %662 : vector<1x1x128x384xf32> to vector<128x384xf32>
    %c1_279 = arith.constant 1 : index
    %c0_280 = arith.constant 0 : index
    %c0_281 = arith.constant 0 : index
    %c0_282 = arith.constant 0 : index
    %664 = vector.load %arg4[%c1_279, %c0_280, %c0_281, %c0_282] : memref<2x2x1x384xf32, #tpu.memory_space<vmem>>, vector<1x1x1x384xf32>
    %665 = vector.shape_cast %664 : vector<1x1x1x384xf32> to vector<1x384xf32>
    %c1_283 = arith.constant 1 : index
    %c1_284 = arith.constant 1 : index
    %c0_285 = arith.constant 0 : index
    %c0_286 = arith.constant 0 : index
    %666 = vector.load %arg4[%c1_283, %c1_284, %c0_285, %c0_286] : memref<2x2x1x384xf32, #tpu.memory_space<vmem>>, vector<1x1x1x384xf32>
    %667 = vector.shape_cast %666 : vector<1x1x1x384xf32> to vector<1x384xf32>
    %cst_287 = arith.constant 0.000000e+00 : f32
    %668 = vector.broadcast %cst_287 : f32 to vector<8x128xf32>
    %c0_288 = arith.constant 0 : index
    %c0_289 = arith.constant 0 : index
    %669 = vector.load %arg12[%c0_288, %c0_289] : memref<8x128xf32, #tpu.memory_space<vmem>>, vector<8x128xf32>
    tpu.vector_store %arg12[%c0_288, %c0_289], %668 {strides = array<i32>} : memref<8x128xf32, #tpu.memory_space<vmem>>, vector<8x128xf32>,
    %cst_290 = arith.constant 0.000000e+00 : f32
    %670 = vector.broadcast %cst_290 : f32 to vector<8x128xf32>
    %c0_291 = arith.constant 0 : index
    %c0_292 = arith.constant 0 : index
    %671 = vector.load %arg13[%c0_291, %c0_292] : memref<8x128xf32, #tpu.memory_space<vmem>>, vector<8x128xf32>
    tpu.vector_store %arg13[%c0_291, %c0_292], %670 {strides = array<i32>} : memref<8x128xf32, #tpu.memory_space<vmem>>, vector<8x128xf32>,
    %c0_i32_293 = arith.constant 0 : i32
    %c7_i32_294 = arith.constant 7 : i32
    %672 = arith.subi %c7_i32_294, %c0_i32_293 : i32
    %c8_i32_295 = arith.constant 8 : i32
    %673 = arith.muli %c0_i32_293, %c8_i32_295 : i32
    %674 = tpu.assume_multiple %673, 8 : i32
    %c8_i32_296 = arith.constant 8 : i32
    %675 = arith.muli %672, %c8_i32_296 : i32
    %676 = tpu.assume_multiple %675, 8 : i32
    %c0_297 = arith.constant 0 : index
    %c0_298 = arith.constant 0 : index
    %677 = vector.load %arg12[%c0_297, %c0_298] : memref<8x128xf32, #tpu.memory_space<vmem>>, vector<8x128xf32>
    %c0_299 = arith.constant 0 : index
    %c0_300 = arith.constant 0 : index
    %678 = vector.load %arg13[%c0_299, %c0_300] : memref<8x128xf32, #tpu.memory_space<vmem>>, vector<8x128xf32>
    %cst_301 = arith.constant dense<0.000000e+00> : vector<8x384xf32>
    %679 = tpu.matmul %677, %661, %cst_301 {dimension_numbers = #tpu.dot_dimension_numbers<[1], [0], [0], [1], [0, 0, 1, 1], [], []>} : vector<8x128xf32>, vector<128x384xf32>, vector<8x384xf32> -> vector<8x384xf32>
    %680 = vector.broadcast %665 : vector<1x384xf32> to vector<8x384xf32>
    %681 = arith.addf %679, %680 : vector<8x384xf32>
    %cst_302 = arith.constant dense<0.000000e+00> : vector<8x384xf32>
    %682 = tpu.matmul %678, %663, %cst_302 {dimension_numbers = #tpu.dot_dimension_numbers<[1], [0], [0], [1], [0, 0, 1, 1], [], []>} : vector<8x128xf32>, vector<128x384xf32>, vector<8x384xf32> -> vector<8x384xf32>
    %683 = vector.broadcast %667 : vector<1x384xf32> to vector<8x384xf32>
    %684 = arith.addf %682, %683 : vector<8x384xf32>
    %685 = arith.index_cast %674 : i32 to index
    %c0_303 = arith.constant 0 : index
    %686 = vector.load %arg10[%685, %c0_303] : memref<64x384xf32, #tpu.memory_space<vmem>>, vector<8x384xf32>
    %687 = vector.extract_strided_slice %686 {offsets = [0, 0], sizes = [8, 128], strides = [1, 1]} : vector<8x384xf32> to vector<8x128xf32>
    %688 = vector.extract_strided_slice %681 {offsets = [0, 0], sizes = [8, 128], strides = [1, 1]} : vector<8x384xf32> to vector<8x128xf32>
    %689 = arith.addf %687, %688 : vector<8x128xf32>
    %690 = arith.negf %689 : vector<8x128xf32>
    %691 = math.exp %690 : vector<8x128xf32>
    %cst_304 = arith.constant 1.000000e+00 : f32
    %692 = vector.broadcast %cst_304 : f32 to vector<8x128xf32>
    %693 = arith.addf %692, %691 : vector<8x128xf32>
    %694 = arith.divf %692, %693 : vector<8x128xf32>
    %695 = vector.extract_strided_slice %686 {offsets = [0, 128], sizes = [8, 128], strides = [1, 1]} : vector<8x384xf32> to vector<8x128xf32>
    %696 = vector.extract_strided_slice %681 {offsets = [0, 128], sizes = [8, 128], strides = [1, 1]} : vector<8x384xf32> to vector<8x128xf32>
    %697 = arith.addf %695, %696 : vector<8x128xf32>
    %698 = arith.negf %697 : vector<8x128xf32>
    %699 = math.exp %698 : vector<8x128xf32>
    %cst_305 = arith.constant 1.000000e+00 : f32
    %700 = vector.broadcast %cst_305 : f32 to vector<8x128xf32>
    %701 = arith.addf %700, %699 : vector<8x128xf32>
    %702 = arith.divf %700, %701 : vector<8x128xf32>
    %703 = vector.extract_strided_slice %686 {offsets = [0, 256], sizes = [8, 128], strides = [1, 1]} : vector<8x384xf32> to vector<8x128xf32>
    %704 = vector.extract_strided_slice %681 {offsets = [0, 256], sizes = [8, 128], strides = [1, 1]} : vector<8x384xf32> to vector<8x128xf32>
    %705 = arith.mulf %694, %704 : vector<8x128xf32>
    %706 = arith.addf %703, %705 : vector<8x128xf32>
    %707 = math.tanh %706 : vector<8x128xf32>
    %cst_306 = arith.constant 1.000000e+00 : f32
    %708 = vector.broadcast %cst_306 : f32 to vector<8x128xf32>
    %709 = arith.subf %708, %702 : vector<8x128xf32>
    %710 = arith.mulf %709, %707 : vector<8x128xf32>
    %711 = arith.mulf %702, %677 : vector<8x128xf32>
    %712 = arith.addf %710, %711 : vector<8x128xf32>
    %713 = arith.index_cast %676 : i32 to index
    %c0_307 = arith.constant 0 : index
    %714 = vector.load %arg11[%713, %c0_307] : memref<64x384xf32, #tpu.memory_space<vmem>>, vector<8x384xf32>
    %715 = vector.extract_strided_slice %714 {offsets = [0, 0], sizes = [8, 128], strides = [1, 1]} : vector<8x384xf32> to vector<8x128xf32>
    %716 = vector.extract_strided_slice %684 {offsets = [0, 0], sizes = [8, 128], strides = [1, 1]} : vector<8x384xf32> to vector<8x128xf32>
    %717 = arith.addf %715, %716 : vector<8x128xf32>
    %718 = arith.negf %717 : vector<8x128xf32>
    %719 = math.exp %718 : vector<8x128xf32>
    %cst_308 = arith.constant 1.000000e+00 : f32
    %720 = vector.broadcast %cst_308 : f32 to vector<8x128xf32>
    %721 = arith.addf %720, %719 : vector<8x128xf32>
    %722 = arith.divf %720, %721 : vector<8x128xf32>
    %723 = vector.extract_strided_slice %714 {offsets = [0, 128], sizes = [8, 128], strides = [1, 1]} : vector<8x384xf32> to vector<8x128xf32>
    %724 = vector.extract_strided_slice %684 {offsets = [0, 128], sizes = [8, 128], strides = [1, 1]} : vector<8x384xf32> to vector<8x128xf32>
    %725 = arith.addf %723, %724 : vector<8x128xf32>
    %726 = arith.negf %725 : vector<8x128xf32>
    %727 = math.exp %726 : vector<8x128xf32>
    %cst_309 = arith.constant 1.000000e+00 : f32
    %728 = vector.broadcast %cst_309 : f32 to vector<8x128xf32>
    %729 = arith.addf %728, %727 : vector<8x128xf32>
    %730 = arith.divf %728, %729 : vector<8x128xf32>
    %731 = vector.extract_strided_slice %714 {offsets = [0, 256], sizes = [8, 128], strides = [1, 1]} : vector<8x384xf32> to vector<8x128xf32>
    %732 = vector.extract_strided_slice %684 {offsets = [0, 256], sizes = [8, 128], strides = [1, 1]} : vector<8x384xf32> to vector<8x128xf32>
    %733 = arith.mulf %722, %732 : vector<8x128xf32>
    %734 = arith.addf %731, %733 : vector<8x128xf32>
    %735 = math.tanh %734 : vector<8x128xf32>
    %cst_310 = arith.constant 1.000000e+00 : f32
    %736 = vector.broadcast %cst_310 : f32 to vector<8x128xf32>
    %737 = arith.subf %736, %730 : vector<8x128xf32>
    %738 = arith.mulf %737, %735 : vector<8x128xf32>
    %739 = arith.mulf %730, %678 : vector<8x128xf32>
    %740 = arith.addf %738, %739 : vector<8x128xf32>
    %c0_311 = arith.constant 0 : index
    %c0_312 = arith.constant 0 : index
    %741 = vector.load %arg12[%c0_311, %c0_312] : memref<8x128xf32, #tpu.memory_space<vmem>>, vector<8x128xf32>
    tpu.vector_store %arg12[%c0_311, %c0_312], %712 {strides = array<i32>} : memref<8x128xf32, #tpu.memory_space<vmem>>, vector<8x128xf32>,
    %c0_313 = arith.constant 0 : index
    %c0_314 = arith.constant 0 : index
    %742 = vector.load %arg13[%c0_313, %c0_314] : memref<8x128xf32, #tpu.memory_space<vmem>>, vector<8x128xf32>
    tpu.vector_store %arg13[%c0_313, %c0_314], %740 {strides = array<i32>} : memref<8x128xf32, #tpu.memory_space<vmem>>, vector<8x128xf32>,
    %743 = arith.index_cast %674 : i32 to index
    %c0_315 = arith.constant 0 : index
    %744 = vector.load %arg8[%743, %c0_315] : memref<64x128xf32, #tpu.memory_space<vmem>>, vector<8x128xf32>
    tpu.vector_store %arg8[%743, %c0_315], %712 {strides = array<i32>} : memref<64x128xf32, #tpu.memory_space<vmem>>, vector<8x128xf32>,
    %745 = arith.index_cast %676 : i32 to index
    %c0_316 = arith.constant 0 : index
    %746 = vector.load %arg9[%745, %c0_316] : memref<64x128xf32, #tpu.memory_space<vmem>>, vector<8x128xf32>
    tpu.vector_store %arg9[%745, %c0_316], %740 {strides = array<i32>} : memref<64x128xf32, #tpu.memory_space<vmem>>, vector<8x128xf32>,
    %c1_i32_317 = arith.constant 1 : i32
    %c7_i32_318 = arith.constant 7 : i32
    %747 = arith.subi %c7_i32_318, %c1_i32_317 : i32
    %c8_i32_319 = arith.constant 8 : i32
    %748 = arith.muli %c1_i32_317, %c8_i32_319 : i32
    %749 = tpu.assume_multiple %748, 8 : i32
    %c8_i32_320 = arith.constant 8 : i32
    %750 = arith.muli %747, %c8_i32_320 : i32
    %751 = tpu.assume_multiple %750, 8 : i32
    %c0_321 = arith.constant 0 : index
    %c0_322 = arith.constant 0 : index
    %752 = vector.load %arg12[%c0_321, %c0_322] : memref<8x128xf32, #tpu.memory_space<vmem>>, vector<8x128xf32>
    %c0_323 = arith.constant 0 : index
    %c0_324 = arith.constant 0 : index
    %753 = vector.load %arg13[%c0_323, %c0_324] : memref<8x128xf32, #tpu.memory_space<vmem>>, vector<8x128xf32>
    %cst_325 = arith.constant dense<0.000000e+00> : vector<8x384xf32>
    %754 = tpu.matmul %752, %661, %cst_325 {dimension_numbers = #tpu.dot_dimension_numbers<[1], [0], [0], [1], [0, 0, 1, 1], [], []>} : vector<8x128xf32>, vector<128x384xf32>, vector<8x384xf32> -> vector<8x384xf32>
    %755 = vector.broadcast %665 : vector<1x384xf32> to vector<8x384xf32>
    %756 = arith.addf %754, %755 : vector<8x384xf32>
    %cst_326 = arith.constant dense<0.000000e+00> : vector<8x384xf32>
    %757 = tpu.matmul %753, %663, %cst_326 {dimension_numbers = #tpu.dot_dimension_numbers<[1], [0], [0], [1], [0, 0, 1, 1], [], []>} : vector<8x128xf32>, vector<128x384xf32>, vector<8x384xf32> -> vector<8x384xf32>
    %758 = vector.broadcast %667 : vector<1x384xf32> to vector<8x384xf32>
    %759 = arith.addf %757, %758 : vector<8x384xf32>
    %760 = arith.index_cast %749 : i32 to index
    %c0_327 = arith.constant 0 : index
    %761 = vector.load %arg10[%760, %c0_327] : memref<64x384xf32, #tpu.memory_space<vmem>>, vector<8x384xf32>
    %762 = vector.extract_strided_slice %761 {offsets = [0, 0], sizes = [8, 128], strides = [1, 1]} : vector<8x384xf32> to vector<8x128xf32>
    %763 = vector.extract_strided_slice %756 {offsets = [0, 0], sizes = [8, 128], strides = [1, 1]} : vector<8x384xf32> to vector<8x128xf32>
    %764 = arith.addf %762, %763 : vector<8x128xf32>
    %765 = arith.negf %764 : vector<8x128xf32>
    %766 = math.exp %765 : vector<8x128xf32>
    %cst_328 = arith.constant 1.000000e+00 : f32
    %767 = vector.broadcast %cst_328 : f32 to vector<8x128xf32>
    %768 = arith.addf %767, %766 : vector<8x128xf32>
    %769 = arith.divf %767, %768 : vector<8x128xf32>
    %770 = vector.extract_strided_slice %761 {offsets = [0, 128], sizes = [8, 128], strides = [1, 1]} : vector<8x384xf32> to vector<8x128xf32>
    %771 = vector.extract_strided_slice %756 {offsets = [0, 128], sizes = [8, 128], strides = [1, 1]} : vector<8x384xf32> to vector<8x128xf32>
    %772 = arith.addf %770, %771 : vector<8x128xf32>
    %773 = arith.negf %772 : vector<8x128xf32>
    %774 = math.exp %773 : vector<8x128xf32>
    %cst_329 = arith.constant 1.000000e+00 : f32
    %775 = vector.broadcast %cst_329 : f32 to vector<8x128xf32>
    %776 = arith.addf %775, %774 : vector<8x128xf32>
    %777 = arith.divf %775, %776 : vector<8x128xf32>
    %778 = vector.extract_strided_slice %761 {offsets = [0, 256], sizes = [8, 128], strides = [1, 1]} : vector<8x384xf32> to vector<8x128xf32>
    %779 = vector.extract_strided_slice %756 {offsets = [0, 256], sizes = [8, 128], strides = [1, 1]} : vector<8x384xf32> to vector<8x128xf32>
    %780 = arith.mulf %769, %779 : vector<8x128xf32>
    %781 = arith.addf %778, %780 : vector<8x128xf32>
    %782 = math.tanh %781 : vector<8x128xf32>
    %cst_330 = arith.constant 1.000000e+00 : f32
    %783 = vector.broadcast %cst_330 : f32 to vector<8x128xf32>
    %784 = arith.subf %783, %777 : vector<8x128xf32>
    %785 = arith.mulf %784, %782 : vector<8x128xf32>
    %786 = arith.mulf %777, %752 : vector<8x128xf32>
    %787 = arith.addf %785, %786 : vector<8x128xf32>
    %788 = arith.index_cast %751 : i32 to index
    %c0_331 = arith.constant 0 : index
    %789 = vector.load %arg11[%788, %c0_331] : memref<64x384xf32, #tpu.memory_space<vmem>>, vector<8x384xf32>
    %790 = vector.extract_strided_slice %789 {offsets = [0, 0], sizes = [8, 128], strides = [1, 1]} : vector<8x384xf32> to vector<8x128xf32>
    %791 = vector.extract_strided_slice %759 {offsets = [0, 0], sizes = [8, 128], strides = [1, 1]} : vector<8x384xf32> to vector<8x128xf32>
    %792 = arith.addf %790, %791 : vector<8x128xf32>
    %793 = arith.negf %792 : vector<8x128xf32>
    %794 = math.exp %793 : vector<8x128xf32>
    %cst_332 = arith.constant 1.000000e+00 : f32
    %795 = vector.broadcast %cst_332 : f32 to vector<8x128xf32>
    %796 = arith.addf %795, %794 : vector<8x128xf32>
    %797 = arith.divf %795, %796 : vector<8x128xf32>
    %798 = vector.extract_strided_slice %789 {offsets = [0, 128], sizes = [8, 128], strides = [1, 1]} : vector<8x384xf32> to vector<8x128xf32>
    %799 = vector.extract_strided_slice %759 {offsets = [0, 128], sizes = [8, 128], strides = [1, 1]} : vector<8x384xf32> to vector<8x128xf32>
    %800 = arith.addf %798, %799 : vector<8x128xf32>
    %801 = arith.negf %800 : vector<8x128xf32>
    %802 = math.exp %801 : vector<8x128xf32>
    %cst_333 = arith.constant 1.000000e+00 : f32
    %803 = vector.broadcast %cst_333 : f32 to vector<8x128xf32>
    %804 = arith.addf %803, %802 : vector<8x128xf32>
    %805 = arith.divf %803, %804 : vector<8x128xf32>
    %806 = vector.extract_strided_slice %789 {offsets = [0, 256], sizes = [8, 128], strides = [1, 1]} : vector<8x384xf32> to vector<8x128xf32>
    %807 = vector.extract_strided_slice %759 {offsets = [0, 256], sizes = [8, 128], strides = [1, 1]} : vector<8x384xf32> to vector<8x128xf32>
    %808 = arith.mulf %797, %807 : vector<8x128xf32>
    %809 = arith.addf %806, %808 : vector<8x128xf32>
    %810 = math.tanh %809 : vector<8x128xf32>
    %cst_334 = arith.constant 1.000000e+00 : f32
    %811 = vector.broadcast %cst_334 : f32 to vector<8x128xf32>
    %812 = arith.subf %811, %805 : vector<8x128xf32>
    %813 = arith.mulf %812, %810 : vector<8x128xf32>
    %814 = arith.mulf %805, %753 : vector<8x128xf32>
    %815 = arith.addf %813, %814 : vector<8x128xf32>
    %c0_335 = arith.constant 0 : index
    %c0_336 = arith.constant 0 : index
    %816 = vector.load %arg12[%c0_335, %c0_336] : memref<8x128xf32, #tpu.memory_space<vmem>>, vector<8x128xf32>
    tpu.vector_store %arg12[%c0_335, %c0_336], %787 {strides = array<i32>} : memref<8x128xf32, #tpu.memory_space<vmem>>, vector<8x128xf32>,
    %c0_337 = arith.constant 0 : index
    %c0_338 = arith.constant 0 : index
    %817 = vector.load %arg13[%c0_337, %c0_338] : memref<8x128xf32, #tpu.memory_space<vmem>>, vector<8x128xf32>
    tpu.vector_store %arg13[%c0_337, %c0_338], %815 {strides = array<i32>} : memref<8x128xf32, #tpu.memory_space<vmem>>, vector<8x128xf32>,
    %818 = arith.index_cast %749 : i32 to index
    %c0_339 = arith.constant 0 : index
    %819 = vector.load %arg8[%818, %c0_339] : memref<64x128xf32, #tpu.memory_space<vmem>>, vector<8x128xf32>
    tpu.vector_store %arg8[%818, %c0_339], %787 {strides = array<i32>} : memref<64x128xf32, #tpu.memory_space<vmem>>, vector<8x128xf32>,
    %820 = arith.index_cast %751 : i32 to index
    %c0_340 = arith.constant 0 : index
    %821 = vector.load %arg9[%820, %c0_340] : memref<64x128xf32, #tpu.memory_space<vmem>>, vector<8x128xf32>
    tpu.vector_store %arg9[%820, %c0_340], %815 {strides = array<i32>} : memref<64x128xf32, #tpu.memory_space<vmem>>, vector<8x128xf32>,
    %c2_i32_341 = arith.constant 2 : i32
    %c7_i32_342 = arith.constant 7 : i32
    %822 = arith.subi %c7_i32_342, %c2_i32_341 : i32
    %c8_i32_343 = arith.constant 8 : i32
    %823 = arith.muli %c2_i32_341, %c8_i32_343 : i32
    %824 = tpu.assume_multiple %823, 8 : i32
    %c8_i32_344 = arith.constant 8 : i32
    %825 = arith.muli %822, %c8_i32_344 : i32
    %826 = tpu.assume_multiple %825, 8 : i32
    %c0_345 = arith.constant 0 : index
    %c0_346 = arith.constant 0 : index
    %827 = vector.load %arg12[%c0_345, %c0_346] : memref<8x128xf32, #tpu.memory_space<vmem>>, vector<8x128xf32>
    %c0_347 = arith.constant 0 : index
    %c0_348 = arith.constant 0 : index
    %828 = vector.load %arg13[%c0_347, %c0_348] : memref<8x128xf32, #tpu.memory_space<vmem>>, vector<8x128xf32>
    %cst_349 = arith.constant dense<0.000000e+00> : vector<8x384xf32>
    %829 = tpu.matmul %827, %661, %cst_349 {dimension_numbers = #tpu.dot_dimension_numbers<[1], [0], [0], [1], [0, 0, 1, 1], [], []>} : vector<8x128xf32>, vector<128x384xf32>, vector<8x384xf32> -> vector<8x384xf32>
    %830 = vector.broadcast %665 : vector<1x384xf32> to vector<8x384xf32>
    %831 = arith.addf %829, %830 : vector<8x384xf32>
    %cst_350 = arith.constant dense<0.000000e+00> : vector<8x384xf32>
    %832 = tpu.matmul %828, %663, %cst_350 {dimension_numbers = #tpu.dot_dimension_numbers<[1], [0], [0], [1], [0, 0, 1, 1], [], []>} : vector<8x128xf32>, vector<128x384xf32>, vector<8x384xf32> -> vector<8x384xf32>
    %833 = vector.broadcast %667 : vector<1x384xf32> to vector<8x384xf32>
    %834 = arith.addf %832, %833 : vector<8x384xf32>
    %835 = arith.index_cast %824 : i32 to index
    %c0_351 = arith.constant 0 : index
    %836 = vector.load %arg10[%835, %c0_351] : memref<64x384xf32, #tpu.memory_space<vmem>>, vector<8x384xf32>
    %837 = vector.extract_strided_slice %836 {offsets = [0, 0], sizes = [8, 128], strides = [1, 1]} : vector<8x384xf32> to vector<8x128xf32>
    %838 = vector.extract_strided_slice %831 {offsets = [0, 0], sizes = [8, 128], strides = [1, 1]} : vector<8x384xf32> to vector<8x128xf32>
    %839 = arith.addf %837, %838 : vector<8x128xf32>
    %840 = arith.negf %839 : vector<8x128xf32>
    %841 = math.exp %840 : vector<8x128xf32>
    %cst_352 = arith.constant 1.000000e+00 : f32
    %842 = vector.broadcast %cst_352 : f32 to vector<8x128xf32>
    %843 = arith.addf %842, %841 : vector<8x128xf32>
    %844 = arith.divf %842, %843 : vector<8x128xf32>
    %845 = vector.extract_strided_slice %836 {offsets = [0, 128], sizes = [8, 128], strides = [1, 1]} : vector<8x384xf32> to vector<8x128xf32>
    %846 = vector.extract_strided_slice %831 {offsets = [0, 128], sizes = [8, 128], strides = [1, 1]} : vector<8x384xf32> to vector<8x128xf32>
    %847 = arith.addf %845, %846 : vector<8x128xf32>
    %848 = arith.negf %847 : vector<8x128xf32>
    %849 = math.exp %848 : vector<8x128xf32>
    %cst_353 = arith.constant 1.000000e+00 : f32
    %850 = vector.broadcast %cst_353 : f32 to vector<8x128xf32>
    %851 = arith.addf %850, %849 : vector<8x128xf32>
    %852 = arith.divf %850, %851 : vector<8x128xf32>
    %853 = vector.extract_strided_slice %836 {offsets = [0, 256], sizes = [8, 128], strides = [1, 1]} : vector<8x384xf32> to vector<8x128xf32>
    %854 = vector.extract_strided_slice %831 {offsets = [0, 256], sizes = [8, 128], strides = [1, 1]} : vector<8x384xf32> to vector<8x128xf32>
    %855 = arith.mulf %844, %854 : vector<8x128xf32>
    %856 = arith.addf %853, %855 : vector<8x128xf32>
    %857 = math.tanh %856 : vector<8x128xf32>
    %cst_354 = arith.constant 1.000000e+00 : f32
    %858 = vector.broadcast %cst_354 : f32 to vector<8x128xf32>
    %859 = arith.subf %858, %852 : vector<8x128xf32>
    %860 = arith.mulf %859, %857 : vector<8x128xf32>
    %861 = arith.mulf %852, %827 : vector<8x128xf32>
    %862 = arith.addf %860, %861 : vector<8x128xf32>
    %863 = arith.index_cast %826 : i32 to index
    %c0_355 = arith.constant 0 : index
    %864 = vector.load %arg11[%863, %c0_355] : memref<64x384xf32, #tpu.memory_space<vmem>>, vector<8x384xf32>
    %865 = vector.extract_strided_slice %864 {offsets = [0, 0], sizes = [8, 128], strides = [1, 1]} : vector<8x384xf32> to vector<8x128xf32>
    %866 = vector.extract_strided_slice %834 {offsets = [0, 0], sizes = [8, 128], strides = [1, 1]} : vector<8x384xf32> to vector<8x128xf32>
    %867 = arith.addf %865, %866 : vector<8x128xf32>
    %868 = arith.negf %867 : vector<8x128xf32>
    %869 = math.exp %868 : vector<8x128xf32>
    %cst_356 = arith.constant 1.000000e+00 : f32
    %870 = vector.broadcast %cst_356 : f32 to vector<8x128xf32>
    %871 = arith.addf %870, %869 : vector<8x128xf32>
    %872 = arith.divf %870, %871 : vector<8x128xf32>
    %873 = vector.extract_strided_slice %864 {offsets = [0, 128], sizes = [8, 128], strides = [1, 1]} : vector<8x384xf32> to vector<8x128xf32>
    %874 = vector.extract_strided_slice %834 {offsets = [0, 128], sizes = [8, 128], strides = [1, 1]} : vector<8x384xf32> to vector<8x128xf32>
    %875 = arith.addf %873, %874 : vector<8x128xf32>
    %876 = arith.negf %875 : vector<8x128xf32>
    %877 = math.exp %876 : vector<8x128xf32>
    %cst_357 = arith.constant 1.000000e+00 : f32
    %878 = vector.broadcast %cst_357 : f32 to vector<8x128xf32>
    %879 = arith.addf %878, %877 : vector<8x128xf32>
    %880 = arith.divf %878, %879 : vector<8x128xf32>
    %881 = vector.extract_strided_slice %864 {offsets = [0, 256], sizes = [8, 128], strides = [1, 1]} : vector<8x384xf32> to vector<8x128xf32>
    %882 = vector.extract_strided_slice %834 {offsets = [0, 256], sizes = [8, 128], strides = [1, 1]} : vector<8x384xf32> to vector<8x128xf32>
    %883 = arith.mulf %872, %882 : vector<8x128xf32>
    %884 = arith.addf %881, %883 : vector<8x128xf32>
    %885 = math.tanh %884 : vector<8x128xf32>
    %cst_358 = arith.constant 1.000000e+00 : f32
    %886 = vector.broadcast %cst_358 : f32 to vector<8x128xf32>
    %887 = arith.subf %886, %880 : vector<8x128xf32>
    %888 = arith.mulf %887, %885 : vector<8x128xf32>
    %889 = arith.mulf %880, %828 : vector<8x128xf32>
    %890 = arith.addf %888, %889 : vector<8x128xf32>
    %c0_359 = arith.constant 0 : index
    %c0_360 = arith.constant 0 : index
    %891 = vector.load %arg12[%c0_359, %c0_360] : memref<8x128xf32, #tpu.memory_space<vmem>>, vector<8x128xf32>
    tpu.vector_store %arg12[%c0_359, %c0_360], %862 {strides = array<i32>} : memref<8x128xf32, #tpu.memory_space<vmem>>, vector<8x128xf32>,
    %c0_361 = arith.constant 0 : index
    %c0_362 = arith.constant 0 : index
    %892 = vector.load %arg13[%c0_361, %c0_362] : memref<8x128xf32, #tpu.memory_space<vmem>>, vector<8x128xf32>
    tpu.vector_store %arg13[%c0_361, %c0_362], %890 {strides = array<i32>} : memref<8x128xf32, #tpu.memory_space<vmem>>, vector<8x128xf32>,
    %893 = arith.index_cast %824 : i32 to index
    %c0_363 = arith.constant 0 : index
    %894 = vector.load %arg8[%893, %c0_363] : memref<64x128xf32, #tpu.memory_space<vmem>>, vector<8x128xf32>
    tpu.vector_store %arg8[%893, %c0_363], %862 {strides = array<i32>} : memref<64x128xf32, #tpu.memory_space<vmem>>, vector<8x128xf32>,
    %895 = arith.index_cast %826 : i32 to index
    %c0_364 = arith.constant 0 : index
    %896 = vector.load %arg9[%895, %c0_364] : memref<64x128xf32, #tpu.memory_space<vmem>>, vector<8x128xf32>
    tpu.vector_store %arg9[%895, %c0_364], %890 {strides = array<i32>} : memref<64x128xf32, #tpu.memory_space<vmem>>, vector<8x128xf32>,
    %c3_i32_365 = arith.constant 3 : i32
    %c7_i32_366 = arith.constant 7 : i32
    %897 = arith.subi %c7_i32_366, %c3_i32_365 : i32
    %c8_i32_367 = arith.constant 8 : i32
    %898 = arith.muli %c3_i32_365, %c8_i32_367 : i32
    %899 = tpu.assume_multiple %898, 8 : i32
    %c8_i32_368 = arith.constant 8 : i32
    %900 = arith.muli %897, %c8_i32_368 : i32
    %901 = tpu.assume_multiple %900, 8 : i32
    %c0_369 = arith.constant 0 : index
    %c0_370 = arith.constant 0 : index
    %902 = vector.load %arg12[%c0_369, %c0_370] : memref<8x128xf32, #tpu.memory_space<vmem>>, vector<8x128xf32>
    %c0_371 = arith.constant 0 : index
    %c0_372 = arith.constant 0 : index
    %903 = vector.load %arg13[%c0_371, %c0_372] : memref<8x128xf32, #tpu.memory_space<vmem>>, vector<8x128xf32>
    %cst_373 = arith.constant dense<0.000000e+00> : vector<8x384xf32>
    %904 = tpu.matmul %902, %661, %cst_373 {dimension_numbers = #tpu.dot_dimension_numbers<[1], [0], [0], [1], [0, 0, 1, 1], [], []>} : vector<8x128xf32>, vector<128x384xf32>, vector<8x384xf32> -> vector<8x384xf32>
    %905 = vector.broadcast %665 : vector<1x384xf32> to vector<8x384xf32>
    %906 = arith.addf %904, %905 : vector<8x384xf32>
    %cst_374 = arith.constant dense<0.000000e+00> : vector<8x384xf32>
    %907 = tpu.matmul %903, %663, %cst_374 {dimension_numbers = #tpu.dot_dimension_numbers<[1], [0], [0], [1], [0, 0, 1, 1], [], []>} : vector<8x128xf32>, vector<128x384xf32>, vector<8x384xf32> -> vector<8x384xf32>
    %908 = vector.broadcast %667 : vector<1x384xf32> to vector<8x384xf32>
    %909 = arith.addf %907, %908 : vector<8x384xf32>
    %910 = arith.index_cast %899 : i32 to index
    %c0_375 = arith.constant 0 : index
    %911 = vector.load %arg10[%910, %c0_375] : memref<64x384xf32, #tpu.memory_space<vmem>>, vector<8x384xf32>
    %912 = vector.extract_strided_slice %911 {offsets = [0, 0], sizes = [8, 128], strides = [1, 1]} : vector<8x384xf32> to vector<8x128xf32>
    %913 = vector.extract_strided_slice %906 {offsets = [0, 0], sizes = [8, 128], strides = [1, 1]} : vector<8x384xf32> to vector<8x128xf32>
    %914 = arith.addf %912, %913 : vector<8x128xf32>
    %915 = arith.negf %914 : vector<8x128xf32>
    %916 = math.exp %915 : vector<8x128xf32>
    %cst_376 = arith.constant 1.000000e+00 : f32
    %917 = vector.broadcast %cst_376 : f32 to vector<8x128xf32>
    %918 = arith.addf %917, %916 : vector<8x128xf32>
    %919 = arith.divf %917, %918 : vector<8x128xf32>
    %920 = vector.extract_strided_slice %911 {offsets = [0, 128], sizes = [8, 128], strides = [1, 1]} : vector<8x384xf32> to vector<8x128xf32>
    %921 = vector.extract_strided_slice %906 {offsets = [0, 128], sizes = [8, 128], strides = [1, 1]} : vector<8x384xf32> to vector<8x128xf32>
    %922 = arith.addf %920, %921 : vector<8x128xf32>
    %923 = arith.negf %922 : vector<8x128xf32>
    %924 = math.exp %923 : vector<8x128xf32>
    %cst_377 = arith.constant 1.000000e+00 : f32
    %925 = vector.broadcast %cst_377 : f32 to vector<8x128xf32>
    %926 = arith.addf %925, %924 : vector<8x128xf32>
    %927 = arith.divf %925, %926 : vector<8x128xf32>
    %928 = vector.extract_strided_slice %911 {offsets = [0, 256], sizes = [8, 128], strides = [1, 1]} : vector<8x384xf32> to vector<8x128xf32>
    %929 = vector.extract_strided_slice %906 {offsets = [0, 256], sizes = [8, 128], strides = [1, 1]} : vector<8x384xf32> to vector<8x128xf32>
    %930 = arith.mulf %919, %929 : vector<8x128xf32>
    %931 = arith.addf %928, %930 : vector<8x128xf32>
    %932 = math.tanh %931 : vector<8x128xf32>
    %cst_378 = arith.constant 1.000000e+00 : f32
    %933 = vector.broadcast %cst_378 : f32 to vector<8x128xf32>
    %934 = arith.subf %933, %927 : vector<8x128xf32>
    %935 = arith.mulf %934, %932 : vector<8x128xf32>
    %936 = arith.mulf %927, %902 : vector<8x128xf32>
    %937 = arith.addf %935, %936 : vector<8x128xf32>
    %938 = arith.index_cast %901 : i32 to index
    %c0_379 = arith.constant 0 : index
    %939 = vector.load %arg11[%938, %c0_379] : memref<64x384xf32, #tpu.memory_space<vmem>>, vector<8x384xf32>
    %940 = vector.extract_strided_slice %939 {offsets = [0, 0], sizes = [8, 128], strides = [1, 1]} : vector<8x384xf32> to vector<8x128xf32>
    %941 = vector.extract_strided_slice %909 {offsets = [0, 0], sizes = [8, 128], strides = [1, 1]} : vector<8x384xf32> to vector<8x128xf32>
    %942 = arith.addf %940, %941 : vector<8x128xf32>
    %943 = arith.negf %942 : vector<8x128xf32>
    %944 = math.exp %943 : vector<8x128xf32>
    %cst_380 = arith.constant 1.000000e+00 : f32
    %945 = vector.broadcast %cst_380 : f32 to vector<8x128xf32>
    %946 = arith.addf %945, %944 : vector<8x128xf32>
    %947 = arith.divf %945, %946 : vector<8x128xf32>
    %948 = vector.extract_strided_slice %939 {offsets = [0, 128], sizes = [8, 128], strides = [1, 1]} : vector<8x384xf32> to vector<8x128xf32>
    %949 = vector.extract_strided_slice %909 {offsets = [0, 128], sizes = [8, 128], strides = [1, 1]} : vector<8x384xf32> to vector<8x128xf32>
    %950 = arith.addf %948, %949 : vector<8x128xf32>
    %951 = arith.negf %950 : vector<8x128xf32>
    %952 = math.exp %951 : vector<8x128xf32>
    %cst_381 = arith.constant 1.000000e+00 : f32
    %953 = vector.broadcast %cst_381 : f32 to vector<8x128xf32>
    %954 = arith.addf %953, %952 : vector<8x128xf32>
    %955 = arith.divf %953, %954 : vector<8x128xf32>
    %956 = vector.extract_strided_slice %939 {offsets = [0, 256], sizes = [8, 128], strides = [1, 1]} : vector<8x384xf32> to vector<8x128xf32>
    %957 = vector.extract_strided_slice %909 {offsets = [0, 256], sizes = [8, 128], strides = [1, 1]} : vector<8x384xf32> to vector<8x128xf32>
    %958 = arith.mulf %947, %957 : vector<8x128xf32>
    %959 = arith.addf %956, %958 : vector<8x128xf32>
    %960 = math.tanh %959 : vector<8x128xf32>
    %cst_382 = arith.constant 1.000000e+00 : f32
    %961 = vector.broadcast %cst_382 : f32 to vector<8x128xf32>
    %962 = arith.subf %961, %955 : vector<8x128xf32>
    %963 = arith.mulf %962, %960 : vector<8x128xf32>
    %964 = arith.mulf %955, %903 : vector<8x128xf32>
    %965 = arith.addf %963, %964 : vector<8x128xf32>
    %c0_383 = arith.constant 0 : index
    %c0_384 = arith.constant 0 : index
    %966 = vector.load %arg12[%c0_383, %c0_384] : memref<8x128xf32, #tpu.memory_space<vmem>>, vector<8x128xf32>
    tpu.vector_store %arg12[%c0_383, %c0_384], %937 {strides = array<i32>} : memref<8x128xf32, #tpu.memory_space<vmem>>, vector<8x128xf32>,
    %c0_385 = arith.constant 0 : index
    %c0_386 = arith.constant 0 : index
    %967 = vector.load %arg13[%c0_385, %c0_386] : memref<8x128xf32, #tpu.memory_space<vmem>>, vector<8x128xf32>
    tpu.vector_store %arg13[%c0_385, %c0_386], %965 {strides = array<i32>} : memref<8x128xf32, #tpu.memory_space<vmem>>, vector<8x128xf32>,
    %968 = arith.index_cast %899 : i32 to index
    %c0_387 = arith.constant 0 : index
    %969 = vector.load %arg8[%968, %c0_387] : memref<64x128xf32, #tpu.memory_space<vmem>>, vector<8x128xf32>
    tpu.vector_store %arg8[%968, %c0_387], %937 {strides = array<i32>} : memref<64x128xf32, #tpu.memory_space<vmem>>, vector<8x128xf32>,
    %970 = arith.index_cast %901 : i32 to index
    %c0_388 = arith.constant 0 : index
    %971 = vector.load %arg9[%970, %c0_388] : memref<64x128xf32, #tpu.memory_space<vmem>>, vector<8x128xf32>
    tpu.vector_store %arg9[%970, %c0_388], %965 {strides = array<i32>} : memref<64x128xf32, #tpu.memory_space<vmem>>, vector<8x128xf32>,
    %c4_i32_389 = arith.constant 4 : i32
    %c7_i32_390 = arith.constant 7 : i32
    %972 = arith.subi %c7_i32_390, %c4_i32_389 : i32
    %c8_i32_391 = arith.constant 8 : i32
    %973 = arith.muli %c4_i32_389, %c8_i32_391 : i32
    %974 = tpu.assume_multiple %973, 8 : i32
    %c8_i32_392 = arith.constant 8 : i32
    %975 = arith.muli %972, %c8_i32_392 : i32
    %976 = tpu.assume_multiple %975, 8 : i32
    %c0_393 = arith.constant 0 : index
    %c0_394 = arith.constant 0 : index
    %977 = vector.load %arg12[%c0_393, %c0_394] : memref<8x128xf32, #tpu.memory_space<vmem>>, vector<8x128xf32>
    %c0_395 = arith.constant 0 : index
    %c0_396 = arith.constant 0 : index
    %978 = vector.load %arg13[%c0_395, %c0_396] : memref<8x128xf32, #tpu.memory_space<vmem>>, vector<8x128xf32>
    %cst_397 = arith.constant dense<0.000000e+00> : vector<8x384xf32>
    %979 = tpu.matmul %977, %661, %cst_397 {dimension_numbers = #tpu.dot_dimension_numbers<[1], [0], [0], [1], [0, 0, 1, 1], [], []>} : vector<8x128xf32>, vector<128x384xf32>, vector<8x384xf32> -> vector<8x384xf32>
    %980 = vector.broadcast %665 : vector<1x384xf32> to vector<8x384xf32>
    %981 = arith.addf %979, %980 : vector<8x384xf32>
    %cst_398 = arith.constant dense<0.000000e+00> : vector<8x384xf32>
    %982 = tpu.matmul %978, %663, %cst_398 {dimension_numbers = #tpu.dot_dimension_numbers<[1], [0], [0], [1], [0, 0, 1, 1], [], []>} : vector<8x128xf32>, vector<128x384xf32>, vector<8x384xf32> -> vector<8x384xf32>
    %983 = vector.broadcast %667 : vector<1x384xf32> to vector<8x384xf32>
    %984 = arith.addf %982, %983 : vector<8x384xf32>
    %985 = arith.index_cast %974 : i32 to index
    %c0_399 = arith.constant 0 : index
    %986 = vector.load %arg10[%985, %c0_399] : memref<64x384xf32, #tpu.memory_space<vmem>>, vector<8x384xf32>
    %987 = vector.extract_strided_slice %986 {offsets = [0, 0], sizes = [8, 128], strides = [1, 1]} : vector<8x384xf32> to vector<8x128xf32>
    %988 = vector.extract_strided_slice %981 {offsets = [0, 0], sizes = [8, 128], strides = [1, 1]} : vector<8x384xf32> to vector<8x128xf32>
    %989 = arith.addf %987, %988 : vector<8x128xf32>
    %990 = arith.negf %989 : vector<8x128xf32>
    %991 = math.exp %990 : vector<8x128xf32>
    %cst_400 = arith.constant 1.000000e+00 : f32
    %992 = vector.broadcast %cst_400 : f32 to vector<8x128xf32>
    %993 = arith.addf %992, %991 : vector<8x128xf32>
    %994 = arith.divf %992, %993 : vector<8x128xf32>
    %995 = vector.extract_strided_slice %986 {offsets = [0, 128], sizes = [8, 128], strides = [1, 1]} : vector<8x384xf32> to vector<8x128xf32>
    %996 = vector.extract_strided_slice %981 {offsets = [0, 128], sizes = [8, 128], strides = [1, 1]} : vector<8x384xf32> to vector<8x128xf32>
    %997 = arith.addf %995, %996 : vector<8x128xf32>
    %998 = arith.negf %997 : vector<8x128xf32>
    %999 = math.exp %998 : vector<8x128xf32>
    %cst_401 = arith.constant 1.000000e+00 : f32
    %1000 = vector.broadcast %cst_401 : f32 to vector<8x128xf32>
    %1001 = arith.addf %1000, %999 : vector<8x128xf32>
    %1002 = arith.divf %1000, %1001 : vector<8x128xf32>
    %1003 = vector.extract_strided_slice %986 {offsets = [0, 256], sizes = [8, 128], strides = [1, 1]} : vector<8x384xf32> to vector<8x128xf32>
    %1004 = vector.extract_strided_slice %981 {offsets = [0, 256], sizes = [8, 128], strides = [1, 1]} : vector<8x384xf32> to vector<8x128xf32>
    %1005 = arith.mulf %994, %1004 : vector<8x128xf32>
    %1006 = arith.addf %1003, %1005 : vector<8x128xf32>
    %1007 = math.tanh %1006 : vector<8x128xf32>
    %cst_402 = arith.constant 1.000000e+00 : f32
    %1008 = vector.broadcast %cst_402 : f32 to vector<8x128xf32>
    %1009 = arith.subf %1008, %1002 : vector<8x128xf32>
    %1010 = arith.mulf %1009, %1007 : vector<8x128xf32>
    %1011 = arith.mulf %1002, %977 : vector<8x128xf32>
    %1012 = arith.addf %1010, %1011 : vector<8x128xf32>
    %1013 = arith.index_cast %976 : i32 to index
    %c0_403 = arith.constant 0 : index
    %1014 = vector.load %arg11[%1013, %c0_403] : memref<64x384xf32, #tpu.memory_space<vmem>>, vector<8x384xf32>
    %1015 = vector.extract_strided_slice %1014 {offsets = [0, 0], sizes = [8, 128], strides = [1, 1]} : vector<8x384xf32> to vector<8x128xf32>
    %1016 = vector.extract_strided_slice %984 {offsets = [0, 0], sizes = [8, 128], strides = [1, 1]} : vector<8x384xf32> to vector<8x128xf32>
    %1017 = arith.addf %1015, %1016 : vector<8x128xf32>
    %1018 = arith.negf %1017 : vector<8x128xf32>
    %1019 = math.exp %1018 : vector<8x128xf32>
    %cst_404 = arith.constant 1.000000e+00 : f32
    %1020 = vector.broadcast %cst_404 : f32 to vector<8x128xf32>
    %1021 = arith.addf %1020, %1019 : vector<8x128xf32>
    %1022 = arith.divf %1020, %1021 : vector<8x128xf32>
    %1023 = vector.extract_strided_slice %1014 {offsets = [0, 128], sizes = [8, 128], strides = [1, 1]} : vector<8x384xf32> to vector<8x128xf32>
    %1024 = vector.extract_strided_slice %984 {offsets = [0, 128], sizes = [8, 128], strides = [1, 1]} : vector<8x384xf32> to vector<8x128xf32>
    %1025 = arith.addf %1023, %1024 : vector<8x128xf32>
    %1026 = arith.negf %1025 : vector<8x128xf32>
    %1027 = math.exp %1026 : vector<8x128xf32>
    %cst_405 = arith.constant 1.000000e+00 : f32
    %1028 = vector.broadcast %cst_405 : f32 to vector<8x128xf32>
    %1029 = arith.addf %1028, %1027 : vector<8x128xf32>
    %1030 = arith.divf %1028, %1029 : vector<8x128xf32>
    %1031 = vector.extract_strided_slice %1014 {offsets = [0, 256], sizes = [8, 128], strides = [1, 1]} : vector<8x384xf32> to vector<8x128xf32>
    %1032 = vector.extract_strided_slice %984 {offsets = [0, 256], sizes = [8, 128], strides = [1, 1]} : vector<8x384xf32> to vector<8x128xf32>
    %1033 = arith.mulf %1022, %1032 : vector<8x128xf32>
    %1034 = arith.addf %1031, %1033 : vector<8x128xf32>
    %1035 = math.tanh %1034 : vector<8x128xf32>
    %cst_406 = arith.constant 1.000000e+00 : f32
    %1036 = vector.broadcast %cst_406 : f32 to vector<8x128xf32>
    %1037 = arith.subf %1036, %1030 : vector<8x128xf32>
    %1038 = arith.mulf %1037, %1035 : vector<8x128xf32>
    %1039 = arith.mulf %1030, %978 : vector<8x128xf32>
    %1040 = arith.addf %1038, %1039 : vector<8x128xf32>
    %c0_407 = arith.constant 0 : index
    %c0_408 = arith.constant 0 : index
    %1041 = vector.load %arg12[%c0_407, %c0_408] : memref<8x128xf32, #tpu.memory_space<vmem>>, vector<8x128xf32>
    tpu.vector_store %arg12[%c0_407, %c0_408], %1012 {strides = array<i32>} : memref<8x128xf32, #tpu.memory_space<vmem>>, vector<8x128xf32>,
    %c0_409 = arith.constant 0 : index
    %c0_410 = arith.constant 0 : index
    %1042 = vector.load %arg13[%c0_409, %c0_410] : memref<8x128xf32, #tpu.memory_space<vmem>>, vector<8x128xf32>
    tpu.vector_store %arg13[%c0_409, %c0_410], %1040 {strides = array<i32>} : memref<8x128xf32, #tpu.memory_space<vmem>>, vector<8x128xf32>,
    %1043 = arith.index_cast %974 : i32 to index
    %c0_411 = arith.constant 0 : index
    %1044 = vector.load %arg8[%1043, %c0_411] : memref<64x128xf32, #tpu.memory_space<vmem>>, vector<8x128xf32>
    tpu.vector_store %arg8[%1043, %c0_411], %1012 {strides = array<i32>} : memref<64x128xf32, #tpu.memory_space<vmem>>, vector<8x128xf32>,
    %1045 = arith.index_cast %976 : i32 to index
    %c0_412 = arith.constant 0 : index
    %1046 = vector.load %arg9[%1045, %c0_412] : memref<64x128xf32, #tpu.memory_space<vmem>>, vector<8x128xf32>
    tpu.vector_store %arg9[%1045, %c0_412], %1040 {strides = array<i32>} : memref<64x128xf32, #tpu.memory_space<vmem>>, vector<8x128xf32>,
    %c5_i32_413 = arith.constant 5 : i32
    %c7_i32_414 = arith.constant 7 : i32
    %1047 = arith.subi %c7_i32_414, %c5_i32_413 : i32
    %c8_i32_415 = arith.constant 8 : i32
    %1048 = arith.muli %c5_i32_413, %c8_i32_415 : i32
    %1049 = tpu.assume_multiple %1048, 8 : i32
    %c8_i32_416 = arith.constant 8 : i32
    %1050 = arith.muli %1047, %c8_i32_416 : i32
    %1051 = tpu.assume_multiple %1050, 8 : i32
    %c0_417 = arith.constant 0 : index
    %c0_418 = arith.constant 0 : index
    %1052 = vector.load %arg12[%c0_417, %c0_418] : memref<8x128xf32, #tpu.memory_space<vmem>>, vector<8x128xf32>
    %c0_419 = arith.constant 0 : index
    %c0_420 = arith.constant 0 : index
    %1053 = vector.load %arg13[%c0_419, %c0_420] : memref<8x128xf32, #tpu.memory_space<vmem>>, vector<8x128xf32>
    %cst_421 = arith.constant dense<0.000000e+00> : vector<8x384xf32>
    %1054 = tpu.matmul %1052, %661, %cst_421 {dimension_numbers = #tpu.dot_dimension_numbers<[1], [0], [0], [1], [0, 0, 1, 1], [], []>} : vector<8x128xf32>, vector<128x384xf32>, vector<8x384xf32> -> vector<8x384xf32>
    %1055 = vector.broadcast %665 : vector<1x384xf32> to vector<8x384xf32>
    %1056 = arith.addf %1054, %1055 : vector<8x384xf32>
    %cst_422 = arith.constant dense<0.000000e+00> : vector<8x384xf32>
    %1057 = tpu.matmul %1053, %663, %cst_422 {dimension_numbers = #tpu.dot_dimension_numbers<[1], [0], [0], [1], [0, 0, 1, 1], [], []>} : vector<8x128xf32>, vector<128x384xf32>, vector<8x384xf32> -> vector<8x384xf32>
    %1058 = vector.broadcast %667 : vector<1x384xf32> to vector<8x384xf32>
    %1059 = arith.addf %1057, %1058 : vector<8x384xf32>
    %1060 = arith.index_cast %1049 : i32 to index
    %c0_423 = arith.constant 0 : index
    %1061 = vector.load %arg10[%1060, %c0_423] : memref<64x384xf32, #tpu.memory_space<vmem>>, vector<8x384xf32>
    %1062 = vector.extract_strided_slice %1061 {offsets = [0, 0], sizes = [8, 128], strides = [1, 1]} : vector<8x384xf32> to vector<8x128xf32>
    %1063 = vector.extract_strided_slice %1056 {offsets = [0, 0], sizes = [8, 128], strides = [1, 1]} : vector<8x384xf32> to vector<8x128xf32>
    %1064 = arith.addf %1062, %1063 : vector<8x128xf32>
    %1065 = arith.negf %1064 : vector<8x128xf32>
    %1066 = math.exp %1065 : vector<8x128xf32>
    %cst_424 = arith.constant 1.000000e+00 : f32
    %1067 = vector.broadcast %cst_424 : f32 to vector<8x128xf32>
    %1068 = arith.addf %1067, %1066 : vector<8x128xf32>
    %1069 = arith.divf %1067, %1068 : vector<8x128xf32>
    %1070 = vector.extract_strided_slice %1061 {offsets = [0, 128], sizes = [8, 128], strides = [1, 1]} : vector<8x384xf32> to vector<8x128xf32>
    %1071 = vector.extract_strided_slice %1056 {offsets = [0, 128], sizes = [8, 128], strides = [1, 1]} : vector<8x384xf32> to vector<8x128xf32>
    %1072 = arith.addf %1070, %1071 : vector<8x128xf32>
    %1073 = arith.negf %1072 : vector<8x128xf32>
    %1074 = math.exp %1073 : vector<8x128xf32>
    %cst_425 = arith.constant 1.000000e+00 : f32
    %1075 = vector.broadcast %cst_425 : f32 to vector<8x128xf32>
    %1076 = arith.addf %1075, %1074 : vector<8x128xf32>
    %1077 = arith.divf %1075, %1076 : vector<8x128xf32>
    %1078 = vector.extract_strided_slice %1061 {offsets = [0, 256], sizes = [8, 128], strides = [1, 1]} : vector<8x384xf32> to vector<8x128xf32>
    %1079 = vector.extract_strided_slice %1056 {offsets = [0, 256], sizes = [8, 128], strides = [1, 1]} : vector<8x384xf32> to vector<8x128xf32>
    %1080 = arith.mulf %1069, %1079 : vector<8x128xf32>
    %1081 = arith.addf %1078, %1080 : vector<8x128xf32>
    %1082 = math.tanh %1081 : vector<8x128xf32>
    %cst_426 = arith.constant 1.000000e+00 : f32
    %1083 = vector.broadcast %cst_426 : f32 to vector<8x128xf32>
    %1084 = arith.subf %1083, %1077 : vector<8x128xf32>
    %1085 = arith.mulf %1084, %1082 : vector<8x128xf32>
    %1086 = arith.mulf %1077, %1052 : vector<8x128xf32>
    %1087 = arith.addf %1085, %1086 : vector<8x128xf32>
    %1088 = arith.index_cast %1051 : i32 to index
    %c0_427 = arith.constant 0 : index
    %1089 = vector.load %arg11[%1088, %c0_427] : memref<64x384xf32, #tpu.memory_space<vmem>>, vector<8x384xf32>
    %1090 = vector.extract_strided_slice %1089 {offsets = [0, 0], sizes = [8, 128], strides = [1, 1]} : vector<8x384xf32> to vector<8x128xf32>
    %1091 = vector.extract_strided_slice %1059 {offsets = [0, 0], sizes = [8, 128], strides = [1, 1]} : vector<8x384xf32> to vector<8x128xf32>
    %1092 = arith.addf %1090, %1091 : vector<8x128xf32>
    %1093 = arith.negf %1092 : vector<8x128xf32>
    %1094 = math.exp %1093 : vector<8x128xf32>
    %cst_428 = arith.constant 1.000000e+00 : f32
    %1095 = vector.broadcast %cst_428 : f32 to vector<8x128xf32>
    %1096 = arith.addf %1095, %1094 : vector<8x128xf32>
    %1097 = arith.divf %1095, %1096 : vector<8x128xf32>
    %1098 = vector.extract_strided_slice %1089 {offsets = [0, 128], sizes = [8, 128], strides = [1, 1]} : vector<8x384xf32> to vector<8x128xf32>
    %1099 = vector.extract_strided_slice %1059 {offsets = [0, 128], sizes = [8, 128], strides = [1, 1]} : vector<8x384xf32> to vector<8x128xf32>
    %1100 = arith.addf %1098, %1099 : vector<8x128xf32>
    %1101 = arith.negf %1100 : vector<8x128xf32>
    %1102 = math.exp %1101 : vector<8x128xf32>
    %cst_429 = arith.constant 1.000000e+00 : f32
    %1103 = vector.broadcast %cst_429 : f32 to vector<8x128xf32>
    %1104 = arith.addf %1103, %1102 : vector<8x128xf32>
    %1105 = arith.divf %1103, %1104 : vector<8x128xf32>
    %1106 = vector.extract_strided_slice %1089 {offsets = [0, 256], sizes = [8, 128], strides = [1, 1]} : vector<8x384xf32> to vector<8x128xf32>
    %1107 = vector.extract_strided_slice %1059 {offsets = [0, 256], sizes = [8, 128], strides = [1, 1]} : vector<8x384xf32> to vector<8x128xf32>
    %1108 = arith.mulf %1097, %1107 : vector<8x128xf32>
    %1109 = arith.addf %1106, %1108 : vector<8x128xf32>
    %1110 = math.tanh %1109 : vector<8x128xf32>
    %cst_430 = arith.constant 1.000000e+00 : f32
    %1111 = vector.broadcast %cst_430 : f32 to vector<8x128xf32>
    %1112 = arith.subf %1111, %1105 : vector<8x128xf32>
    %1113 = arith.mulf %1112, %1110 : vector<8x128xf32>
    %1114 = arith.mulf %1105, %1053 : vector<8x128xf32>
    %1115 = arith.addf %1113, %1114 : vector<8x128xf32>
    %c0_431 = arith.constant 0 : index
    %c0_432 = arith.constant 0 : index
    %1116 = vector.load %arg12[%c0_431, %c0_432] : memref<8x128xf32, #tpu.memory_space<vmem>>, vector<8x128xf32>
    tpu.vector_store %arg12[%c0_431, %c0_432], %1087 {strides = array<i32>} : memref<8x128xf32, #tpu.memory_space<vmem>>, vector<8x128xf32>,
    %c0_433 = arith.constant 0 : index
    %c0_434 = arith.constant 0 : index
    %1117 = vector.load %arg13[%c0_433, %c0_434] : memref<8x128xf32, #tpu.memory_space<vmem>>, vector<8x128xf32>
    tpu.vector_store %arg13[%c0_433, %c0_434], %1115 {strides = array<i32>} : memref<8x128xf32, #tpu.memory_space<vmem>>, vector<8x128xf32>,
    %1118 = arith.index_cast %1049 : i32 to index
    %c0_435 = arith.constant 0 : index
    %1119 = vector.load %arg8[%1118, %c0_435] : memref<64x128xf32, #tpu.memory_space<vmem>>, vector<8x128xf32>
    tpu.vector_store %arg8[%1118, %c0_435], %1087 {strides = array<i32>} : memref<64x128xf32, #tpu.memory_space<vmem>>, vector<8x128xf32>,
    %1120 = arith.index_cast %1051 : i32 to index
    %c0_436 = arith.constant 0 : index
    %1121 = vector.load %arg9[%1120, %c0_436] : memref<64x128xf32, #tpu.memory_space<vmem>>, vector<8x128xf32>
    tpu.vector_store %arg9[%1120, %c0_436], %1115 {strides = array<i32>} : memref<64x128xf32, #tpu.memory_space<vmem>>, vector<8x128xf32>,
    %c6_i32_437 = arith.constant 6 : i32
    %c7_i32_438 = arith.constant 7 : i32
    %1122 = arith.subi %c7_i32_438, %c6_i32_437 : i32
    %c8_i32_439 = arith.constant 8 : i32
    %1123 = arith.muli %c6_i32_437, %c8_i32_439 : i32
    %1124 = tpu.assume_multiple %1123, 8 : i32
    %c8_i32_440 = arith.constant 8 : i32
    %1125 = arith.muli %1122, %c8_i32_440 : i32
    %1126 = tpu.assume_multiple %1125, 8 : i32
    %c0_441 = arith.constant 0 : index
    %c0_442 = arith.constant 0 : index
    %1127 = vector.load %arg12[%c0_441, %c0_442] : memref<8x128xf32, #tpu.memory_space<vmem>>, vector<8x128xf32>
    %c0_443 = arith.constant 0 : index
    %c0_444 = arith.constant 0 : index
    %1128 = vector.load %arg13[%c0_443, %c0_444] : memref<8x128xf32, #tpu.memory_space<vmem>>, vector<8x128xf32>
    %cst_445 = arith.constant dense<0.000000e+00> : vector<8x384xf32>
    %1129 = tpu.matmul %1127, %661, %cst_445 {dimension_numbers = #tpu.dot_dimension_numbers<[1], [0], [0], [1], [0, 0, 1, 1], [], []>} : vector<8x128xf32>, vector<128x384xf32>, vector<8x384xf32> -> vector<8x384xf32>
    %1130 = vector.broadcast %665 : vector<1x384xf32> to vector<8x384xf32>
    %1131 = arith.addf %1129, %1130 : vector<8x384xf32>
    %cst_446 = arith.constant dense<0.000000e+00> : vector<8x384xf32>
    %1132 = tpu.matmul %1128, %663, %cst_446 {dimension_numbers = #tpu.dot_dimension_numbers<[1], [0], [0], [1], [0, 0, 1, 1], [], []>} : vector<8x128xf32>, vector<128x384xf32>, vector<8x384xf32> -> vector<8x384xf32>
    %1133 = vector.broadcast %667 : vector<1x384xf32> to vector<8x384xf32>
    %1134 = arith.addf %1132, %1133 : vector<8x384xf32>
    %1135 = arith.index_cast %1124 : i32 to index
    %c0_447 = arith.constant 0 : index
    %1136 = vector.load %arg10[%1135, %c0_447] : memref<64x384xf32, #tpu.memory_space<vmem>>, vector<8x384xf32>
    %1137 = vector.extract_strided_slice %1136 {offsets = [0, 0], sizes = [8, 128], strides = [1, 1]} : vector<8x384xf32> to vector<8x128xf32>
    %1138 = vector.extract_strided_slice %1131 {offsets = [0, 0], sizes = [8, 128], strides = [1, 1]} : vector<8x384xf32> to vector<8x128xf32>
    %1139 = arith.addf %1137, %1138 : vector<8x128xf32>
    %1140 = arith.negf %1139 : vector<8x128xf32>
    %1141 = math.exp %1140 : vector<8x128xf32>
    %cst_448 = arith.constant 1.000000e+00 : f32
    %1142 = vector.broadcast %cst_448 : f32 to vector<8x128xf32>
    %1143 = arith.addf %1142, %1141 : vector<8x128xf32>
    %1144 = arith.divf %1142, %1143 : vector<8x128xf32>
    %1145 = vector.extract_strided_slice %1136 {offsets = [0, 128], sizes = [8, 128], strides = [1, 1]} : vector<8x384xf32> to vector<8x128xf32>
    %1146 = vector.extract_strided_slice %1131 {offsets = [0, 128], sizes = [8, 128], strides = [1, 1]} : vector<8x384xf32> to vector<8x128xf32>
    %1147 = arith.addf %1145, %1146 : vector<8x128xf32>
    %1148 = arith.negf %1147 : vector<8x128xf32>
    %1149 = math.exp %1148 : vector<8x128xf32>
    %cst_449 = arith.constant 1.000000e+00 : f32
    %1150 = vector.broadcast %cst_449 : f32 to vector<8x128xf32>
    %1151 = arith.addf %1150, %1149 : vector<8x128xf32>
    %1152 = arith.divf %1150, %1151 : vector<8x128xf32>
    %1153 = vector.extract_strided_slice %1136 {offsets = [0, 256], sizes = [8, 128], strides = [1, 1]} : vector<8x384xf32> to vector<8x128xf32>
    %1154 = vector.extract_strided_slice %1131 {offsets = [0, 256], sizes = [8, 128], strides = [1, 1]} : vector<8x384xf32> to vector<8x128xf32>
    %1155 = arith.mulf %1144, %1154 : vector<8x128xf32>
    %1156 = arith.addf %1153, %1155 : vector<8x128xf32>
    %1157 = math.tanh %1156 : vector<8x128xf32>
    %cst_450 = arith.constant 1.000000e+00 : f32
    %1158 = vector.broadcast %cst_450 : f32 to vector<8x128xf32>
    %1159 = arith.subf %1158, %1152 : vector<8x128xf32>
    %1160 = arith.mulf %1159, %1157 : vector<8x128xf32>
    %1161 = arith.mulf %1152, %1127 : vector<8x128xf32>
    %1162 = arith.addf %1160, %1161 : vector<8x128xf32>
    %1163 = arith.index_cast %1126 : i32 to index
    %c0_451 = arith.constant 0 : index
    %1164 = vector.load %arg11[%1163, %c0_451] : memref<64x384xf32, #tpu.memory_space<vmem>>, vector<8x384xf32>
    %1165 = vector.extract_strided_slice %1164 {offsets = [0, 0], sizes = [8, 128], strides = [1, 1]} : vector<8x384xf32> to vector<8x128xf32>
    %1166 = vector.extract_strided_slice %1134 {offsets = [0, 0], sizes = [8, 128], strides = [1, 1]} : vector<8x384xf32> to vector<8x128xf32>
    %1167 = arith.addf %1165, %1166 : vector<8x128xf32>
    %1168 = arith.negf %1167 : vector<8x128xf32>
    %1169 = math.exp %1168 : vector<8x128xf32>
    %cst_452 = arith.constant 1.000000e+00 : f32
    %1170 = vector.broadcast %cst_452 : f32 to vector<8x128xf32>
    %1171 = arith.addf %1170, %1169 : vector<8x128xf32>
    %1172 = arith.divf %1170, %1171 : vector<8x128xf32>
    %1173 = vector.extract_strided_slice %1164 {offsets = [0, 128], sizes = [8, 128], strides = [1, 1]} : vector<8x384xf32> to vector<8x128xf32>
    %1174 = vector.extract_strided_slice %1134 {offsets = [0, 128], sizes = [8, 128], strides = [1, 1]} : vector<8x384xf32> to vector<8x128xf32>
    %1175 = arith.addf %1173, %1174 : vector<8x128xf32>
    %1176 = arith.negf %1175 : vector<8x128xf32>
    %1177 = math.exp %1176 : vector<8x128xf32>
    %cst_453 = arith.constant 1.000000e+00 : f32
    %1178 = vector.broadcast %cst_453 : f32 to vector<8x128xf32>
    %1179 = arith.addf %1178, %1177 : vector<8x128xf32>
    %1180 = arith.divf %1178, %1179 : vector<8x128xf32>
    %1181 = vector.extract_strided_slice %1164 {offsets = [0, 256], sizes = [8, 128], strides = [1, 1]} : vector<8x384xf32> to vector<8x128xf32>
    %1182 = vector.extract_strided_slice %1134 {offsets = [0, 256], sizes = [8, 128], strides = [1, 1]} : vector<8x384xf32> to vector<8x128xf32>
    %1183 = arith.mulf %1172, %1182 : vector<8x128xf32>
    %1184 = arith.addf %1181, %1183 : vector<8x128xf32>
    %1185 = math.tanh %1184 : vector<8x128xf32>
    %cst_454 = arith.constant 1.000000e+00 : f32
    %1186 = vector.broadcast %cst_454 : f32 to vector<8x128xf32>
    %1187 = arith.subf %1186, %1180 : vector<8x128xf32>
    %1188 = arith.mulf %1187, %1185 : vector<8x128xf32>
    %1189 = arith.mulf %1180, %1128 : vector<8x128xf32>
    %1190 = arith.addf %1188, %1189 : vector<8x128xf32>
    %c0_455 = arith.constant 0 : index
    %c0_456 = arith.constant 0 : index
    %1191 = vector.load %arg12[%c0_455, %c0_456] : memref<8x128xf32, #tpu.memory_space<vmem>>, vector<8x128xf32>
    tpu.vector_store %arg12[%c0_455, %c0_456], %1162 {strides = array<i32>} : memref<8x128xf32, #tpu.memory_space<vmem>>, vector<8x128xf32>,
    %c0_457 = arith.constant 0 : index
    %c0_458 = arith.constant 0 : index
    %1192 = vector.load %arg13[%c0_457, %c0_458] : memref<8x128xf32, #tpu.memory_space<vmem>>, vector<8x128xf32>
    tpu.vector_store %arg13[%c0_457, %c0_458], %1190 {strides = array<i32>} : memref<8x128xf32, #tpu.memory_space<vmem>>, vector<8x128xf32>,
    %1193 = arith.index_cast %1124 : i32 to index
    %c0_459 = arith.constant 0 : index
    %1194 = vector.load %arg8[%1193, %c0_459] : memref<64x128xf32, #tpu.memory_space<vmem>>, vector<8x128xf32>
    tpu.vector_store %arg8[%1193, %c0_459], %1162 {strides = array<i32>} : memref<64x128xf32, #tpu.memory_space<vmem>>, vector<8x128xf32>,
    %1195 = arith.index_cast %1126 : i32 to index
    %c0_460 = arith.constant 0 : index
    %1196 = vector.load %arg9[%1195, %c0_460] : memref<64x128xf32, #tpu.memory_space<vmem>>, vector<8x128xf32>
    tpu.vector_store %arg9[%1195, %c0_460], %1190 {strides = array<i32>} : memref<64x128xf32, #tpu.memory_space<vmem>>, vector<8x128xf32>,
    %c7_i32_461 = arith.constant 7 : i32
    %c7_i32_462 = arith.constant 7 : i32
    %1197 = arith.subi %c7_i32_462, %c7_i32_461 : i32
    %c8_i32_463 = arith.constant 8 : i32
    %1198 = arith.muli %c7_i32_461, %c8_i32_463 : i32
    %1199 = tpu.assume_multiple %1198, 8 : i32
    %c8_i32_464 = arith.constant 8 : i32
    %1200 = arith.muli %1197, %c8_i32_464 : i32
    %1201 = tpu.assume_multiple %1200, 8 : i32
    %c0_465 = arith.constant 0 : index
    %c0_466 = arith.constant 0 : index
    %1202 = vector.load %arg12[%c0_465, %c0_466] : memref<8x128xf32, #tpu.memory_space<vmem>>, vector<8x128xf32>
    %c0_467 = arith.constant 0 : index
    %c0_468 = arith.constant 0 : index
    %1203 = vector.load %arg13[%c0_467, %c0_468] : memref<8x128xf32, #tpu.memory_space<vmem>>, vector<8x128xf32>
    %cst_469 = arith.constant dense<0.000000e+00> : vector<8x384xf32>
    %1204 = tpu.matmul %1202, %661, %cst_469 {dimension_numbers = #tpu.dot_dimension_numbers<[1], [0], [0], [1], [0, 0, 1, 1], [], []>} : vector<8x128xf32>, vector<128x384xf32>, vector<8x384xf32> -> vector<8x384xf32>
    %1205 = vector.broadcast %665 : vector<1x384xf32> to vector<8x384xf32>
    %1206 = arith.addf %1204, %1205 : vector<8x384xf32>
    %cst_470 = arith.constant dense<0.000000e+00> : vector<8x384xf32>
    %1207 = tpu.matmul %1203, %663, %cst_470 {dimension_numbers = #tpu.dot_dimension_numbers<[1], [0], [0], [1], [0, 0, 1, 1], [], []>} : vector<8x128xf32>, vector<128x384xf32>, vector<8x384xf32> -> vector<8x384xf32>
    %1208 = vector.broadcast %667 : vector<1x384xf32> to vector<8x384xf32>
    %1209 = arith.addf %1207, %1208 : vector<8x384xf32>
    %1210 = arith.index_cast %1199 : i32 to index
    %c0_471 = arith.constant 0 : index
    %1211 = vector.load %arg10[%1210, %c0_471] : memref<64x384xf32, #tpu.memory_space<vmem>>, vector<8x384xf32>
    %1212 = vector.extract_strided_slice %1211 {offsets = [0, 0], sizes = [8, 128], strides = [1, 1]} : vector<8x384xf32> to vector<8x128xf32>
    %1213 = vector.extract_strided_slice %1206 {offsets = [0, 0], sizes = [8, 128], strides = [1, 1]} : vector<8x384xf32> to vector<8x128xf32>
    %1214 = arith.addf %1212, %1213 : vector<8x128xf32>
    %1215 = arith.negf %1214 : vector<8x128xf32>
    %1216 = math.exp %1215 : vector<8x128xf32>
    %cst_472 = arith.constant 1.000000e+00 : f32
    %1217 = vector.broadcast %cst_472 : f32 to vector<8x128xf32>
    %1218 = arith.addf %1217, %1216 : vector<8x128xf32>
    %1219 = arith.divf %1217, %1218 : vector<8x128xf32>
    %1220 = vector.extract_strided_slice %1211 {offsets = [0, 128], sizes = [8, 128], strides = [1, 1]} : vector<8x384xf32> to vector<8x128xf32>
    %1221 = vector.extract_strided_slice %1206 {offsets = [0, 128], sizes = [8, 128], strides = [1, 1]} : vector<8x384xf32> to vector<8x128xf32>
    %1222 = arith.addf %1220, %1221 : vector<8x128xf32>
    %1223 = arith.negf %1222 : vector<8x128xf32>
    %1224 = math.exp %1223 : vector<8x128xf32>
    %cst_473 = arith.constant 1.000000e+00 : f32
    %1225 = vector.broadcast %cst_473 : f32 to vector<8x128xf32>
    %1226 = arith.addf %1225, %1224 : vector<8x128xf32>
    %1227 = arith.divf %1225, %1226 : vector<8x128xf32>
    %1228 = vector.extract_strided_slice %1211 {offsets = [0, 256], sizes = [8, 128], strides = [1, 1]} : vector<8x384xf32> to vector<8x128xf32>
    %1229 = vector.extract_strided_slice %1206 {offsets = [0, 256], sizes = [8, 128], strides = [1, 1]} : vector<8x384xf32> to vector<8x128xf32>
    %1230 = arith.mulf %1219, %1229 : vector<8x128xf32>
    %1231 = arith.addf %1228, %1230 : vector<8x128xf32>
    %1232 = math.tanh %1231 : vector<8x128xf32>
    %cst_474 = arith.constant 1.000000e+00 : f32
    %1233 = vector.broadcast %cst_474 : f32 to vector<8x128xf32>
    %1234 = arith.subf %1233, %1227 : vector<8x128xf32>
    %1235 = arith.mulf %1234, %1232 : vector<8x128xf32>
    %1236 = arith.mulf %1227, %1202 : vector<8x128xf32>
    %1237 = arith.addf %1235, %1236 : vector<8x128xf32>
    %1238 = arith.index_cast %1201 : i32 to index
    %c0_475 = arith.constant 0 : index
    %1239 = vector.load %arg11[%1238, %c0_475] : memref<64x384xf32, #tpu.memory_space<vmem>>, vector<8x384xf32>
    %1240 = vector.extract_strided_slice %1239 {offsets = [0, 0], sizes = [8, 128], strides = [1, 1]} : vector<8x384xf32> to vector<8x128xf32>
    %1241 = vector.extract_strided_slice %1209 {offsets = [0, 0], sizes = [8, 128], strides = [1, 1]} : vector<8x384xf32> to vector<8x128xf32>
    %1242 = arith.addf %1240, %1241 : vector<8x128xf32>
    %1243 = arith.negf %1242 : vector<8x128xf32>
    %1244 = math.exp %1243 : vector<8x128xf32>
    %cst_476 = arith.constant 1.000000e+00 : f32
    %1245 = vector.broadcast %cst_476 : f32 to vector<8x128xf32>
    %1246 = arith.addf %1245, %1244 : vector<8x128xf32>
    %1247 = arith.divf %1245, %1246 : vector<8x128xf32>
    %1248 = vector.extract_strided_slice %1239 {offsets = [0, 128], sizes = [8, 128], strides = [1, 1]} : vector<8x384xf32> to vector<8x128xf32>
    %1249 = vector.extract_strided_slice %1209 {offsets = [0, 128], sizes = [8, 128], strides = [1, 1]} : vector<8x384xf32> to vector<8x128xf32>
    %1250 = arith.addf %1248, %1249 : vector<8x128xf32>
    %1251 = arith.negf %1250 : vector<8x128xf32>
    %1252 = math.exp %1251 : vector<8x128xf32>
    %cst_477 = arith.constant 1.000000e+00 : f32
    %1253 = vector.broadcast %cst_477 : f32 to vector<8x128xf32>
    %1254 = arith.addf %1253, %1252 : vector<8x128xf32>
    %1255 = arith.divf %1253, %1254 : vector<8x128xf32>
    %1256 = vector.extract_strided_slice %1239 {offsets = [0, 256], sizes = [8, 128], strides = [1, 1]} : vector<8x384xf32> to vector<8x128xf32>
    %1257 = vector.extract_strided_slice %1209 {offsets = [0, 256], sizes = [8, 128], strides = [1, 1]} : vector<8x384xf32> to vector<8x128xf32>
    %1258 = arith.mulf %1247, %1257 : vector<8x128xf32>
    %1259 = arith.addf %1256, %1258 : vector<8x128xf32>
    %1260 = math.tanh %1259 : vector<8x128xf32>
    %cst_478 = arith.constant 1.000000e+00 : f32
    %1261 = vector.broadcast %cst_478 : f32 to vector<8x128xf32>
    %1262 = arith.subf %1261, %1255 : vector<8x128xf32>
    %1263 = arith.mulf %1262, %1260 : vector<8x128xf32>
    %1264 = arith.mulf %1255, %1203 : vector<8x128xf32>
    %1265 = arith.addf %1263, %1264 : vector<8x128xf32>
    %c0_479 = arith.constant 0 : index
    %c0_480 = arith.constant 0 : index
    %1266 = vector.load %arg12[%c0_479, %c0_480] : memref<8x128xf32, #tpu.memory_space<vmem>>, vector<8x128xf32>
    tpu.vector_store %arg12[%c0_479, %c0_480], %1237 {strides = array<i32>} : memref<8x128xf32, #tpu.memory_space<vmem>>, vector<8x128xf32>,
    %c0_481 = arith.constant 0 : index
    %c0_482 = arith.constant 0 : index
    %1267 = vector.load %arg13[%c0_481, %c0_482] : memref<8x128xf32, #tpu.memory_space<vmem>>, vector<8x128xf32>
    tpu.vector_store %arg13[%c0_481, %c0_482], %1265 {strides = array<i32>} : memref<8x128xf32, #tpu.memory_space<vmem>>, vector<8x128xf32>,
    %1268 = arith.index_cast %1199 : i32 to index
    %c0_483 = arith.constant 0 : index
    %1269 = vector.load %arg8[%1268, %c0_483] : memref<64x128xf32, #tpu.memory_space<vmem>>, vector<8x128xf32>
    tpu.vector_store %arg8[%1268, %c0_483], %1237 {strides = array<i32>} : memref<64x128xf32, #tpu.memory_space<vmem>>, vector<8x128xf32>,
    %1270 = arith.index_cast %1201 : i32 to index
    %c0_484 = arith.constant 0 : index
    %1271 = vector.load %arg9[%1270, %c0_484] : memref<64x128xf32, #tpu.memory_space<vmem>>, vector<8x128xf32>
    tpu.vector_store %arg9[%1270, %c0_484], %1265 {strides = array<i32>} : memref<64x128xf32, #tpu.memory_space<vmem>>, vector<8x128xf32>,
    %c8_i32_485 = arith.constant 8 : i32
    %c0_486 = arith.constant 0 : index
    %c0_487 = arith.constant 0 : index
    %1272 = vector.load %arg12[%c0_486, %c0_487] : memref<8x128xf32, #tpu.memory_space<vmem>>, vector<8x128xf32>
    %c2 = arith.constant 2 : index
    %c0_488 = arith.constant 0 : index
    %c0_489 = arith.constant 0 : index
    %1273 = vector.load %arg6[%c2, %c0_488, %c0_489] : memref<4x8x128xf32, #tpu.memory_space<vmem>>, vector<1x8x128xf32>
    %1274 = vector.shape_cast %1273 : vector<1x8x128xf32> to vector<8x128xf32>
    %1275 = vector.shape_cast %1272 : vector<8x128xf32> to vector<1x8x128xf32>
    tpu.vector_store %arg6[%c2, %c0_488, %c0_489], %1275 {strides = array<i32>} : memref<4x8x128xf32, #tpu.memory_space<vmem>>, vector<1x8x128xf32>,
    %c0_490 = arith.constant 0 : index
    %c0_491 = arith.constant 0 : index
    %1276 = vector.load %arg13[%c0_490, %c0_491] : memref<8x128xf32, #tpu.memory_space<vmem>>, vector<8x128xf32>
    %c3 = arith.constant 3 : index
    %c0_492 = arith.constant 0 : index
    %c0_493 = arith.constant 0 : index
    %1277 = vector.load %arg6[%c3, %c0_492, %c0_493] : memref<4x8x128xf32, #tpu.memory_space<vmem>>, vector<1x8x128xf32>
    %1278 = vector.shape_cast %1277 : vector<1x8x128xf32> to vector<8x128xf32>
    %1279 = vector.shape_cast %1276 : vector<8x128xf32> to vector<1x8x128xf32>
    tpu.vector_store %arg6[%c3, %c0_492, %c0_493], %1279 {strides = array<i32>} : memref<4x8x128xf32, #tpu.memory_space<vmem>>, vector<1x8x128xf32>,
    %c0_494 = arith.constant 0 : index
    %c0_495 = arith.constant 0 : index
    %1280 = vector.load %arg8[%c0_494, %c0_495] : memref<64x128xf32, #tpu.memory_space<vmem>>, vector<64x128xf32>
    %c0_496 = arith.constant 0 : index
    %c0_497 = arith.constant 0 : index
    %1281 = vector.load %arg9[%c0_496, %c0_497] : memref<64x128xf32, #tpu.memory_space<vmem>>, vector<64x128xf32>
    %1282 = arith.addf %1280, %1281 : vector<64x128xf32>
    %c0_498 = arith.constant 0 : index
    %c0_499 = arith.constant 0 : index
    %1283 = vector.load %arg5[%c0_498, %c0_499] : memref<64x128xf32, #tpu.memory_space<vmem>>, vector<64x128xf32>
    tpu.vector_store %arg5[%c0_498, %c0_499], %1282 {strides = array<i32>} : memref<64x128xf32, #tpu.memory_space<vmem>>, vector<64x128xf32>,
    return
  }
}

</mosaic_0001>

<llo_original>
// kernel: tpu_custom_call.1
$region0: #{tpu_custom_call.1}
  #allocation0 [shape = 'u32[]', space=smem, size = 0x4, offset = 0x4, fixed_abs, tag = 'smem constant byte address 0x4 - core index']
  #allocation1 [shape = 'u32[144,128]{1,0:T(1,128)}', space=vmem, size = 0x12000, scoped, tag = 'internal scratch']
  #allocation2 [shape = 'f32[64,256]{1,0:T(8,128)}', space=vmem, size = 0x10000, scoped, tag = 'scratch operand']
  #allocation3 [shape = 'f32[64,128]{1,0:T(8,128)}', space=vmem, size = 0x8000, scoped, tag = 'scratch operand']
  #allocation4 [shape = 'f32[64,128]{1,0:T(8,128)}', space=vmem, size = 0x8000, scoped, tag = 'scratch operand']
  #allocation5 [shape = 'f32[64,384]{1,0:T(8,128)}', space=vmem, size = 0x18000, scoped, tag = 'scratch operand']
  #allocation6 [shape = 'f32[64,384]{1,0:T(8,128)}', space=vmem, size = 0x18000, scoped, tag = 'scratch operand']
  #allocation7 [shape = 'f32[8,128]{1,0:T(8,128)}', space=vmem, size = 0x1000, scoped, tag = 'scratch operand']
  #allocation8 [shape = 'f32[8,128]{1,0:T(8,128)}', space=vmem, size = 0x1000, scoped, tag = 'scratch operand']
  %s0 = inlined_call_operand.hbm [shape: f32[64,256], index: 0, kind: input, shape index: {}]
  %s1 = inlined_call_operand.hbm [shape: f32[2,2,256,384], index: 1, kind: input, shape index: {}]
  %s2 = inlined_call_operand.hbm [shape: f32[2,2,1,384], index: 2, kind: input, shape index: {}]
  %s3 = inlined_call_operand.hbm [shape: f32[2,2,128,384], index: 3, kind: input, shape index: {}]
  %s4 = inlined_call_operand.hbm [shape: f32[2,2,1,384], index: 4, kind: input, shape index: {}]
  %s5 = inlined_call_operand.hbm [shape: f32[64,128], index: 5, kind: output, shape index: {0}]
  %s6 = inlined_call_operand.hbm [shape: f32[4,8,128], index: 6, kind: output, shape index: {1}]
  %7 = xla_tuple %s5, %s6
  %s8 = sld [smem:[#allocation0]]
  $region58: #{tpu_custom_call.1} parent=0
    _
  %s10 = ssub.s32 1, %s8
  %s11 = scalar_select 0, %s10, %s8
  $region1: #{tpu_custom_call.1} parent=0
    #allocation9 [shape = 'u8[65536]{0}', space=vmem, size = 0x10000, scoped, tag = 'input window, operand 0, single buffered']
    #allocation10 [shape = 's32[1]{0}', space=sflag, size = 0x4, scoped, tag = 'scoped memory for tpu_custom_call.1']
    #allocation11 [shape = 's32[1]{0}', space=sflag, size = 0x4, scoped, tag = 'scoped memory for tpu_custom_call.1']
    #allocation12 [shape = 'u8[1572864]{0}', space=vmem, size = 0x180000, scoped, tag = 'input window, operand 1, single buffered']
    #allocation13 [shape = 's32[1]{0}', space=sflag, size = 0x4, scoped, tag = 'scoped memory for tpu_custom_call.1']
    #allocation14 [shape = 'u8[6144]{0}', space=vmem, size = 0x1800, scoped, tag = 'input window, operand 2, single buffered']
    #allocation15 [shape = 'u8[786432]{0}', space=vmem, size = 0xc0000, scoped, tag = 'input window, operand 3, single buffered']
    #allocation16 [shape = 's32[1]{0}', space=sflag, size = 0x4, scoped, tag = 'scoped memory for tpu_custom_call.1']
    #allocation17 [shape = 'u8[6144]{0}', space=vmem, size = 0x1800, scoped, tag = 'input window, operand 4, single buffered']
    #allocation18 [shape = 'u8[32768]{0}', space=vmem, size = 0x8000, scoped, tag = 'output window, operand 0, single buffered']
    #allocation19 [shape = 'u8[16384]{0}', space=vmem, size = 0x4000, scoped, tag = 'output window, operand 1, single buffered']
    #allocation20 [shape = 's32[1]{0}', space=sflag, size = 0x4, scoped, tag = 'scoped memory for tpu_custom_call.1']
    %12 = vsyncpa [#allocation10], 0
    %13 = vsyncpa [#allocation13], 0
    %14 = vsyncpa [#allocation16], 0
    %15 = vsyncpa [#allocation11], 0
    %16 = vsyncpa [#allocation20], 0
    // Predicated region
    $region2: #{tpu_custom_call.1} parent=1 // pred_check
      _
    $region3: #{tpu_custom_call.1} parent=1 // pred_check_branch
      %18 = sbr.rel (0) target = $region5
    $region4: #{tpu_custom_call.1} parent=1 // pred_region
      %s20 = ssub.s32 2048, 2048
      %21 = vsyncadd [#allocation10], %s20
      %s22 = sshll.u32 [#allocation9], 4
      %s23 = int_to_ptr.vmem [resolvable:$true] %s22
      %28 = dma.hbm_to_vmem [thread:$0]  %s0, 2048, %s23, [#allocation10], 256, 256, 16
    $region5: #{tpu_custom_call.1} parent=1 // pred_fallthru
      _
    // Predicated region
    $region6: #{tpu_custom_call.1} parent=1 // pred_check
      _
    $region7: #{tpu_custom_call.1} parent=1 // pred_check_branch
      %30 = sbr.rel (0) target = $region9
    $region8: #{tpu_custom_call.1} parent=1 // pred_region
      %s32 = ssub.s32 49152, 49152
      %33 = vsyncadd [#allocation13], %s32
      %s34 = sshll.u32 [#allocation12], 4
      %s35 = int_to_ptr.vmem [resolvable:$true] %s34
      %40 = dma.hbm_to_vmem [thread:$0]  %s1, 49152, %s35, [#allocation13], 384, 384, 24
    $region9: #{tpu_custom_call.1} parent=1 // pred_fallthru
      _
    // Predicated region
    $region10: #{tpu_custom_call.1} parent=1 // pred_check
      _
    $region11: #{tpu_custom_call.1} parent=1 // pred_check_branch
      %42 = sbr.rel (0) target = $region13
    $region12: #{tpu_custom_call.1} parent=1 // pred_region
      %s44 = ssub.s32 192, 192
      %45 = vsyncadd [#allocation13], %s44
      %s46 = sshll.u32 [#allocation14], 4
      %s47 = int_to_ptr.vmem [resolvable:$true] %s46
      %52 = dma.hbm_to_vmem [thread:$0]  %s2, 192, %s47, [#allocation13], 48, 48, 3
    $region13: #{tpu_custom_call.1} parent=1 // pred_fallthru
      _
    // Predicated region
    $region14: #{tpu_custom_call.1} parent=1 // pred_check
      _
    $region15: #{tpu_custom_call.1} parent=1 // pred_check_branch
      %54 = sbr.rel (0) target = $region17
    $region16: #{tpu_custom_call.1} parent=1 // pred_region
      %s56 = ssub.s32 24576, 24576
      %57 = vsyncadd [#allocation16], %s56
      %s58 = sshll.u32 [#allocation15], 4
      %s59 = int_to_ptr.vmem [resolvable:$true] %s58
      %64 = dma.hbm_to_vmem [thread:$0]  %s3, 24576, %s59, [#allocation16], 384, 384, 24
    $region17: #{tpu_custom_call.1} parent=1 // pred_fallthru
      _
    // Predicated region
    $region18: #{tpu_custom_call.1} parent=1 // pred_check
      _
    $region19: #{tpu_custom_call.1} parent=1 // pred_check_branch
      %66 = sbr.rel (0) target = $region21
    $region20: #{tpu_custom_call.1} parent=1 // pred_region
      %s68 = ssub.s32 192, 192
      %69 = vsyncadd [#allocation16], %s68
      %s70 = sshll.u32 [#allocation17], 4
      %s71 = int_to_ptr.vmem [resolvable:$true] %s70
      %76 = dma.hbm_to_vmem [thread:$0]  %s4, 192, %s71, [#allocation16], 48, 48, 3
    $region21: #{tpu_custom_call.1} parent=1 // pred_fallthru
      _
    // Predicated region
    $region22: #{tpu_custom_call.1} parent=1 // pred_check
      _
    $region23: #{tpu_custom_call.1} parent=1 // pred_check_branch
      %78 = sbr.rel (0) target = $region25
    $region24: #{tpu_custom_call.1} parent=1 // pred_region
      %79 = dma.done [#allocation10], 2048
    $region25: #{tpu_custom_call.1} parent=1 // pred_fallthru
      _
    // Predicated region
    $region26: #{tpu_custom_call.1} parent=1 // pred_check
      _
    $region27: #{tpu_custom_call.1} parent=1 // pred_check_branch
      %81 = sbr.rel (0) target = $region29
    $region28: #{tpu_custom_call.1} parent=1 // pred_region
      %82 = dma.done [#allocation13], 49152
    $region29: #{tpu_custom_call.1} parent=1 // pred_fallthru
      _
    // Predicated region
    $region30: #{tpu_custom_call.1} parent=1 // pred_check
      _
    $region31: #{tpu_custom_call.1} parent=1 // pred_check_branch
      %84 = sbr.rel (0) target = $region33
    $region32: #{tpu_custom_call.1} parent=1 // pred_region
      %85 = dma.done [#allocation13], 192
    $region33: #{tpu_custom_call.1} parent=1 // pred_fallthru
      _
    // Predicated region
    $region34: #{tpu_custom_call.1} parent=1 // pred_check
      _
    $region35: #{tpu_custom_call.1} parent=1 // pred_check_branch
      %87 = sbr.rel (0) target = $region37
    $region36: #{tpu_custom_call.1} parent=1 // pred_region
      %88 = dma.done [#allocation16], 24576
    $region37: #{tpu_custom_call.1} parent=1 // pred_fallthru
      _
    // Predicated region
    $region38: #{tpu_custom_call.1} parent=1 // pred_check
      _
    $region39: #{tpu_custom_call.1} parent=1 // pred_check_branch
      %90 = sbr.rel (0) target = $region41
    $region40: #{tpu_custom_call.1} parent=1 // pred_region
      %91 = dma.done [#allocation16], 192
    $region41: #{tpu_custom_call.1} parent=1 // pred_fallthru
      _
    %92 = vst [vmem:[#allocation2] sm:$0xff] 0.0
    %93 = vst [vmem:[#allocation2 + $0x8] sm:$0xff] 0.0
    %94 = vst [vmem:[#allocation2 + $0x10] sm:$0xff] 0.0
    %95 = vst [vmem:[#allocation2 + $0x18] sm:$0xff] 0.0
    %96 = vst [vmem:[#allocation2 + $0x20] sm:$0xff] 0.0
    %97 = vst [vmem:[#allocation2 + $0x28] sm:$0xff] 0.0
    %98 = vst [vmem:[#allocation2 + $0x30] sm:$0xff] 0.0
    %99 = vst [vmem:[#allocation2 + $0x38] sm:$0xff] 0.0
    %100 = vst [vmem:[#allocation2 + $0x40] sm:$0xff] 0.0
    %101 = vst [vmem:[#allocation2 + $0x48] sm:$0xff] 0.0
    %102 = vst [vmem:[#allocation2 + $0x50] sm:$0xff] 0.0
    %103 = vst [vmem:[#allocation2 + $0x58] sm:$0xff] 0.0
    %104 = vst [vmem:[#allocation2 + $0x60] sm:$0xff] 0.0
    %105 = vst [vmem:[#allocation2 + $0x68] sm:$0xff] 0.0
    %106 = vst [vmem:[#allocation2 + $0x70] sm:$0xff] 0.0
    %107 = vst [vmem:[#allocation2 + $0x78] sm:$0xff] 0.0
    %v108 = vld [vmem:[#allocation9] sm:$0xff]
    %v109 = vld [vmem:[#allocation9 + $0x8] sm:$0xff]
    %v110 = vld [vmem:[#allocation9 + $0x10] sm:$0xff]
    %v111 = vld [vmem:[#allocation9 + $0x18] sm:$0xff]
    %v112 = vld [vmem:[#allocation9 + $0x20] sm:$0xff]
    %v113 = vld [vmem:[#allocation9 + $0x28] sm:$0xff]
    %v114 = vld [vmem:[#allocation9 + $0x30] sm:$0xff]
    %v115 = vld [vmem:[#allocation9 + $0x38] sm:$0xff]
    %v116 = vld [vmem:[#allocation9 + $0x40] sm:$0xff]
    %v117 = vld [vmem:[#allocation9 + $0x48] sm:$0xff]
    %v118 = vld [vmem:[#allocation9 + $0x50] sm:$0xff]
    %v119 = vld [vmem:[#allocation9 + $0x58] sm:$0xff]
    %v120 = vld [vmem:[#allocation9 + $0x60] sm:$0xff]
    %v121 = vld [vmem:[#allocation9 + $0x68] sm:$0xff]
    %v122 = vld [vmem:[#allocation9 + $0x70] sm:$0xff]
    %v123 = vld [vmem:[#allocation9 + $0x78] sm:$0xff]
    %v124 = vld [vmem:[#allocation12] sm:$0xff]
    %v125 = vld [vmem:[#allocation12 + $0x8] sm:$0xff]
    %v126 = vld [vmem:[#allocation12 + $0x10] sm:$0xff]
    %v127 = vld [vmem:[#allocation12 + $0x18] sm:$0xff]
    %v128 = vld [vmem:[#allocation12 + $0x20] sm:$0xff]
    %v129 = vld [vmem:[#allocation12 + $0x28] sm:$0xff]
    %v130 = vld [vmem:[#allocation12 + $0x30] sm:$0xff]
    %v131 = vld [vmem:[#allocation12 + $0x38] sm:$0xff]
    %v132 = vld [vmem:[#allocation12 + $0x40] sm:$0xff]
    %v133 = vld [vmem:[#allocation12 + $0x48] sm:$0xff]
    %v134 = vld [vmem:[#allocation12 + $0x50] sm:$0xff]
    %v135 = vld [vmem:[#allocation12 + $0x58] sm:$0xff]
    %v136 = vld [vmem:[#allocation12 + $0x60] sm:$0xff]
    %v137 = vld [vmem:[#allocation12 + $0x68] sm:$0xff]
    %v138 = vld [vmem:[#allocation12 + $0x70] sm:$0xff]
    %v139 = vld [vmem:[#allocation12 + $0x78] sm:$0xff]
    %v140 = vld [vmem:[#allocation12 + $0x80] sm:$0xff]
    %v141 = vld [vmem:[#allocation12 + $0x88] sm:$0xff]
    %v142 = vld [vmem:[#allocation12 + $0x90] sm:$0xff]
    %v143 = vld [vmem:[#allocation12 + $0x98] sm:$0xff]
    %v144 = vld [vmem:[#allocation12 + $0xa0] sm:$0xff]
    %v145 = vld [vmem:[#allocation12 + $0xa8] sm:$0xff]
    %v146 = vld [vmem:[#allocation12 + $0xb0] sm:$0xff]
    %v147 = vld [vmem:[#allocation12 + $0xb8] sm:$0xff]
    %v148 = vld [vmem:[#allocation12 + $0xc0] sm:$0xff]
    %v149 = vld [vmem:[#allocation12 + $0xc8] sm:$0xff]
    %v150 = vld [vmem:[#allocation12 + $0xd0] sm:$0xff]
    %v151 = vld [vmem:[#allocation12 + $0xd8] sm:$0xff]
    %v152 = vld [vmem:[#allocation12 + $0xe0] sm:$0xff]
    %v153 = vld [vmem:[#allocation12 + $0xe8] sm:$0xff]
    %v154 = vld [vmem:[#allocation12 + $0xf0] sm:$0xff]
    %v155 = vld [vmem:[#allocation12 + $0xf8] sm:$0xff]
    %v156 = vld [vmem:[#allocation12 + $0x100] sm:$0xff]
    %v157 = vld [vmem:[#allocation12 + $0x108] sm:$0xff]
    %v158 = vld [vmem:[#allocation12 + $0x110] sm:$0xff]
    %v159 = vld [vmem:[#allocation12 + $0x118] sm:$0xff]
    %v160 = vld [vmem:[#allocation12 + $0x120] sm:$0xff]
    %v161 = vld [vmem:[#allocation12 + $0x128] sm:$0xff]
    %v162 = vld [vmem:[#allocation12 + $0x130] sm:$0xff]
    %v163 = vld [vmem:[#allocation12 + $0x138] sm:$0xff]
    %v164 = vld [vmem:[#allocation12 + $0x140] sm:$0xff]
    %v165 = vld [vmem:[#allocation12 + $0x148] sm:$0xff]
    %v166 = vld [vmem:[#allocation12 + $0x150] sm:$0xff]
    %v167 = vld [vmem:[#allocation12 + $0x158] sm:$0xff]
    %v168 = vld [vmem:[#allocation12 + $0x160] sm:$0xff]
    %v169 = vld [vmem:[#allocation12 + $0x168] sm:$0xff]
    %v170 = vld [vmem:[#allocation12 + $0x170] sm:$0xff]
    %v171 = vld [vmem:[#allocation12 + $0x178] sm:$0xff]
    %v172 = vld [vmem:[#allocation12 + $0x180] sm:$0xff]
    %v173 = vld [vmem:[#allocation12 + $0x188] sm:$0xff]
    %v174 = vld [vmem:[#allocation12 + $0x190] sm:$0xff]
    %v175 = vld [vmem:[#allocation12 + $0x198] sm:$0xff]
    %v176 = vld [vmem:[#allocation12 + $0x1a0] sm:$0xff]
    %v177 = vld [vmem:[#allocation12 + $0x1a8] sm:$0xff]
    %v178 = vld [vmem:[#allocation12 + $0x1b0] sm:$0xff]
    %v179 = vld [vmem:[#allocation12 + $0x1b8] sm:$0xff]
    %v180 = vld [vmem:[#allocation12 + $0x1c0] sm:$0xff]
    %v181 = vld [vmem:[#allocation12 + $0x1c8] sm:$0xff]
    %v182 = vld [vmem:[#allocation12 + $0x1d0] sm:$0xff]
    %v183 = vld [vmem:[#allocation12 + $0x1d8] sm:$0xff]
    %v184 = vld [vmem:[#allocation12 + $0x1e0] sm:$0xff]
    %v185 = vld [vmem:[#allocation12 + $0x1e8] sm:$0xff]
    %v186 = vld [vmem:[#allocation12 + $0x1f0] sm:$0xff]
    %v187 = vld [vmem:[#allocation12 + $0x1f8] sm:$0xff]
    %v188 = vld [vmem:[#allocation12 + $0x200] sm:$0xff]
    %v189 = vld [vmem:[#allocation12 + $0x208] sm:$0xff]
    %v190 = vld [vmem:[#allocation12 + $0x210] sm:$0xff]
    %v191 = vld [vmem:[#allocation12 + $0x218] sm:$0xff]
    %v192 = vld [vmem:[#allocation12 + $0x220] sm:$0xff]
    %v193 = vld [vmem:[#allocation12 + $0x228] sm:$0xff]
    %v194 = vld [vmem:[#allocation12 + $0x230] sm:$0xff]
    %v195 = vld [vmem:[#allocation12 + $0x238] sm:$0xff]
    %v196 = vld [vmem:[#allocation12 + $0x240] sm:$0xff]
    %v197 = vld [vmem:[#allocation12 + $0x248] sm:$0xff]
    %v198 = vld [vmem:[#allocation12 + $0x250] sm:$0xff]
    %v199 = vld [vmem:[#allocation12 + $0x258] sm:$0xff]
    %v200 = vld [vmem:[#allocation12 + $0x260] sm:$0xff]
    %v201 = vld [vmem:[#allocation12 + $0x268] sm:$0xff]
    %v202 = vld [vmem:[#allocation12 + $0x270] sm:$0xff]
    %v203 = vld [vmem:[#allocation12 + $0x278] sm:$0xff]
    %v204 = vld [vmem:[#allocation12 + $0x280] sm:$0xff]
    %v205 = vld [vmem:[#allocation12 + $0x288] sm:$0xff]
    %v206 = vld [vmem:[#allocation12 + $0x290] sm:$0xff]
    %v207 = vld [vmem:[#allocation12 + $0x298] sm:$0xff]
    %v208 = vld [vmem:[#allocation12 + $0x2a0] sm:$0xff]
    %v209 = vld [vmem:[#allocation12 + $0x2a8] sm:$0xff]
    %v210 = vld [vmem:[#allocation12 + $0x2b0] sm:$0xff]
    %v211 = vld [vmem:[#allocation12 + $0x2b8] sm:$0xff]
    %v212 = vld [vmem:[#allocation12 + $0x2c0] sm:$0xff]
    %v213 = vld [vmem:[#allocation12 + $0x2c8] sm:$0xff]
    %v214 = vld [vmem:[#allocation12 + $0x2d0] sm:$0xff]
    %v215 = vld [vmem:[#allocation12 + $0x2d8] sm:$0xff]
    %v216 = vld [vmem:[#allocation12 + $0x2e0] sm:$0xff]
    %v217 = vld [vmem:[#allocation12 + $0x2e8] sm:$0xff]
    %v218 = vld [vmem:[#allocation12 + $0x2f0] sm:$0xff]
    %v219 = vld [vmem:[#allocation12 + $0x2f8] sm:$0xff]
    %v220 = vld [vmem:[#allocation14] sm:$0x7]
    %v222 = vlaneseq
    %v223 = vshrl.u32 %v222, 7
    %v224 = vsub.s32 0, %v223
    %v225 = vrot.slane %v220, %v224
    %v226 = vlaneseq
    %v227 = vshrl.u32 %v226, 7
    %v228 = vsub.s32 1, %v227
    %v229 = vrot.slane %v220, %v228
    %v230 = vlaneseq
    %v231 = vshrl.u32 %v230, 7
    %v232 = vsub.s32 2, %v231
    %v233 = vrot.slane %v220, %v232
    %237 = vmatprep.subr.mxu0 %v170
    %238 = vmatpush1.msra.mxu0 %v169
    %239 = vmatprep.subr.mxu0 %v167
    %240 = vmatpush1.msra.mxu0 %v166
    %241 = vmatprep.subr.mxu0 %v164
    %242 = vmatpush1.msra.mxu0 %v163
    %243 = vmatprep.subr.mxu0 %v161
    %244 = vmatpush1.msra.mxu0 %v160
    %245 = vmatprep.subr.mxu0 %v158
    %246 = vmatpush1.msra.mxu0 %v157
    %247 = vmatprep.subr.mxu0 %v155
    %248 = vmatpush1.msra.mxu0 %v154
    %249 = vmatprep.subr.mxu0 %v152
    %250 = vmatpush1.msra.mxu0 %v151
    %251 = vmatprep.subr.mxu0 %v149
    %252 = vmatpush1.msra.mxu0 %v148
    %253 = vmatprep.subr.mxu0 %v146
    %254 = vmatpush1.msra.mxu0 %v145
    %255 = vmatprep.subr.mxu0 %v143
    %256 = vmatpush1.msra.mxu0 %v142
    %257 = vmatprep.subr.mxu0 %v140
    %258 = vmatpush1.msra.mxu0 %v139
    %259 = vmatprep.subr.mxu0 %v137
    %260 = vmatpush1.msra.mxu0 %v136
    %261 = vmatprep.subr.mxu0 %v134
    %262 = vmatpush1.msra.mxu0 %v133
    %263 = vmatprep.subr.mxu0 %v131
    %264 = vmatpush1.msra.mxu0 %v130
    %265 = vmatprep.subr.mxu0 %v128
    %266 = vmatpush1.msra.mxu0 %v127
    %267 = vmatprep.subr.mxu0 %v125
    %268 = vmatpush1.msra.mxu0 %v124
    %269 = vmatprep.subr.mxu0 %v218
    %270 = vmatpush2.msra.mxu0 %v217
    %271 = vmatprep.subr.mxu0 %v215
    %272 = vmatpush2.msra.mxu0 %v214
    %273 = vmatprep.subr.mxu0 %v212
    %274 = vmatpush2.msra.mxu0 %v211
    %275 = vmatprep.subr.mxu0 %v209
    %276 = vmatpush2.msra.mxu0 %v208
    %277 = vmatprep.subr.mxu0 %v206
    %278 = vmatpush2.msra.mxu0 %v205
    %279 = vmatprep.subr.mxu0 %v203
    %280 = vmatpush2.msra.mxu0 %v202
    %281 = vmatprep.subr.mxu0 %v200
    %282 = vmatpush2.msra.mxu0 %v199
    %283 = vmatprep.subr.mxu0 %v197
    %284 = vmatpush2.msra.mxu0 %v196
    %285 = vmatprep.subr.mxu0 %v194
    %286 = vmatpush2.msra.mxu0 %v193
    %287 = vmatprep.subr.mxu0 %v191
    %288 = vmatpush2.msra.mxu0 %v190
    %289 = vmatprep.subr.mxu0 %v188
    %290 = vmatpush2.msra.mxu0 %v187
    %291 = vmatprep.subr.mxu0 %v185
    %292 = vmatpush2.msra.mxu0 %v184
    %293 = vmatprep.subr.mxu0 %v182
    %294 = vmatpush2.msra.mxu0 %v181
    %295 = vmatprep.subr.mxu0 %v179
    %296 = vmatpush2.msra.mxu0 %v178
    %297 = vmatprep.subr.mxu0 %v176
    %298 = vmatpush2.msra.mxu0 %v175
    %299 = vmatprep.subr.mxu0 %v173
    %300 = vmatpush2.msra.mxu0 %v172
    %301 = vmatprep.mubr.f32.mxu0 %v109
    %302 = vmatmul.mubr.f32.gmra.mxu0 %v108
    %v303 = vpop.f32.mrf.mxu0
    %v304 = vadd.f32 %v225, %v303
    %v305 = vpop.f32.mrf.mxu0
    %v306 = vadd.f32 %v229, %v305
    %307 = vmatprep.mubr.f32.mxu0 %v111
    %308 = vmatmul.mubr.f32.gmra.mxu0 %v110
    %v309 = vpop.f32.mrf.mxu0
    %v310 = vadd.f32 %v225, %v309
    %v311 = vpop.f32.mrf.mxu0
    %v312 = vadd.f32 %v229, %v311
    %313 = vmatprep.mubr.f32.mxu0 %v113
    %314 = vmatmul.mubr.f32.gmra.mxu0 %v112
    %v315 = vpop.f32.mrf.mxu0
    %v316 = vadd.f32 %v225, %v315
    %v317 = vpop.f32.mrf.mxu0
    %v318 = vadd.f32 %v229, %v317
    %319 = vmatprep.mubr.f32.mxu0 %v115
    %320 = vmatmul.mubr.f32.gmra.mxu0 %v114
    %v321 = vpop.f32.mrf.mxu0
    %v322 = vadd.f32 %v225, %v321
    %v323 = vpop.f32.mrf.mxu0
    %v324 = vadd.f32 %v229, %v323
    %325 = vmatprep.mubr.f32.mxu0 %v117
    %326 = vmatmul.mubr.f32.gmra.mxu0 %v116
    %v327 = vpop.f32.mrf.mxu0
    %v328 = vadd.f32 %v225, %v327
    %v329 = vpop.f32.mrf.mxu0
    %v330 = vadd.f32 %v229, %v329
    %331 = vmatprep.mubr.f32.mxu0 %v119
    %332 = vmatmul.mubr.f32.gmra.mxu0 %v118
    %v333 = vpop.f32.mrf.mxu0
    %v334 = vadd.f32 %v225, %v333
    %v335 = vpop.f32.mrf.mxu0
    %v336 = vadd.f32 %v229, %v335
    %337 = vmatprep.mubr.f32.mxu0 %v121
    %338 = vmatmul.mubr.f32.gmra.mxu0 %v120
    %v339 = vpop.f32.mrf.mxu0
    %v340 = vadd.f32 %v225, %v339
    %v341 = vpop.f32.mrf.mxu0
    %v342 = vadd.f32 %v229, %v341
    %343 = vmatprep.mubr.f32.mxu0 %v123
    %344 = vmatmul.mubr.f32.gmra.mxu0 %v122
    %v345 = vpop.f32.mrf.mxu0
    %v346 = vadd.f32 %v225, %v345
    %v347 = vpop.f32.mrf.mxu0
    %v348 = vadd.f32 %v229, %v347
    %349 = vdwg.mxu0
    %350 = vmatprep.subr.mxu0 0.0
    %351 = vmatpush1.msra.mxu0 %v171
    %352 = vmatprep.subr.mxu0 0.0
    %353 = vmatpush1.msra.mxu0 %v168
    %354 = vmatprep.subr.mxu0 0.0
    %355 = vmatpush1.msra.mxu0 %v165
    %356 = vmatprep.subr.mxu0 0.0
    %357 = vmatpush1.msra.mxu0 %v162
    %358 = vmatprep.subr.mxu0 0.0
    %359 = vmatpush1.msra.mxu0 %v159
    %360 = vmatprep.subr.mxu0 0.0
    %361 = vmatpush1.msra.mxu0 %v156
    %362 = vmatprep.subr.mxu0 0.0
    %363 = vmatpush1.msra.mxu0 %v153
    %364 = vmatprep.subr.mxu0 0.0
    %365 = vmatpush1.msra.mxu0 %v150
    %366 = vmatprep.subr.mxu0 0.0
    %367 = vmatpush1.msra.mxu0 %v147
    %368 = vmatprep.subr.mxu0 0.0
    %369 = vmatpush1.msra.mxu0 %v144
    %370 = vmatprep.subr.mxu0 0.0
    %371 = vmatpush1.msra.mxu0 %v141
    %372 = vmatprep.subr.mxu0 0.0
    %373 = vmatpush1.msra.mxu0 %v138
    %374 = vmatprep.subr.mxu0 0.0
    %375 = vmatpush1.msra.mxu0 %v135
    %376 = vmatprep.subr.mxu0 0.0
    %377 = vmatpush1.msra.mxu0 %v132
    %378 = vmatprep.subr.mxu0 0.0
    %379 = vmatpush1.msra.mxu0 %v129
    %380 = vmatprep.subr.mxu0 0.0
    %381 = vmatpush1.msra.mxu0 %v126
    %382 = vmatprep.subr.mxu0 0.0
    %383 = vmatpush2.msra.mxu0 %v219
    %384 = vmatprep.subr.mxu0 0.0
    %385 = vmatpush2.msra.mxu0 %v216
    %386 = vmatprep.subr.mxu0 0.0
    %387 = vmatpush2.msra.mxu0 %v213
    %388 = vmatprep.subr.mxu0 0.0
    %389 = vmatpush2.msra.mxu0 %v210
    %390 = vmatprep.subr.mxu0 0.0
    %391 = vmatpush2.msra.mxu0 %v207
    %392 = vmatprep.subr.mxu0 0.0
    %393 = vmatpush2.msra.mxu0 %v204
    %394 = vmatprep.subr.mxu0 0.0
    %395 = vmatpush2.msra.mxu0 %v201
    %396 = vmatprep.subr.mxu0 0.0
    %397 = vmatpush2.msra.mxu0 %v198
    %398 = vmatprep.subr.mxu0 0.0
    %399 = vmatpush2.msra.mxu0 %v195
    %400 = vmatprep.subr.mxu0 0.0
    %401 = vmatpush2.msra.mxu0 %v192
    %402 = vmatprep.subr.mxu0 0.0
    %403 = vmatpush2.msra.mxu0 %v189
    %404 = vmatprep.subr.mxu0 0.0
    %405 = vmatpush2.msra.mxu0 %v186
    %406 = vmatprep.subr.mxu0 0.0
    %407 = vmatpush2.msra.mxu0 %v183
    %408 = vmatprep.subr.mxu0 0.0
    %409 = vmatpush2.msra.mxu0 %v180
    %410 = vmatprep.subr.mxu0 0.0
    %411 = vmatpush2.msra.mxu0 %v177
    %412 = vmatprep.subr.mxu0 0.0
    %413 = vmatpush2.msra.mxu0 %v174
    %414 = vmatprep.mubr.f32.mxu0 %v109
    %415 = vmatmul.mubr.f32.gmra.mxu0 %v108
    %v416 = vpop.f32.mrf.mxu0
    %v417 = vadd.f32 %v233, %v416
    %v418 = vpop.f32.mrf.mxu0
    %419 = vmatprep.mubr.f32.mxu0 %v111
    %420 = vmatmul.mubr.f32.gmra.mxu0 %v110
    %v421 = vpop.f32.mrf.mxu0
    %v422 = vadd.f32 %v233, %v421
    %v423 = vpop.f32.mrf.mxu0
    %424 = vmatprep.mubr.f32.mxu0 %v113
    %425 = vmatmul.mubr.f32.gmra.mxu0 %v112
    %v426 = vpop.f32.mrf.mxu0
    %v427 = vadd.f32 %v233, %v426
    %v428 = vpop.f32.mrf.mxu0
    %429 = vmatprep.mubr.f32.mxu0 %v115
    %430 = vmatmul.mubr.f32.gmra.mxu0 %v114
    %v431 = vpop.f32.mrf.mxu0
    %v432 = vadd.f32 %v233, %v431
    %v433 = vpop.f32.mrf.mxu0
    %434 = vmatprep.mubr.f32.mxu0 %v117
    %435 = vmatmul.mubr.f32.gmra.mxu0 %v116
    %v436 = vpop.f32.mrf.mxu0
    %v437 = vadd.f32 %v233, %v436
    %v438 = vpop.f32.mrf.mxu0
    %439 = vmatprep.mubr.f32.mxu0 %v119
    %440 = vmatmul.mubr.f32.gmra.mxu0 %v118
    %v441 = vpop.f32.mrf.mxu0
    %v442 = vadd.f32 %v233, %v441
    %v443 = vpop.f32.mrf.mxu0
    %444 = vmatprep.mubr.f32.mxu0 %v121
    %445 = vmatmul.mubr.f32.gmra.mxu0 %v120
    %v446 = vpop.f32.mrf.mxu0
    %v447 = vadd.f32 %v233, %v446
    %v448 = vpop.f32.mrf.mxu0
    %449 = vmatprep.mubr.f32.mxu0 %v123
    %450 = vmatmul.mubr.f32.gmra.mxu0 %v122
    %v451 = vpop.f32.mrf.mxu0
    %v452 = vadd.f32 %v233, %v451
    %v453 = vpop.f32.mrf.mxu0
    %454 = vdwg.mxu0
    %455 = vst [vmem:[#allocation5] sm:$0xff] %v304
    %456 = vst [vmem:[#allocation5 + $0x8] sm:$0xff] %v306
    %457 = vst [vmem:[#allocation5 + $0x10] sm:$0xff] %v417
    %458 = vst [vmem:[#allocation5 + $0x18] sm:$0xff] %v310
    %459 = vst [vmem:[#allocation5 + $0x20] sm:$0xff] %v312
    %460 = vst [vmem:[#allocation5 + $0x28] sm:$0xff] %v422
    %461 = vst [vmem:[#allocation5 + $0x30] sm:$0xff] %v316
    %462 = vst [vmem:[#allocation5 + $0x38] sm:$0xff] %v318
    %463 = vst [vmem:[#allocation5 + $0x40] sm:$0xff] %v427
    %464 = vst [vmem:[#allocation5 + $0x48] sm:$0xff] %v322
    %465 = vst [vmem:[#allocation5 + $0x50] sm:$0xff] %v324
    %466 = vst [vmem:[#allocation5 + $0x58] sm:$0xff] %v432
    %467 = vst [vmem:[#allocation5 + $0x60] sm:$0xff] %v328
    %468 = vst [vmem:[#allocation5 + $0x68] sm:$0xff] %v330
    %469 = vst [vmem:[#allocation5 + $0x70] sm:$0xff] %v437
    %470 = vst [vmem:[#allocation5 + $0x78] sm:$0xff] %v334
    %471 = vst [vmem:[#allocation5 + $0x80] sm:$0xff] %v336
    %472 = vst [vmem:[#allocation5 + $0x88] sm:$0xff] %v442
    %473 = vst [vmem:[#allocation5 + $0x90] sm:$0xff] %v340
    %474 = vst [vmem:[#allocation5 + $0x98] sm:$0xff] %v342
    %475 = vst [vmem:[#allocation5 + $0xa0] sm:$0xff] %v447
    %476 = vst [vmem:[#allocation5 + $0xa8] sm:$0xff] %v346
    %477 = vst [vmem:[#allocation5 + $0xb0] sm:$0xff] %v348
    %478 = vst [vmem:[#allocation5 + $0xb8] sm:$0xff] %v452
    %s479 = scalar_lea.vmem [#allocation12], 768
    %v480 = vld [vmem:[%s479] sm:$0xff]
    %v481 = vld [vmem:[%s479 + $0x8] sm:$0xff]
    %v482 = vld [vmem:[%s479 + $0x10] sm:$0xff]
    %v483 = vld [vmem:[%s479 + $0x18] sm:$0xff]
    %v484 = vld [vmem:[%s479 + $0x20] sm:$0xff]
    %v485 = vld [vmem:[%s479 + $0x28] sm:$0xff]
    %v486 = vld [vmem:[%s479 + $0x30] sm:$0xff]
    %v487 = vld [vmem:[%s479 + $0x38] sm:$0xff]
    %v488 = vld [vmem:[%s479 + $0x40] sm:$0xff]
    %v489 = vld [vmem:[%s479 + $0x48] sm:$0xff]
    %v490 = vld [vmem:[%s479 + $0x50] sm:$0xff]
    %v491 = vld [vmem:[%s479 + $0x58] sm:$0xff]
    %v492 = vld [vmem:[%s479 + $0x60] sm:$0xff]
    %v493 = vld [vmem:[%s479 + $0x68] sm:$0xff]
    %v494 = vld [vmem:[%s479 + $0x70] sm:$0xff]
    %v495 = vld [vmem:[%s479 + $0x78] sm:$0xff]
    %v496 = vld [vmem:[%s479 + $0x80] sm:$0xff]
    %v497 = vld [vmem:[%s479 + $0x88] sm:$0xff]
    %v498 = vld [vmem:[%s479 + $0x90] sm:$0xff]
    %v499 = vld [vmem:[%s479 + $0x98] sm:$0xff]
    %v500 = vld [vmem:[%s479 + $0xa0] sm:$0xff]
    %v501 = vld [vmem:[%s479 + $0xa8] sm:$0xff]
    %v502 = vld [vmem:[%s479 + $0xb0] sm:$0xff]
    %v503 = vld [vmem:[%s479 + $0xb8] sm:$0xff]
    %v504 = vld [vmem:[%s479 + $0xc0] sm:$0xff]
    %v505 = vld [vmem:[%s479 + $0xc8] sm:$0xff]
    %v506 = vld [vmem:[%s479 + $0xd0] sm:$0xff]
    %v507 = vld [vmem:[%s479 + $0xd8] sm:$0xff]
    %v508 = vld [vmem:[%s479 + $0xe0] sm:$0xff]
    %v509 = vld [vmem:[%s479 + $0xe8] sm:$0xff]
    %v510 = vld [vmem:[%s479 + $0xf0] sm:$0xff]
    %v511 = vld [vmem:[%s479 + $0xf8] sm:$0xff]
    %v512 = vld [vmem:[%s479 + $0x100] sm:$0xff]
    %v513 = vld [vmem:[%s479 + $0x108] sm:$0xff]
    %v514 = vld [vmem:[%s479 + $0x110] sm:$0xff]
    %v515 = vld [vmem:[%s479 + $0x118] sm:$0xff]
    %v516 = vld [vmem:[%s479 + $0x120] sm:$0xff]
    %v517 = vld [vmem:[%s479 + $0x128] sm:$0xff]
    %v518 = vld [vmem:[%s479 + $0x130] sm:$0xff]
    %v519 = vld [vmem:[%s479 + $0x138] sm:$0xff]
    %v520 = vld [vmem:[%s479 + $0x140] sm:$0xff]
    %v521 = vld [vmem:[%s479 + $0x148] sm:$0xff]
    %v522 = vld [vmem:[%s479 + $0x150] sm:$0xff]
    %v523 = vld [vmem:[%s479 + $0x158] sm:$0xff]
    %v524 = vld [vmem:[%s479 + $0x160] sm:$0xff]
    %v525 = vld [vmem:[%s479 + $0x168] sm:$0xff]
    %v526 = vld [vmem:[%s479 + $0x170] sm:$0xff]
    %v527 = vld [vmem:[%s479 + $0x178] sm:$0xff]
    %v528 = vld [vmem:[%s479 + $0x180] sm:$0xff]
    %v529 = vld [vmem:[%s479 + $0x188] sm:$0xff]
    %v530 = vld [vmem:[%s479 + $0x190] sm:$0xff]
    %v531 = vld [vmem:[%s479 + $0x198] sm:$0xff]
    %v532 = vld [vmem:[%s479 + $0x1a0] sm:$0xff]
    %v533 = vld [vmem:[%s479 + $0x1a8] sm:$0xff]
    %v534 = vld [vmem:[%s479 + $0x1b0] sm:$0xff]
    %v535 = vld [vmem:[%s479 + $0x1b8] sm:$0xff]
    %v536 = vld [vmem:[%s479 + $0x1c0] sm:$0xff]
    %v537 = vld [vmem:[%s479 + $0x1c8] sm:$0xff]
    %v538 = vld [vmem:[%s479 + $0x1d0] sm:$0xff]
    %v539 = vld [vmem:[%s479 + $0x1d8] sm:$0xff]
    %v540 = vld [vmem:[%s479 + $0x1e0] sm:$0xff]
    %v541 = vld [vmem:[%s479 + $0x1e8] sm:$0xff]
    %v542 = vld [vmem:[%s479 + $0x1f0] sm:$0xff]
    %v543 = vld [vmem:[%s479 + $0x1f8] sm:$0xff]
    %v544 = vld [vmem:[%s479 + $0x200] sm:$0xff]
    %v545 = vld [vmem:[%s479 + $0x208] sm:$0xff]
    %v546 = vld [vmem:[%s479 + $0x210] sm:$0xff]
    %v547 = vld [vmem:[%s479 + $0x218] sm:$0xff]
    %v548 = vld [vmem:[%s479 + $0x220] sm:$0xff]
    %v549 = vld [vmem:[%s479 + $0x228] sm:$0xff]
    %v550 = vld [vmem:[%s479 + $0x230] sm:$0xff]
    %v551 = vld [vmem:[%s479 + $0x238] sm:$0xff]
    %v552 = vld [vmem:[%s479 + $0x240] sm:$0xff]
    %v553 = vld [vmem:[%s479 + $0x248] sm:$0xff]
    %v554 = vld [vmem:[%s479 + $0x250] sm:$0xff]
    %v555 = vld [vmem:[%s479 + $0x258] sm:$0xff]
    %v556 = vld [vmem:[%s479 + $0x260] sm:$0xff]
    %v557 = vld [vmem:[%s479 + $0x268] sm:$0xff]
    %v558 = vld [vmem:[%s479 + $0x270] sm:$0xff]
    %v559 = vld [vmem:[%s479 + $0x278] sm:$0xff]
    %v560 = vld [vmem:[%s479 + $0x280] sm:$0xff]
    %v561 = vld [vmem:[%s479 + $0x288] sm:$0xff]
    %v562 = vld [vmem:[%s479 + $0x290] sm:$0xff]
    %v563 = vld [vmem:[%s479 + $0x298] sm:$0xff]
    %v564 = vld [vmem:[%s479 + $0x2a0] sm:$0xff]
    %v565 = vld [vmem:[%s479 + $0x2a8] sm:$0xff]
    %v566 = vld [vmem:[%s479 + $0x2b0] sm:$0xff]
    %v567 = vld [vmem:[%s479 + $0x2b8] sm:$0xff]
    %v568 = vld [vmem:[%s479 + $0x2c0] sm:$0xff]
    %v569 = vld [vmem:[%s479 + $0x2c8] sm:$0xff]
    %v570 = vld [vmem:[%s479 + $0x2d0] sm:$0xff]
    %v571 = vld [vmem:[%s479 + $0x2d8] sm:$0xff]
    %v572 = vld [vmem:[%s479 + $0x2e0] sm:$0xff]
    %v573 = vld [vmem:[%s479 + $0x2e8] sm:$0xff]
    %v574 = vld [vmem:[%s479 + $0x2f0] sm:$0xff]
    %v575 = vld [vmem:[%s479 + $0x2f8] sm:$0xff]
    %s576 = scalar_lea.vmem [#allocation14], 3
    %v577 = vld [vmem:[%s576] sm:$0x7]
    %v579 = vlaneseq
    %v580 = vshrl.u32 %v579, 7
    %v581 = vsub.s32 0, %v580
    %v582 = vrot.slane %v577, %v581
    %v583 = vlaneseq
    %v584 = vshrl.u32 %v583, 7
    %v585 = vsub.s32 1, %v584
    %v586 = vrot.slane %v577, %v585
    %v587 = vlaneseq
    %v588 = vshrl.u32 %v587, 7
    %v589 = vsub.s32 2, %v588
    %v590 = vrot.slane %v577, %v589
    %594 = vmatprep.subr.mxu0 %v526
    %595 = vmatpush1.msra.mxu0 %v525
    %596 = vmatprep.subr.mxu0 %v523
    %597 = vmatpush1.msra.mxu0 %v522
    %598 = vmatprep.subr.mxu0 %v520
    %599 = vmatpush1.msra.mxu0 %v519
    %600 = vmatprep.subr.mxu0 %v517
    %601 = vmatpush1.msra.mxu0 %v516
    %602 = vmatprep.subr.mxu0 %v514
    %603 = vmatpush1.msra.mxu0 %v513
    %604 = vmatprep.subr.mxu0 %v511
    %605 = vmatpush1.msra.mxu0 %v510
    %606 = vmatprep.subr.mxu0 %v508
    %607 = vmatpush1.msra.mxu0 %v507
    %608 = vmatprep.subr.mxu0 %v505
    %609 = vmatpush1.msra.mxu0 %v504
    %610 = vmatprep.subr.mxu0 %v502
    %611 = vmatpush1.msra.mxu0 %v501
    %612 = vmatprep.subr.mxu0 %v499
    %613 = vmatpush1.msra.mxu0 %v498
    %614 = vmatprep.subr.mxu0 %v496
    %615 = vmatpush1.msra.mxu0 %v495
    %616 = vmatprep.subr.mxu0 %v493
    %617 = vmatpush1.msra.mxu0 %v492
    %618 = vmatprep.subr.mxu0 %v490
    %619 = vmatpush1.msra.mxu0 %v489
    %620 = vmatprep.subr.mxu0 %v487
    %621 = vmatpush1.msra.mxu0 %v486
    %622 = vmatprep.subr.mxu0 %v484
    %623 = vmatpush1.msra.mxu0 %v483
    %624 = vmatprep.subr.mxu0 %v481
    %625 = vmatpush1.msra.mxu0 %v480
    %626 = vmatprep.subr.mxu0 %v574
    %627 = vmatpush2.msra.mxu0 %v573
    %628 = vmatprep.subr.mxu0 %v571
    %629 = vmatpush2.msra.mxu0 %v570
    %630 = vmatprep.subr.mxu0 %v568
    %631 = vmatpush2.msra.mxu0 %v567
    %632 = vmatprep.subr.mxu0 %v565
    %633 = vmatpush2.msra.mxu0 %v564
    %634 = vmatprep.subr.mxu0 %v562
    %635 = vmatpush2.msra.mxu0 %v561
    %636 = vmatprep.subr.mxu0 %v559
    %637 = vmatpush2.msra.mxu0 %v558
    %638 = vmatprep.subr.mxu0 %v556
    %639 = vmatpush2.msra.mxu0 %v555
    %640 = vmatprep.subr.mxu0 %v553
    %641 = vmatpush2.msra.mxu0 %v552
    %642 = vmatprep.subr.mxu0 %v550
    %643 = vmatpush2.msra.mxu0 %v549
    %644 = vmatprep.subr.mxu0 %v547
    %645 = vmatpush2.msra.mxu0 %v546
    %646 = vmatprep.subr.mxu0 %v544
    %647 = vmatpush2.msra.mxu0 %v543
    %648 = vmatprep.subr.mxu0 %v541
    %649 = vmatpush2.msra.mxu0 %v540
    %650 = vmatprep.subr.mxu0 %v538
    %651 = vmatpush2.msra.mxu0 %v537
    %652 = vmatprep.subr.mxu0 %v535
    %653 = vmatpush2.msra.mxu0 %v534
    %654 = vmatprep.subr.mxu0 %v532
    %655 = vmatpush2.msra.mxu0 %v531
    %656 = vmatprep.subr.mxu0 %v529
    %657 = vmatpush2.msra.mxu0 %v528
    %658 = vmatprep.mubr.f32.mxu0 %v109
    %659 = vmatmul.mubr.f32.gmra.mxu0 %v108
    %v660 = vpop.f32.mrf.mxu0
    %v661 = vadd.f32 %v582, %v660
    %v662 = vpop.f32.mrf.mxu0
    %v663 = vadd.f32 %v586, %v662
    %664 = vmatprep.mubr.f32.mxu0 %v111
    %665 = vmatmul.mubr.f32.gmra.mxu0 %v110
    %v666 = vpop.f32.mrf.mxu0
    %v667 = vadd.f32 %v582, %v666
    %v668 = vpop.f32.mrf.mxu0
    %v669 = vadd.f32 %v586, %v668
    %670 = vmatprep.mubr.f32.mxu0 %v113
    %671 = vmatmul.mubr.f32.gmra.mxu0 %v112
    %v672 = vpop.f32.mrf.mxu0
    %v673 = vadd.f32 %v582, %v672
    %v674 = vpop.f32.mrf.mxu0
    %v675 = vadd.f32 %v586, %v674
    %676 = vmatprep.mubr.f32.mxu0 %v115
    %677 = vmatmul.mubr.f32.gmra.mxu0 %v114
    %v678 = vpop.f32.mrf.mxu0
    %v679 = vadd.f32 %v582, %v678
    %v680 = vpop.f32.mrf.mxu0
    %v681 = vadd.f32 %v586, %v680
    %682 = vmatprep.mubr.f32.mxu0 %v117
    %683 = vmatmul.mubr.f32.gmra.mxu0 %v116
    %v684 = vpop.f32.mrf.mxu0
    %v685 = vadd.f32 %v582, %v684
    %v686 = vpop.f32.mrf.mxu0
    %v687 = vadd.f32 %v586, %v686
    %688 = vmatprep.mubr.f32.mxu0 %v119
    %689 = vmatmul.mubr.f32.gmra.mxu0 %v118
    %v690 = vpop.f32.mrf.mxu0
    %v691 = vadd.f32 %v582, %v690
    %v692 = vpop.f32.mrf.mxu0
    %v693 = vadd.f32 %v586, %v692
    %694 = vmatprep.mubr.f32.mxu0 %v121
    %695 = vmatmul.mubr.f32.gmra.mxu0 %v120
    %v696 = vpop.f32.mrf.mxu0
    %v697 = vadd.f32 %v582, %v696
    %v698 = vpop.f32.mrf.mxu0
    %v699 = vadd.f32 %v586, %v698
    %700 = vmatprep.mubr.f32.mxu0 %v123
    %701 = vmatmul.mubr.f32.gmra.mxu0 %v122
    %v702 = vpop.f32.mrf.mxu0
    %v703 = vadd.f32 %v582, %v702
    %v704 = vpop.f32.mrf.mxu0
    %v705 = vadd.f32 %v586, %v704
    %706 = vdwg.mxu0
    %707 = vmatprep.subr.mxu0 0.0
    %708 = vmatpush1.msra.mxu0 %v527
    %709 = vmatprep.subr.mxu0 0.0
    %710 = vmatpush1.msra.mxu0 %v524
    %711 = vmatprep.subr.mxu0 0.0
    %712 = vmatpush1.msra.mxu0 %v521
    %713 = vmatprep.subr.mxu0 0.0
    %714 = vmatpush1.msra.mxu0 %v518
    %715 = vmatprep.subr.mxu0 0.0
    %716 = vmatpush1.msra.mxu0 %v515
    %717 = vmatprep.subr.mxu0 0.0
    %718 = vmatpush1.msra.mxu0 %v512
    %719 = vmatprep.subr.mxu0 0.0
    %720 = vmatpush1.msra.mxu0 %v509
    %721 = vmatprep.subr.mxu0 0.0
    %722 = vmatpush1.msra.mxu0 %v506
    %723 = vmatprep.subr.mxu0 0.0
    %724 = vmatpush1.msra.mxu0 %v503
    %725 = vmatprep.subr.mxu0 0.0
    %726 = vmatpush1.msra.mxu0 %v500
    %727 = vmatprep.subr.mxu0 0.0
    %728 = vmatpush1.msra.mxu0 %v497
    %729 = vmatprep.subr.mxu0 0.0
    %730 = vmatpush1.msra.mxu0 %v494
    %731 = vmatprep.subr.mxu0 0.0
    %732 = vmatpush1.msra.mxu0 %v491
    %733 = vmatprep.subr.mxu0 0.0
    %734 = vmatpush1.msra.mxu0 %v488
    %735 = vmatprep.subr.mxu0 0.0
    %736 = vmatpush1.msra.mxu0 %v485
    %737 = vmatprep.subr.mxu0 0.0
    %738 = vmatpush1.msra.mxu0 %v482
    %739 = vmatprep.subr.mxu0 0.0
    %740 = vmatpush2.msra.mxu0 %v575
    %741 = vmatprep.subr.mxu0 0.0
    %742 = vmatpush2.msra.mxu0 %v572
    %743 = vmatprep.subr.mxu0 0.0
    %744 = vmatpush2.msra.mxu0 %v569
    %745 = vmatprep.subr.mxu0 0.0
    %746 = vmatpush2.msra.mxu0 %v566
    %747 = vmatprep.subr.mxu0 0.0
    %748 = vmatpush2.msra.mxu0 %v563
    %749 = vmatprep.subr.mxu0 0.0
    %750 = vmatpush2.msra.mxu0 %v560
    %751 = vmatprep.subr.mxu0 0.0
    %752 = vmatpush2.msra.mxu0 %v557
    %753 = vmatprep.subr.mxu0 0.0
    %754 = vmatpush2.msra.mxu0 %v554
    %755 = vmatprep.subr.mxu0 0.0
    %756 = vmatpush2.msra.mxu0 %v551
    %757 = vmatprep.subr.mxu0 0.0
    %758 = vmatpush2.msra.mxu0 %v548
    %759 = vmatprep.subr.mxu0 0.0
    %760 = vmatpush2.msra.mxu0 %v545
    %761 = vmatprep.subr.mxu0 0.0
    %762 = vmatpush2.msra.mxu0 %v542
    %763 = vmatprep.subr.mxu0 0.0
    %764 = vmatpush2.msra.mxu0 %v539
    %765 = vmatprep.subr.mxu0 0.0
    %766 = vmatpush2.msra.mxu0 %v536
    %767 = vmatprep.subr.mxu0 0.0
    %768 = vmatpush2.msra.mxu0 %v533
    %769 = vmatprep.subr.mxu0 0.0
    %770 = vmatpush2.msra.mxu0 %v530
    %771 = vmatprep.mubr.f32.mxu0 %v109
    %772 = vmatmul.mubr.f32.gmra.mxu0 %v108
    %v773 = vpop.f32.mrf.mxu0
    %v774 = vadd.f32 %v590, %v773
    %v775 = vpop.f32.mrf.mxu0
    %776 = vmatprep.mubr.f32.mxu0 %v111
    %777 = vmatmul.mubr.f32.gmra.mxu0 %v110
    %v778 = vpop.f32.mrf.mxu0
    %v779 = vadd.f32 %v590, %v778
    %v780 = vpop.f32.mrf.mxu0
    %781 = vmatprep.mubr.f32.mxu0 %v113
    %782 = vmatmul.mubr.f32.gmra.mxu0 %v112
    %v783 = vpop.f32.mrf.mxu0
    %v784 = vadd.f32 %v590, %v783
    %v785 = vpop.f32.mrf.mxu0
    %786 = vmatprep.mubr.f32.mxu0 %v115
    %787 = vmatmul.mubr.f32.gmra.mxu0 %v114
    %v788 = vpop.f32.mrf.mxu0
    %v789 = vadd.f32 %v590, %v788
    %v790 = vpop.f32.mrf.mxu0
    %791 = vmatprep.mubr.f32.mxu0 %v117
    %792 = vmatmul.mubr.f32.gmra.mxu0 %v116
    %v793 = vpop.f32.mrf.mxu0
    %v794 = vadd.f32 %v590, %v793
    %v795 = vpop.f32.mrf.mxu0
    %796 = vmatprep.mubr.f32.mxu0 %v119
    %797 = vmatmul.mubr.f32.gmra.mxu0 %v118
    %v798 = vpop.f32.mrf.mxu0
    %v799 = vadd.f32 %v590, %v798
    %v800 = vpop.f32.mrf.mxu0
    %801 = vmatprep.mubr.f32.mxu0 %v121
    %802 = vmatmul.mubr.f32.gmra.mxu0 %v120
    %v803 = vpop.f32.mrf.mxu0
    %v804 = vadd.f32 %v590, %v803
    %v805 = vpop.f32.mrf.mxu0
    %806 = vmatprep.mubr.f32.mxu0 %v123
    %807 = vmatmul.mubr.f32.gmra.mxu0 %v122
    %v808 = vpop.f32.mrf.mxu0
    %v809 = vadd.f32 %v590, %v808
    %v810 = vpop.f32.mrf.mxu0
    %811 = vdwg.mxu0
    %812 = vst [vmem:[#allocation6] sm:$0xff] %v661
    %813 = vst [vmem:[#allocation6 + $0x8] sm:$0xff] %v663
    %814 = vst [vmem:[#allocation6 + $0x10] sm:$0xff] %v774
    %815 = vst [vmem:[#allocation6 + $0x18] sm:$0xff] %v667
    %816 = vst [vmem:[#allocation6 + $0x20] sm:$0xff] %v669
    %817 = vst [vmem:[#allocation6 + $0x28] sm:$0xff] %v779
    %818 = vst [vmem:[#allocation6 + $0x30] sm:$0xff] %v673
    %819 = vst [vmem:[#allocation6 + $0x38] sm:$0xff] %v675
    %820 = vst [vmem:[#allocation6 + $0x40] sm:$0xff] %v784
    %821 = vst [vmem:[#allocation6 + $0x48] sm:$0xff] %v679
    %822 = vst [vmem:[#allocation6 + $0x50] sm:$0xff] %v681
    %823 = vst [vmem:[#allocation6 + $0x58] sm:$0xff] %v789
    %824 = vst [vmem:[#allocation6 + $0x60] sm:$0xff] %v685
    %825 = vst [vmem:[#allocation6 + $0x68] sm:$0xff] %v687
    %826 = vst [vmem:[#allocation6 + $0x70] sm:$0xff] %v794
    %827 = vst [vmem:[#allocation6 + $0x78] sm:$0xff] %v691
    %828 = vst [vmem:[#allocation6 + $0x80] sm:$0xff] %v693
    %829 = vst [vmem:[#allocation6 + $0x88] sm:$0xff] %v799
    %830 = vst [vmem:[#allocation6 + $0x90] sm:$0xff] %v697
    %831 = vst [vmem:[#allocation6 + $0x98] sm:$0xff] %v699
    %832 = vst [vmem:[#allocation6 + $0xa0] sm:$0xff] %v804
    %833 = vst [vmem:[#allocation6 + $0xa8] sm:$0xff] %v703
    %834 = vst [vmem:[#allocation6 + $0xb0] sm:$0xff] %v705
    %835 = vst [vmem:[#allocation6 + $0xb8] sm:$0xff] %v809
    %v836 = vld [vmem:[#allocation15] sm:$0xff]
    %v837 = vld [vmem:[#allocation15 + $0x8] sm:$0xff]
    %v838 = vld [vmem:[#allocation15 + $0x10] sm:$0xff]
    %v839 = vld [vmem:[#allocation15 + $0x18] sm:$0xff]
    %v840 = vld [vmem:[#allocation15 + $0x20] sm:$0xff]
    %v841 = vld [vmem:[#allocation15 + $0x28] sm:$0xff]
    %v842 = vld [vmem:[#allocation15 + $0x30] sm:$0xff]
    %v843 = vld [vmem:[#allocation15 + $0x38] sm:$0xff]
    %v844 = vld [vmem:[#allocation15 + $0x40] sm:$0xff]
    %v845 = vld [vmem:[#allocation15 + $0x48] sm:$0xff]
    %v846 = vld [vmem:[#allocation15 + $0x50] sm:$0xff]
    %v847 = vld [vmem:[#allocation15 + $0x58] sm:$0xff]
    %v848 = vld [vmem:[#allocation15 + $0x60] sm:$0xff]
    %v849 = vld [vmem:[#allocation15 + $0x68] sm:$0xff]
    %v850 = vld [vmem:[#allocation15 + $0x70] sm:$0xff]
    %v851 = vld [vmem:[#allocation15 + $0x78] sm:$0xff]
    %v852 = vld [vmem:[#allocation15 + $0x80] sm:$0xff]
    %v853 = vld [vmem:[#allocation15 + $0x88] sm:$0xff]
    %v854 = vld [vmem:[#allocation15 + $0x90] sm:$0xff]
    %v855 = vld [vmem:[#allocation15 + $0x98] sm:$0xff]
    %v856 = vld [vmem:[#allocation15 + $0xa0] sm:$0xff]
    %v857 = vld [vmem:[#allocation15 + $0xa8] sm:$0xff]
    %v858 = vld [vmem:[#allocation15 + $0xb0] sm:$0xff]
    %v859 = vld [vmem:[#allocation15 + $0xb8] sm:$0xff]
    %v860 = vld [vmem:[#allocation15 + $0xc0] sm:$0xff]
    %v861 = vld [vmem:[#allocation15 + $0xc8] sm:$0xff]
    %v862 = vld [vmem:[#allocation15 + $0xd0] sm:$0xff]
    %v863 = vld [vmem:[#allocation15 + $0xd8] sm:$0xff]
    %v864 = vld [vmem:[#allocation15 + $0xe0] sm:$0xff]
    %v865 = vld [vmem:[#allocation15 + $0xe8] sm:$0xff]
    %v866 = vld [vmem:[#allocation15 + $0xf0] sm:$0xff]
    %v867 = vld [vmem:[#allocation15 + $0xf8] sm:$0xff]
    %v868 = vld [vmem:[#allocation15 + $0x100] sm:$0xff]
    %v869 = vld [vmem:[#allocation15 + $0x108] sm:$0xff]
    %v870 = vld [vmem:[#allocation15 + $0x110] sm:$0xff]
    %v871 = vld [vmem:[#allocation15 + $0x118] sm:$0xff]
    %v872 = vld [vmem:[#allocation15 + $0x120] sm:$0xff]
    %v873 = vld [vmem:[#allocation15 + $0x128] sm:$0xff]
    %v874 = vld [vmem:[#allocation15 + $0x130] sm:$0xff]
    %v875 = vld [vmem:[#allocation15 + $0x138] sm:$0xff]
    %v876 = vld [vmem:[#allocation15 + $0x140] sm:$0xff]
    %v877 = vld [vmem:[#allocation15 + $0x148] sm:$0xff]
    %v878 = vld [vmem:[#allocation15 + $0x150] sm:$0xff]
    %v879 = vld [vmem:[#allocation15 + $0x158] sm:$0xff]
    %v880 = vld [vmem:[#allocation15 + $0x160] sm:$0xff]
    %v881 = vld [vmem:[#allocation15 + $0x168] sm:$0xff]
    %v882 = vld [vmem:[#allocation15 + $0x170] sm:$0xff]
    %v883 = vld [vmem:[#allocation15 + $0x178] sm:$0xff]
    %s884 = scalar_lea.vmem [#allocation15], 384
    %v885 = vld [vmem:[%s884] sm:$0xff]
    %v886 = vld [vmem:[%s884 + $0x8] sm:$0xff]
    %v887 = vld [vmem:[%s884 + $0x10] sm:$0xff]
    %v888 = vld [vmem:[%s884 + $0x18] sm:$0xff]
    %v889 = vld [vmem:[%s884 + $0x20] sm:$0xff]
    %v890 = vld [vmem:[%s884 + $0x28] sm:$0xff]
    %v891 = vld [vmem:[%s884 + $0x30] sm:$0xff]
    %v892 = vld [vmem:[%s884 + $0x38] sm:$0xff]
    %v893 = vld [vmem:[%s884 + $0x40] sm:$0xff]
    %v894 = vld [vmem:[%s884 + $0x48] sm:$0xff]
    %v895 = vld [vmem:[%s884 + $0x50] sm:$0xff]
    %v896 = vld [vmem:[%s884 + $0x58] sm:$0xff]
    %v897 = vld [vmem:[%s884 + $0x60] sm:$0xff]
    %v898 = vld [vmem:[%s884 + $0x68] sm:$0xff]
    %v899 = vld [vmem:[%s884 + $0x70] sm:$0xff]
    %v900 = vld [vmem:[%s884 + $0x78] sm:$0xff]
    %v901 = vld [vmem:[%s884 + $0x80] sm:$0xff]
    %v902 = vld [vmem:[%s884 + $0x88] sm:$0xff]
    %v903 = vld [vmem:[%s884 + $0x90] sm:$0xff]
    %v904 = vld [vmem:[%s884 + $0x98] sm:$0xff]
    %v905 = vld [vmem:[%s884 + $0xa0] sm:$0xff]
    %v906 = vld [vmem:[%s884 + $0xa8] sm:$0xff]
    %v907 = vld [vmem:[%s884 + $0xb0] sm:$0xff]
    %v908 = vld [vmem:[%s884 + $0xb8] sm:$0xff]
    %v909 = vld [vmem:[%s884 + $0xc0] sm:$0xff]
    %v910 = vld [vmem:[%s884 + $0xc8] sm:$0xff]
    %v911 = vld [vmem:[%s884 + $0xd0] sm:$0xff]
    %v912 = vld [vmem:[%s884 + $0xd8] sm:$0xff]
    %v913 = vld [vmem:[%s884 + $0xe0] sm:$0xff]
    %v914 = vld [vmem:[%s884 + $0xe8] sm:$0xff]
    %v915 = vld [vmem:[%s884 + $0xf0] sm:$0xff]
    %v916 = vld [vmem:[%s884 + $0xf8] sm:$0xff]
    %v917 = vld [vmem:[%s884 + $0x100] sm:$0xff]
    %v918 = vld [vmem:[%s884 + $0x108] sm:$0xff]
    %v919 = vld [vmem:[%s884 + $0x110] sm:$0xff]
    %v920 = vld [vmem:[%s884 + $0x118] sm:$0xff]
    %v921 = vld [vmem:[%s884 + $0x120] sm:$0xff]
    %v922 = vld [vmem:[%s884 + $0x128] sm:$0xff]
    %v923 = vld [vmem:[%s884 + $0x130] sm:$0xff]
    %v924 = vld [vmem:[%s884 + $0x138] sm:$0xff]
    %v925 = vld [vmem:[%s884 + $0x140] sm:$0xff]
    %v926 = vld [vmem:[%s884 + $0x148] sm:$0xff]
    %v927 = vld [vmem:[%s884 + $0x150] sm:$0xff]
    %v928 = vld [vmem:[%s884 + $0x158] sm:$0xff]
    %v929 = vld [vmem:[%s884 + $0x160] sm:$0xff]
    %v930 = vld [vmem:[%s884 + $0x168] sm:$0xff]
    %v931 = vld [vmem:[%s884 + $0x170] sm:$0xff]
    %v932 = vld [vmem:[%s884 + $0x178] sm:$0xff]
    %v933 = vld [vmem:[#allocation17] sm:$0x7]
    %s934 = scalar_lea.vmem [#allocation17], 3
    %v935 = vld [vmem:[%s934] sm:$0x7]
    %936 = vst [vmem:[#allocation7] sm:$0xff] 0.0
    %937 = vst [vmem:[#allocation8] sm:$0xff] 0.0
    %v938 = vld [vmem:[#allocation7] sm:$0xff]
    %v939 = vld [vmem:[#allocation8] sm:$0xff]
    %v941 = vlaneseq
    %v942 = vshrl.u32 %v941, 7
    %v943 = vsub.s32 0, %v942
    %v944 = vrot.slane %v933, %v943
    %v945 = vlaneseq
    %v946 = vshrl.u32 %v945, 7
    %v947 = vsub.s32 1, %v946
    %v948 = vrot.slane %v933, %v947
    %v949 = vlaneseq
    %v950 = vshrl.u32 %v949, 7
    %v951 = vsub.s32 2, %v950
    %v952 = vrot.slane %v933, %v951
    %956 = vmatprep.subr.mxu0 %v882
    %957 = vmatpush1.msra.mxu0 %v881
    %958 = vmatprep.subr.mxu0 %v879
    %959 = vmatpush1.msra.mxu0 %v878
    %960 = vmatprep.subr.mxu0 %v876
    %961 = vmatpush1.msra.mxu0 %v875
    %962 = vmatprep.subr.mxu0 %v873
    %963 = vmatpush1.msra.mxu0 %v872
    %964 = vmatprep.subr.mxu0 %v870
    %965 = vmatpush1.msra.mxu0 %v869
    %966 = vmatprep.subr.mxu0 %v867
    %967 = vmatpush1.msra.mxu0 %v866
    %968 = vmatprep.subr.mxu0 %v864
    %969 = vmatpush1.msra.mxu0 %v863
    %970 = vmatprep.subr.mxu0 %v861
    %971 = vmatpush1.msra.mxu0 %v860
    %972 = vmatprep.subr.mxu0 %v858
    %973 = vmatpush1.msra.mxu0 %v857
    %974 = vmatprep.subr.mxu0 %v855
    %975 = vmatpush1.msra.mxu0 %v854
    %976 = vmatprep.subr.mxu0 %v852
    %977 = vmatpush1.msra.mxu0 %v851
    %978 = vmatprep.subr.mxu0 %v849
    %979 = vmatpush1.msra.mxu0 %v848
    %980 = vmatprep.subr.mxu0 %v846
    %981 = vmatpush1.msra.mxu0 %v845
    %982 = vmatprep.subr.mxu0 %v843
    %983 = vmatpush1.msra.mxu0 %v842
    %984 = vmatprep.subr.mxu0 %v840
    %985 = vmatpush1.msra.mxu0 %v839
    %986 = vmatprep.subr.mxu0 %v837
    %987 = vmatpush1.msra.mxu0 %v836
    %988 = vmatprep.subr.mxu0 0.0
    %989 = vmatpush2.msra.mxu0 0.0
    %990 = vmatprep.subr.mxu0 0.0
    %991 = vmatpush2.msra.mxu0 0.0
    %992 = vmatprep.subr.mxu0 0.0
    %993 = vmatpush2.msra.mxu0 0.0
    %994 = vmatprep.subr.mxu0 0.0
    %995 = vmatpush2.msra.mxu0 0.0
    %996 = vmatprep.subr.mxu0 0.0
    %997 = vmatpush2.msra.mxu0 0.0
    %998 = vmatprep.subr.mxu0 0.0
    %999 = vmatpush2.msra.mxu0 0.0
    %1000 = vmatprep.subr.mxu0 0.0
    %1001 = vmatpush2.msra.mxu0 0.0
    %1002 = vmatprep.subr.mxu0 0.0
    %1003 = vmatpush2.msra.mxu0 0.0
    %1004 = vmatprep.subr.mxu0 0.0
    %1005 = vmatpush2.msra.mxu0 0.0
    %1006 = vmatprep.subr.mxu0 0.0
    %1007 = vmatpush2.msra.mxu0 0.0
    %1008 = vmatprep.subr.mxu0 0.0
    %1009 = vmatpush2.msra.mxu0 0.0
    %1010 = vmatprep.subr.mxu0 0.0
    %1011 = vmatpush2.msra.mxu0 0.0
    %1012 = vmatprep.subr.mxu0 0.0
    %1013 = vmatpush2.msra.mxu0 0.0
    %1014 = vmatprep.subr.mxu0 0.0
    %1015 = vmatpush2.msra.mxu0 0.0
    %1016 = vmatprep.subr.mxu0 0.0
    %1017 = vmatpush2.msra.mxu0 0.0
    %1018 = vmatprep.subr.mxu0 0.0
    %1019 = vmatpush2.msra.mxu0 0.0
    %1020 = vmatprep.mubr.f32.mxu0 0.0
    %1021 = vmatmul.mubr.f32.gmra.mxu0 %v938
    %v1022 = vpop.f32.mrf.mxu0
    %v1023 = vadd.f32 %v944, %v1022
    %v1024 = vpop.f32.mrf.mxu0
    %v1025 = vadd.f32 %v948, %v1024
    %1026 = vdwg.mxu0
    %1027 = vmatprep.subr.mxu0 0.0
    %1028 = vmatpush1.msra.mxu0 %v883
    %1029 = vmatprep.subr.mxu0 0.0
    %1030 = vmatpush1.msra.mxu0 %v880
    %1031 = vmatprep.subr.mxu0 0.0
    %1032 = vmatpush1.msra.mxu0 %v877
    %1033 = vmatprep.subr.mxu0 0.0
    %1034 = vmatpush1.msra.mxu0 %v874
    %1035 = vmatprep.subr.mxu0 0.0
    %1036 = vmatpush1.msra.mxu0 %v871
    %1037 = vmatprep.subr.mxu0 0.0
    %1038 = vmatpush1.msra.mxu0 %v868
    %1039 = vmatprep.subr.mxu0 0.0
    %1040 = vmatpush1.msra.mxu0 %v865
    %1041 = vmatprep.subr.mxu0 0.0
    %1042 = vmatpush1.msra.mxu0 %v862
    %1043 = vmatprep.subr.mxu0 0.0
    %1044 = vmatpush1.msra.mxu0 %v859
    %1045 = vmatprep.subr.mxu0 0.0
    %1046 = vmatpush1.msra.mxu0 %v856
    %1047 = vmatprep.subr.mxu0 0.0
    %1048 = vmatpush1.msra.mxu0 %v853
    %1049 = vmatprep.subr.mxu0 0.0
    %1050 = vmatpush1.msra.mxu0 %v850
    %1051 = vmatprep.subr.mxu0 0.0
    %1052 = vmatpush1.msra.mxu0 %v847
    %1053 = vmatprep.subr.mxu0 0.0
    %1054 = vmatpush1.msra.mxu0 %v844
    %1055 = vmatprep.subr.mxu0 0.0
    %1056 = vmatpush1.msra.mxu0 %v841
    %1057 = vmatprep.subr.mxu0 0.0
    %1058 = vmatpush1.msra.mxu0 %v838
    %1059 = vmatprep.subr.mxu0 0.0
    %1060 = vmatpush2.msra.mxu0 0.0
    %1061 = vmatprep.subr.mxu0 0.0
    %1062 = vmatpush2.msra.mxu0 0.0
    %1063 = vmatprep.subr.mxu0 0.0
    %1064 = vmatpush2.msra.mxu0 0.0
    %1065 = vmatprep.subr.mxu0 0.0
    %1066 = vmatpush2.msra.mxu0 0.0
    %1067 = vmatprep.subr.mxu0 0.0
    %1068 = vmatpush2.msra.mxu0 0.0
    %1069 = vmatprep.subr.mxu0 0.0
    %1070 = vmatpush2.msra.mxu0 0.0
    %1071 = vmatprep.subr.mxu0 0.0
    %1072 = vmatpush2.msra.mxu0 0.0
    %1073 = vmatprep.subr.mxu0 0.0
    %1074 = vmatpush2.msra.mxu0 0.0
    %1075 = vmatprep.subr.mxu0 0.0
    %1076 = vmatpush2.msra.mxu0 0.0
    %1077 = vmatprep.subr.mxu0 0.0
    %1078 = vmatpush2.msra.mxu0 0.0
    %1079 = vmatprep.subr.mxu0 0.0
    %1080 = vmatpush2.msra.mxu0 0.0
    %1081 = vmatprep.subr.mxu0 0.0
    %1082 = vmatpush2.msra.mxu0 0.0
    %1083 = vmatprep.subr.mxu0 0.0
    %1084 = vmatpush2.msra.mxu0 0.0
    %1085 = vmatprep.subr.mxu0 0.0
    %1086 = vmatpush2.msra.mxu0 0.0
    %1087 = vmatprep.subr.mxu0 0.0
    %1088 = vmatpush2.msra.mxu0 0.0
    %1089 = vmatprep.subr.mxu0 0.0
    %1090 = vmatpush2.msra.mxu0 0.0
    %1091 = vmatprep.mubr.f32.mxu0 0.0
    %1092 = vmatmul.mubr.f32.gmra.mxu0 %v938
    %v1093 = vpop.f32.mrf.mxu0
    %v1094 = vadd.f32 %v952, %v1093
    %v1095 = vpop.f32.mrf.mxu0
    %1096 = vdwg.mxu0
    %v1098 = vlaneseq
    %v1099 = vshrl.u32 %v1098, 7
    %v1100 = vsub.s32 0, %v1099
    %v1101 = vrot.slane %v935, %v1100
    %v1102 = vlaneseq
    %v1103 = vshrl.u32 %v1102, 7
    %v1104 = vsub.s32 1, %v1103
    %v1105 = vrot.slane %v935, %v1104
    %v1106 = vlaneseq
    %v1107 = vshrl.u32 %v1106, 7
    %v1108 = vsub.s32 2, %v1107
    %v1109 = vrot.slane %v935, %v1108
    %1113 = vmatprep.subr.mxu0 %v931
    %1114 = vmatpush1.msra.mxu0 %v930
    %1115 = vmatprep.subr.mxu0 %v928
    %1116 = vmatpush1.msra.mxu0 %v927
    %1117 = vmatprep.subr.mxu0 %v925
    %1118 = vmatpush1.msra.mxu0 %v924
    %1119 = vmatprep.subr.mxu0 %v922
    %1120 = vmatpush1.msra.mxu0 %v921
    %1121 = vmatprep.subr.mxu0 %v919
    %1122 = vmatpush1.msra.mxu0 %v918
    %1123 = vmatprep.subr.mxu0 %v916
    %1124 = vmatpush1.msra.mxu0 %v915
    %1125 = vmatprep.subr.mxu0 %v913
    %1126 = vmatpush1.msra.mxu0 %v912
    %1127 = vmatprep.subr.mxu0 %v910
    %1128 = vmatpush1.msra.mxu0 %v909
    %1129 = vmatprep.subr.mxu0 %v907
    %1130 = vmatpush1.msra.mxu0 %v906
    %1131 = vmatprep.subr.mxu0 %v904
    %1132 = vmatpush1.msra.mxu0 %v903
    %1133 = vmatprep.subr.mxu0 %v901
    %1134 = vmatpush1.msra.mxu0 %v900
    %1135 = vmatprep.subr.mxu0 %v898
    %1136 = vmatpush1.msra.mxu0 %v897
    %1137 = vmatprep.subr.mxu0 %v895
    %1138 = vmatpush1.msra.mxu0 %v894
    %1139 = vmatprep.subr.mxu0 %v892
    %1140 = vmatpush1.msra.mxu0 %v891
    %1141 = vmatprep.subr.mxu0 %v889
    %1142 = vmatpush1.msra.mxu0 %v888
    %1143 = vmatprep.subr.mxu0 %v886
    %1144 = vmatpush1.msra.mxu0 %v885
    %1145 = vmatprep.subr.mxu0 0.0
    %1146 = vmatpush2.msra.mxu0 0.0
    %1147 = vmatprep.subr.mxu0 0.0
    %1148 = vmatpush2.msra.mxu0 0.0
    %1149 = vmatprep.subr.mxu0 0.0
    %1150 = vmatpush2.msra.mxu0 0.0
    %1151 = vmatprep.subr.mxu0 0.0
    %1152 = vmatpush2.msra.mxu0 0.0
    %1153 = vmatprep.subr.mxu0 0.0
    %1154 = vmatpush2.msra.mxu0 0.0
    %1155 = vmatprep.subr.mxu0 0.0
    %1156 = vmatpush2.msra.mxu0 0.0
    %1157 = vmatprep.subr.mxu0 0.0
    %1158 = vmatpush2.msra.mxu0 0.0
    %1159 = vmatprep.subr.mxu0 0.0
    %1160 = vmatpush2.msra.mxu0 0.0
    %1161 = vmatprep.subr.mxu0 0.0
    %1162 = vmatpush2.msra.mxu0 0.0
    %1163 = vmatprep.subr.mxu0 0.0
    %1164 = vmatpush2.msra.mxu0 0.0
    %1165 = vmatprep.subr.mxu0 0.0
    %1166 = vmatpush2.msra.mxu0 0.0
    %1167 = vmatprep.subr.mxu0 0.0
    %1168 = vmatpush2.msra.mxu0 0.0
    %1169 = vmatprep.subr.mxu0 0.0
    %1170 = vmatpush2.msra.mxu0 0.0
    %1171 = vmatprep.subr.mxu0 0.0
    %1172 = vmatpush2.msra.mxu0 0.0
    %1173 = vmatprep.subr.mxu0 0.0
    %1174 = vmatpush2.msra.mxu0 0.0
    %1175 = vmatprep.subr.mxu0 0.0
    %1176 = vmatpush2.msra.mxu0 0.0
    %1177 = vmatprep.mubr.f32.mxu0 0.0
    %1178 = vmatmul.mubr.f32.gmra.mxu0 %v939
    %v1179 = vpop.f32.mrf.mxu0
    %v1180 = vadd.f32 %v1101, %v1179
    %v1181 = vpop.f32.mrf.mxu0
    %v1182 = vadd.f32 %v1105, %v1181
    %1183 = vdwg.mxu0
    %1184 = vmatprep.subr.mxu0 0.0
    %1185 = vmatpush1.msra.mxu0 %v932
    %1186 = vmatprep.subr.mxu0 0.0
    %1187 = vmatpush1.msra.mxu0 %v929
    %1188 = vmatprep.subr.mxu0 0.0
    %1189 = vmatpush1.msra.mxu0 %v926
    %1190 = vmatprep.subr.mxu0 0.0
    %1191 = vmatpush1.msra.mxu0 %v923
    %1192 = vmatprep.subr.mxu0 0.0
    %1193 = vmatpush1.msra.mxu0 %v920
    %1194 = vmatprep.subr.mxu0 0.0
    %1195 = vmatpush1.msra.mxu0 %v917
    %1196 = vmatprep.subr.mxu0 0.0
    %1197 = vmatpush1.msra.mxu0 %v914
    %1198 = vmatprep.subr.mxu0 0.0
    %1199 = vmatpush1.msra.mxu0 %v911
    %1200 = vmatprep.subr.mxu0 0.0
    %1201 = vmatpush1.msra.mxu0 %v908
    %1202 = vmatprep.subr.mxu0 0.0
    %1203 = vmatpush1.msra.mxu0 %v905
    %1204 = vmatprep.subr.mxu0 0.0
    %1205 = vmatpush1.msra.mxu0 %v902
    %1206 = vmatprep.subr.mxu0 0.0
    %1207 = vmatpush1.msra.mxu0 %v899
    %1208 = vmatprep.subr.mxu0 0.0
    %1209 = vmatpush1.msra.mxu0 %v896
    %1210 = vmatprep.subr.mxu0 0.0
    %1211 = vmatpush1.msra.mxu0 %v893
    %1212 = vmatprep.subr.mxu0 0.0
    %1213 = vmatpush1.msra.mxu0 %v890
    %1214 = vmatprep.subr.mxu0 0.0
    %1215 = vmatpush1.msra.mxu0 %v887
    %1216 = vmatprep.subr.mxu0 0.0
    %1217 = vmatpush2.msra.mxu0 0.0
    %1218 = vmatprep.subr.mxu0 0.0
    %1219 = vmatpush2.msra.mxu0 0.0
    %1220 = vmatprep.subr.mxu0 0.0
    %1221 = vmatpush2.msra.mxu0 0.0
    %1222 = vmatprep.subr.mxu0 0.0
    %1223 = vmatpush2.msra.mxu0 0.0
    %1224 = vmatprep.subr.mxu0 0.0
    %1225 = vmatpush2.msra.mxu0 0.0
    %1226 = vmatprep.subr.mxu0 0.0
    %1227 = vmatpush2.msra.mxu0 0.0
    %1228 = vmatprep.subr.mxu0 0.0
    %1229 = vmatpush2.msra.mxu0 0.0
    %1230 = vmatprep.subr.mxu0 0.0
    %1231 = vmatpush2.msra.mxu0 0.0
    %1232 = vmatprep.subr.mxu0 0.0
    %1233 = vmatpush2.msra.mxu0 0.0
    %1234 = vmatprep.subr.mxu0 0.0
    %1235 = vmatpush2.msra.mxu0 0.0
    %1236 = vmatprep.subr.mxu0 0.0
    %1237 = vmatpush2.msra.mxu0 0.0
    %1238 = vmatprep.subr.mxu0 0.0
    %1239 = vmatpush2.msra.mxu0 0.0
    %1240 = vmatprep.subr.mxu0 0.0
    %1241 = vmatpush2.msra.mxu0 0.0
    %1242 = vmatprep.subr.mxu0 0.0
    %1243 = vmatpush2.msra.mxu0 0.0
    %1244 = vmatprep.subr.mxu0 0.0
    %1245 = vmatpush2.msra.mxu0 0.0
    %1246 = vmatprep.subr.mxu0 0.0
    %1247 = vmatpush2.msra.mxu0 0.0
    %1248 = vmatprep.mubr.f32.mxu0 0.0
    %1249 = vmatmul.mubr.f32.gmra.mxu0 %v939
    %v1250 = vpop.f32.mrf.mxu0
    %v1251 = vadd.f32 %v1109, %v1250
    %v1252 = vpop.f32.mrf.mxu0
    %1253 = vdwg.mxu0
    %s1254 = smul.u32 0, 3
    %s1255 = smul.addr %s1254, 8
    %s1256 = scalar_lea.vmem [#allocation5], %s1255
    %v1257 = vld [vmem:[%s1256] sm:$0xff]
    %v1258 = vld [vmem:[%s1256 + $0x8] sm:$0xff]
    %v1259 = vld [vmem:[%s1256 + $0x10] sm:$0xff]
    %v1260 = vadd.f32 %v1257, %v1023
    %v1261 = vxor.u32 %v1260, 2147483648
    %v1262 = vmul.f32 %v1261, 1.442695
    %v1263 = vpow.pop %v1262
    %v1264 = vadd.f32 %v1263, 1.0
    %v1265 = vrcp.pop %v1264
    %v1266 = vmul.f32 1.0, %v1265
    %v1267 = vadd.f32 %v1258, %v1025
    %v1268 = vxor.u32 %v1267, 2147483648
    %v1269 = vmul.f32 %v1268, 1.442695
    %v1270 = vpow.pop %v1269
    %v1271 = vadd.f32 %v1270, 1.0
    %v1272 = vrcp.pop %v1271
    %v1273 = vmul.f32 1.0, %v1272
    %v1274 = vmul.f32 %v1266, %v1094
    %v1275 = vadd.f32 %v1259, %v1274
    %v1276 = vtanh.pop %v1275
    %v1277 = vsub.f32 1.0, %v1273
    %v1278 = vmul.f32 %v1277, %v1276
    %v1279 = vmul.f32 %v1273, %v938
    %v1280 = vadd.f32 %v1278, %v1279
    %s1281 = smul.u32 7, 3
    %s1282 = smul.addr %s1281, 8
    %s1283 = scalar_lea.vmem [#allocation6], %s1282
    %v1284 = vld [vmem:[%s1283] sm:$0xff]
    %v1285 = vld [vmem:[%s1283 + $0x8] sm:$0xff]
    %v1286 = vld [vmem:[%s1283 + $0x10] sm:$0xff]
    %v1287 = vadd.f32 %v1284, %v1180
    %v1288 = vxor.u32 %v1287, 2147483648
    %v1289 = vmul.f32 %v1288, 1.442695
    %v1290 = vpow.pop %v1289
    %v1291 = vadd.f32 %v1290, 1.0
    %v1292 = vrcp.pop %v1291
    %v1293 = vmul.f32 1.0, %v1292
    %v1294 = vadd.f32 %v1285, %v1182
    %v1295 = vxor.u32 %v1294, 2147483648
    %v1296 = vmul.f32 %v1295, 1.442695
    %v1297 = vpow.pop %v1296
    %v1298 = vadd.f32 %v1297, 1.0
    %v1299 = vrcp.pop %v1298
    %v1300 = vmul.f32 1.0, %v1299
    %v1301 = vmul.f32 %v1293, %v1251
    %v1302 = vadd.f32 %v1286, %v1301
    %v1303 = vtanh.pop %v1302
    %v1304 = vsub.f32 1.0, %v1300
    %v1305 = vmul.f32 %v1304, %v1303
    %v1306 = vmul.f32 %v1300, %v939
    %v1307 = vadd.f32 %v1305, %v1306
    %1308 = vst [vmem:[#allocation7] sm:$0xff] %v1280
    %1309 = vst [vmem:[#allocation8] sm:$0xff] %v1307
    %1310 = vst [vmem:[#allocation3] sm:$0xff] %v1280
    %s1311 = scalar_lea.vmem [#allocation4], 56
    %1312 = vst [vmem:[%s1311] sm:$0xff] %v1307
    %v1313 = vld [vmem:[#allocation7] sm:$0xff]
    %v1314 = vld [vmem:[#allocation8] sm:$0xff]
    %1315 = vmatprep.subr.mxu0 %v882
    %1316 = vmatpush1.msra.mxu0 %v881
    %1317 = vmatprep.subr.mxu0 %v879
    %1318 = vmatpush1.msra.mxu0 %v878
    %1319 = vmatprep.subr.mxu0 %v876
    %1320 = vmatpush1.msra.mxu0 %v875
    %1321 = vmatprep.subr.mxu0 %v873
    %1322 = vmatpush1.msra.mxu0 %v872
    %1323 = vmatprep.subr.mxu0 %v870
    %1324 = vmatpush1.msra.mxu0 %v869
    %1325 = vmatprep.subr.mxu0 %v867
    %1326 = vmatpush1.msra.mxu0 %v866
    %1327 = vmatprep.subr.mxu0 %v864
    %1328 = vmatpush1.msra.mxu0 %v863
    %1329 = vmatprep.subr.mxu0 %v861
    %1330 = vmatpush1.msra.mxu0 %v860
    %1331 = vmatprep.subr.mxu0 %v858
    %1332 = vmatpush1.msra.mxu0 %v857
    %1333 = vmatprep.subr.mxu0 %v855
    %1334 = vmatpush1.msra.mxu0 %v854
    %1335 = vmatprep.subr.mxu0 %v852
    %1336 = vmatpush1.msra.mxu0 %v851
    %1337 = vmatprep.subr.mxu0 %v849
    %1338 = vmatpush1.msra.mxu0 %v848
    %1339 = vmatprep.subr.mxu0 %v846
    %1340 = vmatpush1.msra.mxu0 %v845
    %1341 = vmatprep.subr.mxu0 %v843
    %1342 = vmatpush1.msra.mxu0 %v842
    %1343 = vmatprep.subr.mxu0 %v840
    %1344 = vmatpush1.msra.mxu0 %v839
    %1345 = vmatprep.subr.mxu0 %v837
    %1346 = vmatpush1.msra.mxu0 %v836
    %1347 = vmatprep.subr.mxu0 0.0
    %1348 = vmatpush2.msra.mxu0 0.0
    %1349 = vmatprep.subr.mxu0 0.0
    %1350 = vmatpush2.msra.mxu0 0.0
    %1351 = vmatprep.subr.mxu0 0.0
    %1352 = vmatpush2.msra.mxu0 0.0
    %1353 = vmatprep.subr.mxu0 0.0
    %1354 = vmatpush2.msra.mxu0 0.0
    %1355 = vmatprep.subr.mxu0 0.0
    %1356 = vmatpush2.msra.mxu0 0.0
    %1357 = vmatprep.subr.mxu0 0.0
    %1358 = vmatpush2.msra.mxu0 0.0
    %1359 = vmatprep.subr.mxu0 0.0
    %1360 = vmatpush2.msra.mxu0 0.0
    %1361 = vmatprep.subr.mxu0 0.0
    %1362 = vmatpush2.msra.mxu0 0.0
    %1363 = vmatprep.subr.mxu0 0.0
    %1364 = vmatpush2.msra.mxu0 0.0
    %1365 = vmatprep.subr.mxu0 0.0
    %1366 = vmatpush2.msra.mxu0 0.0
    %1367 = vmatprep.subr.mxu0 0.0
    %1368 = vmatpush2.msra.mxu0 0.0
    %1369 = vmatprep.subr.mxu0 0.0
    %1370 = vmatpush2.msra.mxu0 0.0
    %1371 = vmatprep.subr.mxu0 0.0
    %1372 = vmatpush2.msra.mxu0 0.0
    %1373 = vmatprep.subr.mxu0 0.0
    %1374 = vmatpush2.msra.mxu0 0.0
    %1375 = vmatprep.subr.mxu0 0.0
    %1376 = vmatpush2.msra.mxu0 0.0
    %1377 = vmatprep.subr.mxu0 0.0
    %1378 = vmatpush2.msra.mxu0 0.0
    %1379 = vmatprep.mubr.f32.mxu0 0.0
    %1380 = vmatmul.mubr.f32.gmra.mxu0 %v1313
    %v1381 = vpop.f32.mrf.mxu0
    %v1382 = vadd.f32 %v944, %v1381
    %v1383 = vpop.f32.mrf.mxu0
    %v1384 = vadd.f32 %v948, %v1383
    %1385 = vdwg.mxu0
    %1386 = vmatprep.subr.mxu0 0.0
    %1387 = vmatpush1.msra.mxu0 %v883
    %1388 = vmatprep.subr.mxu0 0.0
    %1389 = vmatpush1.msra.mxu0 %v880
    %1390 = vmatprep.subr.mxu0 0.0
    %1391 = vmatpush1.msra.mxu0 %v877
    %1392 = vmatprep.subr.mxu0 0.0
    %1393 = vmatpush1.msra.mxu0 %v874
    %1394 = vmatprep.subr.mxu0 0.0
    %1395 = vmatpush1.msra.mxu0 %v871
    %1396 = vmatprep.subr.mxu0 0.0
    %1397 = vmatpush1.msra.mxu0 %v868
    %1398 = vmatprep.subr.mxu0 0.0
    %1399 = vmatpush1.msra.mxu0 %v865
    %1400 = vmatprep.subr.mxu0 0.0
    %1401 = vmatpush1.msra.mxu0 %v862
    %1402 = vmatprep.subr.mxu0 0.0
    %1403 = vmatpush1.msra.mxu0 %v859
    %1404 = vmatprep.subr.mxu0 0.0
    %1405 = vmatpush1.msra.mxu0 %v856
    %1406 = vmatprep.subr.mxu0 0.0
    %1407 = vmatpush1.msra.mxu0 %v853
    %1408 = vmatprep.subr.mxu0 0.0
    %1409 = vmatpush1.msra.mxu0 %v850
    %1410 = vmatprep.subr.mxu0 0.0
    %1411 = vmatpush1.msra.mxu0 %v847
    %1412 = vmatprep.subr.mxu0 0.0
    %1413 = vmatpush1.msra.mxu0 %v844
    %1414 = vmatprep.subr.mxu0 0.0
    %1415 = vmatpush1.msra.mxu0 %v841
    %1416 = vmatprep.subr.mxu0 0.0
    %1417 = vmatpush1.msra.mxu0 %v838
    %1418 = vmatprep.subr.mxu0 0.0
    %1419 = vmatpush2.msra.mxu0 0.0
    %1420 = vmatprep.subr.mxu0 0.0
    %1421 = vmatpush2.msra.mxu0 0.0
    %1422 = vmatprep.subr.mxu0 0.0
    %1423 = vmatpush2.msra.mxu0 0.0
    %1424 = vmatprep.subr.mxu0 0.0
    %1425 = vmatpush2.msra.mxu0 0.0
    %1426 = vmatprep.subr.mxu0 0.0
    %1427 = vmatpush2.msra.mxu0 0.0
    %1428 = vmatprep.subr.mxu0 0.0
    %1429 = vmatpush2.msra.mxu0 0.0
    %1430 = vmatprep.subr.mxu0 0.0
    %1431 = vmatpush2.msra.mxu0 0.0
    %1432 = vmatprep.subr.mxu0 0.0
    %1433 = vmatpush2.msra.mxu0 0.0
    %1434 = vmatprep.subr.mxu0 0.0
    %1435 = vmatpush2.msra.mxu0 0.0
    %1436 = vmatprep.subr.mxu0 0.0
    %1437 = vmatpush2.msra.mxu0 0.0
    %1438 = vmatprep.subr.mxu0 0.0
    %1439 = vmatpush2.msra.mxu0 0.0
    %1440 = vmatprep.subr.mxu0 0.0
    %1441 = vmatpush2.msra.mxu0 0.0
    %1442 = vmatprep.subr.mxu0 0.0
    %1443 = vmatpush2.msra.mxu0 0.0
    %1444 = vmatprep.subr.mxu0 0.0
    %1445 = vmatpush2.msra.mxu0 0.0
    %1446 = vmatprep.subr.mxu0 0.0
    %1447 = vmatpush2.msra.mxu0 0.0
    %1448 = vmatprep.subr.mxu0 0.0
    %1449 = vmatpush2.msra.mxu0 0.0
    %1450 = vmatprep.mubr.f32.mxu0 0.0
    %1451 = vmatmul.mubr.f32.gmra.mxu0 %v1313
    %v1452 = vpop.f32.mrf.mxu0
    %v1453 = vadd.f32 %v952, %v1452
    %v1454 = vpop.f32.mrf.mxu0
    %1455 = vdwg.mxu0
    %1456 = vmatprep.subr.mxu0 %v931
    %1457 = vmatpush1.msra.mxu0 %v930
    %1458 = vmatprep.subr.mxu0 %v928
    %1459 = vmatpush1.msra.mxu0 %v927
    %1460 = vmatprep.subr.mxu0 %v925
    %1461 = vmatpush1.msra.mxu0 %v924
    %1462 = vmatprep.subr.mxu0 %v922
    %1463 = vmatpush1.msra.mxu0 %v921
    %1464 = vmatprep.subr.mxu0 %v919
    %1465 = vmatpush1.msra.mxu0 %v918
    %1466 = vmatprep.subr.mxu0 %v916
    %1467 = vmatpush1.msra.mxu0 %v915
    %1468 = vmatprep.subr.mxu0 %v913
    %1469 = vmatpush1.msra.mxu0 %v912
    %1470 = vmatprep.subr.mxu0 %v910
    %1471 = vmatpush1.msra.mxu0 %v909
    %1472 = vmatprep.subr.mxu0 %v907
    %1473 = vmatpush1.msra.mxu0 %v906
    %1474 = vmatprep.subr.mxu0 %v904
    %1475 = vmatpush1.msra.mxu0 %v903
    %1476 = vmatprep.subr.mxu0 %v901
    %1477 = vmatpush1.msra.mxu0 %v900
    %1478 = vmatprep.subr.mxu0 %v898
    %1479 = vmatpush1.msra.mxu0 %v897
    %1480 = vmatprep.subr.mxu0 %v895
    %1481 = vmatpush1.msra.mxu0 %v894
    %1482 = vmatprep.subr.mxu0 %v892
    %1483 = vmatpush1.msra.mxu0 %v891
    %1484 = vmatprep.subr.mxu0 %v889
    %1485 = vmatpush1.msra.mxu0 %v888
    %1486 = vmatprep.subr.mxu0 %v886
    %1487 = vmatpush1.msra.mxu0 %v885
    %1488 = vmatprep.subr.mxu0 0.0
    %1489 = vmatpush2.msra.mxu0 0.0
    %1490 = vmatprep.subr.mxu0 0.0
    %1491 = vmatpush2.msra.mxu0 0.0
    %1492 = vmatprep.subr.mxu0 0.0
    %1493 = vmatpush2.msra.mxu0 0.0
    %1494 = vmatprep.subr.mxu0 0.0
    %1495 = vmatpush2.msra.mxu0 0.0
    %1496 = vmatprep.subr.mxu0 0.0
    %1497 = vmatpush2.msra.mxu0 0.0
    %1498 = vmatprep.subr.mxu0 0.0
    %1499 = vmatpush2.msra.mxu0 0.0
    %1500 = vmatprep.subr.mxu0 0.0
    %1501 = vmatpush2.msra.mxu0 0.0
    %1502 = vmatprep.subr.mxu0 0.0
    %1503 = vmatpush2.msra.mxu0 0.0
    %1504 = vmatprep.subr.mxu0 0.0
    %1505 = vmatpush2.msra.mxu0 0.0
    %1506 = vmatprep.subr.mxu0 0.0
    %1507 = vmatpush2.msra.mxu0 0.0
    %1508 = vmatprep.subr.mxu0 0.0
    %1509 = vmatpush2.msra.mxu0 0.0
    %1510 = vmatprep.subr.mxu0 0.0
    %1511 = vmatpush2.msra.mxu0 0.0
    %1512 = vmatprep.subr.mxu0 0.0
    %1513 = vmatpush2.msra.mxu0 0.0
    %1514 = vmatprep.subr.mxu0 0.0
    %1515 = vmatpush2.msra.mxu0 0.0
    %1516 = vmatprep.subr.mxu0 0.0
    %1517 = vmatpush2.msra.mxu0 0.0
    %1518 = vmatprep.subr.mxu0 0.0
    %1519 = vmatpush2.msra.mxu0 0.0
    %1520 = vmatprep.mubr.f32.mxu0 0.0
    %1521 = vmatmul.mubr.f32.gmra.mxu0 %v1314
    %v1522 = vpop.f32.mrf.mxu0
    %v1523 = vadd.f32 %v1101, %v1522
    %v1524 = vpop.f32.mrf.mxu0
    %v1525 = vadd.f32 %v1105, %v1524
    %1526 = vdwg.mxu0
    %1527 = vmatprep.subr.mxu0 0.0
    %1528 = vmatpush1.msra.mxu0 %v932
    %1529 = vmatprep.subr.mxu0 0.0
    %1530 = vmatpush1.msra.mxu0 %v929
    %1531 = vmatprep.subr.mxu0 0.0
    %1532 = vmatpush1.msra.mxu0 %v926
    %1533 = vmatprep.subr.mxu0 0.0
    %1534 = vmatpush1.msra.mxu0 %v923
    %1535 = vmatprep.subr.mxu0 0.0
    %1536 = vmatpush1.msra.mxu0 %v920
    %1537 = vmatprep.subr.mxu0 0.0
    %1538 = vmatpush1.msra.mxu0 %v917
    %1539 = vmatprep.subr.mxu0 0.0
    %1540 = vmatpush1.msra.mxu0 %v914
    %1541 = vmatprep.subr.mxu0 0.0
    %1542 = vmatpush1.msra.mxu0 %v911
    %1543 = vmatprep.subr.mxu0 0.0
    %1544 = vmatpush1.msra.mxu0 %v908
    %1545 = vmatprep.subr.mxu0 0.0
    %1546 = vmatpush1.msra.mxu0 %v905
    %1547 = vmatprep.subr.mxu0 0.0
    %1548 = vmatpush1.msra.mxu0 %v902
    %1549 = vmatprep.subr.mxu0 0.0
    %1550 = vmatpush1.msra.mxu0 %v899
    %1551 = vmatprep.subr.mxu0 0.0
    %1552 = vmatpush1.msra.mxu0 %v896
    %1553 = vmatprep.subr.mxu0 0.0
    %1554 = vmatpush1.msra.mxu0 %v893
    %1555 = vmatprep.subr.mxu0 0.0
    %1556 = vmatpush1.msra.mxu0 %v890
    %1557 = vmatprep.subr.mxu0 0.0
    %1558 = vmatpush1.msra.mxu0 %v887
    %1559 = vmatprep.subr.mxu0 0.0
    %1560 = vmatpush2.msra.mxu0 0.0
    %1561 = vmatprep.subr.mxu0 0.0
    %1562 = vmatpush2.msra.mxu0 0.0
    %1563 = vmatprep.subr.mxu0 0.0
    %1564 = vmatpush2.msra.mxu0 0.0
    %1565 = vmatprep.subr.mxu0 0.0
    %1566 = vmatpush2.msra.mxu0 0.0
    %1567 = vmatprep.subr.mxu0 0.0
    %1568 = vmatpush2.msra.mxu0 0.0
    %1569 = vmatprep.subr.mxu0 0.0
    %1570 = vmatpush2.msra.mxu0 0.0
    %1571 = vmatprep.subr.mxu0 0.0
    %1572 = vmatpush2.msra.mxu0 0.0
    %1573 = vmatprep.subr.mxu0 0.0
    %1574 = vmatpush2.msra.mxu0 0.0
    %1575 = vmatprep.subr.mxu0 0.0
    %1576 = vmatpush2.msra.mxu0 0.0
    %1577 = vmatprep.subr.mxu0 0.0
    %1578 = vmatpush2.msra.mxu0 0.0
    %1579 = vmatprep.subr.mxu0 0.0
    %1580 = vmatpush2.msra.mxu0 0.0
    %1581 = vmatprep.subr.mxu0 0.0
    %1582 = vmatpush2.msra.mxu0 0.0
    %1583 = vmatprep.subr.mxu0 0.0
    %1584 = vmatpush2.msra.mxu0 0.0
    %1585 = vmatprep.subr.mxu0 0.0
    %1586 = vmatpush2.msra.mxu0 0.0
    %1587 = vmatprep.subr.mxu0 0.0
    %1588 = vmatpush2.msra.mxu0 0.0
    %1589 = vmatprep.subr.mxu0 0.0
    %1590 = vmatpush2.msra.mxu0 0.0
    %1591 = vmatprep.mubr.f32.mxu0 0.0
    %1592 = vmatmul.mubr.f32.gmra.mxu0 %v1314
    %v1593 = vpop.f32.mrf.mxu0
    %v1594 = vadd.f32 %v1109, %v1593
    %v1595 = vpop.f32.mrf.mxu0
    %1596 = vdwg.mxu0
    %s1597 = smul.u32 1, 3
    %s1598 = smul.addr %s1597, 8
    %s1599 = scalar_lea.vmem [#allocation5], %s1598
    %v1600 = vld [vmem:[%s1599] sm:$0xff]
    %v1601 = vld [vmem:[%s1599 + $0x8] sm:$0xff]
    %v1602 = vld [vmem:[%s1599 + $0x10] sm:$0xff]
    %v1603 = vadd.f32 %v1600, %v1382
    %v1604 = vxor.u32 %v1603, 2147483648
    %v1605 = vmul.f32 %v1604, 1.442695
    %v1606 = vpow.pop %v1605
    %v1607 = vadd.f32 %v1606, 1.0
    %v1608 = vrcp.pop %v1607
    %v1609 = vmul.f32 1.0, %v1608
    %v1610 = vadd.f32 %v1601, %v1384
    %v1611 = vxor.u32 %v1610, 2147483648
    %v1612 = vmul.f32 %v1611, 1.442695
    %v1613 = vpow.pop %v1612
    %v1614 = vadd.f32 %v1613, 1.0
    %v1615 = vrcp.pop %v1614
    %v1616 = vmul.f32 1.0, %v1615
    %v1617 = vmul.f32 %v1609, %v1453
    %v1618 = vadd.f32 %v1602, %v1617
    %v1619 = vtanh.pop %v1618
    %v1620 = vsub.f32 1.0, %v1616
    %v1621 = vmul.f32 %v1620, %v1619
    %v1622 = vmul.f32 %v1616, %v1313
    %v1623 = vadd.f32 %v1621, %v1622
    %s1624 = smul.u32 6, 3
    %s1625 = smul.addr %s1624, 8
    %s1626 = scalar_lea.vmem [#allocation6], %s1625
    %v1627 = vld [vmem:[%s1626] sm:$0xff]
    %v1628 = vld [vmem:[%s1626 + $0x8] sm:$0xff]
    %v1629 = vld [vmem:[%s1626 + $0x10] sm:$0xff]
    %v1630 = vadd.f32 %v1627, %v1523
    %v1631 = vxor.u32 %v1630, 2147483648
    %v1632 = vmul.f32 %v1631, 1.442695
    %v1633 = vpow.pop %v1632
    %v1634 = vadd.f32 %v1633, 1.0
    %v1635 = vrcp.pop %v1634
    %v1636 = vmul.f32 1.0, %v1635
    %v1637 = vadd.f32 %v1628, %v1525
    %v1638 = vxor.u32 %v1637, 2147483648
    %v1639 = vmul.f32 %v1638, 1.442695
    %v1640 = vpow.pop %v1639
    %v1641 = vadd.f32 %v1640, 1.0
    %v1642 = vrcp.pop %v1641
    %v1643 = vmul.f32 1.0, %v1642
    %v1644 = vmul.f32 %v1636, %v1594
    %v1645 = vadd.f32 %v1629, %v1644
    %v1646 = vtanh.pop %v1645
    %v1647 = vsub.f32 1.0, %v1643
    %v1648 = vmul.f32 %v1647, %v1646
    %v1649 = vmul.f32 %v1643, %v1314
    %v1650 = vadd.f32 %v1648, %v1649
    %1651 = vst [vmem:[#allocation7] sm:$0xff] %v1623
    %1652 = vst [vmem:[#allocation8] sm:$0xff] %v1650
    %s1653 = scalar_lea.vmem [#allocation3], 8
    %1654 = vst [vmem:[%s1653] sm:$0xff] %v1623
    %s1655 = scalar_lea.vmem [#allocation4], 48
    %1656 = vst [vmem:[%s1655] sm:$0xff] %v1650
    %v1657 = vld [vmem:[#allocation7] sm:$0xff]
    %v1658 = vld [vmem:[#allocation8] sm:$0xff]
    %1659 = vmatprep.subr.mxu0 %v882
    %1660 = vmatpush1.msra.mxu0 %v881
    %1661 = vmatprep.subr.mxu0 %v879
    %1662 = vmatpush1.msra.mxu0 %v878
    %1663 = vmatprep.subr.mxu0 %v876
    %1664 = vmatpush1.msra.mxu0 %v875
    %1665 = vmatprep.subr.mxu0 %v873
    %1666 = vmatpush1.msra.mxu0 %v872
    %1667 = vmatprep.subr.mxu0 %v870
    %1668 = vmatpush1.msra.mxu0 %v869
    %1669 = vmatprep.subr.mxu0 %v867
    %1670 = vmatpush1.msra.mxu0 %v866
    %1671 = vmatprep.subr.mxu0 %v864
    %1672 = vmatpush1.msra.mxu0 %v863
    %1673 = vmatprep.subr.mxu0 %v861
    %1674 = vmatpush1.msra.mxu0 %v860
    %1675 = vmatprep.subr.mxu0 %v858
    %1676 = vmatpush1.msra.mxu0 %v857
    %1677 = vmatprep.subr.mxu0 %v855
    %1678 = vmatpush1.msra.mxu0 %v854
    %1679 = vmatprep.subr.mxu0 %v852
    %1680 = vmatpush1.msra.mxu0 %v851
    %1681 = vmatprep.subr.mxu0 %v849
    %1682 = vmatpush1.msra.mxu0 %v848
    %1683 = vmatprep.subr.mxu0 %v846
    %1684 = vmatpush1.msra.mxu0 %v845
    %1685 = vmatprep.subr.mxu0 %v843
    %1686 = vmatpush1.msra.mxu0 %v842
    %1687 = vmatprep.subr.mxu0 %v840
    %1688 = vmatpush1.msra.mxu0 %v839
    %1689 = vmatprep.subr.mxu0 %v837
    %1690 = vmatpush1.msra.mxu0 %v836
    %1691 = vmatprep.subr.mxu0 0.0
    %1692 = vmatpush2.msra.mxu0 0.0
    %1693 = vmatprep.subr.mxu0 0.0
    %1694 = vmatpush2.msra.mxu0 0.0
    %1695 = vmatprep.subr.mxu0 0.0
    %1696 = vmatpush2.msra.mxu0 0.0
    %1697 = vmatprep.subr.mxu0 0.0
    %1698 = vmatpush2.msra.mxu0 0.0
    %1699 = vmatprep.subr.mxu0 0.0
    %1700 = vmatpush2.msra.mxu0 0.0
    %1701 = vmatprep.subr.mxu0 0.0
    %1702 = vmatpush2.msra.mxu0 0.0
    %1703 = vmatprep.subr.mxu0 0.0
    %1704 = vmatpush2.msra.mxu0 0.0
    %1705 = vmatprep.subr.mxu0 0.0
    %1706 = vmatpush2.msra.mxu0 0.0
    %1707 = vmatprep.subr.mxu0 0.0
    %1708 = vmatpush2.msra.mxu0 0.0
    %1709 = vmatprep.subr.mxu0 0.0
    %1710 = vmatpush2.msra.mxu0 0.0
    %1711 = vmatprep.subr.mxu0 0.0
    %1712 = vmatpush2.msra.mxu0 0.0
    %1713 = vmatprep.subr.mxu0 0.0
    %1714 = vmatpush2.msra.mxu0 0.0
    %1715 = vmatprep.subr.mxu0 0.0
    %1716 = vmatpush2.msra.mxu0 0.0
    %1717 = vmatprep.subr.mxu0 0.0
    %1718 = vmatpush2.msra.mxu0 0.0
    %1719 = vmatprep.subr.mxu0 0.0
    %1720 = vmatpush2.msra.mxu0 0.0
    %1721 = vmatprep.subr.mxu0 0.0
    %1722 = vmatpush2.msra.mxu0 0.0
    %1723 = vmatprep.mubr.f32.mxu0 0.0
    %1724 = vmatmul.mubr.f32.gmra.mxu0 %v1657
    %v1725 = vpop.f32.mrf.mxu0
    %v1726 = vadd.f32 %v944, %v1725
    %v1727 = vpop.f32.mrf.mxu0
    %v1728 = vadd.f32 %v948, %v1727
    %1729 = vdwg.mxu0
    %1730 = vmatprep.subr.mxu0 0.0
    %1731 = vmatpush1.msra.mxu0 %v883
    %1732 = vmatprep.subr.mxu0 0.0
    %1733 = vmatpush1.msra.mxu0 %v880
    %1734 = vmatprep.subr.mxu0 0.0
    %1735 = vmatpush1.msra.mxu0 %v877
    %1736 = vmatprep.subr.mxu0 0.0
    %1737 = vmatpush1.msra.mxu0 %v874
    %1738 = vmatprep.subr.mxu0 0.0
    %1739 = vmatpush1.msra.mxu0 %v871
    %1740 = vmatprep.subr.mxu0 0.0
    %1741 = vmatpush1.msra.mxu0 %v868
    %1742 = vmatprep.subr.mxu0 0.0
    %1743 = vmatpush1.msra.mxu0 %v865
    %1744 = vmatprep.subr.mxu0 0.0
    %1745 = vmatpush1.msra.mxu0 %v862
    %1746 = vmatprep.subr.mxu0 0.0
    %1747 = vmatpush1.msra.mxu0 %v859
    %1748 = vmatprep.subr.mxu0 0.0
    %1749 = vmatpush1.msra.mxu0 %v856
    %1750 = vmatprep.subr.mxu0 0.0
    %1751 = vmatpush1.msra.mxu0 %v853
    %1752 = vmatprep.subr.mxu0 0.0
    %1753 = vmatpush1.msra.mxu0 %v850
    %1754 = vmatprep.subr.mxu0 0.0
    %1755 = vmatpush1.msra.mxu0 %v847
    %1756 = vmatprep.subr.mxu0 0.0
    %1757 = vmatpush1.msra.mxu0 %v844
    %1758 = vmatprep.subr.mxu0 0.0
    %1759 = vmatpush1.msra.mxu0 %v841
    %1760 = vmatprep.subr.mxu0 0.0
    %1761 = vmatpush1.msra.mxu0 %v838
    %1762 = vmatprep.subr.mxu0 0.0
    %1763 = vmatpush2.msra.mxu0 0.0
    %1764 = vmatprep.subr.mxu0 0.0
    %1765 = vmatpush2.msra.mxu0 0.0
    %1766 = vmatprep.subr.mxu0 0.0
    %1767 = vmatpush2.msra.mxu0 0.0
    %1768 = vmatprep.subr.mxu0 0.0
    %1769 = vmatpush2.msra.mxu0 0.0
    %1770 = vmatprep.subr.mxu0 0.0
    %1771 = vmatpush2.msra.mxu0 0.0
    %1772 = vmatprep.subr.mxu0 0.0
    %1773 = vmatpush2.msra.mxu0 0.0
    %1774 = vmatprep.subr.mxu0 0.0
    %1775 = vmatpush2.msra.mxu0 0.0
    %1776 = vmatprep.subr.mxu0 0.0
    %1777 = vmatpush2.msra.mxu0 0.0
    %1778 = vmatprep.subr.mxu0 0.0
    %1779 = vmatpush2.msra.mxu0 0.0
    %1780 = vmatprep.subr.mxu0 0.0
    %1781 = vmatpush2.msra.mxu0 0.0
    %1782 = vmatprep.subr.mxu0 0.0
    %1783 = vmatpush2.msra.mxu0 0.0
    %1784 = vmatprep.subr.mxu0 0.0
    %1785 = vmatpush2.msra.mxu0 0.0
    %1786 = vmatprep.subr.mxu0 0.0
    %1787 = vmatpush2.msra.mxu0 0.0
    %1788 = vmatprep.subr.mxu0 0.0
    %1789 = vmatpush2.msra.mxu0 0.0
    %1790 = vmatprep.subr.mxu0 0.0
    %1791 = vmatpush2.msra.mxu0 0.0
    %1792 = vmatprep.subr.mxu0 0.0
    %1793 = vmatpush2.msra.mxu0 0.0
    %1794 = vmatprep.mubr.f32.mxu0 0.0
    %1795 = vmatmul.mubr.f32.gmra.mxu0 %v1657
    %v1796 = vpop.f32.mrf.mxu0
    %v1797 = vadd.f32 %v952, %v1796
    %v1798 = vpop.f32.mrf.mxu0
    %1799 = vdwg.mxu0
    %1800 = vmatprep.subr.mxu0 %v931
    %1801 = vmatpush1.msra.mxu0 %v930
    %1802 = vmatprep.subr.mxu0 %v928
    %1803 = vmatpush1.msra.mxu0 %v927
    %1804 = vmatprep.subr.mxu0 %v925
    %1805 = vmatpush1.msra.mxu0 %v924
    %1806 = vmatprep.subr.mxu0 %v922
    %1807 = vmatpush1.msra.mxu0 %v921
    %1808 = vmatprep.subr.mxu0 %v919
    %1809 = vmatpush1.msra.mxu0 %v918
    %1810 = vmatprep.subr.mxu0 %v916
    %1811 = vmatpush1.msra.mxu0 %v915
    %1812 = vmatprep.subr.mxu0 %v913
    %1813 = vmatpush1.msra.mxu0 %v912
    %1814 = vmatprep.subr.mxu0 %v910
    %1815 = vmatpush1.msra.mxu0 %v909
    %1816 = vmatprep.subr.mxu0 %v907
    %1817 = vmatpush1.msra.mxu0 %v906
    %1818 = vmatprep.subr.mxu0 %v904
    %1819 = vmatpush1.msra.mxu0 %v903
    %1820 = vmatprep.subr.mxu0 %v901
    %1821 = vmatpush1.msra.mxu0 %v900
    %1822 = vmatprep.subr.mxu0 %v898
    %1823 = vmatpush1.msra.mxu0 %v897
    %1824 = vmatprep.subr.mxu0 %v895
    %1825 = vmatpush1.msra.mxu0 %v894
    %1826 = vmatprep.subr.mxu0 %v892
    %1827 = vmatpush1.msra.mxu0 %v891
    %1828 = vmatprep.subr.mxu0 %v889
    %1829 = vmatpush1.msra.mxu0 %v888
    %1830 = vmatprep.subr.mxu0 %v886
    %1831 = vmatpush1.msra.mxu0 %v885
    %1832 = vmatprep.subr.mxu0 0.0
    %1833 = vmatpush2.msra.mxu0 0.0
    %1834 = vmatprep.subr.mxu0 0.0
    %1835 = vmatpush2.msra.mxu0 0.0
    %1836 = vmatprep.subr.mxu0 0.0
    %1837 = vmatpush2.msra.mxu0 0.0
    %1838 = vmatprep.subr.mxu0 0.0
    %1839 = vmatpush2.msra.mxu0 0.0
    %1840 = vmatprep.subr.mxu0 0.0
    %1841 = vmatpush2.msra.mxu0 0.0
    %1842 = vmatprep.subr.mxu0 0.0
    %1843 = vmatpush2.msra.mxu0 0.0
    %1844 = vmatprep.subr.mxu0 0.0
    %1845 = vmatpush2.msra.mxu0 0.0
    %1846 = vmatprep.subr.mxu0 0.0
    %1847 = vmatpush2.msra.mxu0 0.0
    %1848 = vmatprep.subr.mxu0 0.0
    %1849 = vmatpush2.msra.mxu0 0.0
    %1850 = vmatprep.subr.mxu0 0.0
    %1851 = vmatpush2.msra.mxu0 0.0
    %1852 = vmatprep.subr.mxu0 0.0
    %1853 = vmatpush2.msra.mxu0 0.0
    %1854 = vmatprep.subr.mxu0 0.0
    %1855 = vmatpush2.msra.mxu0 0.0
    %1856 = vmatprep.subr.mxu0 0.0
    %1857 = vmatpush2.msra.mxu0 0.0
    %1858 = vmatprep.subr.mxu0 0.0
    %1859 = vmatpush2.msra.mxu0 0.0
    %1860 = vmatprep.subr.mxu0 0.0
    %1861 = vmatpush2.msra.mxu0 0.0
    %1862 = vmatprep.subr.mxu0 0.0
    %1863 = vmatpush2.msra.mxu0 0.0
    %1864 = vmatprep.mubr.f32.mxu0 0.0
    %1865 = vmatmul.mubr.f32.gmra.mxu0 %v1658
    %v1866 = vpop.f32.mrf.mxu0
    %v1867 = vadd.f32 %v1101, %v1866
    %v1868 = vpop.f32.mrf.mxu0
    %v1869 = vadd.f32 %v1105, %v1868
    %1870 = vdwg.mxu0
    %1871 = vmatprep.subr.mxu0 0.0
    %1872 = vmatpush1.msra.mxu0 %v932
    %1873 = vmatprep.subr.mxu0 0.0
    %1874 = vmatpush1.msra.mxu0 %v929
    %1875 = vmatprep.subr.mxu0 0.0
    %1876 = vmatpush1.msra.mxu0 %v926
    %1877 = vmatprep.subr.mxu0 0.0
    %1878 = vmatpush1.msra.mxu0 %v923
    %1879 = vmatprep.subr.mxu0 0.0
    %1880 = vmatpush1.msra.mxu0 %v920
    %1881 = vmatprep.subr.mxu0 0.0
    %1882 = vmatpush1.msra.mxu0 %v917
    %1883 = vmatprep.subr.mxu0 0.0
    %1884 = vmatpush1.msra.mxu0 %v914
    %1885 = vmatprep.subr.mxu0 0.0
    %1886 = vmatpush1.msra.mxu0 %v911
    %1887 = vmatprep.subr.mxu0 0.0
    %1888 = vmatpush1.msra.mxu0 %v908
    %1889 = vmatprep.subr.mxu0 0.0
    %1890 = vmatpush1.msra.mxu0 %v905
    %1891 = vmatprep.subr.mxu0 0.0
    %1892 = vmatpush1.msra.mxu0 %v902
    %1893 = vmatprep.subr.mxu0 0.0
    %1894 = vmatpush1.msra.mxu0 %v899
    %1895 = vmatprep.subr.mxu0 0.0
    %1896 = vmatpush1.msra.mxu0 %v896
    %1897 = vmatprep.subr.mxu0 0.0
    %1898 = vmatpush1.msra.mxu0 %v893
    %1899 = vmatprep.subr.mxu0 0.0
    %1900 = vmatpush1.msra.mxu0 %v890
    %1901 = vmatprep.subr.mxu0 0.0
    %1902 = vmatpush1.msra.mxu0 %v887
    %1903 = vmatprep.subr.mxu0 0.0
    %1904 = vmatpush2.msra.mxu0 0.0
    %1905 = vmatprep.subr.mxu0 0.0
    %1906 = vmatpush2.msra.mxu0 0.0
    %1907 = vmatprep.subr.mxu0 0.0
    %1908 = vmatpush2.msra.mxu0 0.0
    %1909 = vmatprep.subr.mxu0 0.0
    %1910 = vmatpush2.msra.mxu0 0.0
    %1911 = vmatprep.subr.mxu0 0.0
    %1912 = vmatpush2.msra.mxu0 0.0
    %1913 = vmatprep.subr.mxu0 0.0
    %1914 = vmatpush2.msra.mxu0 0.0
    %1915 = vmatprep.subr.mxu0 0.0
    %1916 = vmatpush2.msra.mxu0 0.0
    %1917 = vmatprep.subr.mxu0 0.0
    %1918 = vmatpush2.msra.mxu0 0.0
    %1919 = vmatprep.subr.mxu0 0.0
    %1920 = vmatpush2.msra.mxu0 0.0
    %1921 = vmatprep.subr.mxu0 0.0
    %1922 = vmatpush2.msra.mxu0 0.0
    %1923 = vmatprep.subr.mxu0 0.0
    %1924 = vmatpush2.msra.mxu0 0.0
    %1925 = vmatprep.subr.mxu0 0.0
    %1926 = vmatpush2.msra.mxu0 0.0
    %1927 = vmatprep.subr.mxu0 0.0
    %1928 = vmatpush2.msra.mxu0 0.0
    %1929 = vmatprep.subr.mxu0 0.0
    %1930 = vmatpush2.msra.mxu0 0.0
    %1931 = vmatprep.subr.mxu0 0.0
    %1932 = vmatpush2.msra.mxu0 0.0
    %1933 = vmatprep.subr.mxu0 0.0
    %1934 = vmatpush2.msra.mxu0 0.0
    %1935 = vmatprep.mubr.f32.mxu0 0.0
    %1936 = vmatmul.mubr.f32.gmra.mxu0 %v1658
    %v1937 = vpop.f32.mrf.mxu0
    %v1938 = vadd.f32 %v1109, %v1937
    %v1939 = vpop.f32.mrf.mxu0
    %1940 = vdwg.mxu0
    %s1941 = smul.u32 2, 3
    %s1942 = smul.addr %s1941, 8
    %s1943 = scalar_lea.vmem [#allocation5], %s1942
    %v1944 = vld [vmem:[%s1943] sm:$0xff]
    %v1945 = vld [vmem:[%s1943 + $0x8] sm:$0xff]
    %v1946 = vld [vmem:[%s1943 + $0x10] sm:$0xff]
    %v1947 = vadd.f32 %v1944, %v1726
    %v1948 = vxor.u32 %v1947, 2147483648
    %v1949 = vmul.f32 %v1948, 1.442695
    %v1950 = vpow.pop %v1949
    %v1951 = vadd.f32 %v1950, 1.0
    %v1952 = vrcp.pop %v1951
    %v1953 = vmul.f32 1.0, %v1952
    %v1954 = vadd.f32 %v1945, %v1728
    %v1955 = vxor.u32 %v1954, 2147483648
    %v1956 = vmul.f32 %v1955, 1.442695
    %v1957 = vpow.pop %v1956
    %v1958 = vadd.f32 %v1957, 1.0
    %v1959 = vrcp.pop %v1958
    %v1960 = vmul.f32 1.0, %v1959
    %v1961 = vmul.f32 %v1953, %v1797
    %v1962 = vadd.f32 %v1946, %v1961
    %v1963 = vtanh.pop %v1962
    %v1964 = vsub.f32 1.0, %v1960
    %v1965 = vmul.f32 %v1964, %v1963
    %v1966 = vmul.f32 %v1960, %v1657
    %v1967 = vadd.f32 %v1965, %v1966
    %s1968 = smul.u32 5, 3
    %s1969 = smul.addr %s1968, 8
    %s1970 = scalar_lea.vmem [#allocation6], %s1969
    %v1971 = vld [vmem:[%s1970] sm:$0xff]
    %v1972 = vld [vmem:[%s1970 + $0x8] sm:$0xff]
    %v1973 = vld [vmem:[%s1970 + $0x10] sm:$0xff]
    %v1974 = vadd.f32 %v1971, %v1867
    %v1975 = vxor.u32 %v1974, 2147483648
    %v1976 = vmul.f32 %v1975, 1.442695
    %v1977 = vpow.pop %v1976
    %v1978 = vadd.f32 %v1977, 1.0
    %v1979 = vrcp.pop %v1978
    %v1980 = vmul.f32 1.0, %v1979
    %v1981 = vadd.f32 %v1972, %v1869
    %v1982 = vxor.u32 %v1981, 2147483648
    %v1983 = vmul.f32 %v1982, 1.442695
    %v1984 = vpow.pop %v1983
    %v1985 = vadd.f32 %v1984, 1.0
    %v1986 = vrcp.pop %v1985
    %v1987 = vmul.f32 1.0, %v1986
    %v1988 = vmul.f32 %v1980, %v1938
    %v1989 = vadd.f32 %v1973, %v1988
    %v1990 = vtanh.pop %v1989
    %v1991 = vsub.f32 1.0, %v1987
    %v1992 = vmul.f32 %v1991, %v1990
    %v1993 = vmul.f32 %v1987, %v1658
    %v1994 = vadd.f32 %v1992, %v1993
    %1995 = vst [vmem:[#allocation7] sm:$0xff] %v1967
    %1996 = vst [vmem:[#allocation8] sm:$0xff] %v1994
    %s1997 = scalar_lea.vmem [#allocation3], 16
    %1998 = vst [vmem:[%s1997] sm:$0xff] %v1967
    %s1999 = scalar_lea.vmem [#allocation4], 40
    %2000 = vst [vmem:[%s1999] sm:$0xff] %v1994
    %v2001 = vld [vmem:[#allocation7] sm:$0xff]
    %v2002 = vld [vmem:[#allocation8] sm:$0xff]
    %2003 = vmatprep.subr.mxu0 %v882
    %2004 = vmatpush1.msra.mxu0 %v881
    %2005 = vmatprep.subr.mxu0 %v879
    %2006 = vmatpush1.msra.mxu0 %v878
    %2007 = vmatprep.subr.mxu0 %v876
    %2008 = vmatpush1.msra.mxu0 %v875
    %2009 = vmatprep.subr.mxu0 %v873
    %2010 = vmatpush1.msra.mxu0 %v872
    %2011 = vmatprep.subr.mxu0 %v870
    %2012 = vmatpush1.msra.mxu0 %v869
    %2013 = vmatprep.subr.mxu0 %v867
    %2014 = vmatpush1.msra.mxu0 %v866
    %2015 = vmatprep.subr.mxu0 %v864
    %2016 = vmatpush1.msra.mxu0 %v863
    %2017 = vmatprep.subr.mxu0 %v861
    %2018 = vmatpush1.msra.mxu0 %v860
    %2019 = vmatprep.subr.mxu0 %v858
    %2020 = vmatpush1.msra.mxu0 %v857
    %2021 = vmatprep.subr.mxu0 %v855
    %2022 = vmatpush1.msra.mxu0 %v854
    %2023 = vmatprep.subr.mxu0 %v852
    %2024 = vmatpush1.msra.mxu0 %v851
    %2025 = vmatprep.subr.mxu0 %v849
    %2026 = vmatpush1.msra.mxu0 %v848
    %2027 = vmatprep.subr.mxu0 %v846
    %2028 = vmatpush1.msra.mxu0 %v845
    %2029 = vmatprep.subr.mxu0 %v843
    %2030 = vmatpush1.msra.mxu0 %v842
    %2031 = vmatprep.subr.mxu0 %v840
    %2032 = vmatpush1.msra.mxu0 %v839
    %2033 = vmatprep.subr.mxu0 %v837
    %2034 = vmatpush1.msra.mxu0 %v836
    %2035 = vmatprep.subr.mxu0 0.0
    %2036 = vmatpush2.msra.mxu0 0.0
    %2037 = vmatprep.subr.mxu0 0.0
    %2038 = vmatpush2.msra.mxu0 0.0
    %2039 = vmatprep.subr.mxu0 0.0
    %2040 = vmatpush2.msra.mxu0 0.0
    %2041 = vmatprep.subr.mxu0 0.0
    %2042 = vmatpush2.msra.mxu0 0.0
    %2043 = vmatprep.subr.mxu0 0.0
    %2044 = vmatpush2.msra.mxu0 0.0
    %2045 = vmatprep.subr.mxu0 0.0
    %2046 = vmatpush2.msra.mxu0 0.0
    %2047 = vmatprep.subr.mxu0 0.0
    %2048 = vmatpush2.msra.mxu0 0.0
    %2049 = vmatprep.subr.mxu0 0.0
    %2050 = vmatpush2.msra.mxu0 0.0
    %2051 = vmatprep.subr.mxu0 0.0
    %2052 = vmatpush2.msra.mxu0 0.0
    %2053 = vmatprep.subr.mxu0 0.0
    %2054 = vmatpush2.msra.mxu0 0.0
    %2055 = vmatprep.subr.mxu0 0.0
    %2056 = vmatpush2.msra.mxu0 0.0
    %2057 = vmatprep.subr.mxu0 0.0
    %2058 = vmatpush2.msra.mxu0 0.0
    %2059 = vmatprep.subr.mxu0 0.0
    %2060 = vmatpush2.msra.mxu0 0.0
    %2061 = vmatprep.subr.mxu0 0.0
    %2062 = vmatpush2.msra.mxu0 0.0
    %2063 = vmatprep.subr.mxu0 0.0
    %2064 = vmatpush2.msra.mxu0 0.0
    %2065 = vmatprep.subr.mxu0 0.0
    %2066 = vmatpush2.msra.mxu0 0.0
    %2067 = vmatprep.mubr.f32.mxu0 0.0
    %2068 = vmatmul.mubr.f32.gmra.mxu0 %v2001
    %v2069 = vpop.f32.mrf.mxu0
    %v2070 = vadd.f32 %v944, %v2069
    %v2071 = vpop.f32.mrf.mxu0
    %v2072 = vadd.f32 %v948, %v2071
    %2073 = vdwg.mxu0
    %2074 = vmatprep.subr.mxu0 0.0
    %2075 = vmatpush1.msra.mxu0 %v883
    %2076 = vmatprep.subr.mxu0 0.0
    %2077 = vmatpush1.msra.mxu0 %v880
    %2078 = vmatprep.subr.mxu0 0.0
    %2079 = vmatpush1.msra.mxu0 %v877
    %2080 = vmatprep.subr.mxu0 0.0
    %2081 = vmatpush1.msra.mxu0 %v874
    %2082 = vmatprep.subr.mxu0 0.0
    %2083 = vmatpush1.msra.mxu0 %v871
    %2084 = vmatprep.subr.mxu0 0.0
    %2085 = vmatpush1.msra.mxu0 %v868
    %2086 = vmatprep.subr.mxu0 0.0
    %2087 = vmatpush1.msra.mxu0 %v865
    %2088 = vmatprep.subr.mxu0 0.0
    %2089 = vmatpush1.msra.mxu0 %v862
    %2090 = vmatprep.subr.mxu0 0.0
    %2091 = vmatpush1.msra.mxu0 %v859
    %2092 = vmatprep.subr.mxu0 0.0
    %2093 = vmatpush1.msra.mxu0 %v856
    %2094 = vmatprep.subr.mxu0 0.0
    %2095 = vmatpush1.msra.mxu0 %v853
    %2096 = vmatprep.subr.mxu0 0.0
    %2097 = vmatpush1.msra.mxu0 %v850
    %2098 = vmatprep.subr.mxu0 0.0
    %2099 = vmatpush1.msra.mxu0 %v847
    %2100 = vmatprep.subr.mxu0 0.0
    %2101 = vmatpush1.msra.mxu0 %v844
    %2102 = vmatprep.subr.mxu0 0.0
    %2103 = vmatpush1.msra.mxu0 %v841
    %2104 = vmatprep.subr.mxu0 0.0
    %2105 = vmatpush1.msra.mxu0 %v838
    %2106 = vmatprep.subr.mxu0 0.0
    %2107 = vmatpush2.msra.mxu0 0.0
    %2108 = vmatprep.subr.mxu0 0.0
    %2109 = vmatpush2.msra.mxu0 0.0
    %2110 = vmatprep.subr.mxu0 0.0
    %2111 = vmatpush2.msra.mxu0 0.0
    %2112 = vmatprep.subr.mxu0 0.0
    %2113 = vmatpush2.msra.mxu0 0.0
    %2114 = vmatprep.subr.mxu0 0.0
    %2115 = vmatpush2.msra.mxu0 0.0
    %2116 = vmatprep.subr.mxu0 0.0
    %2117 = vmatpush2.msra.mxu0 0.0
    %2118 = vmatprep.subr.mxu0 0.0
    %2119 = vmatpush2.msra.mxu0 0.0
    %2120 = vmatprep.subr.mxu0 0.0
    %2121 = vmatpush2.msra.mxu0 0.0
    %2122 = vmatprep.subr.mxu0 0.0
    %2123 = vmatpush2.msra.mxu0 0.0
    %2124 = vmatprep.subr.mxu0 0.0
    %2125 = vmatpush2.msra.mxu0 0.0
    %2126 = vmatprep.subr.mxu0 0.0
    %2127 = vmatpush2.msra.mxu0 0.0
    %2128 = vmatprep.subr.mxu0 0.0
    %2129 = vmatpush2.msra.mxu0 0.0
    %2130 = vmatprep.subr.mxu0 0.0
    %2131 = vmatpush2.msra.mxu0 0.0
    %2132 = vmatprep.subr.mxu0 0.0
    %2133 = vmatpush2.msra.mxu0 0.0
    %2134 = vmatprep.subr.mxu0 0.0
    %2135 = vmatpush2.msra.mxu0 0.0
    %2136 = vmatprep.subr.mxu0 0.0
    %2137 = vmatpush2.msra.mxu0 0.0
    %2138 = vmatprep.mubr.f32.mxu0 0.0
    %2139 = vmatmul.mubr.f32.gmra.mxu0 %v2001
    %v2140 = vpop.f32.mrf.mxu0
    %v2141 = vadd.f32 %v952, %v2140
    %v2142 = vpop.f32.mrf.mxu0
    %2143 = vdwg.mxu0
    %2144 = vmatprep.subr.mxu0 %v931
    %2145 = vmatpush1.msra.mxu0 %v930
    %2146 = vmatprep.subr.mxu0 %v928
    %2147 = vmatpush1.msra.mxu0 %v927
    %2148 = vmatprep.subr.mxu0 %v925
    %2149 = vmatpush1.msra.mxu0 %v924
    %2150 = vmatprep.subr.mxu0 %v922
    %2151 = vmatpush1.msra.mxu0 %v921
    %2152 = vmatprep.subr.mxu0 %v919
    %2153 = vmatpush1.msra.mxu0 %v918
    %2154 = vmatprep.subr.mxu0 %v916
    %2155 = vmatpush1.msra.mxu0 %v915
    %2156 = vmatprep.subr.mxu0 %v913
    %2157 = vmatpush1.msra.mxu0 %v912
    %2158 = vmatprep.subr.mxu0 %v910
    %2159 = vmatpush1.msra.mxu0 %v909
    %2160 = vmatprep.subr.mxu0 %v907
    %2161 = vmatpush1.msra.mxu0 %v906
    %2162 = vmatprep.subr.mxu0 %v904
    %2163 = vmatpush1.msra.mxu0 %v903
    %2164 = vmatprep.subr.mxu0 %v901
    %2165 = vmatpush1.msra.mxu0 %v900
    %2166 = vmatprep.subr.mxu0 %v898
    %2167 = vmatpush1.msra.mxu0 %v897
    %2168 = vmatprep.subr.mxu0 %v895
    %2169 = vmatpush1.msra.mxu0 %v894
    %2170 = vmatprep.subr.mxu0 %v892
    %2171 = vmatpush1.msra.mxu0 %v891
    %2172 = vmatprep.subr.mxu0 %v889
    %2173 = vmatpush1.msra.mxu0 %v888
    %2174 = vmatprep.subr.mxu0 %v886
    %2175 = vmatpush1.msra.mxu0 %v885
    %2176 = vmatprep.subr.mxu0 0.0
    %2177 = vmatpush2.msra.mxu0 0.0
    %2178 = vmatprep.subr.mxu0 0.0
    %2179 = vmatpush2.msra.mxu0 0.0
    %2180 = vmatprep.subr.mxu0 0.0
    %2181 = vmatpush2.msra.mxu0 0.0
    %2182 = vmatprep.subr.mxu0 0.0
    %2183 = vmatpush2.msra.mxu0 0.0
    %2184 = vmatprep.subr.mxu0 0.0
    %2185 = vmatpush2.msra.mxu0 0.0
    %2186 = vmatprep.subr.mxu0 0.0
    %2187 = vmatpush2.msra.mxu0 0.0
    %2188 = vmatprep.subr.mxu0 0.0
    %2189 = vmatpush2.msra.mxu0 0.0
    %2190 = vmatprep.subr.mxu0 0.0
    %2191 = vmatpush2.msra.mxu0 0.0
    %2192 = vmatprep.subr.mxu0 0.0
    %2193 = vmatpush2.msra.mxu0 0.0
    %2194 = vmatprep.subr.mxu0 0.0
    %2195 = vmatpush2.msra.mxu0 0.0
    %2196 = vmatprep.subr.mxu0 0.0
    %2197 = vmatpush2.msra.mxu0 0.0
    %2198 = vmatprep.subr.mxu0 0.0
    %2199 = vmatpush2.msra.mxu0 0.0
    %2200 = vmatprep.subr.mxu0 0.0
    %2201 = vmatpush2.msra.mxu0 0.0
    %2202 = vmatprep.subr.mxu0 0.0
    %2203 = vmatpush2.msra.mxu0 0.0
    %2204 = vmatprep.subr.mxu0 0.0
    %2205 = vmatpush2.msra.mxu0 0.0
    %2206 = vmatprep.subr.mxu0 0.0
    %2207 = vmatpush2.msra.mxu0 0.0
    %2208 = vmatprep.mubr.f32.mxu0 0.0
    %2209 = vmatmul.mubr.f32.gmra.mxu0 %v2002
    %v2210 = vpop.f32.mrf.mxu0
    %v2211 = vadd.f32 %v1101, %v2210
    %v2212 = vpop.f32.mrf.mxu0
    %v2213 = vadd.f32 %v1105, %v2212
    %2214 = vdwg.mxu0
    %2215 = vmatprep.subr.mxu0 0.0
    %2216 = vmatpush1.msra.mxu0 %v932
    %2217 = vmatprep.subr.mxu0 0.0
    %2218 = vmatpush1.msra.mxu0 %v929
    %2219 = vmatprep.subr.mxu0 0.0
    %2220 = vmatpush1.msra.mxu0 %v926
    %2221 = vmatprep.subr.mxu0 0.0
    %2222 = vmatpush1.msra.mxu0 %v923
    %2223 = vmatprep.subr.mxu0 0.0
    %2224 = vmatpush1.msra.mxu0 %v920
    %2225 = vmatprep.subr.mxu0 0.0
    %2226 = vmatpush1.msra.mxu0 %v917
    %2227 = vmatprep.subr.mxu0 0.0
    %2228 = vmatpush1.msra.mxu0 %v914
    %2229 = vmatprep.subr.mxu0 0.0
    %2230 = vmatpush1.msra.mxu0 %v911
    %2231 = vmatprep.subr.mxu0 0.0
    %2232 = vmatpush1.msra.mxu0 %v908
    %2233 = vmatprep.subr.mxu0 0.0
    %2234 = vmatpush1.msra.mxu0 %v905
    %2235 = vmatprep.subr.mxu0 0.0
    %2236 = vmatpush1.msra.mxu0 %v902
    %2237 = vmatprep.subr.mxu0 0.0
    %2238 = vmatpush1.msra.mxu0 %v899
    %2239 = vmatprep.subr.mxu0 0.0
    %2240 = vmatpush1.msra.mxu0 %v896
    %2241 = vmatprep.subr.mxu0 0.0
    %2242 = vmatpush1.msra.mxu0 %v893
    %2243 = vmatprep.subr.mxu0 0.0
    %2244 = vmatpush1.msra.mxu0 %v890
    %2245 = vmatprep.subr.mxu0 0.0
    %2246 = vmatpush1.msra.mxu0 %v887
    %2247 = vmatprep.subr.mxu0 0.0
    %2248 = vmatpush2.msra.mxu0 0.0
    %2249 = vmatprep.subr.mxu0 0.0
    %2250 = vmatpush2.msra.mxu0 0.0
    %2251 = vmatprep.subr.mxu0 0.0
    %2252 = vmatpush2.msra.mxu0 0.0
    %2253 = vmatprep.subr.mxu0 0.0
    %2254 = vmatpush2.msra.mxu0 0.0
    %2255 = vmatprep.subr.mxu0 0.0
    %2256 = vmatpush2.msra.mxu0 0.0
    %2257 = vmatprep.subr.mxu0 0.0
    %2258 = vmatpush2.msra.mxu0 0.0
    %2259 = vmatprep.subr.mxu0 0.0
    %2260 = vmatpush2.msra.mxu0 0.0
    %2261 = vmatprep.subr.mxu0 0.0
    %2262 = vmatpush2.msra.mxu0 0.0
    %2263 = vmatprep.subr.mxu0 0.0
    %2264 = vmatpush2.msra.mxu0 0.0
    %2265 = vmatprep.subr.mxu0 0.0
    %2266 = vmatpush2.msra.mxu0 0.0
    %2267 = vmatprep.subr.mxu0 0.0
    %2268 = vmatpush2.msra.mxu0 0.0
    %2269 = vmatprep.subr.mxu0 0.0
    %2270 = vmatpush2.msra.mxu0 0.0
    %2271 = vmatprep.subr.mxu0 0.0
    %2272 = vmatpush2.msra.mxu0 0.0
    %2273 = vmatprep.subr.mxu0 0.0
    %2274 = vmatpush2.msra.mxu0 0.0
    %2275 = vmatprep.subr.mxu0 0.0
    %2276 = vmatpush2.msra.mxu0 0.0
    %2277 = vmatprep.subr.mxu0 0.0
    %2278 = vmatpush2.msra.mxu0 0.0
    %2279 = vmatprep.mubr.f32.mxu0 0.0
    %2280 = vmatmul.mubr.f32.gmra.mxu0 %v2002
    %v2281 = vpop.f32.mrf.mxu0
    %v2282 = vadd.f32 %v1109, %v2281
    %v2283 = vpop.f32.mrf.mxu0
    %2284 = vdwg.mxu0
    %s2285 = smul.u32 3, 3
    %s2286 = smul.addr %s2285, 8
    %s2287 = scalar_lea.vmem [#allocation5], %s2286
    %v2288 = vld [vmem:[%s2287] sm:$0xff]
    %v2289 = vld [vmem:[%s2287 + $0x8] sm:$0xff]
    %v2290 = vld [vmem:[%s2287 + $0x10] sm:$0xff]
    %v2291 = vadd.f32 %v2288, %v2070
    %v2292 = vxor.u32 %v2291, 2147483648
    %v2293 = vmul.f32 %v2292, 1.442695
    %v2294 = vpow.pop %v2293
    %v2295 = vadd.f32 %v2294, 1.0
    %v2296 = vrcp.pop %v2295
    %v2297 = vmul.f32 1.0, %v2296
    %v2298 = vadd.f32 %v2289, %v2072
    %v2299 = vxor.u32 %v2298, 2147483648
    %v2300 = vmul.f32 %v2299, 1.442695
    %v2301 = vpow.pop %v2300
    %v2302 = vadd.f32 %v2301, 1.0
    %v2303 = vrcp.pop %v2302
    %v2304 = vmul.f32 1.0, %v2303
    %v2305 = vmul.f32 %v2297, %v2141
    %v2306 = vadd.f32 %v2290, %v2305
    %v2307 = vtanh.pop %v2306
    %v2308 = vsub.f32 1.0, %v2304
    %v2309 = vmul.f32 %v2308, %v2307
    %v2310 = vmul.f32 %v2304, %v2001
    %v2311 = vadd.f32 %v2309, %v2310
    %s2312 = smul.u32 4, 3
    %s2313 = smul.addr %s2312, 8
    %s2314 = scalar_lea.vmem [#allocation6], %s2313
    %v2315 = vld [vmem:[%s2314] sm:$0xff]
    %v2316 = vld [vmem:[%s2314 + $0x8] sm:$0xff]
    %v2317 = vld [vmem:[%s2314 + $0x10] sm:$0xff]
    %v2318 = vadd.f32 %v2315, %v2211
    %v2319 = vxor.u32 %v2318, 2147483648
    %v2320 = vmul.f32 %v2319, 1.442695
    %v2321 = vpow.pop %v2320
    %v2322 = vadd.f32 %v2321, 1.0
    %v2323 = vrcp.pop %v2322
    %v2324 = vmul.f32 1.0, %v2323
    %v2325 = vadd.f32 %v2316, %v2213
    %v2326 = vxor.u32 %v2325, 2147483648
    %v2327 = vmul.f32 %v2326, 1.442695
    %v2328 = vpow.pop %v2327
    %v2329 = vadd.f32 %v2328, 1.0
    %v2330 = vrcp.pop %v2329
    %v2331 = vmul.f32 1.0, %v2330
    %v2332 = vmul.f32 %v2324, %v2282
    %v2333 = vadd.f32 %v2317, %v2332
    %v2334 = vtanh.pop %v2333
    %v2335 = vsub.f32 1.0, %v2331
    %v2336 = vmul.f32 %v2335, %v2334
    %v2337 = vmul.f32 %v2331, %v2002
    %v2338 = vadd.f32 %v2336, %v2337
    %2339 = vst [vmem:[#allocation7] sm:$0xff] %v2311
    %2340 = vst [vmem:[#allocation8] sm:$0xff] %v2338
    %s2341 = scalar_lea.vmem [#allocation3], 24
    %2342 = vst [vmem:[%s2341] sm:$0xff] %v2311
    %s2343 = scalar_lea.vmem [#allocation4], 32
    %2344 = vst [vmem:[%s2343] sm:$0xff] %v2338
    %v2345 = vld [vmem:[#allocation7] sm:$0xff]
    %v2346 = vld [vmem:[#allocation8] sm:$0xff]
    %2347 = vmatprep.subr.mxu0 %v882
    %2348 = vmatpush1.msra.mxu0 %v881
    %2349 = vmatprep.subr.mxu0 %v879
    %2350 = vmatpush1.msra.mxu0 %v878
    %2351 = vmatprep.subr.mxu0 %v876
    %2352 = vmatpush1.msra.mxu0 %v875
    %2353 = vmatprep.subr.mxu0 %v873
    %2354 = vmatpush1.msra.mxu0 %v872
    %2355 = vmatprep.subr.mxu0 %v870
    %2356 = vmatpush1.msra.mxu0 %v869
    %2357 = vmatprep.subr.mxu0 %v867
    %2358 = vmatpush1.msra.mxu0 %v866
    %2359 = vmatprep.subr.mxu0 %v864
    %2360 = vmatpush1.msra.mxu0 %v863
    %2361 = vmatprep.subr.mxu0 %v861
    %2362 = vmatpush1.msra.mxu0 %v860
    %2363 = vmatprep.subr.mxu0 %v858
    %2364 = vmatpush1.msra.mxu0 %v857
    %2365 = vmatprep.subr.mxu0 %v855
    %2366 = vmatpush1.msra.mxu0 %v854
    %2367 = vmatprep.subr.mxu0 %v852
    %2368 = vmatpush1.msra.mxu0 %v851
    %2369 = vmatprep.subr.mxu0 %v849
    %2370 = vmatpush1.msra.mxu0 %v848
    %2371 = vmatprep.subr.mxu0 %v846
    %2372 = vmatpush1.msra.mxu0 %v845
    %2373 = vmatprep.subr.mxu0 %v843
    %2374 = vmatpush1.msra.mxu0 %v842
    %2375 = vmatprep.subr.mxu0 %v840
    %2376 = vmatpush1.msra.mxu0 %v839
    %2377 = vmatprep.subr.mxu0 %v837
    %2378 = vmatpush1.msra.mxu0 %v836
    %2379 = vmatprep.subr.mxu0 0.0
    %2380 = vmatpush2.msra.mxu0 0.0
    %2381 = vmatprep.subr.mxu0 0.0
    %2382 = vmatpush2.msra.mxu0 0.0
    %2383 = vmatprep.subr.mxu0 0.0
    %2384 = vmatpush2.msra.mxu0 0.0
    %2385 = vmatprep.subr.mxu0 0.0
    %2386 = vmatpush2.msra.mxu0 0.0
    %2387 = vmatprep.subr.mxu0 0.0
    %2388 = vmatpush2.msra.mxu0 0.0
    %2389 = vmatprep.subr.mxu0 0.0
    %2390 = vmatpush2.msra.mxu0 0.0
    %2391 = vmatprep.subr.mxu0 0.0
    %2392 = vmatpush2.msra.mxu0 0.0
    %2393 = vmatprep.subr.mxu0 0.0
    %2394 = vmatpush2.msra.mxu0 0.0
    %2395 = vmatprep.subr.mxu0 0.0
    %2396 = vmatpush2.msra.mxu0 0.0
    %2397 = vmatprep.subr.mxu0 0.0
    %2398 = vmatpush2.msra.mxu0 0.0
    %2399 = vmatprep.subr.mxu0 0.0
    %2400 = vmatpush2.msra.mxu0 0.0
    %2401 = vmatprep.subr.mxu0 0.0
    %2402 = vmatpush2.msra.mxu0 0.0
    %2403 = vmatprep.subr.mxu0 0.0
    %2404 = vmatpush2.msra.mxu0 0.0
    %2405 = vmatprep.subr.mxu0 0.0
    %2406 = vmatpush2.msra.mxu0 0.0
    %2407 = vmatprep.subr.mxu0 0.0
    %2408 = vmatpush2.msra.mxu0 0.0
    %2409 = vmatprep.subr.mxu0 0.0
    %2410 = vmatpush2.msra.mxu0 0.0
    %2411 = vmatprep.mubr.f32.mxu0 0.0
    %2412 = vmatmul.mubr.f32.gmra.mxu0 %v2345
    %v2413 = vpop.f32.mrf.mxu0
    %v2414 = vadd.f32 %v944, %v2413
    %v2415 = vpop.f32.mrf.mxu0
    %v2416 = vadd.f32 %v948, %v2415
    %2417 = vdwg.mxu0
    %2418 = vmatprep.subr.mxu0 0.0
    %2419 = vmatpush1.msra.mxu0 %v883
    %2420 = vmatprep.subr.mxu0 0.0
    %2421 = vmatpush1.msra.mxu0 %v880
    %2422 = vmatprep.subr.mxu0 0.0
    %2423 = vmatpush1.msra.mxu0 %v877
    %2424 = vmatprep.subr.mxu0 0.0
    %2425 = vmatpush1.msra.mxu0 %v874
    %2426 = vmatprep.subr.mxu0 0.0
    %2427 = vmatpush1.msra.mxu0 %v871
    %2428 = vmatprep.subr.mxu0 0.0
    %2429 = vmatpush1.msra.mxu0 %v868
    %2430 = vmatprep.subr.mxu0 0.0
    %2431 = vmatpush1.msra.mxu0 %v865
    %2432 = vmatprep.subr.mxu0 0.0
    %2433 = vmatpush1.msra.mxu0 %v862
    %2434 = vmatprep.subr.mxu0 0.0
    %2435 = vmatpush1.msra.mxu0 %v859
    %2436 = vmatprep.subr.mxu0 0.0
    %2437 = vmatpush1.msra.mxu0 %v856
    %2438 = vmatprep.subr.mxu0 0.0
    %2439 = vmatpush1.msra.mxu0 %v853
    %2440 = vmatprep.subr.mxu0 0.0
    %2441 = vmatpush1.msra.mxu0 %v850
    %2442 = vmatprep.subr.mxu0 0.0
    %2443 = vmatpush1.msra.mxu0 %v847
    %2444 = vmatprep.subr.mxu0 0.0
    %2445 = vmatpush1.msra.mxu0 %v844
    %2446 = vmatprep.subr.mxu0 0.0
    %2447 = vmatpush1.msra.mxu0 %v841
    %2448 = vmatprep.subr.mxu0 0.0
    %2449 = vmatpush1.msra.mxu0 %v838
    %2450 = vmatprep.subr.mxu0 0.0
    %2451 = vmatpush2.msra.mxu0 0.0
    %2452 = vmatprep.subr.mxu0 0.0
    %2453 = vmatpush2.msra.mxu0 0.0
    %2454 = vmatprep.subr.mxu0 0.0
    %2455 = vmatpush2.msra.mxu0 0.0
    %2456 = vmatprep.subr.mxu0 0.0
    %2457 = vmatpush2.msra.mxu0 0.0
    %2458 = vmatprep.subr.mxu0 0.0
    %2459 = vmatpush2.msra.mxu0 0.0
    %2460 = vmatprep.subr.mxu0 0.0
    %2461 = vmatpush2.msra.mxu0 0.0
    %2462 = vmatprep.subr.mxu0 0.0
    %2463 = vmatpush2.msra.mxu0 0.0
    %2464 = vmatprep.subr.mxu0 0.0
    %2465 = vmatpush2.msra.mxu0 0.0
    %2466 = vmatprep.subr.mxu0 0.0
    %2467 = vmatpush2.msra.mxu0 0.0
    %2468 = vmatprep.subr.mxu0 0.0
    %2469 = vmatpush2.msra.mxu0 0.0
    %2470 = vmatprep.subr.mxu0 0.0
    %2471 = vmatpush2.msra.mxu0 0.0
    %2472 = vmatprep.subr.mxu0 0.0
    %2473 = vmatpush2.msra.mxu0 0.0
    %2474 = vmatprep.subr.mxu0 0.0
    %2475 = vmatpush2.msra.mxu0 0.0
    %2476 = vmatprep.subr.mxu0 0.0
    %2477 = vmatpush2.msra.mxu0 0.0
    %2478 = vmatprep.subr.mxu0 0.0
    %2479 = vmatpush2.msra.mxu0 0.0
    %2480 = vmatprep.subr.mxu0 0.0
    %2481 = vmatpush2.msra.mxu0 0.0
    %2482 = vmatprep.mubr.f32.mxu0 0.0
    %2483 = vmatmul.mubr.f32.gmra.mxu0 %v2345
    %v2484 = vpop.f32.mrf.mxu0
    %v2485 = vadd.f32 %v952, %v2484
    %v2486 = vpop.f32.mrf.mxu0
    %2487 = vdwg.mxu0
    %2488 = vmatprep.subr.mxu0 %v931
    %2489 = vmatpush1.msra.mxu0 %v930
    %2490 = vmatprep.subr.mxu0 %v928
    %2491 = vmatpush1.msra.mxu0 %v927
    %2492 = vmatprep.subr.mxu0 %v925
    %2493 = vmatpush1.msra.mxu0 %v924
    %2494 = vmatprep.subr.mxu0 %v922
    %2495 = vmatpush1.msra.mxu0 %v921
    %2496 = vmatprep.subr.mxu0 %v919
    %2497 = vmatpush1.msra.mxu0 %v918
    %2498 = vmatprep.subr.mxu0 %v916
    %2499 = vmatpush1.msra.mxu0 %v915
    %2500 = vmatprep.subr.mxu0 %v913
    %2501 = vmatpush1.msra.mxu0 %v912
    %2502 = vmatprep.subr.mxu0 %v910
    %2503 = vmatpush1.msra.mxu0 %v909
    %2504 = vmatprep.subr.mxu0 %v907
    %2505 = vmatpush1.msra.mxu0 %v906
    %2506 = vmatprep.subr.mxu0 %v904
    %2507 = vmatpush1.msra.mxu0 %v903
    %2508 = vmatprep.subr.mxu0 %v901
    %2509 = vmatpush1.msra.mxu0 %v900
    %2510 = vmatprep.subr.mxu0 %v898
    %2511 = vmatpush1.msra.mxu0 %v897
    %2512 = vmatprep.subr.mxu0 %v895
    %2513 = vmatpush1.msra.mxu0 %v894
    %2514 = vmatprep.subr.mxu0 %v892
    %2515 = vmatpush1.msra.mxu0 %v891
    %2516 = vmatprep.subr.mxu0 %v889
    %2517 = vmatpush1.msra.mxu0 %v888
    %2518 = vmatprep.subr.mxu0 %v886
    %2519 = vmatpush1.msra.mxu0 %v885
    %2520 = vmatprep.subr.mxu0 0.0
    %2521 = vmatpush2.msra.mxu0 0.0
    %2522 = vmatprep.subr.mxu0 0.0
    %2523 = vmatpush2.msra.mxu0 0.0
    %2524 = vmatprep.subr.mxu0 0.0
    %2525 = vmatpush2.msra.mxu0 0.0
    %2526 = vmatprep.subr.mxu0 0.0
    %2527 = vmatpush2.msra.mxu0 0.0
    %2528 = vmatprep.subr.mxu0 0.0
    %2529 = vmatpush2.msra.mxu0 0.0
    %2530 = vmatprep.subr.mxu0 0.0
    %2531 = vmatpush2.msra.mxu0 0.0
    %2532 = vmatprep.subr.mxu0 0.0
    %2533 = vmatpush2.msra.mxu0 0.0
    %2534 = vmatprep.subr.mxu0 0.0
    %2535 = vmatpush2.msra.mxu0 0.0
    %2536 = vmatprep.subr.mxu0 0.0
    %2537 = vmatpush2.msra.mxu0 0.0
    %2538 = vmatprep.subr.mxu0 0.0
    %2539 = vmatpush2.msra.mxu0 0.0
    %2540 = vmatprep.subr.mxu0 0.0
    %2541 = vmatpush2.msra.mxu0 0.0
    %2542 = vmatprep.subr.mxu0 0.0
    %2543 = vmatpush2.msra.mxu0 0.0
    %2544 = vmatprep.subr.mxu0 0.0
    %2545 = vmatpush2.msra.mxu0 0.0
    %2546 = vmatprep.subr.mxu0 0.0
    %2547 = vmatpush2.msra.mxu0 0.0
    %2548 = vmatprep.subr.mxu0 0.0
    %2549 = vmatpush2.msra.mxu0 0.0
    %2550 = vmatprep.subr.mxu0 0.0
    %2551 = vmatpush2.msra.mxu0 0.0
    %2552 = vmatprep.mubr.f32.mxu0 0.0
    %2553 = vmatmul.mubr.f32.gmra.mxu0 %v2346
    %v2554 = vpop.f32.mrf.mxu0
    %v2555 = vadd.f32 %v1101, %v2554
    %v2556 = vpop.f32.mrf.mxu0
    %v2557 = vadd.f32 %v1105, %v2556
    %2558 = vdwg.mxu0
    %2559 = vmatprep.subr.mxu0 0.0
    %2560 = vmatpush1.msra.mxu0 %v932
    %2561 = vmatprep.subr.mxu0 0.0
    %2562 = vmatpush1.msra.mxu0 %v929
    %2563 = vmatprep.subr.mxu0 0.0
    %2564 = vmatpush1.msra.mxu0 %v926
    %2565 = vmatprep.subr.mxu0 0.0
    %2566 = vmatpush1.msra.mxu0 %v923
    %2567 = vmatprep.subr.mxu0 0.0
    %2568 = vmatpush1.msra.mxu0 %v920
    %2569 = vmatprep.subr.mxu0 0.0
    %2570 = vmatpush1.msra.mxu0 %v917
    %2571 = vmatprep.subr.mxu0 0.0
    %2572 = vmatpush1.msra.mxu0 %v914
    %2573 = vmatprep.subr.mxu0 0.0
    %2574 = vmatpush1.msra.mxu0 %v911
    %2575 = vmatprep.subr.mxu0 0.0
    %2576 = vmatpush1.msra.mxu0 %v908
    %2577 = vmatprep.subr.mxu0 0.0
    %2578 = vmatpush1.msra.mxu0 %v905
    %2579 = vmatprep.subr.mxu0 0.0
    %2580 = vmatpush1.msra.mxu0 %v902
    %2581 = vmatprep.subr.mxu0 0.0
    %2582 = vmatpush1.msra.mxu0 %v899
    %2583 = vmatprep.subr.mxu0 0.0
    %2584 = vmatpush1.msra.mxu0 %v896
    %2585 = vmatprep.subr.mxu0 0.0
    %2586 = vmatpush1.msra.mxu0 %v893
    %2587 = vmatprep.subr.mxu0 0.0
    %2588 = vmatpush1.msra.mxu0 %v890
    %2589 = vmatprep.subr.mxu0 0.0
    %2590 = vmatpush1.msra.mxu0 %v887
    %2591 = vmatprep.subr.mxu0 0.0
    %2592 = vmatpush2.msra.mxu0 0.0
    %2593 = vmatprep.subr.mxu0 0.0
    %2594 = vmatpush2.msra.mxu0 0.0
    %2595 = vmatprep.subr.mxu0 0.0
    %2596 = vmatpush2.msra.mxu0 0.0
    %2597 = vmatprep.subr.mxu0 0.0
    %2598 = vmatpush2.msra.mxu0 0.0
    %2599 = vmatprep.subr.mxu0 0.0
    %2600 = vmatpush2.msra.mxu0 0.0
    %2601 = vmatprep.subr.mxu0 0.0
    %2602 = vmatpush2.msra.mxu0 0.0
    %2603 = vmatprep.subr.mxu0 0.0
    %2604 = vmatpush2.msra.mxu0 0.0
    %2605 = vmatprep.subr.mxu0 0.0
    %2606 = vmatpush2.msra.mxu0 0.0
    %2607 = vmatprep.subr.mxu0 0.0
    %2608 = vmatpush2.msra.mxu0 0.0
    %2609 = vmatprep.subr.mxu0 0.0
    %2610 = vmatpush2.msra.mxu0 0.0
    %2611 = vmatprep.subr.mxu0 0.0
    %2612 = vmatpush2.msra.mxu0 0.0
    %2613 = vmatprep.subr.mxu0 0.0
    %2614 = vmatpush2.msra.mxu0 0.0
    %2615 = vmatprep.subr.mxu0 0.0
    %2616 = vmatpush2.msra.mxu0 0.0
    %2617 = vmatprep.subr.mxu0 0.0
    %2618 = vmatpush2.msra.mxu0 0.0
    %2619 = vmatprep.subr.mxu0 0.0
    %2620 = vmatpush2.msra.mxu0 0.0
    %2621 = vmatprep.subr.mxu0 0.0
    %2622 = vmatpush2.msra.mxu0 0.0
    %2623 = vmatprep.mubr.f32.mxu0 0.0
    %2624 = vmatmul.mubr.f32.gmra.mxu0 %v2346
    %v2625 = vpop.f32.mrf.mxu0
    %v2626 = vadd.f32 %v1109, %v2625
    %v2627 = vpop.f32.mrf.mxu0
    %2628 = vdwg.mxu0
    %s2629 = smul.addr %s2312, 8
    %s2630 = scalar_lea.vmem [#allocation5], %s2629
    %v2631 = vld [vmem:[%s2630] sm:$0xff]
    %v2632 = vld [vmem:[%s2630 + $0x8] sm:$0xff]
    %v2633 = vld [vmem:[%s2630 + $0x10] sm:$0xff]
    %v2634 = vadd.f32 %v2631, %v2414
    %v2635 = vxor.u32 %v2634, 2147483648
    %v2636 = vmul.f32 %v2635, 1.442695
    %v2637 = vpow.pop %v2636
    %v2638 = vadd.f32 %v2637, 1.0
    %v2639 = vrcp.pop %v2638
    %v2640 = vmul.f32 1.0, %v2639
    %v2641 = vadd.f32 %v2632, %v2416
    %v2642 = vxor.u32 %v2641, 2147483648
    %v2643 = vmul.f32 %v2642, 1.442695
    %v2644 = vpow.pop %v2643
    %v2645 = vadd.f32 %v2644, 1.0
    %v2646 = vrcp.pop %v2645
    %v2647 = vmul.f32 1.0, %v2646
    %v2648 = vmul.f32 %v2640, %v2485
    %v2649 = vadd.f32 %v2633, %v2648
    %v2650 = vtanh.pop %v2649
    %v2651 = vsub.f32 1.0, %v2647
    %v2652 = vmul.f32 %v2651, %v2650
    %v2653 = vmul.f32 %v2647, %v2345
    %v2654 = vadd.f32 %v2652, %v2653
    %s2655 = smul.addr %s2285, 8
    %s2656 = scalar_lea.vmem [#allocation6], %s2655
    %v2657 = vld [vmem:[%s2656] sm:$0xff]
    %v2658 = vld [vmem:[%s2656 + $0x8] sm:$0xff]
    %v2659 = vld [vmem:[%s2656 + $0x10] sm:$0xff]
    %v2660 = vadd.f32 %v2657, %v2555
    %v2661 = vxor.u32 %v2660, 2147483648
    %v2662 = vmul.f32 %v2661, 1.442695
    %v2663 = vpow.pop %v2662
    %v2664 = vadd.f32 %v2663, 1.0
    %v2665 = vrcp.pop %v2664
    %v2666 = vmul.f32 1.0, %v2665
    %v2667 = vadd.f32 %v2658, %v2557
    %v2668 = vxor.u32 %v2667, 2147483648
    %v2669 = vmul.f32 %v2668, 1.442695
    %v2670 = vpow.pop %v2669
    %v2671 = vadd.f32 %v2670, 1.0
    %v2672 = vrcp.pop %v2671
    %v2673 = vmul.f32 1.0, %v2672
    %v2674 = vmul.f32 %v2666, %v2626
    %v2675 = vadd.f32 %v2659, %v2674
    %v2676 = vtanh.pop %v2675
    %v2677 = vsub.f32 1.0, %v2673
    %v2678 = vmul.f32 %v2677, %v2676
    %v2679 = vmul.f32 %v2673, %v2346
    %v2680 = vadd.f32 %v2678, %v2679
    %2681 = vst [vmem:[#allocation7] sm:$0xff] %v2654
    %2682 = vst [vmem:[#allocation8] sm:$0xff] %v2680
    %s2683 = scalar_lea.vmem [#allocation3], 32
    %2684 = vst [vmem:[%s2683] sm:$0xff] %v2654
    %s2685 = scalar_lea.vmem [#allocation4], 24
    %2686 = vst [vmem:[%s2685] sm:$0xff] %v2680
    %v2687 = vld [vmem:[#allocation7] sm:$0xff]
    %v2688 = vld [vmem:[#allocation8] sm:$0xff]
    %2689 = vmatprep.subr.mxu0 %v882
    %2690 = vmatpush1.msra.mxu0 %v881
    %2691 = vmatprep.subr.mxu0 %v879
    %2692 = vmatpush1.msra.mxu0 %v878
    %2693 = vmatprep.subr.mxu0 %v876
    %2694 = vmatpush1.msra.mxu0 %v875
    %2695 = vmatprep.subr.mxu0 %v873
    %2696 = vmatpush1.msra.mxu0 %v872
    %2697 = vmatprep.subr.mxu0 %v870
    %2698 = vmatpush1.msra.mxu0 %v869
    %2699 = vmatprep.subr.mxu0 %v867
    %2700 = vmatpush1.msra.mxu0 %v866
    %2701 = vmatprep.subr.mxu0 %v864
    %2702 = vmatpush1.msra.mxu0 %v863
    %2703 = vmatprep.subr.mxu0 %v861
    %2704 = vmatpush1.msra.mxu0 %v860
    %2705 = vmatprep.subr.mxu0 %v858
    %2706 = vmatpush1.msra.mxu0 %v857
    %2707 = vmatprep.subr.mxu0 %v855
    %2708 = vmatpush1.msra.mxu0 %v854
    %2709 = vmatprep.subr.mxu0 %v852
    %2710 = vmatpush1.msra.mxu0 %v851
    %2711 = vmatprep.subr.mxu0 %v849
    %2712 = vmatpush1.msra.mxu0 %v848
    %2713 = vmatprep.subr.mxu0 %v846
    %2714 = vmatpush1.msra.mxu0 %v845
    %2715 = vmatprep.subr.mxu0 %v843
    %2716 = vmatpush1.msra.mxu0 %v842
    %2717 = vmatprep.subr.mxu0 %v840
    %2718 = vmatpush1.msra.mxu0 %v839
    %2719 = vmatprep.subr.mxu0 %v837
    %2720 = vmatpush1.msra.mxu0 %v836
    %2721 = vmatprep.subr.mxu0 0.0
    %2722 = vmatpush2.msra.mxu0 0.0
    %2723 = vmatprep.subr.mxu0 0.0
    %2724 = vmatpush2.msra.mxu0 0.0
    %2725 = vmatprep.subr.mxu0 0.0
    %2726 = vmatpush2.msra.mxu0 0.0
    %2727 = vmatprep.subr.mxu0 0.0
    %2728 = vmatpush2.msra.mxu0 0.0
    %2729 = vmatprep.subr.mxu0 0.0
    %2730 = vmatpush2.msra.mxu0 0.0
    %2731 = vmatprep.subr.mxu0 0.0
    %2732 = vmatpush2.msra.mxu0 0.0
    %2733 = vmatprep.subr.mxu0 0.0
    %2734 = vmatpush2.msra.mxu0 0.0
    %2735 = vmatprep.subr.mxu0 0.0
    %2736 = vmatpush2.msra.mxu0 0.0
    %2737 = vmatprep.subr.mxu0 0.0
    %2738 = vmatpush2.msra.mxu0 0.0
    %2739 = vmatprep.subr.mxu0 0.0
    %2740 = vmatpush2.msra.mxu0 0.0
    %2741 = vmatprep.subr.mxu0 0.0
    %2742 = vmatpush2.msra.mxu0 0.0
    %2743 = vmatprep.subr.mxu0 0.0
    %2744 = vmatpush2.msra.mxu0 0.0
    %2745 = vmatprep.subr.mxu0 0.0
    %2746 = vmatpush2.msra.mxu0 0.0
    %2747 = vmatprep.subr.mxu0 0.0
    %2748 = vmatpush2.msra.mxu0 0.0
    %2749 = vmatprep.subr.mxu0 0.0
    %2750 = vmatpush2.msra.mxu0 0.0
    %2751 = vmatprep.subr.mxu0 0.0
    %2752 = vmatpush2.msra.mxu0 0.0
    %2753 = vmatprep.mubr.f32.mxu0 0.0
    %2754 = vmatmul.mubr.f32.gmra.mxu0 %v2687
    %v2755 = vpop.f32.mrf.mxu0
    %v2756 = vadd.f32 %v944, %v2755
    %v2757 = vpop.f32.mrf.mxu0
    %v2758 = vadd.f32 %v948, %v2757
    %2759 = vdwg.mxu0
    %2760 = vmatprep.subr.mxu0 0.0
    %2761 = vmatpush1.msra.mxu0 %v883
    %2762 = vmatprep.subr.mxu0 0.0
    %2763 = vmatpush1.msra.mxu0 %v880
    %2764 = vmatprep.subr.mxu0 0.0
    %2765 = vmatpush1.msra.mxu0 %v877
    %2766 = vmatprep.subr.mxu0 0.0
    %2767 = vmatpush1.msra.mxu0 %v874
    %2768 = vmatprep.subr.mxu0 0.0
    %2769 = vmatpush1.msra.mxu0 %v871
    %2770 = vmatprep.subr.mxu0 0.0
    %2771 = vmatpush1.msra.mxu0 %v868
    %2772 = vmatprep.subr.mxu0 0.0
    %2773 = vmatpush1.msra.mxu0 %v865
    %2774 = vmatprep.subr.mxu0 0.0
    %2775 = vmatpush1.msra.mxu0 %v862
    %2776 = vmatprep.subr.mxu0 0.0
    %2777 = vmatpush1.msra.mxu0 %v859
    %2778 = vmatprep.subr.mxu0 0.0
    %2779 = vmatpush1.msra.mxu0 %v856
    %2780 = vmatprep.subr.mxu0 0.0
    %2781 = vmatpush1.msra.mxu0 %v853
    %2782 = vmatprep.subr.mxu0 0.0
    %2783 = vmatpush1.msra.mxu0 %v850
    %2784 = vmatprep.subr.mxu0 0.0
    %2785 = vmatpush1.msra.mxu0 %v847
    %2786 = vmatprep.subr.mxu0 0.0
    %2787 = vmatpush1.msra.mxu0 %v844
    %2788 = vmatprep.subr.mxu0 0.0
    %2789 = vmatpush1.msra.mxu0 %v841
    %2790 = vmatprep.subr.mxu0 0.0
    %2791 = vmatpush1.msra.mxu0 %v838
    %2792 = vmatprep.subr.mxu0 0.0
    %2793 = vmatpush2.msra.mxu0 0.0
    %2794 = vmatprep.subr.mxu0 0.0
    %2795 = vmatpush2.msra.mxu0 0.0
    %2796 = vmatprep.subr.mxu0 0.0
    %2797 = vmatpush2.msra.mxu0 0.0
    %2798 = vmatprep.subr.mxu0 0.0
    %2799 = vmatpush2.msra.mxu0 0.0
    %2800 = vmatprep.subr.mxu0 0.0
    %2801 = vmatpush2.msra.mxu0 0.0
    %2802 = vmatprep.subr.mxu0 0.0
    %2803 = vmatpush2.msra.mxu0 0.0
    %2804 = vmatprep.subr.mxu0 0.0
    %2805 = vmatpush2.msra.mxu0 0.0
    %2806 = vmatprep.subr.mxu0 0.0
    %2807 = vmatpush2.msra.mxu0 0.0
    %2808 = vmatprep.subr.mxu0 0.0
    %2809 = vmatpush2.msra.mxu0 0.0
    %2810 = vmatprep.subr.mxu0 0.0
    %2811 = vmatpush2.msra.mxu0 0.0
    %2812 = vmatprep.subr.mxu0 0.0
    %2813 = vmatpush2.msra.mxu0 0.0
    %2814 = vmatprep.subr.mxu0 0.0
    %2815 = vmatpush2.msra.mxu0 0.0
    %2816 = vmatprep.subr.mxu0 0.0
    %2817 = vmatpush2.msra.mxu0 0.0
    %2818 = vmatprep.subr.mxu0 0.0
    %2819 = vmatpush2.msra.mxu0 0.0
    %2820 = vmatprep.subr.mxu0 0.0
    %2821 = vmatpush2.msra.mxu0 0.0
    %2822 = vmatprep.subr.mxu0 0.0
    %2823 = vmatpush2.msra.mxu0 0.0
    %2824 = vmatprep.mubr.f32.mxu0 0.0
    %2825 = vmatmul.mubr.f32.gmra.mxu0 %v2687
    %v2826 = vpop.f32.mrf.mxu0
    %v2827 = vadd.f32 %v952, %v2826
    %v2828 = vpop.f32.mrf.mxu0
    %2829 = vdwg.mxu0
    %2830 = vmatprep.subr.mxu0 %v931
    %2831 = vmatpush1.msra.mxu0 %v930
    %2832 = vmatprep.subr.mxu0 %v928
    %2833 = vmatpush1.msra.mxu0 %v927
    %2834 = vmatprep.subr.mxu0 %v925
    %2835 = vmatpush1.msra.mxu0 %v924
    %2836 = vmatprep.subr.mxu0 %v922
    %2837 = vmatpush1.msra.mxu0 %v921
    %2838 = vmatprep.subr.mxu0 %v919
    %2839 = vmatpush1.msra.mxu0 %v918
    %2840 = vmatprep.subr.mxu0 %v916
    %2841 = vmatpush1.msra.mxu0 %v915
    %2842 = vmatprep.subr.mxu0 %v913
    %2843 = vmatpush1.msra.mxu0 %v912
    %2844 = vmatprep.subr.mxu0 %v910
    %2845 = vmatpush1.msra.mxu0 %v909
    %2846 = vmatprep.subr.mxu0 %v907
    %2847 = vmatpush1.msra.mxu0 %v906
    %2848 = vmatprep.subr.mxu0 %v904
    %2849 = vmatpush1.msra.mxu0 %v903
    %2850 = vmatprep.subr.mxu0 %v901
    %2851 = vmatpush1.msra.mxu0 %v900
    %2852 = vmatprep.subr.mxu0 %v898
    %2853 = vmatpush1.msra.mxu0 %v897
    %2854 = vmatprep.subr.mxu0 %v895
    %2855 = vmatpush1.msra.mxu0 %v894
    %2856 = vmatprep.subr.mxu0 %v892
    %2857 = vmatpush1.msra.mxu0 %v891
    %2858 = vmatprep.subr.mxu0 %v889
    %2859 = vmatpush1.msra.mxu0 %v888
    %2860 = vmatprep.subr.mxu0 %v886
    %2861 = vmatpush1.msra.mxu0 %v885
    %2862 = vmatprep.subr.mxu0 0.0
    %2863 = vmatpush2.msra.mxu0 0.0
    %2864 = vmatprep.subr.mxu0 0.0
    %2865 = vmatpush2.msra.mxu0 0.0
    %2866 = vmatprep.subr.mxu0 0.0
    %2867 = vmatpush2.msra.mxu0 0.0
    %2868 = vmatprep.subr.mxu0 0.0
    %2869 = vmatpush2.msra.mxu0 0.0
    %2870 = vmatprep.subr.mxu0 0.0
    %2871 = vmatpush2.msra.mxu0 0.0
    %2872 = vmatprep.subr.mxu0 0.0
    %2873 = vmatpush2.msra.mxu0 0.0
    %2874 = vmatprep.subr.mxu0 0.0
    %2875 = vmatpush2.msra.mxu0 0.0
    %2876 = vmatprep.subr.mxu0 0.0
    %2877 = vmatpush2.msra.mxu0 0.0
    %2878 = vmatprep.subr.mxu0 0.0
    %2879 = vmatpush2.msra.mxu0 0.0
    %2880 = vmatprep.subr.mxu0 0.0
    %2881 = vmatpush2.msra.mxu0 0.0
    %2882 = vmatprep.subr.mxu0 0.0
    %2883 = vmatpush2.msra.mxu0 0.0
    %2884 = vmatprep.subr.mxu0 0.0
    %2885 = vmatpush2.msra.mxu0 0.0
    %2886 = vmatprep.subr.mxu0 0.0
    %2887 = vmatpush2.msra.mxu0 0.0
    %2888 = vmatprep.subr.mxu0 0.0
    %2889 = vmatpush2.msra.mxu0 0.0
    %2890 = vmatprep.subr.mxu0 0.0
    %2891 = vmatpush2.msra.mxu0 0.0
    %2892 = vmatprep.subr.mxu0 0.0
    %2893 = vmatpush2.msra.mxu0 0.0
    %2894 = vmatprep.mubr.f32.mxu0 0.0
    %2895 = vmatmul.mubr.f32.gmra.mxu0 %v2688
    %v2896 = vpop.f32.mrf.mxu0
    %v2897 = vadd.f32 %v1101, %v2896
    %v2898 = vpop.f32.mrf.mxu0
    %v2899 = vadd.f32 %v1105, %v2898
    %2900 = vdwg.mxu0
    %2901 = vmatprep.subr.mxu0 0.0
    %2902 = vmatpush1.msra.mxu0 %v932
    %2903 = vmatprep.subr.mxu0 0.0
    %2904 = vmatpush1.msra.mxu0 %v929
    %2905 = vmatprep.subr.mxu0 0.0
    %2906 = vmatpush1.msra.mxu0 %v926
    %2907 = vmatprep.subr.mxu0 0.0
    %2908 = vmatpush1.msra.mxu0 %v923
    %2909 = vmatprep.subr.mxu0 0.0
    %2910 = vmatpush1.msra.mxu0 %v920
    %2911 = vmatprep.subr.mxu0 0.0
    %2912 = vmatpush1.msra.mxu0 %v917
    %2913 = vmatprep.subr.mxu0 0.0
    %2914 = vmatpush1.msra.mxu0 %v914
    %2915 = vmatprep.subr.mxu0 0.0
    %2916 = vmatpush1.msra.mxu0 %v911
    %2917 = vmatprep.subr.mxu0 0.0
    %2918 = vmatpush1.msra.mxu0 %v908
    %2919 = vmatprep.subr.mxu0 0.0
    %2920 = vmatpush1.msra.mxu0 %v905
    %2921 = vmatprep.subr.mxu0 0.0
    %2922 = vmatpush1.msra.mxu0 %v902
    %2923 = vmatprep.subr.mxu0 0.0
    %2924 = vmatpush1.msra.mxu0 %v899
    %2925 = vmatprep.subr.mxu0 0.0
    %2926 = vmatpush1.msra.mxu0 %v896
    %2927 = vmatprep.subr.mxu0 0.0
    %2928 = vmatpush1.msra.mxu0 %v893
    %2929 = vmatprep.subr.mxu0 0.0
    %2930 = vmatpush1.msra.mxu0 %v890
    %2931 = vmatprep.subr.mxu0 0.0
    %2932 = vmatpush1.msra.mxu0 %v887
    %2933 = vmatprep.subr.mxu0 0.0
    %2934 = vmatpush2.msra.mxu0 0.0
    %2935 = vmatprep.subr.mxu0 0.0
    %2936 = vmatpush2.msra.mxu0 0.0
    %2937 = vmatprep.subr.mxu0 0.0
    %2938 = vmatpush2.msra.mxu0 0.0
    %2939 = vmatprep.subr.mxu0 0.0
    %2940 = vmatpush2.msra.mxu0 0.0
    %2941 = vmatprep.subr.mxu0 0.0
    %2942 = vmatpush2.msra.mxu0 0.0
    %2943 = vmatprep.subr.mxu0 0.0
    %2944 = vmatpush2.msra.mxu0 0.0
    %2945 = vmatprep.subr.mxu0 0.0
    %2946 = vmatpush2.msra.mxu0 0.0
    %2947 = vmatprep.subr.mxu0 0.0
    %2948 = vmatpush2.msra.mxu0 0.0
    %2949 = vmatprep.subr.mxu0 0.0
    %2950 = vmatpush2.msra.mxu0 0.0
    %2951 = vmatprep.subr.mxu0 0.0
    %2952 = vmatpush2.msra.mxu0 0.0
    %2953 = vmatprep.subr.mxu0 0.0
    %2954 = vmatpush2.msra.mxu0 0.0
    %2955 = vmatprep.subr.mxu0 0.0
    %2956 = vmatpush2.msra.mxu0 0.0
    %2957 = vmatprep.subr.mxu0 0.0
    %2958 = vmatpush2.msra.mxu0 0.0
    %2959 = vmatprep.subr.mxu0 0.0
    %2960 = vmatpush2.msra.mxu0 0.0
    %2961 = vmatprep.subr.mxu0 0.0
    %2962 = vmatpush2.msra.mxu0 0.0
    %2963 = vmatprep.subr.mxu0 0.0
    %2964 = vmatpush2.msra.mxu0 0.0
    %2965 = vmatprep.mubr.f32.mxu0 0.0
    %2966 = vmatmul.mubr.f32.gmra.mxu0 %v2688
    %v2967 = vpop.f32.mrf.mxu0
    %v2968 = vadd.f32 %v1109, %v2967
    %v2969 = vpop.f32.mrf.mxu0
    %2970 = vdwg.mxu0
    %s2971 = smul.addr %s1968, 8
    %s2972 = scalar_lea.vmem [#allocation5], %s2971
    %v2973 = vld [vmem:[%s2972] sm:$0xff]
    %v2974 = vld [vmem:[%s2972 + $0x8] sm:$0xff]
    %v2975 = vld [vmem:[%s2972 + $0x10] sm:$0xff]
    %v2976 = vadd.f32 %v2973, %v2756
    %v2977 = vxor.u32 %v2976, 2147483648
    %v2978 = vmul.f32 %v2977, 1.442695
    %v2979 = vpow.pop %v2978
    %v2980 = vadd.f32 %v2979, 1.0
    %v2981 = vrcp.pop %v2980
    %v2982 = vmul.f32 1.0, %v2981
    %v2983 = vadd.f32 %v2974, %v2758
    %v2984 = vxor.u32 %v2983, 2147483648
    %v2985 = vmul.f32 %v2984, 1.442695
    %v2986 = vpow.pop %v2985
    %v2987 = vadd.f32 %v2986, 1.0
    %v2988 = vrcp.pop %v2987
    %v2989 = vmul.f32 1.0, %v2988
    %v2990 = vmul.f32 %v2982, %v2827
    %v2991 = vadd.f32 %v2975, %v2990
    %v2992 = vtanh.pop %v2991
    %v2993 = vsub.f32 1.0, %v2989
    %v2994 = vmul.f32 %v2993, %v2992
    %v2995 = vmul.f32 %v2989, %v2687
    %v2996 = vadd.f32 %v2994, %v2995
    %s2997 = smul.addr %s1941, 8
    %s2998 = scalar_lea.vmem [#allocation6], %s2997
    %v2999 = vld [vmem:[%s2998] sm:$0xff]
    %v3000 = vld [vmem:[%s2998 + $0x8] sm:$0xff]
    %v3001 = vld [vmem:[%s2998 + $0x10] sm:$0xff]
    %v3002 = vadd.f32 %v2999, %v2897
    %v3003 = vxor.u32 %v3002, 2147483648
    %v3004 = vmul.f32 %v3003, 1.442695
    %v3005 = vpow.pop %v3004
    %v3006 = vadd.f32 %v3005, 1.0
    %v3007 = vrcp.pop %v3006
    %v3008 = vmul.f32 1.0, %v3007
    %v3009 = vadd.f32 %v3000, %v2899
    %v3010 = vxor.u32 %v3009, 2147483648
    %v3011 = vmul.f32 %v3010, 1.442695
    %v3012 = vpow.pop %v3011
    %v3013 = vadd.f32 %v3012, 1.0
    %v3014 = vrcp.pop %v3013
    %v3015 = vmul.f32 1.0, %v3014
    %v3016 = vmul.f32 %v3008, %v2968
    %v3017 = vadd.f32 %v3001, %v3016
    %v3018 = vtanh.pop %v3017
    %v3019 = vsub.f32 1.0, %v3015
    %v3020 = vmul.f32 %v3019, %v3018
    %v3021 = vmul.f32 %v3015, %v2688
    %v3022 = vadd.f32 %v3020, %v3021
    %3023 = vst [vmem:[#allocation7] sm:$0xff] %v2996
    %3024 = vst [vmem:[#allocation8] sm:$0xff] %v3022
    %s3025 = scalar_lea.vmem [#allocation3], 40
    %3026 = vst [vmem:[%s3025] sm:$0xff] %v2996
    %s3027 = scalar_lea.vmem [#allocation4], 16
    %3028 = vst [vmem:[%s3027] sm:$0xff] %v3022
    %v3029 = vld [vmem:[#allocation7] sm:$0xff]
    %v3030 = vld [vmem:[#allocation8] sm:$0xff]
    %3031 = vmatprep.subr.mxu0 %v882
    %3032 = vmatpush1.msra.mxu0 %v881
    %3033 = vmatprep.subr.mxu0 %v879
    %3034 = vmatpush1.msra.mxu0 %v878
    %3035 = vmatprep.subr.mxu0 %v876
    %3036 = vmatpush1.msra.mxu0 %v875
    %3037 = vmatprep.subr.mxu0 %v873
    %3038 = vmatpush1.msra.mxu0 %v872
    %3039 = vmatprep.subr.mxu0 %v870
    %3040 = vmatpush1.msra.mxu0 %v869
    %3041 = vmatprep.subr.mxu0 %v867
    %3042 = vmatpush1.msra.mxu0 %v866
    %3043 = vmatprep.subr.mxu0 %v864
    %3044 = vmatpush1.msra.mxu0 %v863
    %3045 = vmatprep.subr.mxu0 %v861
    %3046 = vmatpush1.msra.mxu0 %v860
    %3047 = vmatprep.subr.mxu0 %v858
    %3048 = vmatpush1.msra.mxu0 %v857
    %3049 = vmatprep.subr.mxu0 %v855
    %3050 = vmatpush1.msra.mxu0 %v854
    %3051 = vmatprep.subr.mxu0 %v852
    %3052 = vmatpush1.msra.mxu0 %v851
    %3053 = vmatprep.subr.mxu0 %v849
    %3054 = vmatpush1.msra.mxu0 %v848
    %3055 = vmatprep.subr.mxu0 %v846
    %3056 = vmatpush1.msra.mxu0 %v845
    %3057 = vmatprep.subr.mxu0 %v843
    %3058 = vmatpush1.msra.mxu0 %v842
    %3059 = vmatprep.subr.mxu0 %v840
    %3060 = vmatpush1.msra.mxu0 %v839
    %3061 = vmatprep.subr.mxu0 %v837
    %3062 = vmatpush1.msra.mxu0 %v836
    %3063 = vmatprep.subr.mxu0 0.0
    %3064 = vmatpush2.msra.mxu0 0.0
    %3065 = vmatprep.subr.mxu0 0.0
    %3066 = vmatpush2.msra.mxu0 0.0
    %3067 = vmatprep.subr.mxu0 0.0
    %3068 = vmatpush2.msra.mxu0 0.0
    %3069 = vmatprep.subr.mxu0 0.0
    %3070 = vmatpush2.msra.mxu0 0.0
    %3071 = vmatprep.subr.mxu0 0.0
    %3072 = vmatpush2.msra.mxu0 0.0
    %3073 = vmatprep.subr.mxu0 0.0
    %3074 = vmatpush2.msra.mxu0 0.0
    %3075 = vmatprep.subr.mxu0 0.0
    %3076 = vmatpush2.msra.mxu0 0.0
    %3077 = vmatprep.subr.mxu0 0.0
    %3078 = vmatpush2.msra.mxu0 0.0
    %3079 = vmatprep.subr.mxu0 0.0
    %3080 = vmatpush2.msra.mxu0 0.0
    %3081 = vmatprep.subr.mxu0 0.0
    %3082 = vmatpush2.msra.mxu0 0.0
    %3083 = vmatprep.subr.mxu0 0.0
    %3084 = vmatpush2.msra.mxu0 0.0
    %3085 = vmatprep.subr.mxu0 0.0
    %3086 = vmatpush2.msra.mxu0 0.0
    %3087 = vmatprep.subr.mxu0 0.0
    %3088 = vmatpush2.msra.mxu0 0.0
    %3089 = vmatprep.subr.mxu0 0.0
    %3090 = vmatpush2.msra.mxu0 0.0
    %3091 = vmatprep.subr.mxu0 0.0
    %3092 = vmatpush2.msra.mxu0 0.0
    %3093 = vmatprep.subr.mxu0 0.0
    %3094 = vmatpush2.msra.mxu0 0.0
    %3095 = vmatprep.mubr.f32.mxu0 0.0
    %3096 = vmatmul.mubr.f32.gmra.mxu0 %v3029
    %v3097 = vpop.f32.mrf.mxu0
    %v3098 = vadd.f32 %v944, %v3097
    %v3099 = vpop.f32.mrf.mxu0
    %v3100 = vadd.f32 %v948, %v3099
    %3101 = vdwg.mxu0
    %3102 = vmatprep.subr.mxu0 0.0
    %3103 = vmatpush1.msra.mxu0 %v883
    %3104 = vmatprep.subr.mxu0 0.0
    %3105 = vmatpush1.msra.mxu0 %v880
    %3106 = vmatprep.subr.mxu0 0.0
    %3107 = vmatpush1.msra.mxu0 %v877
    %3108 = vmatprep.subr.mxu0 0.0
    %3109 = vmatpush1.msra.mxu0 %v874
    %3110 = vmatprep.subr.mxu0 0.0
    %3111 = vmatpush1.msra.mxu0 %v871
    %3112 = vmatprep.subr.mxu0 0.0
    %3113 = vmatpush1.msra.mxu0 %v868
    %3114 = vmatprep.subr.mxu0 0.0
    %3115 = vmatpush1.msra.mxu0 %v865
    %3116 = vmatprep.subr.mxu0 0.0
    %3117 = vmatpush1.msra.mxu0 %v862
    %3118 = vmatprep.subr.mxu0 0.0
    %3119 = vmatpush1.msra.mxu0 %v859
    %3120 = vmatprep.subr.mxu0 0.0
    %3121 = vmatpush1.msra.mxu0 %v856
    %3122 = vmatprep.subr.mxu0 0.0
    %3123 = vmatpush1.msra.mxu0 %v853
    %3124 = vmatprep.subr.mxu0 0.0
    %3125 = vmatpush1.msra.mxu0 %v850
    %3126 = vmatprep.subr.mxu0 0.0
    %3127 = vmatpush1.msra.mxu0 %v847
    %3128 = vmatprep.subr.mxu0 0.0
    %3129 = vmatpush1.msra.mxu0 %v844
    %3130 = vmatprep.subr.mxu0 0.0
    %3131 = vmatpush1.msra.mxu0 %v841
    %3132 = vmatprep.subr.mxu0 0.0
    %3133 = vmatpush1.msra.mxu0 %v838
    %3134 = vmatprep.subr.mxu0 0.0
    %3135 = vmatpush2.msra.mxu0 0.0
    %3136 = vmatprep.subr.mxu0 0.0
    %3137 = vmatpush2.msra.mxu0 0.0
    %3138 = vmatprep.subr.mxu0 0.0
    %3139 = vmatpush2.msra.mxu0 0.0
    %3140 = vmatprep.subr.mxu0 0.0
    %3141 = vmatpush2.msra.mxu0 0.0
    %3142 = vmatprep.subr.mxu0 0.0
    %3143 = vmatpush2.msra.mxu0 0.0
    %3144 = vmatprep.subr.mxu0 0.0
    %3145 = vmatpush2.msra.mxu0 0.0
    %3146 = vmatprep.subr.mxu0 0.0
    %3147 = vmatpush2.msra.mxu0 0.0
    %3148 = vmatprep.subr.mxu0 0.0
    %3149 = vmatpush2.msra.mxu0 0.0
    %3150 = vmatprep.subr.mxu0 0.0
    %3151 = vmatpush2.msra.mxu0 0.0
    %3152 = vmatprep.subr.mxu0 0.0
    %3153 = vmatpush2.msra.mxu0 0.0
    %3154 = vmatprep.subr.mxu0 0.0
    %3155 = vmatpush2.msra.mxu0 0.0
    %3156 = vmatprep.subr.mxu0 0.0
    %3157 = vmatpush2.msra.mxu0 0.0
    %3158 = vmatprep.subr.mxu0 0.0
    %3159 = vmatpush2.msra.mxu0 0.0
    %3160 = vmatprep.subr.mxu0 0.0
    %3161 = vmatpush2.msra.mxu0 0.0
    %3162 = vmatprep.subr.mxu0 0.0
    %3163 = vmatpush2.msra.mxu0 0.0
    %3164 = vmatprep.subr.mxu0 0.0
    %3165 = vmatpush2.msra.mxu0 0.0
    %3166 = vmatprep.mubr.f32.mxu0 0.0
    %3167 = vmatmul.mubr.f32.gmra.mxu0 %v3029
    %v3168 = vpop.f32.mrf.mxu0
    %v3169 = vadd.f32 %v952, %v3168
    %v3170 = vpop.f32.mrf.mxu0
    %3171 = vdwg.mxu0
    %3172 = vmatprep.subr.mxu0 %v931
    %3173 = vmatpush1.msra.mxu0 %v930
    %3174 = vmatprep.subr.mxu0 %v928
    %3175 = vmatpush1.msra.mxu0 %v927
    %3176 = vmatprep.subr.mxu0 %v925
    %3177 = vmatpush1.msra.mxu0 %v924
    %3178 = vmatprep.subr.mxu0 %v922
    %3179 = vmatpush1.msra.mxu0 %v921
    %3180 = vmatprep.subr.mxu0 %v919
    %3181 = vmatpush1.msra.mxu0 %v918
    %3182 = vmatprep.subr.mxu0 %v916
    %3183 = vmatpush1.msra.mxu0 %v915
    %3184 = vmatprep.subr.mxu0 %v913
    %3185 = vmatpush1.msra.mxu0 %v912
    %3186 = vmatprep.subr.mxu0 %v910
    %3187 = vmatpush1.msra.mxu0 %v909
    %3188 = vmatprep.subr.mxu0 %v907
    %3189 = vmatpush1.msra.mxu0 %v906
    %3190 = vmatprep.subr.mxu0 %v904
    %3191 = vmatpush1.msra.mxu0 %v903
    %3192 = vmatprep.subr.mxu0 %v901
    %3193 = vmatpush1.msra.mxu0 %v900
    %3194 = vmatprep.subr.mxu0 %v898
    %3195 = vmatpush1.msra.mxu0 %v897
    %3196 = vmatprep.subr.mxu0 %v895
    %3197 = vmatpush1.msra.mxu0 %v894
    %3198 = vmatprep.subr.mxu0 %v892
    %3199 = vmatpush1.msra.mxu0 %v891
    %3200 = vmatprep.subr.mxu0 %v889
    %3201 = vmatpush1.msra.mxu0 %v888
    %3202 = vmatprep.subr.mxu0 %v886
    %3203 = vmatpush1.msra.mxu0 %v885
    %3204 = vmatprep.subr.mxu0 0.0
    %3205 = vmatpush2.msra.mxu0 0.0
    %3206 = vmatprep.subr.mxu0 0.0
    %3207 = vmatpush2.msra.mxu0 0.0
    %3208 = vmatprep.subr.mxu0 0.0
    %3209 = vmatpush2.msra.mxu0 0.0
    %3210 = vmatprep.subr.mxu0 0.0
    %3211 = vmatpush2.msra.mxu0 0.0
    %3212 = vmatprep.subr.mxu0 0.0
    %3213 = vmatpush2.msra.mxu0 0.0
    %3214 = vmatprep.subr.mxu0 0.0
    %3215 = vmatpush2.msra.mxu0 0.0
    %3216 = vmatprep.subr.mxu0 0.0
    %3217 = vmatpush2.msra.mxu0 0.0
    %3218 = vmatprep.subr.mxu0 0.0
    %3219 = vmatpush2.msra.mxu0 0.0
    %3220 = vmatprep.subr.mxu0 0.0
    %3221 = vmatpush2.msra.mxu0 0.0
    %3222 = vmatprep.subr.mxu0 0.0
    %3223 = vmatpush2.msra.mxu0 0.0
    %3224 = vmatprep.subr.mxu0 0.0
    %3225 = vmatpush2.msra.mxu0 0.0
    %3226 = vmatprep.subr.mxu0 0.0
    %3227 = vmatpush2.msra.mxu0 0.0
    %3228 = vmatprep.subr.mxu0 0.0
    %3229 = vmatpush2.msra.mxu0 0.0
    %3230 = vmatprep.subr.mxu0 0.0
    %3231 = vmatpush2.msra.mxu0 0.0
    %3232 = vmatprep.subr.mxu0 0.0
    %3233 = vmatpush2.msra.mxu0 0.0
    %3234 = vmatprep.subr.mxu0 0.0
    %3235 = vmatpush2.msra.mxu0 0.0
    %3236 = vmatprep.mubr.f32.mxu0 0.0
    %3237 = vmatmul.mubr.f32.gmra.mxu0 %v3030
    %v3238 = vpop.f32.mrf.mxu0
    %v3239 = vadd.f32 %v1101, %v3238
    %v3240 = vpop.f32.mrf.mxu0
    %v3241 = vadd.f32 %v1105, %v3240
    %3242 = vdwg.mxu0
    %3243 = vmatprep.subr.mxu0 0.0
    %3244 = vmatpush1.msra.mxu0 %v932
    %3245 = vmatprep.subr.mxu0 0.0
    %3246 = vmatpush1.msra.mxu0 %v929
    %3247 = vmatprep.subr.mxu0 0.0
    %3248 = vmatpush1.msra.mxu0 %v926
    %3249 = vmatprep.subr.mxu0 0.0
    %3250 = vmatpush1.msra.mxu0 %v923
    %3251 = vmatprep.subr.mxu0 0.0
    %3252 = vmatpush1.msra.mxu0 %v920
    %3253 = vmatprep.subr.mxu0 0.0
    %3254 = vmatpush1.msra.mxu0 %v917
    %3255 = vmatprep.subr.mxu0 0.0
    %3256 = vmatpush1.msra.mxu0 %v914
    %3257 = vmatprep.subr.mxu0 0.0
    %3258 = vmatpush1.msra.mxu0 %v911
    %3259 = vmatprep.subr.mxu0 0.0
    %3260 = vmatpush1.msra.mxu0 %v908
    %3261 = vmatprep.subr.mxu0 0.0
    %3262 = vmatpush1.msra.mxu0 %v905
    %3263 = vmatprep.subr.mxu0 0.0
    %3264 = vmatpush1.msra.mxu0 %v902
    %3265 = vmatprep.subr.mxu0 0.0
    %3266 = vmatpush1.msra.mxu0 %v899
    %3267 = vmatprep.subr.mxu0 0.0
    %3268 = vmatpush1.msra.mxu0 %v896
    %3269 = vmatprep.subr.mxu0 0.0
    %3270 = vmatpush1.msra.mxu0 %v893
    %3271 = vmatprep.subr.mxu0 0.0
    %3272 = vmatpush1.msra.mxu0 %v890
    %3273 = vmatprep.subr.mxu0 0.0
    %3274 = vmatpush1.msra.mxu0 %v887
    %3275 = vmatprep.subr.mxu0 0.0
    %3276 = vmatpush2.msra.mxu0 0.0
    %3277 = vmatprep.subr.mxu0 0.0
    %3278 = vmatpush2.msra.mxu0 0.0
    %3279 = vmatprep.subr.mxu0 0.0
    %3280 = vmatpush2.msra.mxu0 0.0
    %3281 = vmatprep.subr.mxu0 0.0
    %3282 = vmatpush2.msra.mxu0 0.0
    %3283 = vmatprep.subr.mxu0 0.0
    %3284 = vmatpush2.msra.mxu0 0.0
    %3285 = vmatprep.subr.mxu0 0.0
    %3286 = vmatpush2.msra.mxu0 0.0
    %3287 = vmatprep.subr.mxu0 0.0
    %3288 = vmatpush2.msra.mxu0 0.0
    %3289 = vmatprep.subr.mxu0 0.0
    %3290 = vmatpush2.msra.mxu0 0.0
    %3291 = vmatprep.subr.mxu0 0.0
    %3292 = vmatpush2.msra.mxu0 0.0
    %3293 = vmatprep.subr.mxu0 0.0
    %3294 = vmatpush2.msra.mxu0 0.0
    %3295 = vmatprep.subr.mxu0 0.0
    %3296 = vmatpush2.msra.mxu0 0.0
    %3297 = vmatprep.subr.mxu0 0.0
    %3298 = vmatpush2.msra.mxu0 0.0
    %3299 = vmatprep.subr.mxu0 0.0
    %3300 = vmatpush2.msra.mxu0 0.0
    %3301 = vmatprep.subr.mxu0 0.0
    %3302 = vmatpush2.msra.mxu0 0.0
    %3303 = vmatprep.subr.mxu0 0.0
    %3304 = vmatpush2.msra.mxu0 0.0
    %3305 = vmatprep.subr.mxu0 0.0
    %3306 = vmatpush2.msra.mxu0 0.0
    %3307 = vmatprep.mubr.f32.mxu0 0.0
    %3308 = vmatmul.mubr.f32.gmra.mxu0 %v3030
    %v3309 = vpop.f32.mrf.mxu0
    %v3310 = vadd.f32 %v1109, %v3309
    %v3311 = vpop.f32.mrf.mxu0
    %3312 = vdwg.mxu0
    %s3313 = smul.addr %s1624, 8
    %s3314 = scalar_lea.vmem [#allocation5], %s3313
    %v3315 = vld [vmem:[%s3314] sm:$0xff]
    %v3316 = vld [vmem:[%s3314 + $0x8] sm:$0xff]
    %v3317 = vld [vmem:[%s3314 + $0x10] sm:$0xff]
    %v3318 = vadd.f32 %v3315, %v3098
    %v3319 = vxor.u32 %v3318, 2147483648
    %v3320 = vmul.f32 %v3319, 1.442695
    %v3321 = vpow.pop %v3320
    %v3322 = vadd.f32 %v3321, 1.0
    %v3323 = vrcp.pop %v3322
    %v3324 = vmul.f32 1.0, %v3323
    %v3325 = vadd.f32 %v3316, %v3100
    %v3326 = vxor.u32 %v3325, 2147483648
    %v3327 = vmul.f32 %v3326, 1.442695
    %v3328 = vpow.pop %v3327
    %v3329 = vadd.f32 %v3328, 1.0
    %v3330 = vrcp.pop %v3329
    %v3331 = vmul.f32 1.0, %v3330
    %v3332 = vmul.f32 %v3324, %v3169
    %v3333 = vadd.f32 %v3317, %v3332
    %v3334 = vtanh.pop %v3333
    %v3335 = vsub.f32 1.0, %v3331
    %v3336 = vmul.f32 %v3335, %v3334
    %v3337 = vmul.f32 %v3331, %v3029
    %v3338 = vadd.f32 %v3336, %v3337
    %s3339 = smul.addr %s1597, 8
    %s3340 = scalar_lea.vmem [#allocation6], %s3339
    %v3341 = vld [vmem:[%s3340] sm:$0xff]
    %v3342 = vld [vmem:[%s3340 + $0x8] sm:$0xff]
    %v3343 = vld [vmem:[%s3340 + $0x10] sm:$0xff]
    %v3344 = vadd.f32 %v3341, %v3239
    %v3345 = vxor.u32 %v3344, 2147483648
    %v3346 = vmul.f32 %v3345, 1.442695
    %v3347 = vpow.pop %v3346
    %v3348 = vadd.f32 %v3347, 1.0
    %v3349 = vrcp.pop %v3348
    %v3350 = vmul.f32 1.0, %v3349
    %v3351 = vadd.f32 %v3342, %v3241
    %v3352 = vxor.u32 %v3351, 2147483648
    %v3353 = vmul.f32 %v3352, 1.442695
    %v3354 = vpow.pop %v3353
    %v3355 = vadd.f32 %v3354, 1.0
    %v3356 = vrcp.pop %v3355
    %v3357 = vmul.f32 1.0, %v3356
    %v3358 = vmul.f32 %v3350, %v3310
    %v3359 = vadd.f32 %v3343, %v3358
    %v3360 = vtanh.pop %v3359
    %v3361 = vsub.f32 1.0, %v3357
    %v3362 = vmul.f32 %v3361, %v3360
    %v3363 = vmul.f32 %v3357, %v3030
    %v3364 = vadd.f32 %v3362, %v3363
    %3365 = vst [vmem:[#allocation7] sm:$0xff] %v3338
    %3366 = vst [vmem:[#allocation8] sm:$0xff] %v3364
    %s3367 = scalar_lea.vmem [#allocation3], 48
    %3368 = vst [vmem:[%s3367] sm:$0xff] %v3338
    %s3369 = scalar_lea.vmem [#allocation4], 8
    %3370 = vst [vmem:[%s3369] sm:$0xff] %v3364
    %v3371 = vld [vmem:[#allocation7] sm:$0xff]
    %v3372 = vld [vmem:[#allocation8] sm:$0xff]
    %3373 = vmatprep.subr.mxu0 %v882
    %3374 = vmatpush1.msra.mxu0 %v881
    %3375 = vmatprep.subr.mxu0 %v879
    %3376 = vmatpush1.msra.mxu0 %v878
    %3377 = vmatprep.subr.mxu0 %v876
    %3378 = vmatpush1.msra.mxu0 %v875
    %3379 = vmatprep.subr.mxu0 %v873
    %3380 = vmatpush1.msra.mxu0 %v872
    %3381 = vmatprep.subr.mxu0 %v870
    %3382 = vmatpush1.msra.mxu0 %v869
    %3383 = vmatprep.subr.mxu0 %v867
    %3384 = vmatpush1.msra.mxu0 %v866
    %3385 = vmatprep.subr.mxu0 %v864
    %3386 = vmatpush1.msra.mxu0 %v863
    %3387 = vmatprep.subr.mxu0 %v861
    %3388 = vmatpush1.msra.mxu0 %v860
    %3389 = vmatprep.subr.mxu0 %v858
    %3390 = vmatpush1.msra.mxu0 %v857
    %3391 = vmatprep.subr.mxu0 %v855
    %3392 = vmatpush1.msra.mxu0 %v854
    %3393 = vmatprep.subr.mxu0 %v852
    %3394 = vmatpush1.msra.mxu0 %v851
    %3395 = vmatprep.subr.mxu0 %v849
    %3396 = vmatpush1.msra.mxu0 %v848
    %3397 = vmatprep.subr.mxu0 %v846
    %3398 = vmatpush1.msra.mxu0 %v845
    %3399 = vmatprep.subr.mxu0 %v843
    %3400 = vmatpush1.msra.mxu0 %v842
    %3401 = vmatprep.subr.mxu0 %v840
    %3402 = vmatpush1.msra.mxu0 %v839
    %3403 = vmatprep.subr.mxu0 %v837
    %3404 = vmatpush1.msra.mxu0 %v836
    %3405 = vmatprep.subr.mxu0 0.0
    %3406 = vmatpush2.msra.mxu0 0.0
    %3407 = vmatprep.subr.mxu0 0.0
    %3408 = vmatpush2.msra.mxu0 0.0
    %3409 = vmatprep.subr.mxu0 0.0
    %3410 = vmatpush2.msra.mxu0 0.0
    %3411 = vmatprep.subr.mxu0 0.0
    %3412 = vmatpush2.msra.mxu0 0.0
    %3413 = vmatprep.subr.mxu0 0.0
    %3414 = vmatpush2.msra.mxu0 0.0
    %3415 = vmatprep.subr.mxu0 0.0
    %3416 = vmatpush2.msra.mxu0 0.0
    %3417 = vmatprep.subr.mxu0 0.0
    %3418 = vmatpush2.msra.mxu0 0.0
    %3419 = vmatprep.subr.mxu0 0.0
    %3420 = vmatpush2.msra.mxu0 0.0
    %3421 = vmatprep.subr.mxu0 0.0
    %3422 = vmatpush2.msra.mxu0 0.0
    %3423 = vmatprep.subr.mxu0 0.0
    %3424 = vmatpush2.msra.mxu0 0.0
    %3425 = vmatprep.subr.mxu0 0.0
    %3426 = vmatpush2.msra.mxu0 0.0
    %3427 = vmatprep.subr.mxu0 0.0
    %3428 = vmatpush2.msra.mxu0 0.0
    %3429 = vmatprep.subr.mxu0 0.0
    %3430 = vmatpush2.msra.mxu0 0.0
    %3431 = vmatprep.subr.mxu0 0.0
    %3432 = vmatpush2.msra.mxu0 0.0
    %3433 = vmatprep.subr.mxu0 0.0
    %3434 = vmatpush2.msra.mxu0 0.0
    %3435 = vmatprep.subr.mxu0 0.0
    %3436 = vmatpush2.msra.mxu0 0.0
    %3437 = vmatprep.mubr.f32.mxu0 0.0
    %3438 = vmatmul.mubr.f32.gmra.mxu0 %v3371
    %v3439 = vpop.f32.mrf.mxu0
    %v3440 = vadd.f32 %v944, %v3439
    %v3441 = vpop.f32.mrf.mxu0
    %v3442 = vadd.f32 %v948, %v3441
    %3443 = vdwg.mxu0
    %3444 = vmatprep.subr.mxu0 0.0
    %3445 = vmatpush1.msra.mxu0 %v883
    %3446 = vmatprep.subr.mxu0 0.0
    %3447 = vmatpush1.msra.mxu0 %v880
    %3448 = vmatprep.subr.mxu0 0.0
    %3449 = vmatpush1.msra.mxu0 %v877
    %3450 = vmatprep.subr.mxu0 0.0
    %3451 = vmatpush1.msra.mxu0 %v874
    %3452 = vmatprep.subr.mxu0 0.0
    %3453 = vmatpush1.msra.mxu0 %v871
    %3454 = vmatprep.subr.mxu0 0.0
    %3455 = vmatpush1.msra.mxu0 %v868
    %3456 = vmatprep.subr.mxu0 0.0
    %3457 = vmatpush1.msra.mxu0 %v865
    %3458 = vmatprep.subr.mxu0 0.0
    %3459 = vmatpush1.msra.mxu0 %v862
    %3460 = vmatprep.subr.mxu0 0.0
    %3461 = vmatpush1.msra.mxu0 %v859
    %3462 = vmatprep.subr.mxu0 0.0
    %3463 = vmatpush1.msra.mxu0 %v856
    %3464 = vmatprep.subr.mxu0 0.0
    %3465 = vmatpush1.msra.mxu0 %v853
    %3466 = vmatprep.subr.mxu0 0.0
    %3467 = vmatpush1.msra.mxu0 %v850
    %3468 = vmatprep.subr.mxu0 0.0
    %3469 = vmatpush1.msra.mxu0 %v847
    %3470 = vmatprep.subr.mxu0 0.0
    %3471 = vmatpush1.msra.mxu0 %v844
    %3472 = vmatprep.subr.mxu0 0.0
    %3473 = vmatpush1.msra.mxu0 %v841
    %3474 = vmatprep.subr.mxu0 0.0
    %3475 = vmatpush1.msra.mxu0 %v838
    %3476 = vmatprep.subr.mxu0 0.0
    %3477 = vmatpush2.msra.mxu0 0.0
    %3478 = vmatprep.subr.mxu0 0.0
    %3479 = vmatpush2.msra.mxu0 0.0
    %3480 = vmatprep.subr.mxu0 0.0
    %3481 = vmatpush2.msra.mxu0 0.0
    %3482 = vmatprep.subr.mxu0 0.0
    %3483 = vmatpush2.msra.mxu0 0.0
    %3484 = vmatprep.subr.mxu0 0.0
    %3485 = vmatpush2.msra.mxu0 0.0
    %3486 = vmatprep.subr.mxu0 0.0
    %3487 = vmatpush2.msra.mxu0 0.0
    %3488 = vmatprep.subr.mxu0 0.0
    %3489 = vmatpush2.msra.mxu0 0.0
    %3490 = vmatprep.subr.mxu0 0.0
    %3491 = vmatpush2.msra.mxu0 0.0
    %3492 = vmatprep.subr.mxu0 0.0
    %3493 = vmatpush2.msra.mxu0 0.0
    %3494 = vmatprep.subr.mxu0 0.0
    %3495 = vmatpush2.msra.mxu0 0.0
    %3496 = vmatprep.subr.mxu0 0.0
    %3497 = vmatpush2.msra.mxu0 0.0
    %3498 = vmatprep.subr.mxu0 0.0
    %3499 = vmatpush2.msra.mxu0 0.0
    %3500 = vmatprep.subr.mxu0 0.0
    %3501 = vmatpush2.msra.mxu0 0.0
    %3502 = vmatprep.subr.mxu0 0.0
    %3503 = vmatpush2.msra.mxu0 0.0
    %3504 = vmatprep.subr.mxu0 0.0
    %3505 = vmatpush2.msra.mxu0 0.0
    %3506 = vmatprep.subr.mxu0 0.0
    %3507 = vmatpush2.msra.mxu0 0.0
    %3508 = vmatprep.mubr.f32.mxu0 0.0
    %3509 = vmatmul.mubr.f32.gmra.mxu0 %v3371
    %v3510 = vpop.f32.mrf.mxu0
    %v3511 = vadd.f32 %v952, %v3510
    %v3512 = vpop.f32.mrf.mxu0
    %3513 = vdwg.mxu0
    %3514 = vmatprep.subr.mxu0 %v931
    %3515 = vmatpush1.msra.mxu0 %v930
    %3516 = vmatprep.subr.mxu0 %v928
    %3517 = vmatpush1.msra.mxu0 %v927
    %3518 = vmatprep.subr.mxu0 %v925
    %3519 = vmatpush1.msra.mxu0 %v924
    %3520 = vmatprep.subr.mxu0 %v922
    %3521 = vmatpush1.msra.mxu0 %v921
    %3522 = vmatprep.subr.mxu0 %v919
    %3523 = vmatpush1.msra.mxu0 %v918
    %3524 = vmatprep.subr.mxu0 %v916
    %3525 = vmatpush1.msra.mxu0 %v915
    %3526 = vmatprep.subr.mxu0 %v913
    %3527 = vmatpush1.msra.mxu0 %v912
    %3528 = vmatprep.subr.mxu0 %v910
    %3529 = vmatpush1.msra.mxu0 %v909
    %3530 = vmatprep.subr.mxu0 %v907
    %3531 = vmatpush1.msra.mxu0 %v906
    %3532 = vmatprep.subr.mxu0 %v904
    %3533 = vmatpush1.msra.mxu0 %v903
    %3534 = vmatprep.subr.mxu0 %v901
    %3535 = vmatpush1.msra.mxu0 %v900
    %3536 = vmatprep.subr.mxu0 %v898
    %3537 = vmatpush1.msra.mxu0 %v897
    %3538 = vmatprep.subr.mxu0 %v895
    %3539 = vmatpush1.msra.mxu0 %v894
    %3540 = vmatprep.subr.mxu0 %v892
    %3541 = vmatpush1.msra.mxu0 %v891
    %3542 = vmatprep.subr.mxu0 %v889
    %3543 = vmatpush1.msra.mxu0 %v888
    %3544 = vmatprep.subr.mxu0 %v886
    %3545 = vmatpush1.msra.mxu0 %v885
    %3546 = vmatprep.subr.mxu0 0.0
    %3547 = vmatpush2.msra.mxu0 0.0
    %3548 = vmatprep.subr.mxu0 0.0
    %3549 = vmatpush2.msra.mxu0 0.0
    %3550 = vmatprep.subr.mxu0 0.0
    %3551 = vmatpush2.msra.mxu0 0.0
    %3552 = vmatprep.subr.mxu0 0.0
    %3553 = vmatpush2.msra.mxu0 0.0
    %3554 = vmatprep.subr.mxu0 0.0
    %3555 = vmatpush2.msra.mxu0 0.0
    %3556 = vmatprep.subr.mxu0 0.0
    %3557 = vmatpush2.msra.mxu0 0.0
    %3558 = vmatprep.subr.mxu0 0.0
    %3559 = vmatpush2.msra.mxu0 0.0
    %3560 = vmatprep.subr.mxu0 0.0
    %3561 = vmatpush2.msra.mxu0 0.0
    %3562 = vmatprep.subr.mxu0 0.0
    %3563 = vmatpush2.msra.mxu0 0.0
    %3564 = vmatprep.subr.mxu0 0.0
    %3565 = vmatpush2.msra.mxu0 0.0
    %3566 = vmatprep.subr.mxu0 0.0
    %3567 = vmatpush2.msra.mxu0 0.0
    %3568 = vmatprep.subr.mxu0 0.0
    %3569 = vmatpush2.msra.mxu0 0.0
    %3570 = vmatprep.subr.mxu0 0.0
    %3571 = vmatpush2.msra.mxu0 0.0
    %3572 = vmatprep.subr.mxu0 0.0
    %3573 = vmatpush2.msra.mxu0 0.0
    %3574 = vmatprep.subr.mxu0 0.0
    %3575 = vmatpush2.msra.mxu0 0.0
    %3576 = vmatprep.subr.mxu0 0.0
    %3577 = vmatpush2.msra.mxu0 0.0
    %3578 = vmatprep.mubr.f32.mxu0 0.0
    %3579 = vmatmul.mubr.f32.gmra.mxu0 %v3372
    %v3580 = vpop.f32.mrf.mxu0
    %v3581 = vadd.f32 %v1101, %v3580
    %v3582 = vpop.f32.mrf.mxu0
    %v3583 = vadd.f32 %v1105, %v3582
    %3584 = vdwg.mxu0
    %3585 = vmatprep.subr.mxu0 0.0
    %3586 = vmatpush1.msra.mxu0 %v932
    %3587 = vmatprep.subr.mxu0 0.0
    %3588 = vmatpush1.msra.mxu0 %v929
    %3589 = vmatprep.subr.mxu0 0.0
    %3590 = vmatpush1.msra.mxu0 %v926
    %3591 = vmatprep.subr.mxu0 0.0
    %3592 = vmatpush1.msra.mxu0 %v923
    %3593 = vmatprep.subr.mxu0 0.0
    %3594 = vmatpush1.msra.mxu0 %v920
    %3595 = vmatprep.subr.mxu0 0.0
    %3596 = vmatpush1.msra.mxu0 %v917
    %3597 = vmatprep.subr.mxu0 0.0
    %3598 = vmatpush1.msra.mxu0 %v914
    %3599 = vmatprep.subr.mxu0 0.0
    %3600 = vmatpush1.msra.mxu0 %v911
    %3601 = vmatprep.subr.mxu0 0.0
    %3602 = vmatpush1.msra.mxu0 %v908
    %3603 = vmatprep.subr.mxu0 0.0
    %3604 = vmatpush1.msra.mxu0 %v905
    %3605 = vmatprep.subr.mxu0 0.0
    %3606 = vmatpush1.msra.mxu0 %v902
    %3607 = vmatprep.subr.mxu0 0.0
    %3608 = vmatpush1.msra.mxu0 %v899
    %3609 = vmatprep.subr.mxu0 0.0
    %3610 = vmatpush1.msra.mxu0 %v896
    %3611 = vmatprep.subr.mxu0 0.0
    %3612 = vmatpush1.msra.mxu0 %v893
    %3613 = vmatprep.subr.mxu0 0.0
    %3614 = vmatpush1.msra.mxu0 %v890
    %3615 = vmatprep.subr.mxu0 0.0
    %3616 = vmatpush1.msra.mxu0 %v887
    %3617 = vmatprep.subr.mxu0 0.0
    %3618 = vmatpush2.msra.mxu0 0.0
    %3619 = vmatprep.subr.mxu0 0.0
    %3620 = vmatpush2.msra.mxu0 0.0
    %3621 = vmatprep.subr.mxu0 0.0
    %3622 = vmatpush2.msra.mxu0 0.0
    %3623 = vmatprep.subr.mxu0 0.0
    %3624 = vmatpush2.msra.mxu0 0.0
    %3625 = vmatprep.subr.mxu0 0.0
    %3626 = vmatpush2.msra.mxu0 0.0
    %3627 = vmatprep.subr.mxu0 0.0
    %3628 = vmatpush2.msra.mxu0 0.0
    %3629 = vmatprep.subr.mxu0 0.0
    %3630 = vmatpush2.msra.mxu0 0.0
    %3631 = vmatprep.subr.mxu0 0.0
    %3632 = vmatpush2.msra.mxu0 0.0
    %3633 = vmatprep.subr.mxu0 0.0
    %3634 = vmatpush2.msra.mxu0 0.0
    %3635 = vmatprep.subr.mxu0 0.0
    %3636 = vmatpush2.msra.mxu0 0.0
    %3637 = vmatprep.subr.mxu0 0.0
    %3638 = vmatpush2.msra.mxu0 0.0
    %3639 = vmatprep.subr.mxu0 0.0
    %3640 = vmatpush2.msra.mxu0 0.0
    %3641 = vmatprep.subr.mxu0 0.0
    %3642 = vmatpush2.msra.mxu0 0.0
    %3643 = vmatprep.subr.mxu0 0.0
    %3644 = vmatpush2.msra.mxu0 0.0
    %3645 = vmatprep.subr.mxu0 0.0
    %3646 = vmatpush2.msra.mxu0 0.0
    %3647 = vmatprep.subr.mxu0 0.0
    %3648 = vmatpush2.msra.mxu0 0.0
    %3649 = vmatprep.mubr.f32.mxu0 0.0
    %3650 = vmatmul.mubr.f32.gmra.mxu0 %v3372
    %v3651 = vpop.f32.mrf.mxu0
    %v3652 = vadd.f32 %v1109, %v3651
    %v3653 = vpop.f32.mrf.mxu0
    %3654 = vdwg.mxu0
    %s3655 = smul.addr %s1281, 8
    %s3656 = scalar_lea.vmem [#allocation5], %s3655
    %v3657 = vld [vmem:[%s3656] sm:$0xff]
    %v3658 = vld [vmem:[%s3656 + $0x8] sm:$0xff]
    %v3659 = vld [vmem:[%s3656 + $0x10] sm:$0xff]
    %v3660 = vadd.f32 %v3657, %v3440
    %v3661 = vxor.u32 %v3660, 2147483648
    %v3662 = vmul.f32 %v3661, 1.442695
    %v3663 = vpow.pop %v3662
    %v3664 = vadd.f32 %v3663, 1.0
    %v3665 = vrcp.pop %v3664
    %v3666 = vmul.f32 1.0, %v3665
    %v3667 = vadd.f32 %v3658, %v3442
    %v3668 = vxor.u32 %v3667, 2147483648
    %v3669 = vmul.f32 %v3668, 1.442695
    %v3670 = vpow.pop %v3669
    %v3671 = vadd.f32 %v3670, 1.0
    %v3672 = vrcp.pop %v3671
    %v3673 = vmul.f32 1.0, %v3672
    %v3674 = vmul.f32 %v3666, %v3511
    %v3675 = vadd.f32 %v3659, %v3674
    %v3676 = vtanh.pop %v3675
    %v3677 = vsub.f32 1.0, %v3673
    %v3678 = vmul.f32 %v3677, %v3676
    %v3679 = vmul.f32 %v3673, %v3371
    %v3680 = vadd.f32 %v3678, %v3679
    %s3681 = smul.addr %s1254, 8
    %s3682 = scalar_lea.vmem [#allocation6], %s3681
    %v3683 = vld [vmem:[%s3682] sm:$0xff]
    %v3684 = vld [vmem:[%s3682 + $0x8] sm:$0xff]
    %v3685 = vld [vmem:[%s3682 + $0x10] sm:$0xff]
    %v3686 = vadd.f32 %v3683, %v3581
    %v3687 = vxor.u32 %v3686, 2147483648
    %v3688 = vmul.f32 %v3687, 1.442695
    %v3689 = vpow.pop %v3688
    %v3690 = vadd.f32 %v3689, 1.0
    %v3691 = vrcp.pop %v3690
    %v3692 = vmul.f32 1.0, %v3691
    %v3693 = vadd.f32 %v3684, %v3583
    %v3694 = vxor.u32 %v3693, 2147483648
    %v3695 = vmul.f32 %v3694, 1.442695
    %v3696 = vpow.pop %v3695
    %v3697 = vadd.f32 %v3696, 1.0
    %v3698 = vrcp.pop %v3697
    %v3699 = vmul.f32 1.0, %v3698
    %v3700 = vmul.f32 %v3692, %v3652
    %v3701 = vadd.f32 %v3685, %v3700
    %v3702 = vtanh.pop %v3701
    %v3703 = vsub.f32 1.0, %v3699
    %v3704 = vmul.f32 %v3703, %v3702
    %v3705 = vmul.f32 %v3699, %v3372
    %v3706 = vadd.f32 %v3704, %v3705
    %3707 = vst [vmem:[#allocation7] sm:$0xff] %v3680
    %3708 = vst [vmem:[#allocation8] sm:$0xff] %v3706
    %s3709 = scalar_lea.vmem [#allocation3], 56
    %3710 = vst [vmem:[%s3709] sm:$0xff] %v3680
    %3711 = vst [vmem:[#allocation4] sm:$0xff] %v3706
    %v3712 = vld [vmem:[#allocation7] sm:$0xff]
    %3713 = vst [vmem:[#allocation19] sm:$0xff] %v3712
    %v3714 = vld [vmem:[#allocation8] sm:$0xff]
    %s3715 = scalar_lea.vmem [#allocation19], 8
    %3716 = vst [vmem:[%s3715] sm:$0xff] %v3714
    %v3717 = vld [vmem:[#allocation3] sm:$0xff]
    %v3718 = vld [vmem:[#allocation3 + $0x8] sm:$0xff]
    %v3719 = vld [vmem:[#allocation3 + $0x10] sm:$0xff]
    %v3720 = vld [vmem:[#allocation3 + $0x18] sm:$0xff]
    %v3721 = vld [vmem:[#allocation3 + $0x20] sm:$0xff]
    %v3722 = vld [vmem:[#allocation3 + $0x28] sm:$0xff]
    %v3723 = vld [vmem:[#allocation3 + $0x30] sm:$0xff]
    %v3724 = vld [vmem:[#allocation3 + $0x38] sm:$0xff]
    %3725 = vst [vmem:[#allocation2] sm:$0xff] %v3717
    %3726 = vst [vmem:[#allocation2 + $0x10] sm:$0xff] %v3718
    %3727 = vst [vmem:[#allocation2 + $0x20] sm:$0xff] %v3719
    %3728 = vst [vmem:[#allocation2 + $0x30] sm:$0xff] %v3720
    %3729 = vst [vmem:[#allocation2 + $0x40] sm:$0xff] %v3721
    %3730 = vst [vmem:[#allocation2 + $0x50] sm:$0xff] %v3722
    %3731 = vst [vmem:[#allocation2 + $0x60] sm:$0xff] %v3723
    %3732 = vst [vmem:[#allocation2 + $0x70] sm:$0xff] %v3724
    %v3733 = vld [vmem:[#allocation4] sm:$0xff]
    %v3734 = vld [vmem:[#allocation4 + $0x8] sm:$0xff]
    %v3735 = vld [vmem:[#allocation4 + $0x10] sm:$0xff]
    %v3736 = vld [vmem:[#allocation4 + $0x18] sm:$0xff]
    %v3737 = vld [vmem:[#allocation4 + $0x20] sm:$0xff]
    %v3738 = vld [vmem:[#allocation4 + $0x28] sm:$0xff]
    %v3739 = vld [vmem:[#allocation4 + $0x30] sm:$0xff]
    %v3740 = vld [vmem:[#allocation4 + $0x38] sm:$0xff]
    %3741 = vst [vmem:[#allocation2 + $0x8] sm:$0xff] %v3733
    %3742 = vst [vmem:[#allocation2 + $0x18] sm:$0xff] %v3734
    %3743 = vst [vmem:[#allocation2 + $0x28] sm:$0xff] %v3735
    %3744 = vst [vmem:[#allocation2 + $0x38] sm:$0xff] %v3736
    %3745 = vst [vmem:[#allocation2 + $0x48] sm:$0xff] %v3737
    %3746 = vst [vmem:[#allocation2 + $0x58] sm:$0xff] %v3738
    %3747 = vst [vmem:[#allocation2 + $0x68] sm:$0xff] %v3739
    %3748 = vst [vmem:[#allocation2 + $0x78] sm:$0xff] %v3740
    %v3749 = vld [vmem:[#allocation2] sm:$0xff]
    %v3750 = vld [vmem:[#allocation2 + $0x8] sm:$0xff]
    %v3751 = vld [vmem:[#allocation2 + $0x10] sm:$0xff]
    %v3752 = vld [vmem:[#allocation2 + $0x18] sm:$0xff]
    %v3753 = vld [vmem:[#allocation2 + $0x20] sm:$0xff]
    %v3754 = vld [vmem:[#allocation2 + $0x28] sm:$0xff]
    %v3755 = vld [vmem:[#allocation2 + $0x30] sm:$0xff]
    %v3756 = vld [vmem:[#allocation2 + $0x38] sm:$0xff]
    %v3757 = vld [vmem:[#allocation2 + $0x40] sm:$0xff]
    %v3758 = vld [vmem:[#allocation2 + $0x48] sm:$0xff]
    %v3759 = vld [vmem:[#allocation2 + $0x50] sm:$0xff]
    %v3760 = vld [vmem:[#allocation2 + $0x58] sm:$0xff]
    %v3761 = vld [vmem:[#allocation2 + $0x60] sm:$0xff]
    %v3762 = vld [vmem:[#allocation2 + $0x68] sm:$0xff]
    %v3763 = vld [vmem:[#allocation2 + $0x70] sm:$0xff]
    %v3764 = vld [vmem:[#allocation2 + $0x78] sm:$0xff]
    %s3765 = scalar_lea.vmem [#allocation12], 1536
    %v3766 = vld [vmem:[%s3765] sm:$0xff]
    %v3767 = vld [vmem:[%s3765 + $0x8] sm:$0xff]
    %v3768 = vld [vmem:[%s3765 + $0x10] sm:$0xff]
    %v3769 = vld [vmem:[%s3765 + $0x18] sm:$0xff]
    %v3770 = vld [vmem:[%s3765 + $0x20] sm:$0xff]
    %v3771 = vld [vmem:[%s3765 + $0x28] sm:$0xff]
    %v3772 = vld [vmem:[%s3765 + $0x30] sm:$0xff]
    %v3773 = vld [vmem:[%s3765 + $0x38] sm:$0xff]
    %v3774 = vld [vmem:[%s3765 + $0x40] sm:$0xff]
    %v3775 = vld [vmem:[%s3765 + $0x48] sm:$0xff]
    %v3776 = vld [vmem:[%s3765 + $0x50] sm:$0xff]
    %v3777 = vld [vmem:[%s3765 + $0x58] sm:$0xff]
    %v3778 = vld [vmem:[%s3765 + $0x60] sm:$0xff]
    %v3779 = vld [vmem:[%s3765 + $0x68] sm:$0xff]
    %v3780 = vld [vmem:[%s3765 + $0x70] sm:$0xff]
    %v3781 = vld [vmem:[%s3765 + $0x78] sm:$0xff]
    %v3782 = vld [vmem:[%s3765 + $0x80] sm:$0xff]
    %v3783 = vld [vmem:[%s3765 + $0x88] sm:$0xff]
    %v3784 = vld [vmem:[%s3765 + $0x90] sm:$0xff]
    %v3785 = vld [vmem:[%s3765 + $0x98] sm:$0xff]
    %v3786 = vld [vmem:[%s3765 + $0xa0] sm:$0xff]
    %v3787 = vld [vmem:[%s3765 + $0xa8] sm:$0xff]
    %v3788 = vld [vmem:[%s3765 + $0xb0] sm:$0xff]
    %v3789 = vld [vmem:[%s3765 + $0xb8] sm:$0xff]
    %v3790 = vld [vmem:[%s3765 + $0xc0] sm:$0xff]
    %v3791 = vld [vmem:[%s3765 + $0xc8] sm:$0xff]
    %v3792 = vld [vmem:[%s3765 + $0xd0] sm:$0xff]
    %v3793 = vld [vmem:[%s3765 + $0xd8] sm:$0xff]
    %v3794 = vld [vmem:[%s3765 + $0xe0] sm:$0xff]
    %v3795 = vld [vmem:[%s3765 + $0xe8] sm:$0xff]
    %v3796 = vld [vmem:[%s3765 + $0xf0] sm:$0xff]
    %v3797 = vld [vmem:[%s3765 + $0xf8] sm:$0xff]
    %v3798 = vld [vmem:[%s3765 + $0x100] sm:$0xff]
    %v3799 = vld [vmem:[%s3765 + $0x108] sm:$0xff]
    %v3800 = vld [vmem:[%s3765 + $0x110] sm:$0xff]
    %v3801 = vld [vmem:[%s3765 + $0x118] sm:$0xff]
    %v3802 = vld [vmem:[%s3765 + $0x120] sm:$0xff]
    %v3803 = vld [vmem:[%s3765 + $0x128] sm:$0xff]
    %v3804 = vld [vmem:[%s3765 + $0x130] sm:$0xff]
    %v3805 = vld [vmem:[%s3765 + $0x138] sm:$0xff]
    %v3806 = vld [vmem:[%s3765 + $0x140] sm:$0xff]
    %v3807 = vld [vmem:[%s3765 + $0x148] sm:$0xff]
    %v3808 = vld [vmem:[%s3765 + $0x150] sm:$0xff]
    %v3809 = vld [vmem:[%s3765 + $0x158] sm:$0xff]
    %v3810 = vld [vmem:[%s3765 + $0x160] sm:$0xff]
    %v3811 = vld [vmem:[%s3765 + $0x168] sm:$0xff]
    %v3812 = vld [vmem:[%s3765 + $0x170] sm:$0xff]
    %v3813 = vld [vmem:[%s3765 + $0x178] sm:$0xff]
    %v3814 = vld [vmem:[%s3765 + $0x180] sm:$0xff]
    %v3815 = vld [vmem:[%s3765 + $0x188] sm:$0xff]
    %v3816 = vld [vmem:[%s3765 + $0x190] sm:$0xff]
    %v3817 = vld [vmem:[%s3765 + $0x198] sm:$0xff]
    %v3818 = vld [vmem:[%s3765 + $0x1a0] sm:$0xff]
    %v3819 = vld [vmem:[%s3765 + $0x1a8] sm:$0xff]
    %v3820 = vld [vmem:[%s3765 + $0x1b0] sm:$0xff]
    %v3821 = vld [vmem:[%s3765 + $0x1b8] sm:$0xff]
    %v3822 = vld [vmem:[%s3765 + $0x1c0] sm:$0xff]
    %v3823 = vld [vmem:[%s3765 + $0x1c8] sm:$0xff]
    %v3824 = vld [vmem:[%s3765 + $0x1d0] sm:$0xff]
    %v3825 = vld [vmem:[%s3765 + $0x1d8] sm:$0xff]
    %v3826 = vld [vmem:[%s3765 + $0x1e0] sm:$0xff]
    %v3827 = vld [vmem:[%s3765 + $0x1e8] sm:$0xff]
    %v3828 = vld [vmem:[%s3765 + $0x1f0] sm:$0xff]
    %v3829 = vld [vmem:[%s3765 + $0x1f8] sm:$0xff]
    %v3830 = vld [vmem:[%s3765 + $0x200] sm:$0xff]
    %v3831 = vld [vmem:[%s3765 + $0x208] sm:$0xff]
    %v3832 = vld [vmem:[%s3765 + $0x210] sm:$0xff]
    %v3833 = vld [vmem:[%s3765 + $0x218] sm:$0xff]
    %v3834 = vld [vmem:[%s3765 + $0x220] sm:$0xff]
    %v3835 = vld [vmem:[%s3765 + $0x228] sm:$0xff]
    %v3836 = vld [vmem:[%s3765 + $0x230] sm:$0xff]
    %v3837 = vld [vmem:[%s3765 + $0x238] sm:$0xff]
    %v3838 = vld [vmem:[%s3765 + $0x240] sm:$0xff]
    %v3839 = vld [vmem:[%s3765 + $0x248] sm:$0xff]
    %v3840 = vld [vmem:[%s3765 + $0x250] sm:$0xff]
    %v3841 = vld [vmem:[%s3765 + $0x258] sm:$0xff]
    %v3842 = vld [vmem:[%s3765 + $0x260] sm:$0xff]
    %v3843 = vld [vmem:[%s3765 + $0x268] sm:$0xff]
    %v3844 = vld [vmem:[%s3765 + $0x270] sm:$0xff]
    %v3845 = vld [vmem:[%s3765 + $0x278] sm:$0xff]
    %v3846 = vld [vmem:[%s3765 + $0x280] sm:$0xff]
    %v3847 = vld [vmem:[%s3765 + $0x288] sm:$0xff]
    %v3848 = vld [vmem:[%s3765 + $0x290] sm:$0xff]
    %v3849 = vld [vmem:[%s3765 + $0x298] sm:$0xff]
    %v3850 = vld [vmem:[%s3765 + $0x2a0] sm:$0xff]
    %v3851 = vld [vmem:[%s3765 + $0x2a8] sm:$0xff]
    %v3852 = vld [vmem:[%s3765 + $0x2b0] sm:$0xff]
    %v3853 = vld [vmem:[%s3765 + $0x2b8] sm:$0xff]
    %v3854 = vld [vmem:[%s3765 + $0x2c0] sm:$0xff]
    %v3855 = vld [vmem:[%s3765 + $0x2c8] sm:$0xff]
    %v3856 = vld [vmem:[%s3765 + $0x2d0] sm:$0xff]
    %v3857 = vld [vmem:[%s3765 + $0x2d8] sm:$0xff]
    %v3858 = vld [vmem:[%s3765 + $0x2e0] sm:$0xff]
    %v3859 = vld [vmem:[%s3765 + $0x2e8] sm:$0xff]
    %v3860 = vld [vmem:[%s3765 + $0x2f0] sm:$0xff]
    %v3861 = vld [vmem:[%s3765 + $0x2f8] sm:$0xff]
    %s3862 = scalar_lea.vmem [#allocation14], 6
    %v3863 = vld [vmem:[%s3862] sm:$0x7]
    %v3865 = vlaneseq
    %v3866 = vshrl.u32 %v3865, 7
    %v3867 = vsub.s32 0, %v3866
    %v3868 = vrot.slane %v3863, %v3867
    %v3869 = vlaneseq
    %v3870 = vshrl.u32 %v3869, 7
    %v3871 = vsub.s32 1, %v3870
    %v3872 = vrot.slane %v3863, %v3871
    %v3873 = vlaneseq
    %v3874 = vshrl.u32 %v3873, 7
    %v3875 = vsub.s32 2, %v3874
    %v3876 = vrot.slane %v3863, %v3875
    %3880 = vmatprep.subr.mxu0 %v3812
    %3881 = vmatpush1.msra.mxu0 %v3811
    %3882 = vmatprep.subr.mxu0 %v3809
    %3883 = vmatpush1.msra.mxu0 %v3808
    %3884 = vmatprep.subr.mxu0 %v3806
    %3885 = vmatpush1.msra.mxu0 %v3805
    %3886 = vmatprep.subr.mxu0 %v3803
    %3887 = vmatpush1.msra.mxu0 %v3802
    %3888 = vmatprep.subr.mxu0 %v3800
    %3889 = vmatpush1.msra.mxu0 %v3799
    %3890 = vmatprep.subr.mxu0 %v3797
    %3891 = vmatpush1.msra.mxu0 %v3796
    %3892 = vmatprep.subr.mxu0 %v3794
    %3893 = vmatpush1.msra.mxu0 %v3793
    %3894 = vmatprep.subr.mxu0 %v3791
    %3895 = vmatpush1.msra.mxu0 %v3790
    %3896 = vmatprep.subr.mxu0 %v3788
    %3897 = vmatpush1.msra.mxu0 %v3787
    %3898 = vmatprep.subr.mxu0 %v3785
    %3899 = vmatpush1.msra.mxu0 %v3784
    %3900 = vmatprep.subr.mxu0 %v3782
    %3901 = vmatpush1.msra.mxu0 %v3781
    %3902 = vmatprep.subr.mxu0 %v3779
    %3903 = vmatpush1.msra.mxu0 %v3778
    %3904 = vmatprep.subr.mxu0 %v3776
    %3905 = vmatpush1.msra.mxu0 %v3775
    %3906 = vmatprep.subr.mxu0 %v3773
    %3907 = vmatpush1.msra.mxu0 %v3772
    %3908 = vmatprep.subr.mxu0 %v3770
    %3909 = vmatpush1.msra.mxu0 %v3769
    %3910 = vmatprep.subr.mxu0 %v3767
    %3911 = vmatpush1.msra.mxu0 %v3766
    %3912 = vmatprep.subr.mxu0 %v3860
    %3913 = vmatpush2.msra.mxu0 %v3859
    %3914 = vmatprep.subr.mxu0 %v3857
    %3915 = vmatpush2.msra.mxu0 %v3856
    %3916 = vmatprep.subr.mxu0 %v3854
    %3917 = vmatpush2.msra.mxu0 %v3853
    %3918 = vmatprep.subr.mxu0 %v3851
    %3919 = vmatpush2.msra.mxu0 %v3850
    %3920 = vmatprep.subr.mxu0 %v3848
    %3921 = vmatpush2.msra.mxu0 %v3847
    %3922 = vmatprep.subr.mxu0 %v3845
    %3923 = vmatpush2.msra.mxu0 %v3844
    %3924 = vmatprep.subr.mxu0 %v3842
    %3925 = vmatpush2.msra.mxu0 %v3841
    %3926 = vmatprep.subr.mxu0 %v3839
    %3927 = vmatpush2.msra.mxu0 %v3838
    %3928 = vmatprep.subr.mxu0 %v3836
    %3929 = vmatpush2.msra.mxu0 %v3835
    %3930 = vmatprep.subr.mxu0 %v3833
    %3931 = vmatpush2.msra.mxu0 %v3832
    %3932 = vmatprep.subr.mxu0 %v3830
    %3933 = vmatpush2.msra.mxu0 %v3829
    %3934 = vmatprep.subr.mxu0 %v3827
    %3935 = vmatpush2.msra.mxu0 %v3826
    %3936 = vmatprep.subr.mxu0 %v3824
    %3937 = vmatpush2.msra.mxu0 %v3823
    %3938 = vmatprep.subr.mxu0 %v3821
    %3939 = vmatpush2.msra.mxu0 %v3820
    %3940 = vmatprep.subr.mxu0 %v3818
    %3941 = vmatpush2.msra.mxu0 %v3817
    %3942 = vmatprep.subr.mxu0 %v3815
    %3943 = vmatpush2.msra.mxu0 %v3814
    %3944 = vmatprep.mubr.f32.mxu0 %v3750
    %3945 = vmatmul.mubr.f32.gmra.mxu0 %v3749
    %v3946 = vpop.f32.mrf.mxu0
    %v3947 = vadd.f32 %v3868, %v3946
    %v3948 = vpop.f32.mrf.mxu0
    %v3949 = vadd.f32 %v3872, %v3948
    %3950 = vmatprep.mubr.f32.mxu0 %v3752
    %3951 = vmatmul.mubr.f32.gmra.mxu0 %v3751
    %v3952 = vpop.f32.mrf.mxu0
    %v3953 = vadd.f32 %v3868, %v3952
    %v3954 = vpop.f32.mrf.mxu0
    %v3955 = vadd.f32 %v3872, %v3954
    %3956 = vmatprep.mubr.f32.mxu0 %v3754
    %3957 = vmatmul.mubr.f32.gmra.mxu0 %v3753
    %v3958 = vpop.f32.mrf.mxu0
    %v3959 = vadd.f32 %v3868, %v3958
    %v3960 = vpop.f32.mrf.mxu0
    %v3961 = vadd.f32 %v3872, %v3960
    %3962 = vmatprep.mubr.f32.mxu0 %v3756
    %3963 = vmatmul.mubr.f32.gmra.mxu0 %v3755
    %v3964 = vpop.f32.mrf.mxu0
    %v3965 = vadd.f32 %v3868, %v3964
    %v3966 = vpop.f32.mrf.mxu0
    %v3967 = vadd.f32 %v3872, %v3966
    %3968 = vmatprep.mubr.f32.mxu0 %v3758
    %3969 = vmatmul.mubr.f32.gmra.mxu0 %v3757
    %v3970 = vpop.f32.mrf.mxu0
    %v3971 = vadd.f32 %v3868, %v3970
    %v3972 = vpop.f32.mrf.mxu0
    %v3973 = vadd.f32 %v3872, %v3972
    %3974 = vmatprep.mubr.f32.mxu0 %v3760
    %3975 = vmatmul.mubr.f32.gmra.mxu0 %v3759
    %v3976 = vpop.f32.mrf.mxu0
    %v3977 = vadd.f32 %v3868, %v3976
    %v3978 = vpop.f32.mrf.mxu0
    %v3979 = vadd.f32 %v3872, %v3978
    %3980 = vmatprep.mubr.f32.mxu0 %v3762
    %3981 = vmatmul.mubr.f32.gmra.mxu0 %v3761
    %v3982 = vpop.f32.mrf.mxu0
    %v3983 = vadd.f32 %v3868, %v3982
    %v3984 = vpop.f32.mrf.mxu0
    %v3985 = vadd.f32 %v3872, %v3984
    %3986 = vmatprep.mubr.f32.mxu0 %v3764
    %3987 = vmatmul.mubr.f32.gmra.mxu0 %v3763
    %v3988 = vpop.f32.mrf.mxu0
    %v3989 = vadd.f32 %v3868, %v3988
    %v3990 = vpop.f32.mrf.mxu0
    %v3991 = vadd.f32 %v3872, %v3990
    %3992 = vdwg.mxu0
    %3993 = vmatprep.subr.mxu0 0.0
    %3994 = vmatpush1.msra.mxu0 %v3813
    %3995 = vmatprep.subr.mxu0 0.0
    %3996 = vmatpush1.msra.mxu0 %v3810
    %3997 = vmatprep.subr.mxu0 0.0
    %3998 = vmatpush1.msra.mxu0 %v3807
    %3999 = vmatprep.subr.mxu0 0.0
    %4000 = vmatpush1.msra.mxu0 %v3804
    %4001 = vmatprep.subr.mxu0 0.0
    %4002 = vmatpush1.msra.mxu0 %v3801
    %4003 = vmatprep.subr.mxu0 0.0
    %4004 = vmatpush1.msra.mxu0 %v3798
    %4005 = vmatprep.subr.mxu0 0.0
    %4006 = vmatpush1.msra.mxu0 %v3795
    %4007 = vmatprep.subr.mxu0 0.0
    %4008 = vmatpush1.msra.mxu0 %v3792
    %4009 = vmatprep.subr.mxu0 0.0
    %4010 = vmatpush1.msra.mxu0 %v3789
    %4011 = vmatprep.subr.mxu0 0.0
    %4012 = vmatpush1.msra.mxu0 %v3786
    %4013 = vmatprep.subr.mxu0 0.0
    %4014 = vmatpush1.msra.mxu0 %v3783
    %4015 = vmatprep.subr.mxu0 0.0
    %4016 = vmatpush1.msra.mxu0 %v3780
    %4017 = vmatprep.subr.mxu0 0.0
    %4018 = vmatpush1.msra.mxu0 %v3777
    %4019 = vmatprep.subr.mxu0 0.0
    %4020 = vmatpush1.msra.mxu0 %v3774
    %4021 = vmatprep.subr.mxu0 0.0
    %4022 = vmatpush1.msra.mxu0 %v3771
    %4023 = vmatprep.subr.mxu0 0.0
    %4024 = vmatpush1.msra.mxu0 %v3768
    %4025 = vmatprep.subr.mxu0 0.0
    %4026 = vmatpush2.msra.mxu0 %v3861
    %4027 = vmatprep.subr.mxu0 0.0
    %4028 = vmatpush2.msra.mxu0 %v3858
    %4029 = vmatprep.subr.mxu0 0.0
    %4030 = vmatpush2.msra.mxu0 %v3855
    %4031 = vmatprep.subr.mxu0 0.0
    %4032 = vmatpush2.msra.mxu0 %v3852
    %4033 = vmatprep.subr.mxu0 0.0
    %4034 = vmatpush2.msra.mxu0 %v3849
    %4035 = vmatprep.subr.mxu0 0.0
    %4036 = vmatpush2.msra.mxu0 %v3846
    %4037 = vmatprep.subr.mxu0 0.0
    %4038 = vmatpush2.msra.mxu0 %v3843
    %4039 = vmatprep.subr.mxu0 0.0
    %4040 = vmatpush2.msra.mxu0 %v3840
    %4041 = vmatprep.subr.mxu0 0.0
    %4042 = vmatpush2.msra.mxu0 %v3837
    %4043 = vmatprep.subr.mxu0 0.0
    %4044 = vmatpush2.msra.mxu0 %v3834
    %4045 = vmatprep.subr.mxu0 0.0
    %4046 = vmatpush2.msra.mxu0 %v3831
    %4047 = vmatprep.subr.mxu0 0.0
    %4048 = vmatpush2.msra.mxu0 %v3828
    %4049 = vmatprep.subr.mxu0 0.0
    %4050 = vmatpush2.msra.mxu0 %v3825
    %4051 = vmatprep.subr.mxu0 0.0
    %4052 = vmatpush2.msra.mxu0 %v3822
    %4053 = vmatprep.subr.mxu0 0.0
    %4054 = vmatpush2.msra.mxu0 %v3819
    %4055 = vmatprep.subr.mxu0 0.0
    %4056 = vmatpush2.msra.mxu0 %v3816
    %4057 = vmatprep.mubr.f32.mxu0 %v3750
    %4058 = vmatmul.mubr.f32.gmra.mxu0 %v3749
    %v4059 = vpop.f32.mrf.mxu0
    %v4060 = vadd.f32 %v3876, %v4059
    %v4061 = vpop.f32.mrf.mxu0
    %4062 = vmatprep.mubr.f32.mxu0 %v3752
    %4063 = vmatmul.mubr.f32.gmra.mxu0 %v3751
    %v4064 = vpop.f32.mrf.mxu0
    %v4065 = vadd.f32 %v3876, %v4064
    %v4066 = vpop.f32.mrf.mxu0
    %4067 = vmatprep.mubr.f32.mxu0 %v3754
    %4068 = vmatmul.mubr.f32.gmra.mxu0 %v3753
    %v4069 = vpop.f32.mrf.mxu0
    %v4070 = vadd.f32 %v3876, %v4069
    %v4071 = vpop.f32.mrf.mxu0
    %4072 = vmatprep.mubr.f32.mxu0 %v3756
    %4073 = vmatmul.mubr.f32.gmra.mxu0 %v3755
    %v4074 = vpop.f32.mrf.mxu0
    %v4075 = vadd.f32 %v3876, %v4074
    %v4076 = vpop.f32.mrf.mxu0
    %4077 = vmatprep.mubr.f32.mxu0 %v3758
    %4078 = vmatmul.mubr.f32.gmra.mxu0 %v3757
    %v4079 = vpop.f32.mrf.mxu0
    %v4080 = vadd.f32 %v3876, %v4079
    %v4081 = vpop.f32.mrf.mxu0
    %4082 = vmatprep.mubr.f32.mxu0 %v3760
    %4083 = vmatmul.mubr.f32.gmra.mxu0 %v3759
    %v4084 = vpop.f32.mrf.mxu0
    %v4085 = vadd.f32 %v3876, %v4084
    %v4086 = vpop.f32.mrf.mxu0
    %4087 = vmatprep.mubr.f32.mxu0 %v3762
    %4088 = vmatmul.mubr.f32.gmra.mxu0 %v3761
    %v4089 = vpop.f32.mrf.mxu0
    %v4090 = vadd.f32 %v3876, %v4089
    %v4091 = vpop.f32.mrf.mxu0
    %4092 = vmatprep.mubr.f32.mxu0 %v3764
    %4093 = vmatmul.mubr.f32.gmra.mxu0 %v3763
    %v4094 = vpop.f32.mrf.mxu0
    %v4095 = vadd.f32 %v3876, %v4094
    %v4096 = vpop.f32.mrf.mxu0
    %4097 = vdwg.mxu0
    %4098 = vst [vmem:[#allocation5] sm:$0xff] %v3947
    %4099 = vst [vmem:[#allocation5 + $0x8] sm:$0xff] %v3949
    %4100 = vst [vmem:[#allocation5 + $0x10] sm:$0xff] %v4060
    %4101 = vst [vmem:[#allocation5 + $0x18] sm:$0xff] %v3953
    %4102 = vst [vmem:[#allocation5 + $0x20] sm:$0xff] %v3955
    %4103 = vst [vmem:[#allocation5 + $0x28] sm:$0xff] %v4065
    %4104 = vst [vmem:[#allocation5 + $0x30] sm:$0xff] %v3959
    %4105 = vst [vmem:[#allocation5 + $0x38] sm:$0xff] %v3961
    %4106 = vst [vmem:[#allocation5 + $0x40] sm:$0xff] %v4070
    %4107 = vst [vmem:[#allocation5 + $0x48] sm:$0xff] %v3965
    %4108 = vst [vmem:[#allocation5 + $0x50] sm:$0xff] %v3967
    %4109 = vst [vmem:[#allocation5 + $0x58] sm:$0xff] %v4075
    %4110 = vst [vmem:[#allocation5 + $0x60] sm:$0xff] %v3971
    %4111 = vst [vmem:[#allocation5 + $0x68] sm:$0xff] %v3973
    %4112 = vst [vmem:[#allocation5 + $0x70] sm:$0xff] %v4080
    %4113 = vst [vmem:[#allocation5 + $0x78] sm:$0xff] %v3977
    %4114 = vst [vmem:[#allocation5 + $0x80] sm:$0xff] %v3979
    %4115 = vst [vmem:[#allocation5 + $0x88] sm:$0xff] %v4085
    %4116 = vst [vmem:[#allocation5 + $0x90] sm:$0xff] %v3983
    %4117 = vst [vmem:[#allocation5 + $0x98] sm:$0xff] %v3985
    %4118 = vst [vmem:[#allocation5 + $0xa0] sm:$0xff] %v4090
    %4119 = vst [vmem:[#allocation5 + $0xa8] sm:$0xff] %v3989
    %4120 = vst [vmem:[#allocation5 + $0xb0] sm:$0xff] %v3991
    %4121 = vst [vmem:[#allocation5 + $0xb8] sm:$0xff] %v4095
    %s4122 = scalar_lea.vmem [#allocation12], 2304
    %v4123 = vld [vmem:[%s4122] sm:$0xff]
    %v4124 = vld [vmem:[%s4122 + $0x8] sm:$0xff]
    %v4125 = vld [vmem:[%s4122 + $0x10] sm:$0xff]
    %v4126 = vld [vmem:[%s4122 + $0x18] sm:$0xff]
    %v4127 = vld [vmem:[%s4122 + $0x20] sm:$0xff]
    %v4128 = vld [vmem:[%s4122 + $0x28] sm:$0xff]
    %v4129 = vld [vmem:[%s4122 + $0x30] sm:$0xff]
    %v4130 = vld [vmem:[%s4122 + $0x38] sm:$0xff]
    %v4131 = vld [vmem:[%s4122 + $0x40] sm:$0xff]
    %v4132 = vld [vmem:[%s4122 + $0x48] sm:$0xff]
    %v4133 = vld [vmem:[%s4122 + $0x50] sm:$0xff]
    %v4134 = vld [vmem:[%s4122 + $0x58] sm:$0xff]
    %v4135 = vld [vmem:[%s4122 + $0x60] sm:$0xff]
    %v4136 = vld [vmem:[%s4122 + $0x68] sm:$0xff]
    %v4137 = vld [vmem:[%s4122 + $0x70] sm:$0xff]
    %v4138 = vld [vmem:[%s4122 + $0x78] sm:$0xff]
    %v4139 = vld [vmem:[%s4122 + $0x80] sm:$0xff]
    %v4140 = vld [vmem:[%s4122 + $0x88] sm:$0xff]
    %v4141 = vld [vmem:[%s4122 + $0x90] sm:$0xff]
    %v4142 = vld [vmem:[%s4122 + $0x98] sm:$0xff]
    %v4143 = vld [vmem:[%s4122 + $0xa0] sm:$0xff]
    %v4144 = vld [vmem:[%s4122 + $0xa8] sm:$0xff]
    %v4145 = vld [vmem:[%s4122 + $0xb0] sm:$0xff]
    %v4146 = vld [vmem:[%s4122 + $0xb8] sm:$0xff]
    %v4147 = vld [vmem:[%s4122 + $0xc0] sm:$0xff]
    %v4148 = vld [vmem:[%s4122 + $0xc8] sm:$0xff]
    %v4149 = vld [vmem:[%s4122 + $0xd0] sm:$0xff]
    %v4150 = vld [vmem:[%s4122 + $0xd8] sm:$0xff]
    %v4151 = vld [vmem:[%s4122 + $0xe0] sm:$0xff]
    %v4152 = vld [vmem:[%s4122 + $0xe8] sm:$0xff]
    %v4153 = vld [vmem:[%s4122 + $0xf0] sm:$0xff]
    %v4154 = vld [vmem:[%s4122 + $0xf8] sm:$0xff]
    %v4155 = vld [vmem:[%s4122 + $0x100] sm:$0xff]
    %v4156 = vld [vmem:[%s4122 + $0x108] sm:$0xff]
    %v4157 = vld [vmem:[%s4122 + $0x110] sm:$0xff]
    %v4158 = vld [vmem:[%s4122 + $0x118] sm:$0xff]
    %v4159 = vld [vmem:[%s4122 + $0x120] sm:$0xff]
    %v4160 = vld [vmem:[%s4122 + $0x128] sm:$0xff]
    %v4161 = vld [vmem:[%s4122 + $0x130] sm:$0xff]
    %v4162 = vld [vmem:[%s4122 + $0x138] sm:$0xff]
    %v4163 = vld [vmem:[%s4122 + $0x140] sm:$0xff]
    %v4164 = vld [vmem:[%s4122 + $0x148] sm:$0xff]
    %v4165 = vld [vmem:[%s4122 + $0x150] sm:$0xff]
    %v4166 = vld [vmem:[%s4122 + $0x158] sm:$0xff]
    %v4167 = vld [vmem:[%s4122 + $0x160] sm:$0xff]
    %v4168 = vld [vmem:[%s4122 + $0x168] sm:$0xff]
    %v4169 = vld [vmem:[%s4122 + $0x170] sm:$0xff]
    %v4170 = vld [vmem:[%s4122 + $0x178] sm:$0xff]
    %v4171 = vld [vmem:[%s4122 + $0x180] sm:$0xff]
    %v4172 = vld [vmem:[%s4122 + $0x188] sm:$0xff]
    %v4173 = vld [vmem:[%s4122 + $0x190] sm:$0xff]
    %v4174 = vld [vmem:[%s4122 + $0x198] sm:$0xff]
    %v4175 = vld [vmem:[%s4122 + $0x1a0] sm:$0xff]
    %v4176 = vld [vmem:[%s4122 + $0x1a8] sm:$0xff]
    %v4177 = vld [vmem:[%s4122 + $0x1b0] sm:$0xff]
    %v4178 = vld [vmem:[%s4122 + $0x1b8] sm:$0xff]
    %v4179 = vld [vmem:[%s4122 + $0x1c0] sm:$0xff]
    %v4180 = vld [vmem:[%s4122 + $0x1c8] sm:$0xff]
    %v4181 = vld [vmem:[%s4122 + $0x1d0] sm:$0xff]
    %v4182 = vld [vmem:[%s4122 + $0x1d8] sm:$0xff]
    %v4183 = vld [vmem:[%s4122 + $0x1e0] sm:$0xff]
    %v4184 = vld [vmem:[%s4122 + $0x1e8] sm:$0xff]
    %v4185 = vld [vmem:[%s4122 + $0x1f0] sm:$0xff]
    %v4186 = vld [vmem:[%s4122 + $0x1f8] sm:$0xff]
    %v4187 = vld [vmem:[%s4122 + $0x200] sm:$0xff]
    %v4188 = vld [vmem:[%s4122 + $0x208] sm:$0xff]
    %v4189 = vld [vmem:[%s4122 + $0x210] sm:$0xff]
    %v4190 = vld [vmem:[%s4122 + $0x218] sm:$0xff]
    %v4191 = vld [vmem:[%s4122 + $0x220] sm:$0xff]
    %v4192 = vld [vmem:[%s4122 + $0x228] sm:$0xff]
    %v4193 = vld [vmem:[%s4122 + $0x230] sm:$0xff]
    %v4194 = vld [vmem:[%s4122 + $0x238] sm:$0xff]
    %v4195 = vld [vmem:[%s4122 + $0x240] sm:$0xff]
    %v4196 = vld [vmem:[%s4122 + $0x248] sm:$0xff]
    %v4197 = vld [vmem:[%s4122 + $0x250] sm:$0xff]
    %v4198 = vld [vmem:[%s4122 + $0x258] sm:$0xff]
    %v4199 = vld [vmem:[%s4122 + $0x260] sm:$0xff]
    %v4200 = vld [vmem:[%s4122 + $0x268] sm:$0xff]
    %v4201 = vld [vmem:[%s4122 + $0x270] sm:$0xff]
    %v4202 = vld [vmem:[%s4122 + $0x278] sm:$0xff]
    %v4203 = vld [vmem:[%s4122 + $0x280] sm:$0xff]
    %v4204 = vld [vmem:[%s4122 + $0x288] sm:$0xff]
    %v4205 = vld [vmem:[%s4122 + $0x290] sm:$0xff]
    %v4206 = vld [vmem:[%s4122 + $0x298] sm:$0xff]
    %v4207 = vld [vmem:[%s4122 + $0x2a0] sm:$0xff]
    %v4208 = vld [vmem:[%s4122 + $0x2a8] sm:$0xff]
    %v4209 = vld [vmem:[%s4122 + $0x2b0] sm:$0xff]
    %v4210 = vld [vmem:[%s4122 + $0x2b8] sm:$0xff]
    %v4211 = vld [vmem:[%s4122 + $0x2c0] sm:$0xff]
    %v4212 = vld [vmem:[%s4122 + $0x2c8] sm:$0xff]
    %v4213 = vld [vmem:[%s4122 + $0x2d0] sm:$0xff]
    %v4214 = vld [vmem:[%s4122 + $0x2d8] sm:$0xff]
    %v4215 = vld [vmem:[%s4122 + $0x2e0] sm:$0xff]
    %v4216 = vld [vmem:[%s4122 + $0x2e8] sm:$0xff]
    %v4217 = vld [vmem:[%s4122 + $0x2f0] sm:$0xff]
    %v4218 = vld [vmem:[%s4122 + $0x2f8] sm:$0xff]
    %s4219 = scalar_lea.vmem [#allocation14], 9
    %v4220 = vld [vmem:[%s4219] sm:$0x7]
    %v4222 = vlaneseq
    %v4223 = vshrl.u32 %v4222, 7
    %v4224 = vsub.s32 0, %v4223
    %v4225 = vrot.slane %v4220, %v4224
    %v4226 = vlaneseq
    %v4227 = vshrl.u32 %v4226, 7
    %v4228 = vsub.s32 1, %v4227
    %v4229 = vrot.slane %v4220, %v4228
    %v4230 = vlaneseq
    %v4231 = vshrl.u32 %v4230, 7
    %v4232 = vsub.s32 2, %v4231
    %v4233 = vrot.slane %v4220, %v4232
    %4237 = vmatprep.subr.mxu0 %v4169
    %4238 = vmatpush1.msra.mxu0 %v4168
    %4239 = vmatprep.subr.mxu0 %v4166
    %4240 = vmatpush1.msra.mxu0 %v4165
    %4241 = vmatprep.subr.mxu0 %v4163
    %4242 = vmatpush1.msra.mxu0 %v4162
    %4243 = vmatprep.subr.mxu0 %v4160
    %4244 = vmatpush1.msra.mxu0 %v4159
    %4245 = vmatprep.subr.mxu0 %v4157
    %4246 = vmatpush1.msra.mxu0 %v4156
    %4247 = vmatprep.subr.mxu0 %v4154
    %4248 = vmatpush1.msra.mxu0 %v4153
    %4249 = vmatprep.subr.mxu0 %v4151
    %4250 = vmatpush1.msra.mxu0 %v4150
    %4251 = vmatprep.subr.mxu0 %v4148
    %4252 = vmatpush1.msra.mxu0 %v4147
    %4253 = vmatprep.subr.mxu0 %v4145
    %4254 = vmatpush1.msra.mxu0 %v4144
    %4255 = vmatprep.subr.mxu0 %v4142
    %4256 = vmatpush1.msra.mxu0 %v4141
    %4257 = vmatprep.subr.mxu0 %v4139
    %4258 = vmatpush1.msra.mxu0 %v4138
    %4259 = vmatprep.subr.mxu0 %v4136
    %4260 = vmatpush1.msra.mxu0 %v4135
    %4261 = vmatprep.subr.mxu0 %v4133
    %4262 = vmatpush1.msra.mxu0 %v4132
    %4263 = vmatprep.subr.mxu0 %v4130
    %4264 = vmatpush1.msra.mxu0 %v4129
    %4265 = vmatprep.subr.mxu0 %v4127
    %4266 = vmatpush1.msra.mxu0 %v4126
    %4267 = vmatprep.subr.mxu0 %v4124
    %4268 = vmatpush1.msra.mxu0 %v4123
    %4269 = vmatprep.subr.mxu0 %v4217
    %4270 = vmatpush2.msra.mxu0 %v4216
    %4271 = vmatprep.subr.mxu0 %v4214
    %4272 = vmatpush2.msra.mxu0 %v4213
    %4273 = vmatprep.subr.mxu0 %v4211
    %4274 = vmatpush2.msra.mxu0 %v4210
    %4275 = vmatprep.subr.mxu0 %v4208
    %4276 = vmatpush2.msra.mxu0 %v4207
    %4277 = vmatprep.subr.mxu0 %v4205
    %4278 = vmatpush2.msra.mxu0 %v4204
    %4279 = vmatprep.subr.mxu0 %v4202
    %4280 = vmatpush2.msra.mxu0 %v4201
    %4281 = vmatprep.subr.mxu0 %v4199
    %4282 = vmatpush2.msra.mxu0 %v4198
    %4283 = vmatprep.subr.mxu0 %v4196
    %4284 = vmatpush2.msra.mxu0 %v4195
    %4285 = vmatprep.subr.mxu0 %v4193
    %4286 = vmatpush2.msra.mxu0 %v4192
    %4287 = vmatprep.subr.mxu0 %v4190
    %4288 = vmatpush2.msra.mxu0 %v4189
    %4289 = vmatprep.subr.mxu0 %v4187
    %4290 = vmatpush2.msra.mxu0 %v4186
    %4291 = vmatprep.subr.mxu0 %v4184
    %4292 = vmatpush2.msra.mxu0 %v4183
    %4293 = vmatprep.subr.mxu0 %v4181
    %4294 = vmatpush2.msra.mxu0 %v4180
    %4295 = vmatprep.subr.mxu0 %v4178
    %4296 = vmatpush2.msra.mxu0 %v4177
    %4297 = vmatprep.subr.mxu0 %v4175
    %4298 = vmatpush2.msra.mxu0 %v4174
    %4299 = vmatprep.subr.mxu0 %v4172
    %4300 = vmatpush2.msra.mxu0 %v4171
    %4301 = vmatprep.mubr.f32.mxu0 %v3750
    %4302 = vmatmul.mubr.f32.gmra.mxu0 %v3749
    %v4303 = vpop.f32.mrf.mxu0
    %v4304 = vadd.f32 %v4225, %v4303
    %v4305 = vpop.f32.mrf.mxu0
    %v4306 = vadd.f32 %v4229, %v4305
    %4307 = vmatprep.mubr.f32.mxu0 %v3752
    %4308 = vmatmul.mubr.f32.gmra.mxu0 %v3751
    %v4309 = vpop.f32.mrf.mxu0
    %v4310 = vadd.f32 %v4225, %v4309
    %v4311 = vpop.f32.mrf.mxu0
    %v4312 = vadd.f32 %v4229, %v4311
    %4313 = vmatprep.mubr.f32.mxu0 %v3754
    %4314 = vmatmul.mubr.f32.gmra.mxu0 %v3753
    %v4315 = vpop.f32.mrf.mxu0
    %v4316 = vadd.f32 %v4225, %v4315
    %v4317 = vpop.f32.mrf.mxu0
    %v4318 = vadd.f32 %v4229, %v4317
    %4319 = vmatprep.mubr.f32.mxu0 %v3756
    %4320 = vmatmul.mubr.f32.gmra.mxu0 %v3755
    %v4321 = vpop.f32.mrf.mxu0
    %v4322 = vadd.f32 %v4225, %v4321
    %v4323 = vpop.f32.mrf.mxu0
    %v4324 = vadd.f32 %v4229, %v4323
    %4325 = vmatprep.mubr.f32.mxu0 %v3758
    %4326 = vmatmul.mubr.f32.gmra.mxu0 %v3757
    %v4327 = vpop.f32.mrf.mxu0
    %v4328 = vadd.f32 %v4225, %v4327
    %v4329 = vpop.f32.mrf.mxu0
    %v4330 = vadd.f32 %v4229, %v4329
    %4331 = vmatprep.mubr.f32.mxu0 %v3760
    %4332 = vmatmul.mubr.f32.gmra.mxu0 %v3759
    %v4333 = vpop.f32.mrf.mxu0
    %v4334 = vadd.f32 %v4225, %v4333
    %v4335 = vpop.f32.mrf.mxu0
    %v4336 = vadd.f32 %v4229, %v4335
    %4337 = vmatprep.mubr.f32.mxu0 %v3762
    %4338 = vmatmul.mubr.f32.gmra.mxu0 %v3761
    %v4339 = vpop.f32.mrf.mxu0
    %v4340 = vadd.f32 %v4225, %v4339
    %v4341 = vpop.f32.mrf.mxu0
    %v4342 = vadd.f32 %v4229, %v4341
    %4343 = vmatprep.mubr.f32.mxu0 %v3764
    %4344 = vmatmul.mubr.f32.gmra.mxu0 %v3763
    %v4345 = vpop.f32.mrf.mxu0
    %v4346 = vadd.f32 %v4225, %v4345
    %v4347 = vpop.f32.mrf.mxu0
    %v4348 = vadd.f32 %v4229, %v4347
    %4349 = vdwg.mxu0
    %4350 = vmatprep.subr.mxu0 0.0
    %4351 = vmatpush1.msra.mxu0 %v4170
    %4352 = vmatprep.subr.mxu0 0.0
    %4353 = vmatpush1.msra.mxu0 %v4167
    %4354 = vmatprep.subr.mxu0 0.0
    %4355 = vmatpush1.msra.mxu0 %v4164
    %4356 = vmatprep.subr.mxu0 0.0
    %4357 = vmatpush1.msra.mxu0 %v4161
    %4358 = vmatprep.subr.mxu0 0.0
    %4359 = vmatpush1.msra.mxu0 %v4158
    %4360 = vmatprep.subr.mxu0 0.0
    %4361 = vmatpush1.msra.mxu0 %v4155
    %4362 = vmatprep.subr.mxu0 0.0
    %4363 = vmatpush1.msra.mxu0 %v4152
    %4364 = vmatprep.subr.mxu0 0.0
    %4365 = vmatpush1.msra.mxu0 %v4149
    %4366 = vmatprep.subr.mxu0 0.0
    %4367 = vmatpush1.msra.mxu0 %v4146
    %4368 = vmatprep.subr.mxu0 0.0
    %4369 = vmatpush1.msra.mxu0 %v4143
    %4370 = vmatprep.subr.mxu0 0.0
    %4371 = vmatpush1.msra.mxu0 %v4140
    %4372 = vmatprep.subr.mxu0 0.0
    %4373 = vmatpush1.msra.mxu0 %v4137
    %4374 = vmatprep.subr.mxu0 0.0
    %4375 = vmatpush1.msra.mxu0 %v4134
    %4376 = vmatprep.subr.mxu0 0.0
    %4377 = vmatpush1.msra.mxu0 %v4131
    %4378 = vmatprep.subr.mxu0 0.0
    %4379 = vmatpush1.msra.mxu0 %v4128
    %4380 = vmatprep.subr.mxu0 0.0
    %4381 = vmatpush1.msra.mxu0 %v4125
    %4382 = vmatprep.subr.mxu0 0.0
    %4383 = vmatpush2.msra.mxu0 %v4218
    %4384 = vmatprep.subr.mxu0 0.0
    %4385 = vmatpush2.msra.mxu0 %v4215
    %4386 = vmatprep.subr.mxu0 0.0
    %4387 = vmatpush2.msra.mxu0 %v4212
    %4388 = vmatprep.subr.mxu0 0.0
    %4389 = vmatpush2.msra.mxu0 %v4209
    %4390 = vmatprep.subr.mxu0 0.0
    %4391 = vmatpush2.msra.mxu0 %v4206
    %4392 = vmatprep.subr.mxu0 0.0
    %4393 = vmatpush2.msra.mxu0 %v4203
    %4394 = vmatprep.subr.mxu0 0.0
    %4395 = vmatpush2.msra.mxu0 %v4200
    %4396 = vmatprep.subr.mxu0 0.0
    %4397 = vmatpush2.msra.mxu0 %v4197
    %4398 = vmatprep.subr.mxu0 0.0
    %4399 = vmatpush2.msra.mxu0 %v4194
    %4400 = vmatprep.subr.mxu0 0.0
    %4401 = vmatpush2.msra.mxu0 %v4191
    %4402 = vmatprep.subr.mxu0 0.0
    %4403 = vmatpush2.msra.mxu0 %v4188
    %4404 = vmatprep.subr.mxu0 0.0
    %4405 = vmatpush2.msra.mxu0 %v4185
    %4406 = vmatprep.subr.mxu0 0.0
    %4407 = vmatpush2.msra.mxu0 %v4182
    %4408 = vmatprep.subr.mxu0 0.0
    %4409 = vmatpush2.msra.mxu0 %v4179
    %4410 = vmatprep.subr.mxu0 0.0
    %4411 = vmatpush2.msra.mxu0 %v4176
    %4412 = vmatprep.subr.mxu0 0.0
    %4413 = vmatpush2.msra.mxu0 %v4173
    %4414 = vmatprep.mubr.f32.mxu0 %v3750
    %4415 = vmatmul.mubr.f32.gmra.mxu0 %v3749
    %v4416 = vpop.f32.mrf.mxu0
    %v4417 = vadd.f32 %v4233, %v4416
    %v4418 = vpop.f32.mrf.mxu0
    %4419 = vmatprep.mubr.f32.mxu0 %v3752
    %4420 = vmatmul.mubr.f32.gmra.mxu0 %v3751
    %v4421 = vpop.f32.mrf.mxu0
    %v4422 = vadd.f32 %v4233, %v4421
    %v4423 = vpop.f32.mrf.mxu0
    %4424 = vmatprep.mubr.f32.mxu0 %v3754
    %4425 = vmatmul.mubr.f32.gmra.mxu0 %v3753
    %v4426 = vpop.f32.mrf.mxu0
    %v4427 = vadd.f32 %v4233, %v4426
    %v4428 = vpop.f32.mrf.mxu0
    %4429 = vmatprep.mubr.f32.mxu0 %v3756
    %4430 = vmatmul.mubr.f32.gmra.mxu0 %v3755
    %v4431 = vpop.f32.mrf.mxu0
    %v4432 = vadd.f32 %v4233, %v4431
    %v4433 = vpop.f32.mrf.mxu0
    %4434 = vmatprep.mubr.f32.mxu0 %v3758
    %4435 = vmatmul.mubr.f32.gmra.mxu0 %v3757
    %v4436 = vpop.f32.mrf.mxu0
    %v4437 = vadd.f32 %v4233, %v4436
    %v4438 = vpop.f32.mrf.mxu0
    %4439 = vmatprep.mubr.f32.mxu0 %v3760
    %4440 = vmatmul.mubr.f32.gmra.mxu0 %v3759
    %v4441 = vpop.f32.mrf.mxu0
    %v4442 = vadd.f32 %v4233, %v4441
    %v4443 = vpop.f32.mrf.mxu0
    %4444 = vmatprep.mubr.f32.mxu0 %v3762
    %4445 = vmatmul.mubr.f32.gmra.mxu0 %v3761
    %v4446 = vpop.f32.mrf.mxu0
    %v4447 = vadd.f32 %v4233, %v4446
    %v4448 = vpop.f32.mrf.mxu0
    %4449 = vmatprep.mubr.f32.mxu0 %v3764
    %4450 = vmatmul.mubr.f32.gmra.mxu0 %v3763
    %v4451 = vpop.f32.mrf.mxu0
    %v4452 = vadd.f32 %v4233, %v4451
    %v4453 = vpop.f32.mrf.mxu0
    %4454 = vdwg.mxu0
    %4455 = vst [vmem:[#allocation6] sm:$0xff] %v4304
    %4456 = vst [vmem:[#allocation6 + $0x8] sm:$0xff] %v4306
    %4457 = vst [vmem:[#allocation6 + $0x10] sm:$0xff] %v4417
    %4458 = vst [vmem:[#allocation6 + $0x18] sm:$0xff] %v4310
    %4459 = vst [vmem:[#allocation6 + $0x20] sm:$0xff] %v4312
    %4460 = vst [vmem:[#allocation6 + $0x28] sm:$0xff] %v4422
    %4461 = vst [vmem:[#allocation6 + $0x30] sm:$0xff] %v4316
    %4462 = vst [vmem:[#allocation6 + $0x38] sm:$0xff] %v4318
    %4463 = vst [vmem:[#allocation6 + $0x40] sm:$0xff] %v4427
    %4464 = vst [vmem:[#allocation6 + $0x48] sm:$0xff] %v4322
    %4465 = vst [vmem:[#allocation6 + $0x50] sm:$0xff] %v4324
    %4466 = vst [vmem:[#allocation6 + $0x58] sm:$0xff] %v4432
    %4467 = vst [vmem:[#allocation6 + $0x60] sm:$0xff] %v4328
    %4468 = vst [vmem:[#allocation6 + $0x68] sm:$0xff] %v4330
    %4469 = vst [vmem:[#allocation6 + $0x70] sm:$0xff] %v4437
    %4470 = vst [vmem:[#allocation6 + $0x78] sm:$0xff] %v4334
    %4471 = vst [vmem:[#allocation6 + $0x80] sm:$0xff] %v4336
    %4472 = vst [vmem:[#allocation6 + $0x88] sm:$0xff] %v4442
    %4473 = vst [vmem:[#allocation6 + $0x90] sm:$0xff] %v4340
    %4474 = vst [vmem:[#allocation6 + $0x98] sm:$0xff] %v4342
    %4475 = vst [vmem:[#allocation6 + $0xa0] sm:$0xff] %v4447
    %4476 = vst [vmem:[#allocation6 + $0xa8] sm:$0xff] %v4346
    %4477 = vst [vmem:[#allocation6 + $0xb0] sm:$0xff] %v4348
    %4478 = vst [vmem:[#allocation6 + $0xb8] sm:$0xff] %v4452
    %s4479 = scalar_lea.vmem [#allocation15], 768
    %v4480 = vld [vmem:[%s4479] sm:$0xff]
    %v4481 = vld [vmem:[%s4479 + $0x8] sm:$0xff]
    %v4482 = vld [vmem:[%s4479 + $0x10] sm:$0xff]
    %v4483 = vld [vmem:[%s4479 + $0x18] sm:$0xff]
    %v4484 = vld [vmem:[%s4479 + $0x20] sm:$0xff]
    %v4485 = vld [vmem:[%s4479 + $0x28] sm:$0xff]
    %v4486 = vld [vmem:[%s4479 + $0x30] sm:$0xff]
    %v4487 = vld [vmem:[%s4479 + $0x38] sm:$0xff]
    %v4488 = vld [vmem:[%s4479 + $0x40] sm:$0xff]
    %v4489 = vld [vmem:[%s4479 + $0x48] sm:$0xff]
    %v4490 = vld [vmem:[%s4479 + $0x50] sm:$0xff]
    %v4491 = vld [vmem:[%s4479 + $0x58] sm:$0xff]
    %v4492 = vld [vmem:[%s4479 + $0x60] sm:$0xff]
    %v4493 = vld [vmem:[%s4479 + $0x68] sm:$0xff]
    %v4494 = vld [vmem:[%s4479 + $0x70] sm:$0xff]
    %v4495 = vld [vmem:[%s4479 + $0x78] sm:$0xff]
    %v4496 = vld [vmem:[%s4479 + $0x80] sm:$0xff]
    %v4497 = vld [vmem:[%s4479 + $0x88] sm:$0xff]
    %v4498 = vld [vmem:[%s4479 + $0x90] sm:$0xff]
    %v4499 = vld [vmem:[%s4479 + $0x98] sm:$0xff]
    %v4500 = vld [vmem:[%s4479 + $0xa0] sm:$0xff]
    %v4501 = vld [vmem:[%s4479 + $0xa8] sm:$0xff]
    %v4502 = vld [vmem:[%s4479 + $0xb0] sm:$0xff]
    %v4503 = vld [vmem:[%s4479 + $0xb8] sm:$0xff]
    %v4504 = vld [vmem:[%s4479 + $0xc0] sm:$0xff]
    %v4505 = vld [vmem:[%s4479 + $0xc8] sm:$0xff]
    %v4506 = vld [vmem:[%s4479 + $0xd0] sm:$0xff]
    %v4507 = vld [vmem:[%s4479 + $0xd8] sm:$0xff]
    %v4508 = vld [vmem:[%s4479 + $0xe0] sm:$0xff]
    %v4509 = vld [vmem:[%s4479 + $0xe8] sm:$0xff]
    %v4510 = vld [vmem:[%s4479 + $0xf0] sm:$0xff]
    %v4511 = vld [vmem:[%s4479 + $0xf8] sm:$0xff]
    %v4512 = vld [vmem:[%s4479 + $0x100] sm:$0xff]
    %v4513 = vld [vmem:[%s4479 + $0x108] sm:$0xff]
    %v4514 = vld [vmem:[%s4479 + $0x110] sm:$0xff]
    %v4515 = vld [vmem:[%s4479 + $0x118] sm:$0xff]
    %v4516 = vld [vmem:[%s4479 + $0x120] sm:$0xff]
    %v4517 = vld [vmem:[%s4479 + $0x128] sm:$0xff]
    %v4518 = vld [vmem:[%s4479 + $0x130] sm:$0xff]
    %v4519 = vld [vmem:[%s4479 + $0x138] sm:$0xff]
    %v4520 = vld [vmem:[%s4479 + $0x140] sm:$0xff]
    %v4521 = vld [vmem:[%s4479 + $0x148] sm:$0xff]
    %v4522 = vld [vmem:[%s4479 + $0x150] sm:$0xff]
    %v4523 = vld [vmem:[%s4479 + $0x158] sm:$0xff]
    %v4524 = vld [vmem:[%s4479 + $0x160] sm:$0xff]
    %v4525 = vld [vmem:[%s4479 + $0x168] sm:$0xff]
    %v4526 = vld [vmem:[%s4479 + $0x170] sm:$0xff]
    %v4527 = vld [vmem:[%s4479 + $0x178] sm:$0xff]
    %s4528 = scalar_lea.vmem [#allocation15], 1152
    %v4529 = vld [vmem:[%s4528] sm:$0xff]
    %v4530 = vld [vmem:[%s4528 + $0x8] sm:$0xff]
    %v4531 = vld [vmem:[%s4528 + $0x10] sm:$0xff]
    %v4532 = vld [vmem:[%s4528 + $0x18] sm:$0xff]
    %v4533 = vld [vmem:[%s4528 + $0x20] sm:$0xff]
    %v4534 = vld [vmem:[%s4528 + $0x28] sm:$0xff]
    %v4535 = vld [vmem:[%s4528 + $0x30] sm:$0xff]
    %v4536 = vld [vmem:[%s4528 + $0x38] sm:$0xff]
    %v4537 = vld [vmem:[%s4528 + $0x40] sm:$0xff]
    %v4538 = vld [vmem:[%s4528 + $0x48] sm:$0xff]
    %v4539 = vld [vmem:[%s4528 + $0x50] sm:$0xff]
    %v4540 = vld [vmem:[%s4528 + $0x58] sm:$0xff]
    %v4541 = vld [vmem:[%s4528 + $0x60] sm:$0xff]
    %v4542 = vld [vmem:[%s4528 + $0x68] sm:$0xff]
    %v4543 = vld [vmem:[%s4528 + $0x70] sm:$0xff]
    %v4544 = vld [vmem:[%s4528 + $0x78] sm:$0xff]
    %v4545 = vld [vmem:[%s4528 + $0x80] sm:$0xff]
    %v4546 = vld [vmem:[%s4528 + $0x88] sm:$0xff]
    %v4547 = vld [vmem:[%s4528 + $0x90] sm:$0xff]
    %v4548 = vld [vmem:[%s4528 + $0x98] sm:$0xff]
    %v4549 = vld [vmem:[%s4528 + $0xa0] sm:$0xff]
    %v4550 = vld [vmem:[%s4528 + $0xa8] sm:$0xff]
    %v4551 = vld [vmem:[%s4528 + $0xb0] sm:$0xff]
    %v4552 = vld [vmem:[%s4528 + $0xb8] sm:$0xff]
    %v4553 = vld [vmem:[%s4528 + $0xc0] sm:$0xff]
    %v4554 = vld [vmem:[%s4528 + $0xc8] sm:$0xff]
    %v4555 = vld [vmem:[%s4528 + $0xd0] sm:$0xff]
    %v4556 = vld [vmem:[%s4528 + $0xd8] sm:$0xff]
    %v4557 = vld [vmem:[%s4528 + $0xe0] sm:$0xff]
    %v4558 = vld [vmem:[%s4528 + $0xe8] sm:$0xff]
    %v4559 = vld [vmem:[%s4528 + $0xf0] sm:$0xff]
    %v4560 = vld [vmem:[%s4528 + $0xf8] sm:$0xff]
    %v4561 = vld [vmem:[%s4528 + $0x100] sm:$0xff]
    %v4562 = vld [vmem:[%s4528 + $0x108] sm:$0xff]
    %v4563 = vld [vmem:[%s4528 + $0x110] sm:$0xff]
    %v4564 = vld [vmem:[%s4528 + $0x118] sm:$0xff]
    %v4565 = vld [vmem:[%s4528 + $0x120] sm:$0xff]
    %v4566 = vld [vmem:[%s4528 + $0x128] sm:$0xff]
    %v4567 = vld [vmem:[%s4528 + $0x130] sm:$0xff]
    %v4568 = vld [vmem:[%s4528 + $0x138] sm:$0xff]
    %v4569 = vld [vmem:[%s4528 + $0x140] sm:$0xff]
    %v4570 = vld [vmem:[%s4528 + $0x148] sm:$0xff]
    %v4571 = vld [vmem:[%s4528 + $0x150] sm:$0xff]
    %v4572 = vld [vmem:[%s4528 + $0x158] sm:$0xff]
    %v4573 = vld [vmem:[%s4528 + $0x160] sm:$0xff]
    %v4574 = vld [vmem:[%s4528 + $0x168] sm:$0xff]
    %v4575 = vld [vmem:[%s4528 + $0x170] sm:$0xff]
    %v4576 = vld [vmem:[%s4528 + $0x178] sm:$0xff]
    %s4577 = scalar_lea.vmem [#allocation17], 6
    %v4578 = vld [vmem:[%s4577] sm:$0x7]
    %s4579 = scalar_lea.vmem [#allocation17], 9
    %v4580 = vld [vmem:[%s4579] sm:$0x7]
    %4581 = vst [vmem:[#allocation7] sm:$0xff] 0.0
    %4582 = vst [vmem:[#allocation8] sm:$0xff] 0.0
    %v4583 = vld [vmem:[#allocation7] sm:$0xff]
    %v4584 = vld [vmem:[#allocation8] sm:$0xff]
    %v4586 = vlaneseq
    %v4587 = vshrl.u32 %v4586, 7
    %v4588 = vsub.s32 0, %v4587
    %v4589 = vrot.slane %v4578, %v4588
    %v4590 = vlaneseq
    %v4591 = vshrl.u32 %v4590, 7
    %v4592 = vsub.s32 1, %v4591
    %v4593 = vrot.slane %v4578, %v4592
    %v4594 = vlaneseq
    %v4595 = vshrl.u32 %v4594, 7
    %v4596 = vsub.s32 2, %v4595
    %v4597 = vrot.slane %v4578, %v4596
    %4601 = vmatprep.subr.mxu0 %v4526
    %4602 = vmatpush1.msra.mxu0 %v4525
    %4603 = vmatprep.subr.mxu0 %v4523
    %4604 = vmatpush1.msra.mxu0 %v4522
    %4605 = vmatprep.subr.mxu0 %v4520
    %4606 = vmatpush1.msra.mxu0 %v4519
    %4607 = vmatprep.subr.mxu0 %v4517
    %4608 = vmatpush1.msra.mxu0 %v4516
    %4609 = vmatprep.subr.mxu0 %v4514
    %4610 = vmatpush1.msra.mxu0 %v4513
    %4611 = vmatprep.subr.mxu0 %v4511
    %4612 = vmatpush1.msra.mxu0 %v4510
    %4613 = vmatprep.subr.mxu0 %v4508
    %4614 = vmatpush1.msra.mxu0 %v4507
    %4615 = vmatprep.subr.mxu0 %v4505
    %4616 = vmatpush1.msra.mxu0 %v4504
    %4617 = vmatprep.subr.mxu0 %v4502
    %4618 = vmatpush1.msra.mxu0 %v4501
    %4619 = vmatprep.subr.mxu0 %v4499
    %4620 = vmatpush1.msra.mxu0 %v4498
    %4621 = vmatprep.subr.mxu0 %v4496
    %4622 = vmatpush1.msra.mxu0 %v4495
    %4623 = vmatprep.subr.mxu0 %v4493
    %4624 = vmatpush1.msra.mxu0 %v4492
    %4625 = vmatprep.subr.mxu0 %v4490
    %4626 = vmatpush1.msra.mxu0 %v4489
    %4627 = vmatprep.subr.mxu0 %v4487
    %4628 = vmatpush1.msra.mxu0 %v4486
    %4629 = vmatprep.subr.mxu0 %v4484
    %4630 = vmatpush1.msra.mxu0 %v4483
    %4631 = vmatprep.subr.mxu0 %v4481
    %4632 = vmatpush1.msra.mxu0 %v4480
    %4633 = vmatprep.subr.mxu0 0.0
    %4634 = vmatpush2.msra.mxu0 0.0
    %4635 = vmatprep.subr.mxu0 0.0
    %4636 = vmatpush2.msra.mxu0 0.0
    %4637 = vmatprep.subr.mxu0 0.0
    %4638 = vmatpush2.msra.mxu0 0.0
    %4639 = vmatprep.subr.mxu0 0.0
    %4640 = vmatpush2.msra.mxu0 0.0
    %4641 = vmatprep.subr.mxu0 0.0
    %4642 = vmatpush2.msra.mxu0 0.0
    %4643 = vmatprep.subr.mxu0 0.0
    %4644 = vmatpush2.msra.mxu0 0.0
    %4645 = vmatprep.subr.mxu0 0.0
    %4646 = vmatpush2.msra.mxu0 0.0
    %4647 = vmatprep.subr.mxu0 0.0
    %4648 = vmatpush2.msra.mxu0 0.0
    %4649 = vmatprep.subr.mxu0 0.0
    %4650 = vmatpush2.msra.mxu0 0.0
    %4651 = vmatprep.subr.mxu0 0.0
    %4652 = vmatpush2.msra.mxu0 0.0
    %4653 = vmatprep.subr.mxu0 0.0
    %4654 = vmatpush2.msra.mxu0 0.0
    %4655 = vmatprep.subr.mxu0 0.0
    %4656 = vmatpush2.msra.mxu0 0.0
    %4657 = vmatprep.subr.mxu0 0.0
    %4658 = vmatpush2.msra.mxu0 0.0
    %4659 = vmatprep.subr.mxu0 0.0
    %4660 = vmatpush2.msra.mxu0 0.0
    %4661 = vmatprep.subr.mxu0 0.0
    %4662 = vmatpush2.msra.mxu0 0.0
    %4663 = vmatprep.subr.mxu0 0.0
    %4664 = vmatpush2.msra.mxu0 0.0
    %4665 = vmatprep.mubr.f32.mxu0 0.0
    %4666 = vmatmul.mubr.f32.gmra.mxu0 %v4583
    %v4667 = vpop.f32.mrf.mxu0
    %v4668 = vadd.f32 %v4589, %v4667
    %v4669 = vpop.f32.mrf.mxu0
    %v4670 = vadd.f32 %v4593, %v4669
    %4671 = vdwg.mxu0
    %4672 = vmatprep.subr.mxu0 0.0
    %4673 = vmatpush1.msra.mxu0 %v4527
    %4674 = vmatprep.subr.mxu0 0.0
    %4675 = vmatpush1.msra.mxu0 %v4524
    %4676 = vmatprep.subr.mxu0 0.0
    %4677 = vmatpush1.msra.mxu0 %v4521
    %4678 = vmatprep.subr.mxu0 0.0
    %4679 = vmatpush1.msra.mxu0 %v4518
    %4680 = vmatprep.subr.mxu0 0.0
    %4681 = vmatpush1.msra.mxu0 %v4515
    %4682 = vmatprep.subr.mxu0 0.0
    %4683 = vmatpush1.msra.mxu0 %v4512
    %4684 = vmatprep.subr.mxu0 0.0
    %4685 = vmatpush1.msra.mxu0 %v4509
    %4686 = vmatprep.subr.mxu0 0.0
    %4687 = vmatpush1.msra.mxu0 %v4506
    %4688 = vmatprep.subr.mxu0 0.0
    %4689 = vmatpush1.msra.mxu0 %v4503
    %4690 = vmatprep.subr.mxu0 0.0
    %4691 = vmatpush1.msra.mxu0 %v4500
    %4692 = vmatprep.subr.mxu0 0.0
    %4693 = vmatpush1.msra.mxu0 %v4497
    %4694 = vmatprep.subr.mxu0 0.0
    %4695 = vmatpush1.msra.mxu0 %v4494
    %4696 = vmatprep.subr.mxu0 0.0
    %4697 = vmatpush1.msra.mxu0 %v4491
    %4698 = vmatprep.subr.mxu0 0.0
    %4699 = vmatpush1.msra.mxu0 %v4488
    %4700 = vmatprep.subr.mxu0 0.0
    %4701 = vmatpush1.msra.mxu0 %v4485
    %4702 = vmatprep.subr.mxu0 0.0
    %4703 = vmatpush1.msra.mxu0 %v4482
    %4704 = vmatprep.subr.mxu0 0.0
    %4705 = vmatpush2.msra.mxu0 0.0
    %4706 = vmatprep.subr.mxu0 0.0
    %4707 = vmatpush2.msra.mxu0 0.0
    %4708 = vmatprep.subr.mxu0 0.0
    %4709 = vmatpush2.msra.mxu0 0.0
    %4710 = vmatprep.subr.mxu0 0.0
    %4711 = vmatpush2.msra.mxu0 0.0
    %4712 = vmatprep.subr.mxu0 0.0
    %4713 = vmatpush2.msra.mxu0 0.0
    %4714 = vmatprep.subr.mxu0 0.0
    %4715 = vmatpush2.msra.mxu0 0.0
    %4716 = vmatprep.subr.mxu0 0.0
    %4717 = vmatpush2.msra.mxu0 0.0
    %4718 = vmatprep.subr.mxu0 0.0
    %4719 = vmatpush2.msra.mxu0 0.0
    %4720 = vmatprep.subr.mxu0 0.0
    %4721 = vmatpush2.msra.mxu0 0.0
    %4722 = vmatprep.subr.mxu0 0.0
    %4723 = vmatpush2.msra.mxu0 0.0
    %4724 = vmatprep.subr.mxu0 0.0
    %4725 = vmatpush2.msra.mxu0 0.0
    %4726 = vmatprep.subr.mxu0 0.0
    %4727 = vmatpush2.msra.mxu0 0.0
    %4728 = vmatprep.subr.mxu0 0.0
    %4729 = vmatpush2.msra.mxu0 0.0
    %4730 = vmatprep.subr.mxu0 0.0
    %4731 = vmatpush2.msra.mxu0 0.0
    %4732 = vmatprep.subr.mxu0 0.0
    %4733 = vmatpush2.msra.mxu0 0.0
    %4734 = vmatprep.subr.mxu0 0.0
    %4735 = vmatpush2.msra.mxu0 0.0
    %4736 = vmatprep.mubr.f32.mxu0 0.0
    %4737 = vmatmul.mubr.f32.gmra.mxu0 %v4583
    %v4738 = vpop.f32.mrf.mxu0
    %v4739 = vadd.f32 %v4597, %v4738
    %v4740 = vpop.f32.mrf.mxu0
    %4741 = vdwg.mxu0
    %v4743 = vlaneseq
    %v4744 = vshrl.u32 %v4743, 7
    %v4745 = vsub.s32 0, %v4744
    %v4746 = vrot.slane %v4580, %v4745
    %v4747 = vlaneseq
    %v4748 = vshrl.u32 %v4747, 7
    %v4749 = vsub.s32 1, %v4748
    %v4750 = vrot.slane %v4580, %v4749
    %v4751 = vlaneseq
    %v4752 = vshrl.u32 %v4751, 7
    %v4753 = vsub.s32 2, %v4752
    %v4754 = vrot.slane %v4580, %v4753
    %4758 = vmatprep.subr.mxu0 %v4575
    %4759 = vmatpush1.msra.mxu0 %v4574
    %4760 = vmatprep.subr.mxu0 %v4572
    %4761 = vmatpush1.msra.mxu0 %v4571
    %4762 = vmatprep.subr.mxu0 %v4569
    %4763 = vmatpush1.msra.mxu0 %v4568
    %4764 = vmatprep.subr.mxu0 %v4566
    %4765 = vmatpush1.msra.mxu0 %v4565
    %4766 = vmatprep.subr.mxu0 %v4563
    %4767 = vmatpush1.msra.mxu0 %v4562
    %4768 = vmatprep.subr.mxu0 %v4560
    %4769 = vmatpush1.msra.mxu0 %v4559
    %4770 = vmatprep.subr.mxu0 %v4557
    %4771 = vmatpush1.msra.mxu0 %v4556
    %4772 = vmatprep.subr.mxu0 %v4554
    %4773 = vmatpush1.msra.mxu0 %v4553
    %4774 = vmatprep.subr.mxu0 %v4551
    %4775 = vmatpush1.msra.mxu0 %v4550
    %4776 = vmatprep.subr.mxu0 %v4548
    %4777 = vmatpush1.msra.mxu0 %v4547
    %4778 = vmatprep.subr.mxu0 %v4545
    %4779 = vmatpush1.msra.mxu0 %v4544
    %4780 = vmatprep.subr.mxu0 %v4542
    %4781 = vmatpush1.msra.mxu0 %v4541
    %4782 = vmatprep.subr.mxu0 %v4539
    %4783 = vmatpush1.msra.mxu0 %v4538
    %4784 = vmatprep.subr.mxu0 %v4536
    %4785 = vmatpush1.msra.mxu0 %v4535
    %4786 = vmatprep.subr.mxu0 %v4533
    %4787 = vmatpush1.msra.mxu0 %v4532
    %4788 = vmatprep.subr.mxu0 %v4530
    %4789 = vmatpush1.msra.mxu0 %v4529
    %4790 = vmatprep.subr.mxu0 0.0
    %4791 = vmatpush2.msra.mxu0 0.0
    %4792 = vmatprep.subr.mxu0 0.0
    %4793 = vmatpush2.msra.mxu0 0.0
    %4794 = vmatprep.subr.mxu0 0.0
    %4795 = vmatpush2.msra.mxu0 0.0
    %4796 = vmatprep.subr.mxu0 0.0
    %4797 = vmatpush2.msra.mxu0 0.0
    %4798 = vmatprep.subr.mxu0 0.0
    %4799 = vmatpush2.msra.mxu0 0.0
    %4800 = vmatprep.subr.mxu0 0.0
    %4801 = vmatpush2.msra.mxu0 0.0
    %4802 = vmatprep.subr.mxu0 0.0
    %4803 = vmatpush2.msra.mxu0 0.0
    %4804 = vmatprep.subr.mxu0 0.0
    %4805 = vmatpush2.msra.mxu0 0.0
    %4806 = vmatprep.subr.mxu0 0.0
    %4807 = vmatpush2.msra.mxu0 0.0
    %4808 = vmatprep.subr.mxu0 0.0
    %4809 = vmatpush2.msra.mxu0 0.0
    %4810 = vmatprep.subr.mxu0 0.0
    %4811 = vmatpush2.msra.mxu0 0.0
    %4812 = vmatprep.subr.mxu0 0.0
    %4813 = vmatpush2.msra.mxu0 0.0
    %4814 = vmatprep.subr.mxu0 0.0
    %4815 = vmatpush2.msra.mxu0 0.0
    %4816 = vmatprep.subr.mxu0 0.0
    %4817 = vmatpush2.msra.mxu0 0.0
    %4818 = vmatprep.subr.mxu0 0.0
    %4819 = vmatpush2.msra.mxu0 0.0
    %4820 = vmatprep.subr.mxu0 0.0
    %4821 = vmatpush2.msra.mxu0 0.0
    %4822 = vmatprep.mubr.f32.mxu0 0.0
    %4823 = vmatmul.mubr.f32.gmra.mxu0 %v4584
    %v4824 = vpop.f32.mrf.mxu0
    %v4825 = vadd.f32 %v4746, %v4824
    %v4826 = vpop.f32.mrf.mxu0
    %v4827 = vadd.f32 %v4750, %v4826
    %4828 = vdwg.mxu0
    %4829 = vmatprep.subr.mxu0 0.0
    %4830 = vmatpush1.msra.mxu0 %v4576
    %4831 = vmatprep.subr.mxu0 0.0
    %4832 = vmatpush1.msra.mxu0 %v4573
    %4833 = vmatprep.subr.mxu0 0.0
    %4834 = vmatpush1.msra.mxu0 %v4570
    %4835 = vmatprep.subr.mxu0 0.0
    %4836 = vmatpush1.msra.mxu0 %v4567
    %4837 = vmatprep.subr.mxu0 0.0
    %4838 = vmatpush1.msra.mxu0 %v4564
    %4839 = vmatprep.subr.mxu0 0.0
    %4840 = vmatpush1.msra.mxu0 %v4561
    %4841 = vmatprep.subr.mxu0 0.0
    %4842 = vmatpush1.msra.mxu0 %v4558
    %4843 = vmatprep.subr.mxu0 0.0
    %4844 = vmatpush1.msra.mxu0 %v4555
    %4845 = vmatprep.subr.mxu0 0.0
    %4846 = vmatpush1.msra.mxu0 %v4552
    %4847 = vmatprep.subr.mxu0 0.0
    %4848 = vmatpush1.msra.mxu0 %v4549
    %4849 = vmatprep.subr.mxu0 0.0
    %4850 = vmatpush1.msra.mxu0 %v4546
    %4851 = vmatprep.subr.mxu0 0.0
    %4852 = vmatpush1.msra.mxu0 %v4543
    %4853 = vmatprep.subr.mxu0 0.0
    %4854 = vmatpush1.msra.mxu0 %v4540
    %4855 = vmatprep.subr.mxu0 0.0
    %4856 = vmatpush1.msra.mxu0 %v4537
    %4857 = vmatprep.subr.mxu0 0.0
    %4858 = vmatpush1.msra.mxu0 %v4534
    %4859 = vmatprep.subr.mxu0 0.0
    %4860 = vmatpush1.msra.mxu0 %v4531
    %4861 = vmatprep.subr.mxu0 0.0
    %4862 = vmatpush2.msra.mxu0 0.0
    %4863 = vmatprep.subr.mxu0 0.0
    %4864 = vmatpush2.msra.mxu0 0.0
    %4865 = vmatprep.subr.mxu0 0.0
    %4866 = vmatpush2.msra.mxu0 0.0
    %4867 = vmatprep.subr.mxu0 0.0
    %4868 = vmatpush2.msra.mxu0 0.0
    %4869 = vmatprep.subr.mxu0 0.0
    %4870 = vmatpush2.msra.mxu0 0.0
    %4871 = vmatprep.subr.mxu0 0.0
    %4872 = vmatpush2.msra.mxu0 0.0
    %4873 = vmatprep.subr.mxu0 0.0
    %4874 = vmatpush2.msra.mxu0 0.0
    %4875 = vmatprep.subr.mxu0 0.0
    %4876 = vmatpush2.msra.mxu0 0.0
    %4877 = vmatprep.subr.mxu0 0.0
    %4878 = vmatpush2.msra.mxu0 0.0
    %4879 = vmatprep.subr.mxu0 0.0
    %4880 = vmatpush2.msra.mxu0 0.0
    %4881 = vmatprep.subr.mxu0 0.0
    %4882 = vmatpush2.msra.mxu0 0.0
    %4883 = vmatprep.subr.mxu0 0.0
    %4884 = vmatpush2.msra.mxu0 0.0
    %4885 = vmatprep.subr.mxu0 0.0
    %4886 = vmatpush2.msra.mxu0 0.0
    %4887 = vmatprep.subr.mxu0 0.0
    %4888 = vmatpush2.msra.mxu0 0.0
    %4889 = vmatprep.subr.mxu0 0.0
    %4890 = vmatpush2.msra.mxu0 0.0
    %4891 = vmatprep.subr.mxu0 0.0
    %4892 = vmatpush2.msra.mxu0 0.0
    %4893 = vmatprep.mubr.f32.mxu0 0.0
    %4894 = vmatmul.mubr.f32.gmra.mxu0 %v4584
    %v4895 = vpop.f32.mrf.mxu0
    %v4896 = vadd.f32 %v4754, %v4895
    %v4897 = vpop.f32.mrf.mxu0
    %4898 = vdwg.mxu0
    %v4899 = vld [vmem:[%s1256] sm:$0xff]
    %v4900 = vld [vmem:[%s1256 + $0x8] sm:$0xff]
    %v4901 = vld [vmem:[%s1256 + $0x10] sm:$0xff]
    %v4902 = vadd.f32 %v4899, %v4668
    %v4903 = vxor.u32 %v4902, 2147483648
    %v4904 = vmul.f32 %v4903, 1.442695
    %v4905 = vpow.pop %v4904
    %v4906 = vadd.f32 %v4905, 1.0
    %v4907 = vrcp.pop %v4906
    %v4908 = vmul.f32 1.0, %v4907
    %v4909 = vadd.f32 %v4900, %v4670
    %v4910 = vxor.u32 %v4909, 2147483648
    %v4911 = vmul.f32 %v4910, 1.442695
    %v4912 = vpow.pop %v4911
    %v4913 = vadd.f32 %v4912, 1.0
    %v4914 = vrcp.pop %v4913
    %v4915 = vmul.f32 1.0, %v4914
    %v4916 = vmul.f32 %v4908, %v4739
    %v4917 = vadd.f32 %v4901, %v4916
    %v4918 = vtanh.pop %v4917
    %v4919 = vsub.f32 1.0, %v4915
    %v4920 = vmul.f32 %v4919, %v4918
    %v4921 = vmul.f32 %v4915, %v4583
    %v4922 = vadd.f32 %v4920, %v4921
    %v4923 = vld [vmem:[%s1283] sm:$0xff]
    %v4924 = vld [vmem:[%s1283 + $0x8] sm:$0xff]
    %v4925 = vld [vmem:[%s1283 + $0x10] sm:$0xff]
    %v4926 = vadd.f32 %v4923, %v4825
    %v4927 = vxor.u32 %v4926, 2147483648
    %v4928 = vmul.f32 %v4927, 1.442695
    %v4929 = vpow.pop %v4928
    %v4930 = vadd.f32 %v4929, 1.0
    %v4931 = vrcp.pop %v4930
    %v4932 = vmul.f32 1.0, %v4931
    %v4933 = vadd.f32 %v4924, %v4827
    %v4934 = vxor.u32 %v4933, 2147483648
    %v4935 = vmul.f32 %v4934, 1.442695
    %v4936 = vpow.pop %v4935
    %v4937 = vadd.f32 %v4936, 1.0
    %v4938 = vrcp.pop %v4937
    %v4939 = vmul.f32 1.0, %v4938
    %v4940 = vmul.f32 %v4932, %v4896
    %v4941 = vadd.f32 %v4925, %v4940
    %v4942 = vtanh.pop %v4941
    %v4943 = vsub.f32 1.0, %v4939
    %v4944 = vmul.f32 %v4943, %v4942
    %v4945 = vmul.f32 %v4939, %v4584
    %v4946 = vadd.f32 %v4944, %v4945
    %4947 = vst [vmem:[#allocation7] sm:$0xff] %v4922
    %4948 = vst [vmem:[#allocation8] sm:$0xff] %v4946
    %4949 = vst [vmem:[#allocation3] sm:$0xff] %v4922
    %4950 = vst [vmem:[%s1311] sm:$0xff] %v4946
    %v4951 = vld [vmem:[#allocation7] sm:$0xff]
    %v4952 = vld [vmem:[#allocation8] sm:$0xff]
    %4953 = vmatprep.subr.mxu0 %v4526
    %4954 = vmatpush1.msra.mxu0 %v4525
    %4955 = vmatprep.subr.mxu0 %v4523
    %4956 = vmatpush1.msra.mxu0 %v4522
    %4957 = vmatprep.subr.mxu0 %v4520
    %4958 = vmatpush1.msra.mxu0 %v4519
    %4959 = vmatprep.subr.mxu0 %v4517
    %4960 = vmatpush1.msra.mxu0 %v4516
    %4961 = vmatprep.subr.mxu0 %v4514
    %4962 = vmatpush1.msra.mxu0 %v4513
    %4963 = vmatprep.subr.mxu0 %v4511
    %4964 = vmatpush1.msra.mxu0 %v4510
    %4965 = vmatprep.subr.mxu0 %v4508
    %4966 = vmatpush1.msra.mxu0 %v4507
    %4967 = vmatprep.subr.mxu0 %v4505
    %4968 = vmatpush1.msra.mxu0 %v4504
    %4969 = vmatprep.subr.mxu0 %v4502
    %4970 = vmatpush1.msra.mxu0 %v4501
    %4971 = vmatprep.subr.mxu0 %v4499
    %4972 = vmatpush1.msra.mxu0 %v4498
    %4973 = vmatprep.subr.mxu0 %v4496
    %4974 = vmatpush1.msra.mxu0 %v4495
    %4975 = vmatprep.subr.mxu0 %v4493
    %4976 = vmatpush1.msra.mxu0 %v4492
    %4977 = vmatprep.subr.mxu0 %v4490
    %4978 = vmatpush1.msra.mxu0 %v4489
    %4979 = vmatprep.subr.mxu0 %v4487
    %4980 = vmatpush1.msra.mxu0 %v4486
    %4981 = vmatprep.subr.mxu0 %v4484
    %4982 = vmatpush1.msra.mxu0 %v4483
    %4983 = vmatprep.subr.mxu0 %v4481
    %4984 = vmatpush1.msra.mxu0 %v4480
    %4985 = vmatprep.subr.mxu0 0.0
    %4986 = vmatpush2.msra.mxu0 0.0
    %4987 = vmatprep.subr.mxu0 0.0
    %4988 = vmatpush2.msra.mxu0 0.0
    %4989 = vmatprep.subr.mxu0 0.0
    %4990 = vmatpush2.msra.mxu0 0.0
    %4991 = vmatprep.subr.mxu0 0.0
    %4992 = vmatpush2.msra.mxu0 0.0
    %4993 = vmatprep.subr.mxu0 0.0
    %4994 = vmatpush2.msra.mxu0 0.0
    %4995 = vmatprep.subr.mxu0 0.0
    %4996 = vmatpush2.msra.mxu0 0.0
    %4997 = vmatprep.subr.mxu0 0.0
    %4998 = vmatpush2.msra.mxu0 0.0
    %4999 = vmatprep.subr.mxu0 0.0
    %5000 = vmatpush2.msra.mxu0 0.0
    %5001 = vmatprep.subr.mxu0 0.0
    %5002 = vmatpush2.msra.mxu0 0.0
    %5003 = vmatprep.subr.mxu0 0.0
    %5004 = vmatpush2.msra.mxu0 0.0
    %5005 = vmatprep.subr.mxu0 0.0
    %5006 = vmatpush2.msra.mxu0 0.0
    %5007 = vmatprep.subr.mxu0 0.0
    %5008 = vmatpush2.msra.mxu0 0.0
    %5009 = vmatprep.subr.mxu0 0.0
    %5010 = vmatpush2.msra.mxu0 0.0
    %5011 = vmatprep.subr.mxu0 0.0
    %5012 = vmatpush2.msra.mxu0 0.0
    %5013 = vmatprep.subr.mxu0 0.0
    %5014 = vmatpush2.msra.mxu0 0.0
    %5015 = vmatprep.subr.mxu0 0.0
    %5016 = vmatpush2.msra.mxu0 0.0
    %5017 = vmatprep.mubr.f32.mxu0 0.0
    %5018 = vmatmul.mubr.f32.gmra.mxu0 %v4951
    %v5019 = vpop.f32.mrf.mxu0
    %v5020 = vadd.f32 %v4589, %v5019
    %v5021 = vpop.f32.mrf.mxu0
    %v5022 = vadd.f32 %v4593, %v5021
    %5023 = vdwg.mxu0
    %5024 = vmatprep.subr.mxu0 0.0
    %5025 = vmatpush1.msra.mxu0 %v4527
    %5026 = vmatprep.subr.mxu0 0.0
    %5027 = vmatpush1.msra.mxu0 %v4524
    %5028 = vmatprep.subr.mxu0 0.0
    %5029 = vmatpush1.msra.mxu0 %v4521
    %5030 = vmatprep.subr.mxu0 0.0
    %5031 = vmatpush1.msra.mxu0 %v4518
    %5032 = vmatprep.subr.mxu0 0.0
    %5033 = vmatpush1.msra.mxu0 %v4515
    %5034 = vmatprep.subr.mxu0 0.0
    %5035 = vmatpush1.msra.mxu0 %v4512
    %5036 = vmatprep.subr.mxu0 0.0
    %5037 = vmatpush1.msra.mxu0 %v4509
    %5038 = vmatprep.subr.mxu0 0.0
    %5039 = vmatpush1.msra.mxu0 %v4506
    %5040 = vmatprep.subr.mxu0 0.0
    %5041 = vmatpush1.msra.mxu0 %v4503
    %5042 = vmatprep.subr.mxu0 0.0
    %5043 = vmatpush1.msra.mxu0 %v4500
    %5044 = vmatprep.subr.mxu0 0.0
    %5045 = vmatpush1.msra.mxu0 %v4497
    %5046 = vmatprep.subr.mxu0 0.0
    %5047 = vmatpush1.msra.mxu0 %v4494
    %5048 = vmatprep.subr.mxu0 0.0
    %5049 = vmatpush1.msra.mxu0 %v4491
    %5050 = vmatprep.subr.mxu0 0.0
    %5051 = vmatpush1.msra.mxu0 %v4488
    %5052 = vmatprep.subr.mxu0 0.0
    %5053 = vmatpush1.msra.mxu0 %v4485
    %5054 = vmatprep.subr.mxu0 0.0
    %5055 = vmatpush1.msra.mxu0 %v4482
    %5056 = vmatprep.subr.mxu0 0.0
    %5057 = vmatpush2.msra.mxu0 0.0
    %5058 = vmatprep.subr.mxu0 0.0
    %5059 = vmatpush2.msra.mxu0 0.0
    %5060 = vmatprep.subr.mxu0 0.0
    %5061 = vmatpush2.msra.mxu0 0.0
    %5062 = vmatprep.subr.mxu0 0.0
    %5063 = vmatpush2.msra.mxu0 0.0
    %5064 = vmatprep.subr.mxu0 0.0
    %5065 = vmatpush2.msra.mxu0 0.0
    %5066 = vmatprep.subr.mxu0 0.0
    %5067 = vmatpush2.msra.mxu0 0.0
    %5068 = vmatprep.subr.mxu0 0.0
    %5069 = vmatpush2.msra.mxu0 0.0
    %5070 = vmatprep.subr.mxu0 0.0
    %5071 = vmatpush2.msra.mxu0 0.0
    %5072 = vmatprep.subr.mxu0 0.0
    %5073 = vmatpush2.msra.mxu0 0.0
    %5074 = vmatprep.subr.mxu0 0.0
    %5075 = vmatpush2.msra.mxu0 0.0
    %5076 = vmatprep.subr.mxu0 0.0
    %5077 = vmatpush2.msra.mxu0 0.0
    %5078 = vmatprep.subr.mxu0 0.0
    %5079 = vmatpush2.msra.mxu0 0.0
    %5080 = vmatprep.subr.mxu0 0.0
    %5081 = vmatpush2.msra.mxu0 0.0
    %5082 = vmatprep.subr.mxu0 0.0
    %5083 = vmatpush2.msra.mxu0 0.0
    %5084 = vmatprep.subr.mxu0 0.0
    %5085 = vmatpush2.msra.mxu0 0.0
    %5086 = vmatprep.subr.mxu0 0.0
    %5087 = vmatpush2.msra.mxu0 0.0
    %5088 = vmatprep.mubr.f32.mxu0 0.0
    %5089 = vmatmul.mubr.f32.gmra.mxu0 %v4951
    %v5090 = vpop.f32.mrf.mxu0
    %v5091 = vadd.f32 %v4597, %v5090
    %v5092 = vpop.f32.mrf.mxu0
    %5093 = vdwg.mxu0
    %5094 = vmatprep.subr.mxu0 %v4575
    %5095 = vmatpush1.msra.mxu0 %v4574
    %5096 = vmatprep.subr.mxu0 %v4572
    %5097 = vmatpush1.msra.mxu0 %v4571
    %5098 = vmatprep.subr.mxu0 %v4569
    %5099 = vmatpush1.msra.mxu0 %v4568
    %5100 = vmatprep.subr.mxu0 %v4566
    %5101 = vmatpush1.msra.mxu0 %v4565
    %5102 = vmatprep.subr.mxu0 %v4563
    %5103 = vmatpush1.msra.mxu0 %v4562
    %5104 = vmatprep.subr.mxu0 %v4560
    %5105 = vmatpush1.msra.mxu0 %v4559
    %5106 = vmatprep.subr.mxu0 %v4557
    %5107 = vmatpush1.msra.mxu0 %v4556
    %5108 = vmatprep.subr.mxu0 %v4554
    %5109 = vmatpush1.msra.mxu0 %v4553
    %5110 = vmatprep.subr.mxu0 %v4551
    %5111 = vmatpush1.msra.mxu0 %v4550
    %5112 = vmatprep.subr.mxu0 %v4548
    %5113 = vmatpush1.msra.mxu0 %v4547
    %5114 = vmatprep.subr.mxu0 %v4545
    %5115 = vmatpush1.msra.mxu0 %v4544
    %5116 = vmatprep.subr.mxu0 %v4542
    %5117 = vmatpush1.msra.mxu0 %v4541
    %5118 = vmatprep.subr.mxu0 %v4539
    %5119 = vmatpush1.msra.mxu0 %v4538
    %5120 = vmatprep.subr.mxu0 %v4536
    %5121 = vmatpush1.msra.mxu0 %v4535
    %5122 = vmatprep.subr.mxu0 %v4533
    %5123 = vmatpush1.msra.mxu0 %v4532
    %5124 = vmatprep.subr.mxu0 %v4530
    %5125 = vmatpush1.msra.mxu0 %v4529
    %5126 = vmatprep.subr.mxu0 0.0
    %5127 = vmatpush2.msra.mxu0 0.0
    %5128 = vmatprep.subr.mxu0 0.0
    %5129 = vmatpush2.msra.mxu0 0.0
    %5130 = vmatprep.subr.mxu0 0.0
    %5131 = vmatpush2.msra.mxu0 0.0
    %5132 = vmatprep.subr.mxu0 0.0
    %5133 = vmatpush2.msra.mxu0 0.0
    %5134 = vmatprep.subr.mxu0 0.0
    %5135 = vmatpush2.msra.mxu0 0.0
    %5136 = vmatprep.subr.mxu0 0.0
    %5137 = vmatpush2.msra.mxu0 0.0
    %5138 = vmatprep.subr.mxu0 0.0
    %5139 = vmatpush2.msra.mxu0 0.0
    %5140 = vmatprep.subr.mxu0 0.0
    %5141 = vmatpush2.msra.mxu0 0.0
    %5142 = vmatprep.subr.mxu0 0.0
    %5143 = vmatpush2.msra.mxu0 0.0
    %5144 = vmatprep.subr.mxu0 0.0
    %5145 = vmatpush2.msra.mxu0 0.0
    %5146 = vmatprep.subr.mxu0 0.0
    %5147 = vmatpush2.msra.mxu0 0.0
    %5148 = vmatprep.subr.mxu0 0.0
    %5149 = vmatpush2.msra.mxu0 0.0
    %5150 = vmatprep.subr.mxu0 0.0
    %5151 = vmatpush2.msra.mxu0 0.0
    %5152 = vmatprep.subr.mxu0 0.0
    %5153 = vmatpush2.msra.mxu0 0.0
    %5154 = vmatprep.subr.mxu0 0.0
    %5155 = vmatpush2.msra.mxu0 0.0
    %5156 = vmatprep.subr.mxu0 0.0
    %5157 = vmatpush2.msra.mxu0 0.0
    %5158 = vmatprep.mubr.f32.mxu0 0.0
    %5159 = vmatmul.mubr.f32.gmra.mxu0 %v4952
    %v5160 = vpop.f32.mrf.mxu0
    %v5161 = vadd.f32 %v4746, %v5160
    %v5162 = vpop.f32.mrf.mxu0
    %v5163 = vadd.f32 %v4750, %v5162
    %5164 = vdwg.mxu0
    %5165 = vmatprep.subr.mxu0 0.0
    %5166 = vmatpush1.msra.mxu0 %v4576
    %5167 = vmatprep.subr.mxu0 0.0
    %5168 = vmatpush1.msra.mxu0 %v4573
    %5169 = vmatprep.subr.mxu0 0.0
    %5170 = vmatpush1.msra.mxu0 %v4570
    %5171 = vmatprep.subr.mxu0 0.0
    %5172 = vmatpush1.msra.mxu0 %v4567
    %5173 = vmatprep.subr.mxu0 0.0
    %5174 = vmatpush1.msra.mxu0 %v4564
    %5175 = vmatprep.subr.mxu0 0.0
    %5176 = vmatpush1.msra.mxu0 %v4561
    %5177 = vmatprep.subr.mxu0 0.0
    %5178 = vmatpush1.msra.mxu0 %v4558
    %5179 = vmatprep.subr.mxu0 0.0
    %5180 = vmatpush1.msra.mxu0 %v4555
    %5181 = vmatprep.subr.mxu0 0.0
    %5182 = vmatpush1.msra.mxu0 %v4552
    %5183 = vmatprep.subr.mxu0 0.0
    %5184 = vmatpush1.msra.mxu0 %v4549
    %5185 = vmatprep.subr.mxu0 0.0
    %5186 = vmatpush1.msra.mxu0 %v4546
    %5187 = vmatprep.subr.mxu0 0.0
    %5188 = vmatpush1.msra.mxu0 %v4543
    %5189 = vmatprep.subr.mxu0 0.0
    %5190 = vmatpush1.msra.mxu0 %v4540
    %5191 = vmatprep.subr.mxu0 0.0
    %5192 = vmatpush1.msra.mxu0 %v4537
    %5193 = vmatprep.subr.mxu0 0.0
    %5194 = vmatpush1.msra.mxu0 %v4534
    %5195 = vmatprep.subr.mxu0 0.0
    %5196 = vmatpush1.msra.mxu0 %v4531
    %5197 = vmatprep.subr.mxu0 0.0
    %5198 = vmatpush2.msra.mxu0 0.0
    %5199 = vmatprep.subr.mxu0 0.0
    %5200 = vmatpush2.msra.mxu0 0.0
    %5201 = vmatprep.subr.mxu0 0.0
    %5202 = vmatpush2.msra.mxu0 0.0
    %5203 = vmatprep.subr.mxu0 0.0
    %5204 = vmatpush2.msra.mxu0 0.0
    %5205 = vmatprep.subr.mxu0 0.0
    %5206 = vmatpush2.msra.mxu0 0.0
    %5207 = vmatprep.subr.mxu0 0.0
    %5208 = vmatpush2.msra.mxu0 0.0
    %5209 = vmatprep.subr.mxu0 0.0
    %5210 = vmatpush2.msra.mxu0 0.0
    %5211 = vmatprep.subr.mxu0 0.0
    %5212 = vmatpush2.msra.mxu0 0.0
    %5213 = vmatprep.subr.mxu0 0.0
    %5214 = vmatpush2.msra.mxu0 0.0
    %5215 = vmatprep.subr.mxu0 0.0
    %5216 = vmatpush2.msra.mxu0 0.0
    %5217 = vmatprep.subr.mxu0 0.0
    %5218 = vmatpush2.msra.mxu0 0.0
    %5219 = vmatprep.subr.mxu0 0.0
    %5220 = vmatpush2.msra.mxu0 0.0
    %5221 = vmatprep.subr.mxu0 0.0
    %5222 = vmatpush2.msra.mxu0 0.0
    %5223 = vmatprep.subr.mxu0 0.0
    %5224 = vmatpush2.msra.mxu0 0.0
    %5225 = vmatprep.subr.mxu0 0.0
    %5226 = vmatpush2.msra.mxu0 0.0
    %5227 = vmatprep.subr.mxu0 0.0
    %5228 = vmatpush2.msra.mxu0 0.0
    %5229 = vmatprep.mubr.f32.mxu0 0.0
    %5230 = vmatmul.mubr.f32.gmra.mxu0 %v4952
    %v5231 = vpop.f32.mrf.mxu0
    %v5232 = vadd.f32 %v4754, %v5231
    %v5233 = vpop.f32.mrf.mxu0
    %5234 = vdwg.mxu0
    %v5235 = vld [vmem:[%s1599] sm:$0xff]
    %v5236 = vld [vmem:[%s1599 + $0x8] sm:$0xff]
    %v5237 = vld [vmem:[%s1599 + $0x10] sm:$0xff]
    %v5238 = vadd.f32 %v5235, %v5020
    %v5239 = vxor.u32 %v5238, 2147483648
    %v5240 = vmul.f32 %v5239, 1.442695
    %v5241 = vpow.pop %v5240
    %v5242 = vadd.f32 %v5241, 1.0
    %v5243 = vrcp.pop %v5242
    %v5244 = vmul.f32 1.0, %v5243
    %v5245 = vadd.f32 %v5236, %v5022
    %v5246 = vxor.u32 %v5245, 2147483648
    %v5247 = vmul.f32 %v5246, 1.442695
    %v5248 = vpow.pop %v5247
    %v5249 = vadd.f32 %v5248, 1.0
    %v5250 = vrcp.pop %v5249
    %v5251 = vmul.f32 1.0, %v5250
    %v5252 = vmul.f32 %v5244, %v5091
    %v5253 = vadd.f32 %v5237, %v5252
    %v5254 = vtanh.pop %v5253
    %v5255 = vsub.f32 1.0, %v5251
    %v5256 = vmul.f32 %v5255, %v5254
    %v5257 = vmul.f32 %v5251, %v4951
    %v5258 = vadd.f32 %v5256, %v5257
    %v5259 = vld [vmem:[%s1626] sm:$0xff]
    %v5260 = vld [vmem:[%s1626 + $0x8] sm:$0xff]
    %v5261 = vld [vmem:[%s1626 + $0x10] sm:$0xff]
    %v5262 = vadd.f32 %v5259, %v5161
    %v5263 = vxor.u32 %v5262, 2147483648
    %v5264 = vmul.f32 %v5263, 1.442695
    %v5265 = vpow.pop %v5264
    %v5266 = vadd.f32 %v5265, 1.0
    %v5267 = vrcp.pop %v5266
    %v5268 = vmul.f32 1.0, %v5267
    %v5269 = vadd.f32 %v5260, %v5163
    %v5270 = vxor.u32 %v5269, 2147483648
    %v5271 = vmul.f32 %v5270, 1.442695
    %v5272 = vpow.pop %v5271
    %v5273 = vadd.f32 %v5272, 1.0
    %v5274 = vrcp.pop %v5273
    %v5275 = vmul.f32 1.0, %v5274
    %v5276 = vmul.f32 %v5268, %v5232
    %v5277 = vadd.f32 %v5261, %v5276
    %v5278 = vtanh.pop %v5277
    %v5279 = vsub.f32 1.0, %v5275
    %v5280 = vmul.f32 %v5279, %v5278
    %v5281 = vmul.f32 %v5275, %v4952
    %v5282 = vadd.f32 %v5280, %v5281
    %5283 = vst [vmem:[#allocation7] sm:$0xff] %v5258
    %5284 = vst [vmem:[#allocation8] sm:$0xff] %v5282
    %5285 = vst [vmem:[%s1653] sm:$0xff] %v5258
    %5286 = vst [vmem:[%s1655] sm:$0xff] %v5282
    %v5287 = vld [vmem:[#allocation7] sm:$0xff]
    %v5288 = vld [vmem:[#allocation8] sm:$0xff]
    %5289 = vmatprep.subr.mxu0 %v4526
    %5290 = vmatpush1.msra.mxu0 %v4525
    %5291 = vmatprep.subr.mxu0 %v4523
    %5292 = vmatpush1.msra.mxu0 %v4522
    %5293 = vmatprep.subr.mxu0 %v4520
    %5294 = vmatpush1.msra.mxu0 %v4519
    %5295 = vmatprep.subr.mxu0 %v4517
    %5296 = vmatpush1.msra.mxu0 %v4516
    %5297 = vmatprep.subr.mxu0 %v4514
    %5298 = vmatpush1.msra.mxu0 %v4513
    %5299 = vmatprep.subr.mxu0 %v4511
    %5300 = vmatpush1.msra.mxu0 %v4510
    %5301 = vmatprep.subr.mxu0 %v4508
    %5302 = vmatpush1.msra.mxu0 %v4507
    %5303 = vmatprep.subr.mxu0 %v4505
    %5304 = vmatpush1.msra.mxu0 %v4504
    %5305 = vmatprep.subr.mxu0 %v4502
    %5306 = vmatpush1.msra.mxu0 %v4501
    %5307 = vmatprep.subr.mxu0 %v4499
    %5308 = vmatpush1.msra.mxu0 %v4498
    %5309 = vmatprep.subr.mxu0 %v4496
    %5310 = vmatpush1.msra.mxu0 %v4495
    %5311 = vmatprep.subr.mxu0 %v4493
    %5312 = vmatpush1.msra.mxu0 %v4492
    %5313 = vmatprep.subr.mxu0 %v4490
    %5314 = vmatpush1.msra.mxu0 %v4489
    %5315 = vmatprep.subr.mxu0 %v4487
    %5316 = vmatpush1.msra.mxu0 %v4486
    %5317 = vmatprep.subr.mxu0 %v4484
    %5318 = vmatpush1.msra.mxu0 %v4483
    %5319 = vmatprep.subr.mxu0 %v4481
    %5320 = vmatpush1.msra.mxu0 %v4480
    %5321 = vmatprep.subr.mxu0 0.0
    %5322 = vmatpush2.msra.mxu0 0.0
    %5323 = vmatprep.subr.mxu0 0.0
    %5324 = vmatpush2.msra.mxu0 0.0
    %5325 = vmatprep.subr.mxu0 0.0
    %5326 = vmatpush2.msra.mxu0 0.0
    %5327 = vmatprep.subr.mxu0 0.0
    %5328 = vmatpush2.msra.mxu0 0.0
    %5329 = vmatprep.subr.mxu0 0.0
    %5330 = vmatpush2.msra.mxu0 0.0
    %5331 = vmatprep.subr.mxu0 0.0
    %5332 = vmatpush2.msra.mxu0 0.0
    %5333 = vmatprep.subr.mxu0 0.0
    %5334 = vmatpush2.msra.mxu0 0.0
    %5335 = vmatprep.subr.mxu0 0.0
    %5336 = vmatpush2.msra.mxu0 0.0
    %5337 = vmatprep.subr.mxu0 0.0
    %5338 = vmatpush2.msra.mxu0 0.0
    %5339 = vmatprep.subr.mxu0 0.0
    %5340 = vmatpush2.msra.mxu0 0.0
    %5341 = vmatprep.subr.mxu0 0.0
    %5342 = vmatpush2.msra.mxu0 0.0
    %5343 = vmatprep.subr.mxu0 0.0
    %5344 = vmatpush2.msra.mxu0 0.0
    %5345 = vmatprep.subr.mxu0 0.0
    %5346 = vmatpush2.msra.mxu0 0.0
    %5347 = vmatprep.subr.mxu0 0.0
    %5348 = vmatpush2.msra.mxu0 0.0
    %5349 = vmatprep.subr.mxu0 0.0
    %5350 = vmatpush2.msra.mxu0 0.0
    %5351 = vmatprep.subr.mxu0 0.0
    %5352 = vmatpush2.msra.mxu0 0.0
    %5353 = vmatprep.mubr.f32.mxu0 0.0
    %5354 = vmatmul.mubr.f32.gmra.mxu0 %v5287
    %v5355 = vpop.f32.mrf.mxu0
    %v5356 = vadd.f32 %v4589, %v5355
    %v5357 = vpop.f32.mrf.mxu0
    %v5358 = vadd.f32 %v4593, %v5357
    %5359 = vdwg.mxu0
    %5360 = vmatprep.subr.mxu0 0.0
    %5361 = vmatpush1.msra.mxu0 %v4527
    %5362 = vmatprep.subr.mxu0 0.0
    %5363 = vmatpush1.msra.mxu0 %v4524
    %5364 = vmatprep.subr.mxu0 0.0
    %5365 = vmatpush1.msra.mxu0 %v4521
    %5366 = vmatprep.subr.mxu0 0.0
    %5367 = vmatpush1.msra.mxu0 %v4518
    %5368 = vmatprep.subr.mxu0 0.0
    %5369 = vmatpush1.msra.mxu0 %v4515
    %5370 = vmatprep.subr.mxu0 0.0
    %5371 = vmatpush1.msra.mxu0 %v4512
    %5372 = vmatprep.subr.mxu0 0.0
    %5373 = vmatpush1.msra.mxu0 %v4509
    %5374 = vmatprep.subr.mxu0 0.0
    %5375 = vmatpush1.msra.mxu0 %v4506
    %5376 = vmatprep.subr.mxu0 0.0
    %5377 = vmatpush1.msra.mxu0 %v4503
    %5378 = vmatprep.subr.mxu0 0.0
    %5379 = vmatpush1.msra.mxu0 %v4500
    %5380 = vmatprep.subr.mxu0 0.0
    %5381 = vmatpush1.msra.mxu0 %v4497
    %5382 = vmatprep.subr.mxu0 0.0
    %5383 = vmatpush1.msra.mxu0 %v4494
    %5384 = vmatprep.subr.mxu0 0.0
    %5385 = vmatpush1.msra.mxu0 %v4491
    %5386 = vmatprep.subr.mxu0 0.0
    %5387 = vmatpush1.msra.mxu0 %v4488
    %5388 = vmatprep.subr.mxu0 0.0
    %5389 = vmatpush1.msra.mxu0 %v4485
    %5390 = vmatprep.subr.mxu0 0.0
    %5391 = vmatpush1.msra.mxu0 %v4482
    %5392 = vmatprep.subr.mxu0 0.0
    %5393 = vmatpush2.msra.mxu0 0.0
    %5394 = vmatprep.subr.mxu0 0.0
    %5395 = vmatpush2.msra.mxu0 0.0
    %5396 = vmatprep.subr.mxu0 0.0
    %5397 = vmatpush2.msra.mxu0 0.0
    %5398 = vmatprep.subr.mxu0 0.0
    %5399 = vmatpush2.msra.mxu0 0.0
    %5400 = vmatprep.subr.mxu0 0.0
    %5401 = vmatpush2.msra.mxu0 0.0
    %5402 = vmatprep.subr.mxu0 0.0
    %5403 = vmatpush2.msra.mxu0 0.0
    %5404 = vmatprep.subr.mxu0 0.0
    %5405 = vmatpush2.msra.mxu0 0.0
    %5406 = vmatprep.subr.mxu0 0.0
    %5407 = vmatpush2.msra.mxu0 0.0
    %5408 = vmatprep.subr.mxu0 0.0
    %5409 = vmatpush2.msra.mxu0 0.0
    %5410 = vmatprep.subr.mxu0 0.0
    %5411 = vmatpush2.msra.mxu0 0.0
    %5412 = vmatprep.subr.mxu0 0.0
    %5413 = vmatpush2.msra.mxu0 0.0
    %5414 = vmatprep.subr.mxu0 0.0
    %5415 = vmatpush2.msra.mxu0 0.0
    %5416 = vmatprep.subr.mxu0 0.0
    %5417 = vmatpush2.msra.mxu0 0.0
    %5418 = vmatprep.subr.mxu0 0.0
    %5419 = vmatpush2.msra.mxu0 0.0
    %5420 = vmatprep.subr.mxu0 0.0
    %5421 = vmatpush2.msra.mxu0 0.0
    %5422 = vmatprep.subr.mxu0 0.0
    %5423 = vmatpush2.msra.mxu0 0.0
    %5424 = vmatprep.mubr.f32.mxu0 0.0
    %5425 = vmatmul.mubr.f32.gmra.mxu0 %v5287
    %v5426 = vpop.f32.mrf.mxu0
    %v5427 = vadd.f32 %v4597, %v5426
    %v5428 = vpop.f32.mrf.mxu0
    %5429 = vdwg.mxu0
    %5430 = vmatprep.subr.mxu0 %v4575
    %5431 = vmatpush1.msra.mxu0 %v4574
    %5432 = vmatprep.subr.mxu0 %v4572
    %5433 = vmatpush1.msra.mxu0 %v4571
    %5434 = vmatprep.subr.mxu0 %v4569
    %5435 = vmatpush1.msra.mxu0 %v4568
    %5436 = vmatprep.subr.mxu0 %v4566
    %5437 = vmatpush1.msra.mxu0 %v4565
    %5438 = vmatprep.subr.mxu0 %v4563
    %5439 = vmatpush1.msra.mxu0 %v4562
    %5440 = vmatprep.subr.mxu0 %v4560
    %5441 = vmatpush1.msra.mxu0 %v4559
    %5442 = vmatprep.subr.mxu0 %v4557
    %5443 = vmatpush1.msra.mxu0 %v4556
    %5444 = vmatprep.subr.mxu0 %v4554
    %5445 = vmatpush1.msra.mxu0 %v4553
    %5446 = vmatprep.subr.mxu0 %v4551
    %5447 = vmatpush1.msra.mxu0 %v4550
    %5448 = vmatprep.subr.mxu0 %v4548
    %5449 = vmatpush1.msra.mxu0 %v4547
    %5450 = vmatprep.subr.mxu0 %v4545
    %5451 = vmatpush1.msra.mxu0 %v4544
    %5452 = vmatprep.subr.mxu0 %v4542
    %5453 = vmatpush1.msra.mxu0 %v4541
    %5454 = vmatprep.subr.mxu0 %v4539
    %5455 = vmatpush1.msra.mxu0 %v4538
    %5456 = vmatprep.subr.mxu0 %v4536
    %5457 = vmatpush1.msra.mxu0 %v4535
    %5458 = vmatprep.subr.mxu0 %v4533
    %5459 = vmatpush1.msra.mxu0 %v4532
    %5460 = vmatprep.subr.mxu0 %v4530
    %5461 = vmatpush1.msra.mxu0 %v4529
    %5462 = vmatprep.subr.mxu0 0.0
    %5463 = vmatpush2.msra.mxu0 0.0
    %5464 = vmatprep.subr.mxu0 0.0
    %5465 = vmatpush2.msra.mxu0 0.0
    %5466 = vmatprep.subr.mxu0 0.0
    %5467 = vmatpush2.msra.mxu0 0.0
    %5468 = vmatprep.subr.mxu0 0.0
    %5469 = vmatpush2.msra.mxu0 0.0
    %5470 = vmatprep.subr.mxu0 0.0
    %5471 = vmatpush2.msra.mxu0 0.0
    %5472 = vmatprep.subr.mxu0 0.0
    %5473 = vmatpush2.msra.mxu0 0.0
    %5474 = vmatprep.subr.mxu0 0.0
    %5475 = vmatpush2.msra.mxu0 0.0
    %5476 = vmatprep.subr.mxu0 0.0
    %5477 = vmatpush2.msra.mxu0 0.0
    %5478 = vmatprep.subr.mxu0 0.0
    %5479 = vmatpush2.msra.mxu0 0.0
    %5480 = vmatprep.subr.mxu0 0.0
    %5481 = vmatpush2.msra.mxu0 0.0
    %5482 = vmatprep.subr.mxu0 0.0
    %5483 = vmatpush2.msra.mxu0 0.0
    %5484 = vmatprep.subr.mxu0 0.0
    %5485 = vmatpush2.msra.mxu0 0.0
    %5486 = vmatprep.subr.mxu0 0.0
    %5487 = vmatpush2.msra.mxu0 0.0
    %5488 = vmatprep.subr.mxu0 0.0
    %5489 = vmatpush2.msra.mxu0 0.0
    %5490 = vmatprep.subr.mxu0 0.0
    %5491 = vmatpush2.msra.mxu0 0.0
    %5492 = vmatprep.subr.mxu0 0.0
    %5493 = vmatpush2.msra.mxu0 0.0
    %5494 = vmatprep.mubr.f32.mxu0 0.0
    %5495 = vmatmul.mubr.f32.gmra.mxu0 %v5288
    %v5496 = vpop.f32.mrf.mxu0
    %v5497 = vadd.f32 %v4746, %v5496
    %v5498 = vpop.f32.mrf.mxu0
    %v5499 = vadd.f32 %v4750, %v5498
    %5500 = vdwg.mxu0
    %5501 = vmatprep.subr.mxu0 0.0
    %5502 = vmatpush1.msra.mxu0 %v4576
    %5503 = vmatprep.subr.mxu0 0.0
    %5504 = vmatpush1.msra.mxu0 %v4573
    %5505 = vmatprep.subr.mxu0 0.0
    %5506 = vmatpush1.msra.mxu0 %v4570
    %5507 = vmatprep.subr.mxu0 0.0
    %5508 = vmatpush1.msra.mxu0 %v4567
    %5509 = vmatprep.subr.mxu0 0.0
    %5510 = vmatpush1.msra.mxu0 %v4564
    %5511 = vmatprep.subr.mxu0 0.0
    %5512 = vmatpush1.msra.mxu0 %v4561
    %5513 = vmatprep.subr.mxu0 0.0
    %5514 = vmatpush1.msra.mxu0 %v4558
    %5515 = vmatprep.subr.mxu0 0.0
    %5516 = vmatpush1.msra.mxu0 %v4555
    %5517 = vmatprep.subr.mxu0 0.0
    %5518 = vmatpush1.msra.mxu0 %v4552
    %5519 = vmatprep.subr.mxu0 0.0
    %5520 = vmatpush1.msra.mxu0 %v4549
    %5521 = vmatprep.subr.mxu0 0.0
    %5522 = vmatpush1.msra.mxu0 %v4546
    %5523 = vmatprep.subr.mxu0 0.0
    %5524 = vmatpush1.msra.mxu0 %v4543
    %5525 = vmatprep.subr.mxu0 0.0
    %5526 = vmatpush1.msra.mxu0 %v4540
    %5527 = vmatprep.subr.mxu0 0.0
    %5528 = vmatpush1.msra.mxu0 %v4537
    %5529 = vmatprep.subr.mxu0 0.0
    %5530 = vmatpush1.msra.mxu0 %v4534
    %5531 = vmatprep.subr.mxu0 0.0
    %5532 = vmatpush1.msra.mxu0 %v4531
    %5533 = vmatprep.subr.mxu0 0.0
    %5534 = vmatpush2.msra.mxu0 0.0
    %5535 = vmatprep.subr.mxu0 0.0
    %5536 = vmatpush2.msra.mxu0 0.0
    %5537 = vmatprep.subr.mxu0 0.0
    %5538 = vmatpush2.msra.mxu0 0.0
    %5539 = vmatprep.subr.mxu0 0.0
    %5540 = vmatpush2.msra.mxu0 0.0
    %5541 = vmatprep.subr.mxu0 0.0
    %5542 = vmatpush2.msra.mxu0 0.0
    %5543 = vmatprep.subr.mxu0 0.0
    %5544 = vmatpush2.msra.mxu0 0.0
    %5545 = vmatprep.subr.mxu0 0.0
    %5546 = vmatpush2.msra.mxu0 0.0
    %5547 = vmatprep.subr.mxu0 0.0
    %5548 = vmatpush2.msra.mxu0 0.0
    %5549 = vmatprep.subr.mxu0 0.0
    %5550 = vmatpush2.msra.mxu0 0.0
    %5551 = vmatprep.subr.mxu0 0.0
    %5552 = vmatpush2.msra.mxu0 0.0
    %5553 = vmatprep.subr.mxu0 0.0
    %5554 = vmatpush2.msra.mxu0 0.0
    %5555 = vmatprep.subr.mxu0 0.0
    %5556 = vmatpush2.msra.mxu0 0.0
    %5557 = vmatprep.subr.mxu0 0.0
    %5558 = vmatpush2.msra.mxu0 0.0
    %5559 = vmatprep.subr.mxu0 0.0
    %5560 = vmatpush2.msra.mxu0 0.0
    %5561 = vmatprep.subr.mxu0 0.0
    %5562 = vmatpush2.msra.mxu0 0.0
    %5563 = vmatprep.subr.mxu0 0.0
    %5564 = vmatpush2.msra.mxu0 0.0
    %5565 = vmatprep.mubr.f32.mxu0 0.0
    %5566 = vmatmul.mubr.f32.gmra.mxu0 %v5288
    %v5567 = vpop.f32.mrf.mxu0
    %v5568 = vadd.f32 %v4754, %v5567
    %v5569 = vpop.f32.mrf.mxu0
    %5570 = vdwg.mxu0
    %v5571 = vld [vmem:[%s1943] sm:$0xff]
    %v5572 = vld [vmem:[%s1943 + $0x8] sm:$0xff]
    %v5573 = vld [vmem:[%s1943 + $0x10] sm:$0xff]
    %v5574 = vadd.f32 %v5571, %v5356
    %v5575 = vxor.u32 %v5574, 2147483648
    %v5576 = vmul.f32 %v5575, 1.442695
    %v5577 = vpow.pop %v5576
    %v5578 = vadd.f32 %v5577, 1.0
    %v5579 = vrcp.pop %v5578
    %v5580 = vmul.f32 1.0, %v5579
    %v5581 = vadd.f32 %v5572, %v5358
    %v5582 = vxor.u32 %v5581, 2147483648
    %v5583 = vmul.f32 %v5582, 1.442695
    %v5584 = vpow.pop %v5583
    %v5585 = vadd.f32 %v5584, 1.0
    %v5586 = vrcp.pop %v5585
    %v5587 = vmul.f32 1.0, %v5586
    %v5588 = vmul.f32 %v5580, %v5427
    %v5589 = vadd.f32 %v5573, %v5588
    %v5590 = vtanh.pop %v5589
    %v5591 = vsub.f32 1.0, %v5587
    %v5592 = vmul.f32 %v5591, %v5590
    %v5593 = vmul.f32 %v5587, %v5287
    %v5594 = vadd.f32 %v5592, %v5593
    %v5595 = vld [vmem:[%s1970] sm:$0xff]
    %v5596 = vld [vmem:[%s1970 + $0x8] sm:$0xff]
    %v5597 = vld [vmem:[%s1970 + $0x10] sm:$0xff]
    %v5598 = vadd.f32 %v5595, %v5497
    %v5599 = vxor.u32 %v5598, 2147483648
    %v5600 = vmul.f32 %v5599, 1.442695
    %v5601 = vpow.pop %v5600
    %v5602 = vadd.f32 %v5601, 1.0
    %v5603 = vrcp.pop %v5602
    %v5604 = vmul.f32 1.0, %v5603
    %v5605 = vadd.f32 %v5596, %v5499
    %v5606 = vxor.u32 %v5605, 2147483648
    %v5607 = vmul.f32 %v5606, 1.442695
    %v5608 = vpow.pop %v5607
    %v5609 = vadd.f32 %v5608, 1.0
    %v5610 = vrcp.pop %v5609
    %v5611 = vmul.f32 1.0, %v5610
    %v5612 = vmul.f32 %v5604, %v5568
    %v5613 = vadd.f32 %v5597, %v5612
    %v5614 = vtanh.pop %v5613
    %v5615 = vsub.f32 1.0, %v5611
    %v5616 = vmul.f32 %v5615, %v5614
    %v5617 = vmul.f32 %v5611, %v5288
    %v5618 = vadd.f32 %v5616, %v5617
    %5619 = vst [vmem:[#allocation7] sm:$0xff] %v5594
    %5620 = vst [vmem:[#allocation8] sm:$0xff] %v5618
    %5621 = vst [vmem:[%s1997] sm:$0xff] %v5594
    %5622 = vst [vmem:[%s1999] sm:$0xff] %v5618
    %v5623 = vld [vmem:[#allocation7] sm:$0xff]
    %v5624 = vld [vmem:[#allocation8] sm:$0xff]
    %5625 = vmatprep.subr.mxu0 %v4526
    %5626 = vmatpush1.msra.mxu0 %v4525
    %5627 = vmatprep.subr.mxu0 %v4523
    %5628 = vmatpush1.msra.mxu0 %v4522
    %5629 = vmatprep.subr.mxu0 %v4520
    %5630 = vmatpush1.msra.mxu0 %v4519
    %5631 = vmatprep.subr.mxu0 %v4517
    %5632 = vmatpush1.msra.mxu0 %v4516
    %5633 = vmatprep.subr.mxu0 %v4514
    %5634 = vmatpush1.msra.mxu0 %v4513
    %5635 = vmatprep.subr.mxu0 %v4511
    %5636 = vmatpush1.msra.mxu0 %v4510
    %5637 = vmatprep.subr.mxu0 %v4508
    %5638 = vmatpush1.msra.mxu0 %v4507
    %5639 = vmatprep.subr.mxu0 %v4505
    %5640 = vmatpush1.msra.mxu0 %v4504
    %5641 = vmatprep.subr.mxu0 %v4502
    %5642 = vmatpush1.msra.mxu0 %v4501
    %5643 = vmatprep.subr.mxu0 %v4499
    %5644 = vmatpush1.msra.mxu0 %v4498
    %5645 = vmatprep.subr.mxu0 %v4496
    %5646 = vmatpush1.msra.mxu0 %v4495
    %5647 = vmatprep.subr.mxu0 %v4493
    %5648 = vmatpush1.msra.mxu0 %v4492
    %5649 = vmatprep.subr.mxu0 %v4490
    %5650 = vmatpush1.msra.mxu0 %v4489
    %5651 = vmatprep.subr.mxu0 %v4487
    %5652 = vmatpush1.msra.mxu0 %v4486
    %5653 = vmatprep.subr.mxu0 %v4484
    %5654 = vmatpush1.msra.mxu0 %v4483
    %5655 = vmatprep.subr.mxu0 %v4481
    %5656 = vmatpush1.msra.mxu0 %v4480
    %5657 = vmatprep.subr.mxu0 0.0
    %5658 = vmatpush2.msra.mxu0 0.0
    %5659 = vmatprep.subr.mxu0 0.0
    %5660 = vmatpush2.msra.mxu0 0.0
    %5661 = vmatprep.subr.mxu0 0.0
    %5662 = vmatpush2.msra.mxu0 0.0
    %5663 = vmatprep.subr.mxu0 0.0
    %5664 = vmatpush2.msra.mxu0 0.0
    %5665 = vmatprep.subr.mxu0 0.0
    %5666 = vmatpush2.msra.mxu0 0.0
    %5667 = vmatprep.subr.mxu0 0.0
    %5668 = vmatpush2.msra.mxu0 0.0
    %5669 = vmatprep.subr.mxu0 0.0
    %5670 = vmatpush2.msra.mxu0 0.0
    %5671 = vmatprep.subr.mxu0 0.0
    %5672 = vmatpush2.msra.mxu0 0.0
    %5673 = vmatprep.subr.mxu0 0.0
    %5674 = vmatpush2.msra.mxu0 0.0
    %5675 = vmatprep.subr.mxu0 0.0
    %5676 = vmatpush2.msra.mxu0 0.0
    %5677 = vmatprep.subr.mxu0 0.0
    %5678 = vmatpush2.msra.mxu0 0.0
    %5679 = vmatprep.subr.mxu0 0.0
    %5680 = vmatpush2.msra.mxu0 0.0
    %5681 = vmatprep.subr.mxu0 0.0
    %5682 = vmatpush2.msra.mxu0 0.0
    %5683 = vmatprep.subr.mxu0 0.0
    %5684 = vmatpush2.msra.mxu0 0.0
    %5685 = vmatprep.subr.mxu0 0.0
    %5686 = vmatpush2.msra.mxu0 0.0
    %5687 = vmatprep.subr.mxu0 0.0
    %5688 = vmatpush2.msra.mxu0 0.0
    %5689 = vmatprep.mubr.f32.mxu0 0.0
    %5690 = vmatmul.mubr.f32.gmra.mxu0 %v5623
    %v5691 = vpop.f32.mrf.mxu0
    %v5692 = vadd.f32 %v4589, %v5691
    %v5693 = vpop.f32.mrf.mxu0
    %v5694 = vadd.f32 %v4593, %v5693
    %5695 = vdwg.mxu0
    %5696 = vmatprep.subr.mxu0 0.0
    %5697 = vmatpush1.msra.mxu0 %v4527
    %5698 = vmatprep.subr.mxu0 0.0
    %5699 = vmatpush1.msra.mxu0 %v4524
    %5700 = vmatprep.subr.mxu0 0.0
    %5701 = vmatpush1.msra.mxu0 %v4521
    %5702 = vmatprep.subr.mxu0 0.0
    %5703 = vmatpush1.msra.mxu0 %v4518
    %5704 = vmatprep.subr.mxu0 0.0
    %5705 = vmatpush1.msra.mxu0 %v4515
    %5706 = vmatprep.subr.mxu0 0.0
    %5707 = vmatpush1.msra.mxu0 %v4512
    %5708 = vmatprep.subr.mxu0 0.0
    %5709 = vmatpush1.msra.mxu0 %v4509
    %5710 = vmatprep.subr.mxu0 0.0
    %5711 = vmatpush1.msra.mxu0 %v4506
    %5712 = vmatprep.subr.mxu0 0.0
    %5713 = vmatpush1.msra.mxu0 %v4503
    %5714 = vmatprep.subr.mxu0 0.0
    %5715 = vmatpush1.msra.mxu0 %v4500
    %5716 = vmatprep.subr.mxu0 0.0
    %5717 = vmatpush1.msra.mxu0 %v4497
    %5718 = vmatprep.subr.mxu0 0.0
    %5719 = vmatpush1.msra.mxu0 %v4494
    %5720 = vmatprep.subr.mxu0 0.0
    %5721 = vmatpush1.msra.mxu0 %v4491
    %5722 = vmatprep.subr.mxu0 0.0
    %5723 = vmatpush1.msra.mxu0 %v4488
    %5724 = vmatprep.subr.mxu0 0.0
    %5725 = vmatpush1.msra.mxu0 %v4485
    %5726 = vmatprep.subr.mxu0 0.0
    %5727 = vmatpush1.msra.mxu0 %v4482
    %5728 = vmatprep.subr.mxu0 0.0
    %5729 = vmatpush2.msra.mxu0 0.0
    %5730 = vmatprep.subr.mxu0 0.0
    %5731 = vmatpush2.msra.mxu0 0.0
    %5732 = vmatprep.subr.mxu0 0.0
    %5733 = vmatpush2.msra.mxu0 0.0
    %5734 = vmatprep.subr.mxu0 0.0
    %5735 = vmatpush2.msra.mxu0 0.0
    %5736 = vmatprep.subr.mxu0 0.0
    %5737 = vmatpush2.msra.mxu0 0.0
    %5738 = vmatprep.subr.mxu0 0.0
    %5739 = vmatpush2.msra.mxu0 0.0
    %5740 = vmatprep.subr.mxu0 0.0
    %5741 = vmatpush2.msra.mxu0 0.0
    %5742 = vmatprep.subr.mxu0 0.0
    %5743 = vmatpush2.msra.mxu0 0.0
    %5744 = vmatprep.subr.mxu0 0.0
    %5745 = vmatpush2.msra.mxu0 0.0
    %5746 = vmatprep.subr.mxu0 0.0
    %5747 = vmatpush2.msra.mxu0 0.0
    %5748 = vmatprep.subr.mxu0 0.0
    %5749 = vmatpush2.msra.mxu0 0.0
    %5750 = vmatprep.subr.mxu0 0.0
    %5751 = vmatpush2.msra.mxu0 0.0
    %5752 = vmatprep.subr.mxu0 0.0
    %5753 = vmatpush2.msra.mxu0 0.0
    %5754 = vmatprep.subr.mxu0 0.0
    %5755 = vmatpush2.msra.mxu0 0.0
    %5756 = vmatprep.subr.mxu0 0.0
    %5757 = vmatpush2.msra.mxu0 0.0
    %5758 = vmatprep.subr.mxu0 0.0
    %5759 = vmatpush2.msra.mxu0 0.0
    %5760 = vmatprep.mubr.f32.mxu0 0.0
    %5761 = vmatmul.mubr.f32.gmra.mxu0 %v5623
    %v5762 = vpop.f32.mrf.mxu0
    %v5763 = vadd.f32 %v4597, %v5762
    %v5764 = vpop.f32.mrf.mxu0
    %5765 = vdwg.mxu0
    %5766 = vmatprep.subr.mxu0 %v4575
    %5767 = vmatpush1.msra.mxu0 %v4574
    %5768 = vmatprep.subr.mxu0 %v4572
    %5769 = vmatpush1.msra.mxu0 %v4571
    %5770 = vmatprep.subr.mxu0 %v4569
    %5771 = vmatpush1.msra.mxu0 %v4568
    %5772 = vmatprep.subr.mxu0 %v4566
    %5773 = vmatpush1.msra.mxu0 %v4565
    %5774 = vmatprep.subr.mxu0 %v4563
    %5775 = vmatpush1.msra.mxu0 %v4562
    %5776 = vmatprep.subr.mxu0 %v4560
    %5777 = vmatpush1.msra.mxu0 %v4559
    %5778 = vmatprep.subr.mxu0 %v4557
    %5779 = vmatpush1.msra.mxu0 %v4556
    %5780 = vmatprep.subr.mxu0 %v4554
    %5781 = vmatpush1.msra.mxu0 %v4553
    %5782 = vmatprep.subr.mxu0 %v4551
    %5783 = vmatpush1.msra.mxu0 %v4550
    %5784 = vmatprep.subr.mxu0 %v4548
    %5785 = vmatpush1.msra.mxu0 %v4547
    %5786 = vmatprep.subr.mxu0 %v4545
    %5787 = vmatpush1.msra.mxu0 %v4544
    %5788 = vmatprep.subr.mxu0 %v4542
    %5789 = vmatpush1.msra.mxu0 %v4541
    %5790 = vmatprep.subr.mxu0 %v4539
    %5791 = vmatpush1.msra.mxu0 %v4538
    %5792 = vmatprep.subr.mxu0 %v4536
    %5793 = vmatpush1.msra.mxu0 %v4535
    %5794 = vmatprep.subr.mxu0 %v4533
    %5795 = vmatpush1.msra.mxu0 %v4532
    %5796 = vmatprep.subr.mxu0 %v4530
    %5797 = vmatpush1.msra.mxu0 %v4529
    %5798 = vmatprep.subr.mxu0 0.0
    %5799 = vmatpush2.msra.mxu0 0.0
    %5800 = vmatprep.subr.mxu0 0.0
    %5801 = vmatpush2.msra.mxu0 0.0
    %5802 = vmatprep.subr.mxu0 0.0
    %5803 = vmatpush2.msra.mxu0 0.0
    %5804 = vmatprep.subr.mxu0 0.0
    %5805 = vmatpush2.msra.mxu0 0.0
    %5806 = vmatprep.subr.mxu0 0.0
    %5807 = vmatpush2.msra.mxu0 0.0
    %5808 = vmatprep.subr.mxu0 0.0
    %5809 = vmatpush2.msra.mxu0 0.0
    %5810 = vmatprep.subr.mxu0 0.0
    %5811 = vmatpush2.msra.mxu0 0.0
    %5812 = vmatprep.subr.mxu0 0.0
    %5813 = vmatpush2.msra.mxu0 0.0
    %5814 = vmatprep.subr.mxu0 0.0
    %5815 = vmatpush2.msra.mxu0 0.0
    %5816 = vmatprep.subr.mxu0 0.0
    %5817 = vmatpush2.msra.mxu0 0.0
    %5818 = vmatprep.subr.mxu0 0.0
    %5819 = vmatpush2.msra.mxu0 0.0
    %5820 = vmatprep.subr.mxu0 0.0
    %5821 = vmatpush2.msra.mxu0 0.0
    %5822 = vmatprep.subr.mxu0 0.0
    %5823 = vmatpush2.msra.mxu0 0.0
    %5824 = vmatprep.subr.mxu0 0.0
    %5825 = vmatpush2.msra.mxu0 0.0
    %5826 = vmatprep.subr.mxu0 0.0
    %5827 = vmatpush2.msra.mxu0 0.0
    %5828 = vmatprep.subr.mxu0 0.0
    %5829 = vmatpush2.msra.mxu0 0.0
    %5830 = vmatprep.mubr.f32.mxu0 0.0
    %5831 = vmatmul.mubr.f32.gmra.mxu0 %v5624
    %v5832 = vpop.f32.mrf.mxu0
    %v5833 = vadd.f32 %v4746, %v5832
    %v5834 = vpop.f32.mrf.mxu0
    %v5835 = vadd.f32 %v4750, %v5834
    %5836 = vdwg.mxu0
    %5837 = vmatprep.subr.mxu0 0.0
    %5838 = vmatpush1.msra.mxu0 %v4576
    %5839 = vmatprep.subr.mxu0 0.0
    %5840 = vmatpush1.msra.mxu0 %v4573
    %5841 = vmatprep.subr.mxu0 0.0
    %5842 = vmatpush1.msra.mxu0 %v4570
    %5843 = vmatprep.subr.mxu0 0.0
    %5844 = vmatpush1.msra.mxu0 %v4567
    %5845 = vmatprep.subr.mxu0 0.0
    %5846 = vmatpush1.msra.mxu0 %v4564
    %5847 = vmatprep.subr.mxu0 0.0
    %5848 = vmatpush1.msra.mxu0 %v4561
    %5849 = vmatprep.subr.mxu0 0.0
    %5850 = vmatpush1.msra.mxu0 %v4558
    %5851 = vmatprep.subr.mxu0 0.0
    %5852 = vmatpush1.msra.mxu0 %v4555
    %5853 = vmatprep.subr.mxu0 0.0
    %5854 = vmatpush1.msra.mxu0 %v4552
    %5855 = vmatprep.subr.mxu0 0.0
    %5856 = vmatpush1.msra.mxu0 %v4549
    %5857 = vmatprep.subr.mxu0 0.0
    %5858 = vmatpush1.msra.mxu0 %v4546
    %5859 = vmatprep.subr.mxu0 0.0
    %5860 = vmatpush1.msra.mxu0 %v4543
    %5861 = vmatprep.subr.mxu0 0.0
    %5862 = vmatpush1.msra.mxu0 %v4540
    %5863 = vmatprep.subr.mxu0 0.0
    %5864 = vmatpush1.msra.mxu0 %v4537
    %5865 = vmatprep.subr.mxu0 0.0
    %5866 = vmatpush1.msra.mxu0 %v4534
    %5867 = vmatprep.subr.mxu0 0.0
    %5868 = vmatpush1.msra.mxu0 %v4531
    %5869 = vmatprep.subr.mxu0 0.0
    %5870 = vmatpush2.msra.mxu0 0.0
    %5871 = vmatprep.subr.mxu0 0.0
    %5872 = vmatpush2.msra.mxu0 0.0
    %5873 = vmatprep.subr.mxu0 0.0
    %5874 = vmatpush2.msra.mxu0 0.0
    %5875 = vmatprep.subr.mxu0 0.0
    %5876 = vmatpush2.msra.mxu0 0.0
    %5877 = vmatprep.subr.mxu0 0.0
    %5878 = vmatpush2.msra.mxu0 0.0
    %5879 = vmatprep.subr.mxu0 0.0
    %5880 = vmatpush2.msra.mxu0 0.0
    %5881 = vmatprep.subr.mxu0 0.0
    %5882 = vmatpush2.msra.mxu0 0.0
    %5883 = vmatprep.subr.mxu0 0.0
    %5884 = vmatpush2.msra.mxu0 0.0
    %5885 = vmatprep.subr.mxu0 0.0
    %5886 = vmatpush2.msra.mxu0 0.0
    %5887 = vmatprep.subr.mxu0 0.0
    %5888 = vmatpush2.msra.mxu0 0.0
    %5889 = vmatprep.subr.mxu0 0.0
    %5890 = vmatpush2.msra.mxu0 0.0
    %5891 = vmatprep.subr.mxu0 0.0
    %5892 = vmatpush2.msra.mxu0 0.0
    %5893 = vmatprep.subr.mxu0 0.0
    %5894 = vmatpush2.msra.mxu0 0.0
    %5895 = vmatprep.subr.mxu0 0.0
    %5896 = vmatpush2.msra.mxu0 0.0
    %5897 = vmatprep.subr.mxu0 0.0
    %5898 = vmatpush2.msra.mxu0 0.0
    %5899 = vmatprep.subr.mxu0 0.0
    %5900 = vmatpush2.msra.mxu0 0.0
    %5901 = vmatprep.mubr.f32.mxu0 0.0
    %5902 = vmatmul.mubr.f32.gmra.mxu0 %v5624
    %v5903 = vpop.f32.mrf.mxu0
    %v5904 = vadd.f32 %v4754, %v5903
    %v5905 = vpop.f32.mrf.mxu0
    %5906 = vdwg.mxu0
    %v5907 = vld [vmem:[%s2287] sm:$0xff]
    %v5908 = vld [vmem:[%s2287 + $0x8] sm:$0xff]
    %v5909 = vld [vmem:[%s2287 + $0x10] sm:$0xff]
    %v5910 = vadd.f32 %v5907, %v5692
    %v5911 = vxor.u32 %v5910, 2147483648
    %v5912 = vmul.f32 %v5911, 1.442695
    %v5913 = vpow.pop %v5912
    %v5914 = vadd.f32 %v5913, 1.0
    %v5915 = vrcp.pop %v5914
    %v5916 = vmul.f32 1.0, %v5915
    %v5917 = vadd.f32 %v5908, %v5694
    %v5918 = vxor.u32 %v5917, 2147483648
    %v5919 = vmul.f32 %v5918, 1.442695
    %v5920 = vpow.pop %v5919
    %v5921 = vadd.f32 %v5920, 1.0
    %v5922 = vrcp.pop %v5921
    %v5923 = vmul.f32 1.0, %v5922
    %v5924 = vmul.f32 %v5916, %v5763
    %v5925 = vadd.f32 %v5909, %v5924
    %v5926 = vtanh.pop %v5925
    %v5927 = vsub.f32 1.0, %v5923
    %v5928 = vmul.f32 %v5927, %v5926
    %v5929 = vmul.f32 %v5923, %v5623
    %v5930 = vadd.f32 %v5928, %v5929
    %v5931 = vld [vmem:[%s2314] sm:$0xff]
    %v5932 = vld [vmem:[%s2314 + $0x8] sm:$0xff]
    %v5933 = vld [vmem:[%s2314 + $0x10] sm:$0xff]
    %v5934 = vadd.f32 %v5931, %v5833
    %v5935 = vxor.u32 %v5934, 2147483648
    %v5936 = vmul.f32 %v5935, 1.442695
    %v5937 = vpow.pop %v5936
    %v5938 = vadd.f32 %v5937, 1.0
    %v5939 = vrcp.pop %v5938
    %v5940 = vmul.f32 1.0, %v5939
    %v5941 = vadd.f32 %v5932, %v5835
    %v5942 = vxor.u32 %v5941, 2147483648
    %v5943 = vmul.f32 %v5942, 1.442695
    %v5944 = vpow.pop %v5943
    %v5945 = vadd.f32 %v5944, 1.0
    %v5946 = vrcp.pop %v5945
    %v5947 = vmul.f32 1.0, %v5946
    %v5948 = vmul.f32 %v5940, %v5904
    %v5949 = vadd.f32 %v5933, %v5948
    %v5950 = vtanh.pop %v5949
    %v5951 = vsub.f32 1.0, %v5947
    %v5952 = vmul.f32 %v5951, %v5950
    %v5953 = vmul.f32 %v5947, %v5624
    %v5954 = vadd.f32 %v5952, %v5953
    %5955 = vst [vmem:[#allocation7] sm:$0xff] %v5930
    %5956 = vst [vmem:[#allocation8] sm:$0xff] %v5954
    %5957 = vst [vmem:[%s2341] sm:$0xff] %v5930
    %5958 = vst [vmem:[%s2343] sm:$0xff] %v5954
    %v5959 = vld [vmem:[#allocation7] sm:$0xff]
    %v5960 = vld [vmem:[#allocation8] sm:$0xff]
    %5961 = vmatprep.subr.mxu0 %v4526
    %5962 = vmatpush1.msra.mxu0 %v4525
    %5963 = vmatprep.subr.mxu0 %v4523
    %5964 = vmatpush1.msra.mxu0 %v4522
    %5965 = vmatprep.subr.mxu0 %v4520
    %5966 = vmatpush1.msra.mxu0 %v4519
    %5967 = vmatprep.subr.mxu0 %v4517
    %5968 = vmatpush1.msra.mxu0 %v4516
    %5969 = vmatprep.subr.mxu0 %v4514
    %5970 = vmatpush1.msra.mxu0 %v4513
    %5971 = vmatprep.subr.mxu0 %v4511
    %5972 = vmatpush1.msra.mxu0 %v4510
    %5973 = vmatprep.subr.mxu0 %v4508
    %5974 = vmatpush1.msra.mxu0 %v4507
    %5975 = vmatprep.subr.mxu0 %v4505
    %5976 = vmatpush1.msra.mxu0 %v4504
    %5977 = vmatprep.subr.mxu0 %v4502
    %5978 = vmatpush1.msra.mxu0 %v4501
    %5979 = vmatprep.subr.mxu0 %v4499
    %5980 = vmatpush1.msra.mxu0 %v4498
    %5981 = vmatprep.subr.mxu0 %v4496
    %5982 = vmatpush1.msra.mxu0 %v4495
    %5983 = vmatprep.subr.mxu0 %v4493
    %5984 = vmatpush1.msra.mxu0 %v4492
    %5985 = vmatprep.subr.mxu0 %v4490
    %5986 = vmatpush1.msra.mxu0 %v4489
    %5987 = vmatprep.subr.mxu0 %v4487
    %5988 = vmatpush1.msra.mxu0 %v4486
    %5989 = vmatprep.subr.mxu0 %v4484
    %5990 = vmatpush1.msra.mxu0 %v4483
    %5991 = vmatprep.subr.mxu0 %v4481
    %5992 = vmatpush1.msra.mxu0 %v4480
    %5993 = vmatprep.subr.mxu0 0.0
    %5994 = vmatpush2.msra.mxu0 0.0
    %5995 = vmatprep.subr.mxu0 0.0
    %5996 = vmatpush2.msra.mxu0 0.0
    %5997 = vmatprep.subr.mxu0 0.0
    %5998 = vmatpush2.msra.mxu0 0.0
    %5999 = vmatprep.subr.mxu0 0.0
    %6000 = vmatpush2.msra.mxu0 0.0
    %6001 = vmatprep.subr.mxu0 0.0
    %6002 = vmatpush2.msra.mxu0 0.0
    %6003 = vmatprep.subr.mxu0 0.0
    %6004 = vmatpush2.msra.mxu0 0.0
    %6005 = vmatprep.subr.mxu0 0.0
    %6006 = vmatpush2.msra.mxu0 0.0
    %6007 = vmatprep.subr.mxu0 0.0
    %6008 = vmatpush2.msra.mxu0 0.0
    %6009 = vmatprep.subr.mxu0 0.0
    %6010 = vmatpush2.msra.mxu0 0.0
    %6011 = vmatprep.subr.mxu0 0.0
    %6012 = vmatpush2.msra.mxu0 0.0
    %6013 = vmatprep.subr.mxu0 0.0
    %6014 = vmatpush2.msra.mxu0 0.0
    %6015 = vmatprep.subr.mxu0 0.0
    %6016 = vmatpush2.msra.mxu0 0.0
    %6017 = vmatprep.subr.mxu0 0.0
    %6018 = vmatpush2.msra.mxu0 0.0
    %6019 = vmatprep.subr.mxu0 0.0
    %6020 = vmatpush2.msra.mxu0 0.0
    %6021 = vmatprep.subr.mxu0 0.0
    %6022 = vmatpush2.msra.mxu0 0.0
    %6023 = vmatprep.subr.mxu0 0.0
    %6024 = vmatpush2.msra.mxu0 0.0
    %6025 = vmatprep.mubr.f32.mxu0 0.0
    %6026 = vmatmul.mubr.f32.gmra.mxu0 %v5959
    %v6027 = vpop.f32.mrf.mxu0
    %v6028 = vadd.f32 %v4589, %v6027
    %v6029 = vpop.f32.mrf.mxu0
    %v6030 = vadd.f32 %v4593, %v6029
    %6031 = vdwg.mxu0
    %6032 = vmatprep.subr.mxu0 0.0
    %6033 = vmatpush1.msra.mxu0 %v4527
    %6034 = vmatprep.subr.mxu0 0.0
    %6035 = vmatpush1.msra.mxu0 %v4524
    %6036 = vmatprep.subr.mxu0 0.0
    %6037 = vmatpush1.msra.mxu0 %v4521
    %6038 = vmatprep.subr.mxu0 0.0
    %6039 = vmatpush1.msra.mxu0 %v4518
    %6040 = vmatprep.subr.mxu0 0.0
    %6041 = vmatpush1.msra.mxu0 %v4515
    %6042 = vmatprep.subr.mxu0 0.0
    %6043 = vmatpush1.msra.mxu0 %v4512
    %6044 = vmatprep.subr.mxu0 0.0
    %6045 = vmatpush1.msra.mxu0 %v4509
    %6046 = vmatprep.subr.mxu0 0.0
    %6047 = vmatpush1.msra.mxu0 %v4506
    %6048 = vmatprep.subr.mxu0 0.0
    %6049 = vmatpush1.msra.mxu0 %v4503
    %6050 = vmatprep.subr.mxu0 0.0
    %6051 = vmatpush1.msra.mxu0 %v4500
    %6052 = vmatprep.subr.mxu0 0.0
    %6053 = vmatpush1.msra.mxu0 %v4497
    %6054 = vmatprep.subr.mxu0 0.0
    %6055 = vmatpush1.msra.mxu0 %v4494
    %6056 = vmatprep.subr.mxu0 0.0
    %6057 = vmatpush1.msra.mxu0 %v4491
    %6058 = vmatprep.subr.mxu0 0.0
    %6059 = vmatpush1.msra.mxu0 %v4488
    %6060 = vmatprep.subr.mxu0 0.0
    %6061 = vmatpush1.msra.mxu0 %v4485
    %6062 = vmatprep.subr.mxu0 0.0
    %6063 = vmatpush1.msra.mxu0 %v4482
    %6064 = vmatprep.subr.mxu0 0.0
    %6065 = vmatpush2.msra.mxu0 0.0
    %6066 = vmatprep.subr.mxu0 0.0
    %6067 = vmatpush2.msra.mxu0 0.0
    %6068 = vmatprep.subr.mxu0 0.0
    %6069 = vmatpush2.msra.mxu0 0.0
    %6070 = vmatprep.subr.mxu0 0.0
    %6071 = vmatpush2.msra.mxu0 0.0
    %6072 = vmatprep.subr.mxu0 0.0
    %6073 = vmatpush2.msra.mxu0 0.0
    %6074 = vmatprep.subr.mxu0 0.0
    %6075 = vmatpush2.msra.mxu0 0.0
    %6076 = vmatprep.subr.mxu0 0.0
    %6077 = vmatpush2.msra.mxu0 0.0
    %6078 = vmatprep.subr.mxu0 0.0
    %6079 = vmatpush2.msra.mxu0 0.0
    %6080 = vmatprep.subr.mxu0 0.0
    %6081 = vmatpush2.msra.mxu0 0.0
    %6082 = vmatprep.subr.mxu0 0.0
    %6083 = vmatpush2.msra.mxu0 0.0
    %6084 = vmatprep.subr.mxu0 0.0
    %6085 = vmatpush2.msra.mxu0 0.0
    %6086 = vmatprep.subr.mxu0 0.0
    %6087 = vmatpush2.msra.mxu0 0.0
    %6088 = vmatprep.subr.mxu0 0.0
    %6089 = vmatpush2.msra.mxu0 0.0
    %6090 = vmatprep.subr.mxu0 0.0
    %6091 = vmatpush2.msra.mxu0 0.0
    %6092 = vmatprep.subr.mxu0 0.0
    %6093 = vmatpush2.msra.mxu0 0.0
    %6094 = vmatprep.subr.mxu0 0.0
    %6095 = vmatpush2.msra.mxu0 0.0
    %6096 = vmatprep.mubr.f32.mxu0 0.0
    %6097 = vmatmul.mubr.f32.gmra.mxu0 %v5959
    %v6098 = vpop.f32.mrf.mxu0
    %v6099 = vadd.f32 %v4597, %v6098
    %v6100 = vpop.f32.mrf.mxu0
    %6101 = vdwg.mxu0
    %6102 = vmatprep.subr.mxu0 %v4575
    %6103 = vmatpush1.msra.mxu0 %v4574
    %6104 = vmatprep.subr.mxu0 %v4572
    %6105 = vmatpush1.msra.mxu0 %v4571
    %6106 = vmatprep.subr.mxu0 %v4569
    %6107 = vmatpush1.msra.mxu0 %v4568
    %6108 = vmatprep.subr.mxu0 %v4566
    %6109 = vmatpush1.msra.mxu0 %v4565
    %6110 = vmatprep.subr.mxu0 %v4563
    %6111 = vmatpush1.msra.mxu0 %v4562
    %6112 = vmatprep.subr.mxu0 %v4560
    %6113 = vmatpush1.msra.mxu0 %v4559
    %6114 = vmatprep.subr.mxu0 %v4557
    %6115 = vmatpush1.msra.mxu0 %v4556
    %6116 = vmatprep.subr.mxu0 %v4554
    %6117 = vmatpush1.msra.mxu0 %v4553
    %6118 = vmatprep.subr.mxu0 %v4551
    %6119 = vmatpush1.msra.mxu0 %v4550
    %6120 = vmatprep.subr.mxu0 %v4548
    %6121 = vmatpush1.msra.mxu0 %v4547
    %6122 = vmatprep.subr.mxu0 %v4545
    %6123 = vmatpush1.msra.mxu0 %v4544
    %6124 = vmatprep.subr.mxu0 %v4542
    %6125 = vmatpush1.msra.mxu0 %v4541
    %6126 = vmatprep.subr.mxu0 %v4539
    %6127 = vmatpush1.msra.mxu0 %v4538
    %6128 = vmatprep.subr.mxu0 %v4536
    %6129 = vmatpush1.msra.mxu0 %v4535
    %6130 = vmatprep.subr.mxu0 %v4533
    %6131 = vmatpush1.msra.mxu0 %v4532
    %6132 = vmatprep.subr.mxu0 %v4530
    %6133 = vmatpush1.msra.mxu0 %v4529
    %6134 = vmatprep.subr.mxu0 0.0
    %6135 = vmatpush2.msra.mxu0 0.0
    %6136 = vmatprep.subr.mxu0 0.0
    %6137 = vmatpush2.msra.mxu0 0.0
    %6138 = vmatprep.subr.mxu0 0.0
    %6139 = vmatpush2.msra.mxu0 0.0
    %6140 = vmatprep.subr.mxu0 0.0
    %6141 = vmatpush2.msra.mxu0 0.0
    %6142 = vmatprep.subr.mxu0 0.0
    %6143 = vmatpush2.msra.mxu0 0.0
    %6144 = vmatprep.subr.mxu0 0.0
    %6145 = vmatpush2.msra.mxu0 0.0
    %6146 = vmatprep.subr.mxu0 0.0
    %6147 = vmatpush2.msra.mxu0 0.0
    %6148 = vmatprep.subr.mxu0 0.0
    %6149 = vmatpush2.msra.mxu0 0.0
    %6150 = vmatprep.subr.mxu0 0.0
    %6151 = vmatpush2.msra.mxu0 0.0
    %6152 = vmatprep.subr.mxu0 0.0
    %6153 = vmatpush2.msra.mxu0 0.0
    %6154 = vmatprep.subr.mxu0 0.0
    %6155 = vmatpush2.msra.mxu0 0.0
    %6156 = vmatprep.subr.mxu0 0.0
    %6157 = vmatpush2.msra.mxu0 0.0
    %6158 = vmatprep.subr.mxu0 0.0
    %6159 = vmatpush2.msra.mxu0 0.0
    %6160 = vmatprep.subr.mxu0 0.0
    %6161 = vmatpush2.msra.mxu0 0.0
    %6162 = vmatprep.subr.mxu0 0.0
    %6163 = vmatpush2.msra.mxu0 0.0
    %6164 = vmatprep.subr.mxu0 0.0
    %6165 = vmatpush2.msra.mxu0 0.0
    %6166 = vmatprep.mubr.f32.mxu0 0.0
    %6167 = vmatmul.mubr.f32.gmra.mxu0 %v5960
    %v6168 = vpop.f32.mrf.mxu0
    %v6169 = vadd.f32 %v4746, %v6168
    %v6170 = vpop.f32.mrf.mxu0
    %v6171 = vadd.f32 %v4750, %v6170
    %6172 = vdwg.mxu0
    %6173 = vmatprep.subr.mxu0 0.0
    %6174 = vmatpush1.msra.mxu0 %v4576
    %6175 = vmatprep.subr.mxu0 0.0
    %6176 = vmatpush1.msra.mxu0 %v4573
    %6177 = vmatprep.subr.mxu0 0.0
    %6178 = vmatpush1.msra.mxu0 %v4570
    %6179 = vmatprep.subr.mxu0 0.0
    %6180 = vmatpush1.msra.mxu0 %v4567
    %6181 = vmatprep.subr.mxu0 0.0
    %6182 = vmatpush1.msra.mxu0 %v4564
    %6183 = vmatprep.subr.mxu0 0.0
    %6184 = vmatpush1.msra.mxu0 %v4561
    %6185 = vmatprep.subr.mxu0 0.0
    %6186 = vmatpush1.msra.mxu0 %v4558
    %6187 = vmatprep.subr.mxu0 0.0
    %6188 = vmatpush1.msra.mxu0 %v4555
    %6189 = vmatprep.subr.mxu0 0.0
    %6190 = vmatpush1.msra.mxu0 %v4552
    %6191 = vmatprep.subr.mxu0 0.0
    %6192 = vmatpush1.msra.mxu0 %v4549
    %6193 = vmatprep.subr.mxu0 0.0
    %6194 = vmatpush1.msra.mxu0 %v4546
    %6195 = vmatprep.subr.mxu0 0.0
    %6196 = vmatpush1.msra.mxu0 %v4543
    %6197 = vmatprep.subr.mxu0 0.0
    %6198 = vmatpush1.msra.mxu0 %v4540
    %6199 = vmatprep.subr.mxu0 0.0
    %6200 = vmatpush1.msra.mxu0 %v4537
    %6201 = vmatprep.subr.mxu0 0.0
    %6202 = vmatpush1.msra.mxu0 %v4534
    %6203 = vmatprep.subr.mxu0 0.0
    %6204 = vmatpush1.msra.mxu0 %v4531
    %6205 = vmatprep.subr.mxu0 0.0
    %6206 = vmatpush2.msra.mxu0 0.0
    %6207 = vmatprep.subr.mxu0 0.0
    %6208 = vmatpush2.msra.mxu0 0.0
    %6209 = vmatprep.subr.mxu0 0.0
    %6210 = vmatpush2.msra.mxu0 0.0
    %6211 = vmatprep.subr.mxu0 0.0
    %6212 = vmatpush2.msra.mxu0 0.0
    %6213 = vmatprep.subr.mxu0 0.0
    %6214 = vmatpush2.msra.mxu0 0.0
    %6215 = vmatprep.subr.mxu0 0.0
    %6216 = vmatpush2.msra.mxu0 0.0
    %6217 = vmatprep.subr.mxu0 0.0
    %6218 = vmatpush2.msra.mxu0 0.0
    %6219 = vmatprep.subr.mxu0 0.0
    %6220 = vmatpush2.msra.mxu0 0.0
    %6221 = vmatprep.subr.mxu0 0.0
    %6222 = vmatpush2.msra.mxu0 0.0
    %6223 = vmatprep.subr.mxu0 0.0
    %6224 = vmatpush2.msra.mxu0 0.0
    %6225 = vmatprep.subr.mxu0 0.0
    %6226 = vmatpush2.msra.mxu0 0.0
    %6227 = vmatprep.subr.mxu0 0.0
    %6228 = vmatpush2.msra.mxu0 0.0
    %6229 = vmatprep.subr.mxu0 0.0
    %6230 = vmatpush2.msra.mxu0 0.0
    %6231 = vmatprep.subr.mxu0 0.0
    %6232 = vmatpush2.msra.mxu0 0.0
    %6233 = vmatprep.subr.mxu0 0.0
    %6234 = vmatpush2.msra.mxu0 0.0
    %6235 = vmatprep.subr.mxu0 0.0
    %6236 = vmatpush2.msra.mxu0 0.0
    %6237 = vmatprep.mubr.f32.mxu0 0.0
    %6238 = vmatmul.mubr.f32.gmra.mxu0 %v5960
    %v6239 = vpop.f32.mrf.mxu0
    %v6240 = vadd.f32 %v4754, %v6239
    %v6241 = vpop.f32.mrf.mxu0
    %6242 = vdwg.mxu0
    %v6243 = vld [vmem:[%s2630] sm:$0xff]
    %v6244 = vld [vmem:[%s2630 + $0x8] sm:$0xff]
    %v6245 = vld [vmem:[%s2630 + $0x10] sm:$0xff]
    %v6246 = vadd.f32 %v6243, %v6028
    %v6247 = vxor.u32 %v6246, 2147483648
    %v6248 = vmul.f32 %v6247, 1.442695
    %v6249 = vpow.pop %v6248
    %v6250 = vadd.f32 %v6249, 1.0
    %v6251 = vrcp.pop %v6250
    %v6252 = vmul.f32 1.0, %v6251
    %v6253 = vadd.f32 %v6244, %v6030
    %v6254 = vxor.u32 %v6253, 2147483648
    %v6255 = vmul.f32 %v6254, 1.442695
    %v6256 = vpow.pop %v6255
    %v6257 = vadd.f32 %v6256, 1.0
    %v6258 = vrcp.pop %v6257
    %v6259 = vmul.f32 1.0, %v6258
    %v6260 = vmul.f32 %v6252, %v6099
    %v6261 = vadd.f32 %v6245, %v6260
    %v6262 = vtanh.pop %v6261
    %v6263 = vsub.f32 1.0, %v6259
    %v6264 = vmul.f32 %v6263, %v6262
    %v6265 = vmul.f32 %v6259, %v5959
    %v6266 = vadd.f32 %v6264, %v6265
    %v6267 = vld [vmem:[%s2656] sm:$0xff]
    %v6268 = vld [vmem:[%s2656 + $0x8] sm:$0xff]
    %v6269 = vld [vmem:[%s2656 + $0x10] sm:$0xff]
    %v6270 = vadd.f32 %v6267, %v6169
    %v6271 = vxor.u32 %v6270, 2147483648
    %v6272 = vmul.f32 %v6271, 1.442695
    %v6273 = vpow.pop %v6272
    %v6274 = vadd.f32 %v6273, 1.0
    %v6275 = vrcp.pop %v6274
    %v6276 = vmul.f32 1.0, %v6275
    %v6277 = vadd.f32 %v6268, %v6171
    %v6278 = vxor.u32 %v6277, 2147483648
    %v6279 = vmul.f32 %v6278, 1.442695
    %v6280 = vpow.pop %v6279
    %v6281 = vadd.f32 %v6280, 1.0
    %v6282 = vrcp.pop %v6281
    %v6283 = vmul.f32 1.0, %v6282
    %v6284 = vmul.f32 %v6276, %v6240
    %v6285 = vadd.f32 %v6269, %v6284
    %v6286 = vtanh.pop %v6285
    %v6287 = vsub.f32 1.0, %v6283
    %v6288 = vmul.f32 %v6287, %v6286
    %v6289 = vmul.f32 %v6283, %v5960
    %v6290 = vadd.f32 %v6288, %v6289
    %6291 = vst [vmem:[#allocation7] sm:$0xff] %v6266
    %6292 = vst [vmem:[#allocation8] sm:$0xff] %v6290
    %6293 = vst [vmem:[%s2683] sm:$0xff] %v6266
    %6294 = vst [vmem:[%s2685] sm:$0xff] %v6290
    %v6295 = vld [vmem:[#allocation7] sm:$0xff]
    %v6296 = vld [vmem:[#allocation8] sm:$0xff]
    %6297 = vmatprep.subr.mxu0 %v4526
    %6298 = vmatpush1.msra.mxu0 %v4525
    %6299 = vmatprep.subr.mxu0 %v4523
    %6300 = vmatpush1.msra.mxu0 %v4522
    %6301 = vmatprep.subr.mxu0 %v4520
    %6302 = vmatpush1.msra.mxu0 %v4519
    %6303 = vmatprep.subr.mxu0 %v4517
    %6304 = vmatpush1.msra.mxu0 %v4516
    %6305 = vmatprep.subr.mxu0 %v4514
    %6306 = vmatpush1.msra.mxu0 %v4513
    %6307 = vmatprep.subr.mxu0 %v4511
    %6308 = vmatpush1.msra.mxu0 %v4510
    %6309 = vmatprep.subr.mxu0 %v4508
    %6310 = vmatpush1.msra.mxu0 %v4507
    %6311 = vmatprep.subr.mxu0 %v4505
    %6312 = vmatpush1.msra.mxu0 %v4504
    %6313 = vmatprep.subr.mxu0 %v4502
    %6314 = vmatpush1.msra.mxu0 %v4501
    %6315 = vmatprep.subr.mxu0 %v4499
    %6316 = vmatpush1.msra.mxu0 %v4498
    %6317 = vmatprep.subr.mxu0 %v4496
    %6318 = vmatpush1.msra.mxu0 %v4495
    %6319 = vmatprep.subr.mxu0 %v4493
    %6320 = vmatpush1.msra.mxu0 %v4492
    %6321 = vmatprep.subr.mxu0 %v4490
    %6322 = vmatpush1.msra.mxu0 %v4489
    %6323 = vmatprep.subr.mxu0 %v4487
    %6324 = vmatpush1.msra.mxu0 %v4486
    %6325 = vmatprep.subr.mxu0 %v4484
    %6326 = vmatpush1.msra.mxu0 %v4483
    %6327 = vmatprep.subr.mxu0 %v4481
    %6328 = vmatpush1.msra.mxu0 %v4480
    %6329 = vmatprep.subr.mxu0 0.0
    %6330 = vmatpush2.msra.mxu0 0.0
    %6331 = vmatprep.subr.mxu0 0.0
    %6332 = vmatpush2.msra.mxu0 0.0
    %6333 = vmatprep.subr.mxu0 0.0
    %6334 = vmatpush2.msra.mxu0 0.0
    %6335 = vmatprep.subr.mxu0 0.0
    %6336 = vmatpush2.msra.mxu0 0.0
    %6337 = vmatprep.subr.mxu0 0.0
    %6338 = vmatpush2.msra.mxu0 0.0
    %6339 = vmatprep.subr.mxu0 0.0
    %6340 = vmatpush2.msra.mxu0 0.0
    %6341 = vmatprep.subr.mxu0 0.0
    %6342 = vmatpush2.msra.mxu0 0.0
    %6343 = vmatprep.subr.mxu0 0.0
    %6344 = vmatpush2.msra.mxu0 0.0
    %6345 = vmatprep.subr.mxu0 0.0
    %6346 = vmatpush2.msra.mxu0 0.0
    %6347 = vmatprep.subr.mxu0 0.0
    %6348 = vmatpush2.msra.mxu0 0.0
    %6349 = vmatprep.subr.mxu0 0.0
    %6350 = vmatpush2.msra.mxu0 0.0
    %6351 = vmatprep.subr.mxu0 0.0
    %6352 = vmatpush2.msra.mxu0 0.0
    %6353 = vmatprep.subr.mxu0 0.0
    %6354 = vmatpush2.msra.mxu0 0.0
    %6355 = vmatprep.subr.mxu0 0.0
    %6356 = vmatpush2.msra.mxu0 0.0
    %6357 = vmatprep.subr.mxu0 0.0
    %6358 = vmatpush2.msra.mxu0 0.0
    %6359 = vmatprep.subr.mxu0 0.0
    %6360 = vmatpush2.msra.mxu0 0.0
    %6361 = vmatprep.mubr.f32.mxu0 0.0
    %6362 = vmatmul.mubr.f32.gmra.mxu0 %v6295
    %v6363 = vpop.f32.mrf.mxu0
    %v6364 = vadd.f32 %v4589, %v6363
    %v6365 = vpop.f32.mrf.mxu0
    %v6366 = vadd.f32 %v4593, %v6365
    %6367 = vdwg.mxu0
    %6368 = vmatprep.subr.mxu0 0.0
    %6369 = vmatpush1.msra.mxu0 %v4527
    %6370 = vmatprep.subr.mxu0 0.0
    %6371 = vmatpush1.msra.mxu0 %v4524
    %6372 = vmatprep.subr.mxu0 0.0
    %6373 = vmatpush1.msra.mxu0 %v4521
    %6374 = vmatprep.subr.mxu0 0.0
    %6375 = vmatpush1.msra.mxu0 %v4518
    %6376 = vmatprep.subr.mxu0 0.0
    %6377 = vmatpush1.msra.mxu0 %v4515
    %6378 = vmatprep.subr.mxu0 0.0
    %6379 = vmatpush1.msra.mxu0 %v4512
    %6380 = vmatprep.subr.mxu0 0.0
    %6381 = vmatpush1.msra.mxu0 %v4509
    %6382 = vmatprep.subr.mxu0 0.0
    %6383 = vmatpush1.msra.mxu0 %v4506
    %6384 = vmatprep.subr.mxu0 0.0
    %6385 = vmatpush1.msra.mxu0 %v4503
    %6386 = vmatprep.subr.mxu0 0.0
    %6387 = vmatpush1.msra.mxu0 %v4500
    %6388 = vmatprep.subr.mxu0 0.0
    %6389 = vmatpush1.msra.mxu0 %v4497
    %6390 = vmatprep.subr.mxu0 0.0
    %6391 = vmatpush1.msra.mxu0 %v4494
    %6392 = vmatprep.subr.mxu0 0.0
    %6393 = vmatpush1.msra.mxu0 %v4491
    %6394 = vmatprep.subr.mxu0 0.0
    %6395 = vmatpush1.msra.mxu0 %v4488
    %6396 = vmatprep.subr.mxu0 0.0
    %6397 = vmatpush1.msra.mxu0 %v4485
    %6398 = vmatprep.subr.mxu0 0.0
    %6399 = vmatpush1.msra.mxu0 %v4482
    %6400 = vmatprep.subr.mxu0 0.0
    %6401 = vmatpush2.msra.mxu0 0.0
    %6402 = vmatprep.subr.mxu0 0.0
    %6403 = vmatpush2.msra.mxu0 0.0
    %6404 = vmatprep.subr.mxu0 0.0
    %6405 = vmatpush2.msra.mxu0 0.0
    %6406 = vmatprep.subr.mxu0 0.0
    %6407 = vmatpush2.msra.mxu0 0.0
    %6408 = vmatprep.subr.mxu0 0.0
    %6409 = vmatpush2.msra.mxu0 0.0
    %6410 = vmatprep.subr.mxu0 0.0
    %6411 = vmatpush2.msra.mxu0 0.0
    %6412 = vmatprep.subr.mxu0 0.0
    %6413 = vmatpush2.msra.mxu0 0.0
    %6414 = vmatprep.subr.mxu0 0.0
    %6415 = vmatpush2.msra.mxu0 0.0
    %6416 = vmatprep.subr.mxu0 0.0
    %6417 = vmatpush2.msra.mxu0 0.0
    %6418 = vmatprep.subr.mxu0 0.0
    %6419 = vmatpush2.msra.mxu0 0.0
    %6420 = vmatprep.subr.mxu0 0.0
    %6421 = vmatpush2.msra.mxu0 0.0
    %6422 = vmatprep.subr.mxu0 0.0
    %6423 = vmatpush2.msra.mxu0 0.0
    %6424 = vmatprep.subr.mxu0 0.0
    %6425 = vmatpush2.msra.mxu0 0.0
    %6426 = vmatprep.subr.mxu0 0.0
    %6427 = vmatpush2.msra.mxu0 0.0
    %6428 = vmatprep.subr.mxu0 0.0
    %6429 = vmatpush2.msra.mxu0 0.0
    %6430 = vmatprep.subr.mxu0 0.0
    %6431 = vmatpush2.msra.mxu0 0.0
    %6432 = vmatprep.mubr.f32.mxu0 0.0
    %6433 = vmatmul.mubr.f32.gmra.mxu0 %v6295
    %v6434 = vpop.f32.mrf.mxu0
    %v6435 = vadd.f32 %v4597, %v6434
    %v6436 = vpop.f32.mrf.mxu0
    %6437 = vdwg.mxu0
    %6438 = vmatprep.subr.mxu0 %v4575
    %6439 = vmatpush1.msra.mxu0 %v4574
    %6440 = vmatprep.subr.mxu0 %v4572
    %6441 = vmatpush1.msra.mxu0 %v4571
    %6442 = vmatprep.subr.mxu0 %v4569
    %6443 = vmatpush1.msra.mxu0 %v4568
    %6444 = vmatprep.subr.mxu0 %v4566
    %6445 = vmatpush1.msra.mxu0 %v4565
    %6446 = vmatprep.subr.mxu0 %v4563
    %6447 = vmatpush1.msra.mxu0 %v4562
    %6448 = vmatprep.subr.mxu0 %v4560
    %6449 = vmatpush1.msra.mxu0 %v4559
    %6450 = vmatprep.subr.mxu0 %v4557
    %6451 = vmatpush1.msra.mxu0 %v4556
    %6452 = vmatprep.subr.mxu0 %v4554
    %6453 = vmatpush1.msra.mxu0 %v4553
    %6454 = vmatprep.subr.mxu0 %v4551
    %6455 = vmatpush1.msra.mxu0 %v4550
    %6456 = vmatprep.subr.mxu0 %v4548
    %6457 = vmatpush1.msra.mxu0 %v4547
    %6458 = vmatprep.subr.mxu0 %v4545
    %6459 = vmatpush1.msra.mxu0 %v4544
    %6460 = vmatprep.subr.mxu0 %v4542
    %6461 = vmatpush1.msra.mxu0 %v4541
    %6462 = vmatprep.subr.mxu0 %v4539
    %6463 = vmatpush1.msra.mxu0 %v4538
    %6464 = vmatprep.subr.mxu0 %v4536
    %6465 = vmatpush1.msra.mxu0 %v4535
    %6466 = vmatprep.subr.mxu0 %v4533
    %6467 = vmatpush1.msra.mxu0 %v4532
    %6468 = vmatprep.subr.mxu0 %v4530
    %6469 = vmatpush1.msra.mxu0 %v4529
    %6470 = vmatprep.subr.mxu0 0.0
    %6471 = vmatpush2.msra.mxu0 0.0
    %6472 = vmatprep.subr.mxu0 0.0
    %6473 = vmatpush2.msra.mxu0 0.0
    %6474 = vmatprep.subr.mxu0 0.0
    %6475 = vmatpush2.msra.mxu0 0.0
    %6476 = vmatprep.subr.mxu0 0.0
    %6477 = vmatpush2.msra.mxu0 0.0
    %6478 = vmatprep.subr.mxu0 0.0
    %6479 = vmatpush2.msra.mxu0 0.0
    %6480 = vmatprep.subr.mxu0 0.0
    %6481 = vmatpush2.msra.mxu0 0.0
    %6482 = vmatprep.subr.mxu0 0.0
    %6483 = vmatpush2.msra.mxu0 0.0
    %6484 = vmatprep.subr.mxu0 0.0
    %6485 = vmatpush2.msra.mxu0 0.0
    %6486 = vmatprep.subr.mxu0 0.0
    %6487 = vmatpush2.msra.mxu0 0.0
    %6488 = vmatprep.subr.mxu0 0.0
    %6489 = vmatpush2.msra.mxu0 0.0
    %6490 = vmatprep.subr.mxu0 0.0
    %6491 = vmatpush2.msra.mxu0 0.0
    %6492 = vmatprep.subr.mxu0 0.0
    %6493 = vmatpush2.msra.mxu0 0.0
    %6494 = vmatprep.subr.mxu0 0.0
    %6495 = vmatpush2.msra.mxu0 0.0
    %6496 = vmatprep.subr.mxu0 0.0
    %6497 = vmatpush2.msra.mxu0 0.0
    %6498 = vmatprep.subr.mxu0 0.0
    %6499 = vmatpush2.msra.mxu0 0.0
    %6500 = vmatprep.subr.mxu0 0.0
    %6501 = vmatpush2.msra.mxu0 0.0
    %6502 = vmatprep.mubr.f32.mxu0 0.0
    %6503 = vmatmul.mubr.f32.gmra.mxu0 %v6296
    %v6504 = vpop.f32.mrf.mxu0
    %v6505 = vadd.f32 %v4746, %v6504
    %v6506 = vpop.f32.mrf.mxu0
    %v6507 = vadd.f32 %v4750, %v6506
    %6508 = vdwg.mxu0
    %6509 = vmatprep.subr.mxu0 0.0
    %6510 = vmatpush1.msra.mxu0 %v4576
    %6511 = vmatprep.subr.mxu0 0.0
    %6512 = vmatpush1.msra.mxu0 %v4573
    %6513 = vmatprep.subr.mxu0 0.0
    %6514 = vmatpush1.msra.mxu0 %v4570
    %6515 = vmatprep.subr.mxu0 0.0
    %6516 = vmatpush1.msra.mxu0 %v4567
    %6517 = vmatprep.subr.mxu0 0.0
    %6518 = vmatpush1.msra.mxu0 %v4564
    %6519 = vmatprep.subr.mxu0 0.0
    %6520 = vmatpush1.msra.mxu0 %v4561
    %6521 = vmatprep.subr.mxu0 0.0
    %6522 = vmatpush1.msra.mxu0 %v4558
    %6523 = vmatprep.subr.mxu0 0.0
    %6524 = vmatpush1.msra.mxu0 %v4555
    %6525 = vmatprep.subr.mxu0 0.0
    %6526 = vmatpush1.msra.mxu0 %v4552
    %6527 = vmatprep.subr.mxu0 0.0
    %6528 = vmatpush1.msra.mxu0 %v4549
    %6529 = vmatprep.subr.mxu0 0.0
    %6530 = vmatpush1.msra.mxu0 %v4546
    %6531 = vmatprep.subr.mxu0 0.0
    %6532 = vmatpush1.msra.mxu0 %v4543
    %6533 = vmatprep.subr.mxu0 0.0
    %6534 = vmatpush1.msra.mxu0 %v4540
    %6535 = vmatprep.subr.mxu0 0.0
    %6536 = vmatpush1.msra.mxu0 %v4537
    %6537 = vmatprep.subr.mxu0 0.0
    %6538 = vmatpush1.msra.mxu0 %v4534
    %6539 = vmatprep.subr.mxu0 0.0
    %6540 = vmatpush1.msra.mxu0 %v4531
    %6541 = vmatprep.subr.mxu0 0.0
    %6542 = vmatpush2.msra.mxu0 0.0
    %6543 = vmatprep.subr.mxu0 0.0
    %6544 = vmatpush2.msra.mxu0 0.0
    %6545 = vmatprep.subr.mxu0 0.0
    %6546 = vmatpush2.msra.mxu0 0.0
    %6547 = vmatprep.subr.mxu0 0.0
    %6548 = vmatpush2.msra.mxu0 0.0
    %6549 = vmatprep.subr.mxu0 0.0
    %6550 = vmatpush2.msra.mxu0 0.0
    %6551 = vmatprep.subr.mxu0 0.0
    %6552 = vmatpush2.msra.mxu0 0.0
    %6553 = vmatprep.subr.mxu0 0.0
    %6554 = vmatpush2.msra.mxu0 0.0
    %6555 = vmatprep.subr.mxu0 0.0
    %6556 = vmatpush2.msra.mxu0 0.0
    %6557 = vmatprep.subr.mxu0 0.0
    %6558 = vmatpush2.msra.mxu0 0.0
    %6559 = vmatprep.subr.mxu0 0.0
    %6560 = vmatpush2.msra.mxu0 0.0
    %6561 = vmatprep.subr.mxu0 0.0
    %6562 = vmatpush2.msra.mxu0 0.0
    %6563 = vmatprep.subr.mxu0 0.0
    %6564 = vmatpush2.msra.mxu0 0.0
    %6565 = vmatprep.subr.mxu0 0.0
    %6566 = vmatpush2.msra.mxu0 0.0
    %6567 = vmatprep.subr.mxu0 0.0
    %6568 = vmatpush2.msra.mxu0 0.0
    %6569 = vmatprep.subr.mxu0 0.0
    %6570 = vmatpush2.msra.mxu0 0.0
    %6571 = vmatprep.subr.mxu0 0.0
    %6572 = vmatpush2.msra.mxu0 0.0
    %6573 = vmatprep.mubr.f32.mxu0 0.0
    %6574 = vmatmul.mubr.f32.gmra.mxu0 %v6296
    %v6575 = vpop.f32.mrf.mxu0
    %v6576 = vadd.f32 %v4754, %v6575
    %v6577 = vpop.f32.mrf.mxu0
    %6578 = vdwg.mxu0
    %v6579 = vld [vmem:[%s2972] sm:$0xff]
    %v6580 = vld [vmem:[%s2972 + $0x8] sm:$0xff]
    %v6581 = vld [vmem:[%s2972 + $0x10] sm:$0xff]
    %v6582 = vadd.f32 %v6579, %v6364
    %v6583 = vxor.u32 %v6582, 2147483648
    %v6584 = vmul.f32 %v6583, 1.442695
    %v6585 = vpow.pop %v6584
    %v6586 = vadd.f32 %v6585, 1.0
    %v6587 = vrcp.pop %v6586
    %v6588 = vmul.f32 1.0, %v6587
    %v6589 = vadd.f32 %v6580, %v6366
    %v6590 = vxor.u32 %v6589, 2147483648
    %v6591 = vmul.f32 %v6590, 1.442695
    %v6592 = vpow.pop %v6591
    %v6593 = vadd.f32 %v6592, 1.0
    %v6594 = vrcp.pop %v6593
    %v6595 = vmul.f32 1.0, %v6594
    %v6596 = vmul.f32 %v6588, %v6435
    %v6597 = vadd.f32 %v6581, %v6596
    %v6598 = vtanh.pop %v6597
    %v6599 = vsub.f32 1.0, %v6595
    %v6600 = vmul.f32 %v6599, %v6598
    %v6601 = vmul.f32 %v6595, %v6295
    %v6602 = vadd.f32 %v6600, %v6601
    %v6603 = vld [vmem:[%s2998] sm:$0xff]
    %v6604 = vld [vmem:[%s2998 + $0x8] sm:$0xff]
    %v6605 = vld [vmem:[%s2998 + $0x10] sm:$0xff]
    %v6606 = vadd.f32 %v6603, %v6505
    %v6607 = vxor.u32 %v6606, 2147483648
    %v6608 = vmul.f32 %v6607, 1.442695
    %v6609 = vpow.pop %v6608
    %v6610 = vadd.f32 %v6609, 1.0
    %v6611 = vrcp.pop %v6610
    %v6612 = vmul.f32 1.0, %v6611
    %v6613 = vadd.f32 %v6604, %v6507
    %v6614 = vxor.u32 %v6613, 2147483648
    %v6615 = vmul.f32 %v6614, 1.442695
    %v6616 = vpow.pop %v6615
    %v6617 = vadd.f32 %v6616, 1.0
    %v6618 = vrcp.pop %v6617
    %v6619 = vmul.f32 1.0, %v6618
    %v6620 = vmul.f32 %v6612, %v6576
    %v6621 = vadd.f32 %v6605, %v6620
    %v6622 = vtanh.pop %v6621
    %v6623 = vsub.f32 1.0, %v6619
    %v6624 = vmul.f32 %v6623, %v6622
    %v6625 = vmul.f32 %v6619, %v6296
    %v6626 = vadd.f32 %v6624, %v6625
    %6627 = vst [vmem:[#allocation7] sm:$0xff] %v6602
    %6628 = vst [vmem:[#allocation8] sm:$0xff] %v6626
    %6629 = vst [vmem:[%s3025] sm:$0xff] %v6602
    %6630 = vst [vmem:[%s3027] sm:$0xff] %v6626
    %v6631 = vld [vmem:[#allocation7] sm:$0xff]
    %v6632 = vld [vmem:[#allocation8] sm:$0xff]
    %6633 = vmatprep.subr.mxu0 %v4526
    %6634 = vmatpush1.msra.mxu0 %v4525
    %6635 = vmatprep.subr.mxu0 %v4523
    %6636 = vmatpush1.msra.mxu0 %v4522
    %6637 = vmatprep.subr.mxu0 %v4520
    %6638 = vmatpush1.msra.mxu0 %v4519
    %6639 = vmatprep.subr.mxu0 %v4517
    %6640 = vmatpush1.msra.mxu0 %v4516
    %6641 = vmatprep.subr.mxu0 %v4514
    %6642 = vmatpush1.msra.mxu0 %v4513
    %6643 = vmatprep.subr.mxu0 %v4511
    %6644 = vmatpush1.msra.mxu0 %v4510
    %6645 = vmatprep.subr.mxu0 %v4508
    %6646 = vmatpush1.msra.mxu0 %v4507
    %6647 = vmatprep.subr.mxu0 %v4505
    %6648 = vmatpush1.msra.mxu0 %v4504
    %6649 = vmatprep.subr.mxu0 %v4502
    %6650 = vmatpush1.msra.mxu0 %v4501
    %6651 = vmatprep.subr.mxu0 %v4499
    %6652 = vmatpush1.msra.mxu0 %v4498
    %6653 = vmatprep.subr.mxu0 %v4496
    %6654 = vmatpush1.msra.mxu0 %v4495
    %6655 = vmatprep.subr.mxu0 %v4493
    %6656 = vmatpush1.msra.mxu0 %v4492
    %6657 = vmatprep.subr.mxu0 %v4490
    %6658 = vmatpush1.msra.mxu0 %v4489
    %6659 = vmatprep.subr.mxu0 %v4487
    %6660 = vmatpush1.msra.mxu0 %v4486
    %6661 = vmatprep.subr.mxu0 %v4484
    %6662 = vmatpush1.msra.mxu0 %v4483
    %6663 = vmatprep.subr.mxu0 %v4481
    %6664 = vmatpush1.msra.mxu0 %v4480
    %6665 = vmatprep.subr.mxu0 0.0
    %6666 = vmatpush2.msra.mxu0 0.0
    %6667 = vmatprep.subr.mxu0 0.0
    %6668 = vmatpush2.msra.mxu0 0.0
    %6669 = vmatprep.subr.mxu0 0.0
    %6670 = vmatpush2.msra.mxu0 0.0
    %6671 = vmatprep.subr.mxu0 0.0
    %6672 = vmatpush2.msra.mxu0 0.0
    %6673 = vmatprep.subr.mxu0 0.0
    %6674 = vmatpush2.msra.mxu0 0.0
    %6675 = vmatprep.subr.mxu0 0.0
    %6676 = vmatpush2.msra.mxu0 0.0
    %6677 = vmatprep.subr.mxu0 0.0
    %6678 = vmatpush2.msra.mxu0 0.0
    %6679 = vmatprep.subr.mxu0 0.0
    %6680 = vmatpush2.msra.mxu0 0.0
    %6681 = vmatprep.subr.mxu0 0.0
    %6682 = vmatpush2.msra.mxu0 0.0
    %6683 = vmatprep.subr.mxu0 0.0
    %6684 = vmatpush2.msra.mxu0 0.0
    %6685 = vmatprep.subr.mxu0 0.0
    %6686 = vmatpush2.msra.mxu0 0.0
    %6687 = vmatprep.subr.mxu0 0.0
    %6688 = vmatpush2.msra.mxu0 0.0
    %6689 = vmatprep.subr.mxu0 0.0
    %6690 = vmatpush2.msra.mxu0 0.0
    %6691 = vmatprep.subr.mxu0 0.0
    %6692 = vmatpush2.msra.mxu0 0.0
    %6693 = vmatprep.subr.mxu0 0.0
    %6694 = vmatpush2.msra.mxu0 0.0
    %6695 = vmatprep.subr.mxu0 0.0
    %6696 = vmatpush2.msra.mxu0 0.0
    %6697 = vmatprep.mubr.f32.mxu0 0.0
    %6698 = vmatmul.mubr.f32.gmra.mxu0 %v6631
    %v6699 = vpop.f32.mrf.mxu0
    %v6700 = vadd.f32 %v4589, %v6699
    %v6701 = vpop.f32.mrf.mxu0
    %v6702 = vadd.f32 %v4593, %v6701
    %6703 = vdwg.mxu0
    %6704 = vmatprep.subr.mxu0 0.0
    %6705 = vmatpush1.msra.mxu0 %v4527
    %6706 = vmatprep.subr.mxu0 0.0
    %6707 = vmatpush1.msra.mxu0 %v4524
    %6708 = vmatprep.subr.mxu0 0.0
    %6709 = vmatpush1.msra.mxu0 %v4521
    %6710 = vmatprep.subr.mxu0 0.0
    %6711 = vmatpush1.msra.mxu0 %v4518
    %6712 = vmatprep.subr.mxu0 0.0
    %6713 = vmatpush1.msra.mxu0 %v4515
    %6714 = vmatprep.subr.mxu0 0.0
    %6715 = vmatpush1.msra.mxu0 %v4512
    %6716 = vmatprep.subr.mxu0 0.0
    %6717 = vmatpush1.msra.mxu0 %v4509
    %6718 = vmatprep.subr.mxu0 0.0
    %6719 = vmatpush1.msra.mxu0 %v4506
    %6720 = vmatprep.subr.mxu0 0.0
    %6721 = vmatpush1.msra.mxu0 %v4503
    %6722 = vmatprep.subr.mxu0 0.0
    %6723 = vmatpush1.msra.mxu0 %v4500
    %6724 = vmatprep.subr.mxu0 0.0
    %6725 = vmatpush1.msra.mxu0 %v4497
    %6726 = vmatprep.subr.mxu0 0.0
    %6727 = vmatpush1.msra.mxu0 %v4494
    %6728 = vmatprep.subr.mxu0 0.0
    %6729 = vmatpush1.msra.mxu0 %v4491
    %6730 = vmatprep.subr.mxu0 0.0
    %6731 = vmatpush1.msra.mxu0 %v4488
    %6732 = vmatprep.subr.mxu0 0.0
    %6733 = vmatpush1.msra.mxu0 %v4485
    %6734 = vmatprep.subr.mxu0 0.0
    %6735 = vmatpush1.msra.mxu0 %v4482
    %6736 = vmatprep.subr.mxu0 0.0
    %6737 = vmatpush2.msra.mxu0 0.0
    %6738 = vmatprep.subr.mxu0 0.0
    %6739 = vmatpush2.msra.mxu0 0.0
    %6740 = vmatprep.subr.mxu0 0.0
    %6741 = vmatpush2.msra.mxu0 0.0
    %6742 = vmatprep.subr.mxu0 0.0
    %6743 = vmatpush2.msra.mxu0 0.0
    %6744 = vmatprep.subr.mxu0 0.0
    %6745 = vmatpush2.msra.mxu0 0.0
    %6746 = vmatprep.subr.mxu0 0.0
    %6747 = vmatpush2.msra.mxu0 0.0
    %6748 = vmatprep.subr.mxu0 0.0
    %6749 = vmatpush2.msra.mxu0 0.0
    %6750 = vmatprep.subr.mxu0 0.0
    %6751 = vmatpush2.msra.mxu0 0.0
    %6752 = vmatprep.subr.mxu0 0.0
    %6753 = vmatpush2.msra.mxu0 0.0
    %6754 = vmatprep.subr.mxu0 0.0
    %6755 = vmatpush2.msra.mxu0 0.0
    %6756 = vmatprep.subr.mxu0 0.0
    %6757 = vmatpush2.msra.mxu0 0.0
    %6758 = vmatprep.subr.mxu0 0.0
    %6759 = vmatpush2.msra.mxu0 0.0
    %6760 = vmatprep.subr.mxu0 0.0
    %6761 = vmatpush2.msra.mxu0 0.0
    %6762 = vmatprep.subr.mxu0 0.0
    %6763 = vmatpush2.msra.mxu0 0.0
    %6764 = vmatprep.subr.mxu0 0.0
    %6765 = vmatpush2.msra.mxu0 0.0
    %6766 = vmatprep.subr.mxu0 0.0
    %6767 = vmatpush2.msra.mxu0 0.0
    %6768 = vmatprep.mubr.f32.mxu0 0.0
    %6769 = vmatmul.mubr.f32.gmra.mxu0 %v6631
    %v6770 = vpop.f32.mrf.mxu0
    %v6771 = vadd.f32 %v4597, %v6770
    %v6772 = vpop.f32.mrf.mxu0
    %6773 = vdwg.mxu0
    %6774 = vmatprep.subr.mxu0 %v4575
    %6775 = vmatpush1.msra.mxu0 %v4574
    %6776 = vmatprep.subr.mxu0 %v4572
    %6777 = vmatpush1.msra.mxu0 %v4571
    %6778 = vmatprep.subr.mxu0 %v4569
    %6779 = vmatpush1.msra.mxu0 %v4568
    %6780 = vmatprep.subr.mxu0 %v4566
    %6781 = vmatpush1.msra.mxu0 %v4565
    %6782 = vmatprep.subr.mxu0 %v4563
    %6783 = vmatpush1.msra.mxu0 %v4562
    %6784 = vmatprep.subr.mxu0 %v4560
    %6785 = vmatpush1.msra.mxu0 %v4559
    %6786 = vmatprep.subr.mxu0 %v4557
    %6787 = vmatpush1.msra.mxu0 %v4556
    %6788 = vmatprep.subr.mxu0 %v4554
    %6789 = vmatpush1.msra.mxu0 %v4553
    %6790 = vmatprep.subr.mxu0 %v4551
    %6791 = vmatpush1.msra.mxu0 %v4550
    %6792 = vmatprep.subr.mxu0 %v4548
    %6793 = vmatpush1.msra.mxu0 %v4547
    %6794 = vmatprep.subr.mxu0 %v4545
    %6795 = vmatpush1.msra.mxu0 %v4544
    %6796 = vmatprep.subr.mxu0 %v4542
    %6797 = vmatpush1.msra.mxu0 %v4541
    %6798 = vmatprep.subr.mxu0 %v4539
    %6799 = vmatpush1.msra.mxu0 %v4538
    %6800 = vmatprep.subr.mxu0 %v4536
    %6801 = vmatpush1.msra.mxu0 %v4535
    %6802 = vmatprep.subr.mxu0 %v4533
    %6803 = vmatpush1.msra.mxu0 %v4532
    %6804 = vmatprep.subr.mxu0 %v4530
    %6805 = vmatpush1.msra.mxu0 %v4529
    %6806 = vmatprep.subr.mxu0 0.0
    %6807 = vmatpush2.msra.mxu0 0.0
    %6808 = vmatprep.subr.mxu0 0.0
    %6809 = vmatpush2.msra.mxu0 0.0
    %6810 = vmatprep.subr.mxu0 0.0
    %6811 = vmatpush2.msra.mxu0 0.0
    %6812 = vmatprep.subr.mxu0 0.0
    %6813 = vmatpush2.msra.mxu0 0.0
    %6814 = vmatprep.subr.mxu0 0.0
    %6815 = vmatpush2.msra.mxu0 0.0
    %6816 = vmatprep.subr.mxu0 0.0
    %6817 = vmatpush2.msra.mxu0 0.0
    %6818 = vmatprep.subr.mxu0 0.0
    %6819 = vmatpush2.msra.mxu0 0.0
    %6820 = vmatprep.subr.mxu0 0.0
    %6821 = vmatpush2.msra.mxu0 0.0
    %6822 = vmatprep.subr.mxu0 0.0
    %6823 = vmatpush2.msra.mxu0 0.0
    %6824 = vmatprep.subr.mxu0 0.0
    %6825 = vmatpush2.msra.mxu0 0.0
    %6826 = vmatprep.subr.mxu0 0.0
    %6827 = vmatpush2.msra.mxu0 0.0
    %6828 = vmatprep.subr.mxu0 0.0
    %6829 = vmatpush2.msra.mxu0 0.0
    %6830 = vmatprep.subr.mxu0 0.0
    %6831 = vmatpush2.msra.mxu0 0.0
    %6832 = vmatprep.subr.mxu0 0.0
    %6833 = vmatpush2.msra.mxu0 0.0
    %6834 = vmatprep.subr.mxu0 0.0
    %6835 = vmatpush2.msra.mxu0 0.0
    %6836 = vmatprep.subr.mxu0 0.0
    %6837 = vmatpush2.msra.mxu0 0.0
    %6838 = vmatprep.mubr.f32.mxu0 0.0
    %6839 = vmatmul.mubr.f32.gmra.mxu0 %v6632
    %v6840 = vpop.f32.mrf.mxu0
    %v6841 = vadd.f32 %v4746, %v6840
    %v6842 = vpop.f32.mrf.mxu0
    %v6843 = vadd.f32 %v4750, %v6842
    %6844 = vdwg.mxu0
    %6845 = vmatprep.subr.mxu0 0.0
    %6846 = vmatpush1.msra.mxu0 %v4576
    %6847 = vmatprep.subr.mxu0 0.0
    %6848 = vmatpush1.msra.mxu0 %v4573
    %6849 = vmatprep.subr.mxu0 0.0
    %6850 = vmatpush1.msra.mxu0 %v4570
    %6851 = vmatprep.subr.mxu0 0.0
    %6852 = vmatpush1.msra.mxu0 %v4567
    %6853 = vmatprep.subr.mxu0 0.0
    %6854 = vmatpush1.msra.mxu0 %v4564
    %6855 = vmatprep.subr.mxu0 0.0
    %6856 = vmatpush1.msra.mxu0 %v4561
    %6857 = vmatprep.subr.mxu0 0.0
    %6858 = vmatpush1.msra.mxu0 %v4558
    %6859 = vmatprep.subr.mxu0 0.0
    %6860 = vmatpush1.msra.mxu0 %v4555
    %6861 = vmatprep.subr.mxu0 0.0
    %6862 = vmatpush1.msra.mxu0 %v4552
    %6863 = vmatprep.subr.mxu0 0.0
    %6864 = vmatpush1.msra.mxu0 %v4549
    %6865 = vmatprep.subr.mxu0 0.0
    %6866 = vmatpush1.msra.mxu0 %v4546
    %6867 = vmatprep.subr.mxu0 0.0
    %6868 = vmatpush1.msra.mxu0 %v4543
    %6869 = vmatprep.subr.mxu0 0.0
    %6870 = vmatpush1.msra.mxu0 %v4540
    %6871 = vmatprep.subr.mxu0 0.0
    %6872 = vmatpush1.msra.mxu0 %v4537
    %6873 = vmatprep.subr.mxu0 0.0
    %6874 = vmatpush1.msra.mxu0 %v4534
    %6875 = vmatprep.subr.mxu0 0.0
    %6876 = vmatpush1.msra.mxu0 %v4531
    %6877 = vmatprep.subr.mxu0 0.0
    %6878 = vmatpush2.msra.mxu0 0.0
    %6879 = vmatprep.subr.mxu0 0.0
    %6880 = vmatpush2.msra.mxu0 0.0
    %6881 = vmatprep.subr.mxu0 0.0
    %6882 = vmatpush2.msra.mxu0 0.0
    %6883 = vmatprep.subr.mxu0 0.0
    %6884 = vmatpush2.msra.mxu0 0.0
    %6885 = vmatprep.subr.mxu0 0.0
    %6886 = vmatpush2.msra.mxu0 0.0
    %6887 = vmatprep.subr.mxu0 0.0
    %6888 = vmatpush2.msra.mxu0 0.0
    %6889 = vmatprep.subr.mxu0 0.0
    %6890 = vmatpush2.msra.mxu0 0.0
    %6891 = vmatprep.subr.mxu0 0.0
    %6892 = vmatpush2.msra.mxu0 0.0
    %6893 = vmatprep.subr.mxu0 0.0
    %6894 = vmatpush2.msra.mxu0 0.0
    %6895 = vmatprep.subr.mxu0 0.0
    %6896 = vmatpush2.msra.mxu0 0.0
    %6897 = vmatprep.subr.mxu0 0.0
    %6898 = vmatpush2.msra.mxu0 0.0
    %6899 = vmatprep.subr.mxu0 0.0
    %6900 = vmatpush2.msra.mxu0 0.0
    %6901 = vmatprep.subr.mxu0 0.0
    %6902 = vmatpush2.msra.mxu0 0.0
    %6903 = vmatprep.subr.mxu0 0.0
    %6904 = vmatpush2.msra.mxu0 0.0
    %6905 = vmatprep.subr.mxu0 0.0
    %6906 = vmatpush2.msra.mxu0 0.0
    %6907 = vmatprep.subr.mxu0 0.0
    %6908 = vmatpush2.msra.mxu0 0.0
    %6909 = vmatprep.mubr.f32.mxu0 0.0
    %6910 = vmatmul.mubr.f32.gmra.mxu0 %v6632
    %v6911 = vpop.f32.mrf.mxu0
    %v6912 = vadd.f32 %v4754, %v6911
    %v6913 = vpop.f32.mrf.mxu0
    %6914 = vdwg.mxu0
    %v6915 = vld [vmem:[%s3314] sm:$0xff]
    %v6916 = vld [vmem:[%s3314 + $0x8] sm:$0xff]
    %v6917 = vld [vmem:[%s3314 + $0x10] sm:$0xff]
    %v6918 = vadd.f32 %v6915, %v6700
    %v6919 = vxor.u32 %v6918, 2147483648
    %v6920 = vmul.f32 %v6919, 1.442695
    %v6921 = vpow.pop %v6920
    %v6922 = vadd.f32 %v6921, 1.0
    %v6923 = vrcp.pop %v6922
    %v6924 = vmul.f32 1.0, %v6923
    %v6925 = vadd.f32 %v6916, %v6702
    %v6926 = vxor.u32 %v6925, 2147483648
    %v6927 = vmul.f32 %v6926, 1.442695
    %v6928 = vpow.pop %v6927
    %v6929 = vadd.f32 %v6928, 1.0
    %v6930 = vrcp.pop %v6929
    %v6931 = vmul.f32 1.0, %v6930
    %v6932 = vmul.f32 %v6924, %v6771
    %v6933 = vadd.f32 %v6917, %v6932
    %v6934 = vtanh.pop %v6933
    %v6935 = vsub.f32 1.0, %v6931
    %v6936 = vmul.f32 %v6935, %v6934
    %v6937 = vmul.f32 %v6931, %v6631
    %v6938 = vadd.f32 %v6936, %v6937
    %v6939 = vld [vmem:[%s3340] sm:$0xff]
    %v6940 = vld [vmem:[%s3340 + $0x8] sm:$0xff]
    %v6941 = vld [vmem:[%s3340 + $0x10] sm:$0xff]
    %v6942 = vadd.f32 %v6939, %v6841
    %v6943 = vxor.u32 %v6942, 2147483648
    %v6944 = vmul.f32 %v6943, 1.442695
    %v6945 = vpow.pop %v6944
    %v6946 = vadd.f32 %v6945, 1.0
    %v6947 = vrcp.pop %v6946
    %v6948 = vmul.f32 1.0, %v6947
    %v6949 = vadd.f32 %v6940, %v6843
    %v6950 = vxor.u32 %v6949, 2147483648
    %v6951 = vmul.f32 %v6950, 1.442695
    %v6952 = vpow.pop %v6951
    %v6953 = vadd.f32 %v6952, 1.0
    %v6954 = vrcp.pop %v6953
    %v6955 = vmul.f32 1.0, %v6954
    %v6956 = vmul.f32 %v6948, %v6912
    %v6957 = vadd.f32 %v6941, %v6956
    %v6958 = vtanh.pop %v6957
    %v6959 = vsub.f32 1.0, %v6955
    %v6960 = vmul.f32 %v6959, %v6958
    %v6961 = vmul.f32 %v6955, %v6632
    %v6962 = vadd.f32 %v6960, %v6961
    %6963 = vst [vmem:[#allocation7] sm:$0xff] %v6938
    %6964 = vst [vmem:[#allocation8] sm:$0xff] %v6962
    %6965 = vst [vmem:[%s3367] sm:$0xff] %v6938
    %6966 = vst [vmem:[%s3369] sm:$0xff] %v6962
    %v6967 = vld [vmem:[#allocation7] sm:$0xff]
    %v6968 = vld [vmem:[#allocation8] sm:$0xff]
    %6969 = vmatprep.subr.mxu0 %v4526
    %6970 = vmatpush1.msra.mxu0 %v4525
    %6971 = vmatprep.subr.mxu0 %v4523
    %6972 = vmatpush1.msra.mxu0 %v4522
    %6973 = vmatprep.subr.mxu0 %v4520
    %6974 = vmatpush1.msra.mxu0 %v4519
    %6975 = vmatprep.subr.mxu0 %v4517
    %6976 = vmatpush1.msra.mxu0 %v4516
    %6977 = vmatprep.subr.mxu0 %v4514
    %6978 = vmatpush1.msra.mxu0 %v4513
    %6979 = vmatprep.subr.mxu0 %v4511
    %6980 = vmatpush1.msra.mxu0 %v4510
    %6981 = vmatprep.subr.mxu0 %v4508
    %6982 = vmatpush1.msra.mxu0 %v4507
    %6983 = vmatprep.subr.mxu0 %v4505
    %6984 = vmatpush1.msra.mxu0 %v4504
    %6985 = vmatprep.subr.mxu0 %v4502
    %6986 = vmatpush1.msra.mxu0 %v4501
    %6987 = vmatprep.subr.mxu0 %v4499
    %6988 = vmatpush1.msra.mxu0 %v4498
    %6989 = vmatprep.subr.mxu0 %v4496
    %6990 = vmatpush1.msra.mxu0 %v4495
    %6991 = vmatprep.subr.mxu0 %v4493
    %6992 = vmatpush1.msra.mxu0 %v4492
    %6993 = vmatprep.subr.mxu0 %v4490
    %6994 = vmatpush1.msra.mxu0 %v4489
    %6995 = vmatprep.subr.mxu0 %v4487
    %6996 = vmatpush1.msra.mxu0 %v4486
    %6997 = vmatprep.subr.mxu0 %v4484
    %6998 = vmatpush1.msra.mxu0 %v4483
    %6999 = vmatprep.subr.mxu0 %v4481
    %7000 = vmatpush1.msra.mxu0 %v4480
    %7001 = vmatprep.subr.mxu0 0.0
    %7002 = vmatpush2.msra.mxu0 0.0
    %7003 = vmatprep.subr.mxu0 0.0
    %7004 = vmatpush2.msra.mxu0 0.0
    %7005 = vmatprep.subr.mxu0 0.0
    %7006 = vmatpush2.msra.mxu0 0.0
    %7007 = vmatprep.subr.mxu0 0.0
    %7008 = vmatpush2.msra.mxu0 0.0
    %7009 = vmatprep.subr.mxu0 0.0
    %7010 = vmatpush2.msra.mxu0 0.0
    %7011 = vmatprep.subr.mxu0 0.0
    %7012 = vmatpush2.msra.mxu0 0.0
    %7013 = vmatprep.subr.mxu0 0.0
    %7014 = vmatpush2.msra.mxu0 0.0
    %7015 = vmatprep.subr.mxu0 0.0
    %7016 = vmatpush2.msra.mxu0 0.0
    %7017 = vmatprep.subr.mxu0 0.0
    %7018 = vmatpush2.msra.mxu0 0.0
    %7019 = vmatprep.subr.mxu0 0.0
    %7020 = vmatpush2.msra.mxu0 0.0
    %7021 = vmatprep.subr.mxu0 0.0
    %7022 = vmatpush2.msra.mxu0 0.0
    %7023 = vmatprep.subr.mxu0 0.0
    %7024 = vmatpush2.msra.mxu0 0.0
    %7025 = vmatprep.subr.mxu0 0.0
    %7026 = vmatpush2.msra.mxu0 0.0
    %7027 = vmatprep.subr.mxu0 0.0
    %7028 = vmatpush2.msra.mxu0 0.0
    %7029 = vmatprep.subr.mxu0 0.0
    %7030 = vmatpush2.msra.mxu0 0.0
    %7031 = vmatprep.subr.mxu0 0.0
    %7032 = vmatpush2.msra.mxu0 0.0
    %7033 = vmatprep.mubr.f32.mxu0 0.0
    %7034 = vmatmul.mubr.f32.gmra.mxu0 %v6967
    %v7035 = vpop.f32.mrf.mxu0
    %v7036 = vadd.f32 %v4589, %v7035
    %v7037 = vpop.f32.mrf.mxu0
    %v7038 = vadd.f32 %v4593, %v7037
    %7039 = vdwg.mxu0
    %7040 = vmatprep.subr.mxu0 0.0
    %7041 = vmatpush1.msra.mxu0 %v4527
    %7042 = vmatprep.subr.mxu0 0.0
    %7043 = vmatpush1.msra.mxu0 %v4524
    %7044 = vmatprep.subr.mxu0 0.0
    %7045 = vmatpush1.msra.mxu0 %v4521
    %7046 = vmatprep.subr.mxu0 0.0
    %7047 = vmatpush1.msra.mxu0 %v4518
    %7048 = vmatprep.subr.mxu0 0.0
    %7049 = vmatpush1.msra.mxu0 %v4515
    %7050 = vmatprep.subr.mxu0 0.0
    %7051 = vmatpush1.msra.mxu0 %v4512
    %7052 = vmatprep.subr.mxu0 0.0
    %7053 = vmatpush1.msra.mxu0 %v4509
    %7054 = vmatprep.subr.mxu0 0.0
    %7055 = vmatpush1.msra.mxu0 %v4506
    %7056 = vmatprep.subr.mxu0 0.0
    %7057 = vmatpush1.msra.mxu0 %v4503
    %7058 = vmatprep.subr.mxu0 0.0
    %7059 = vmatpush1.msra.mxu0 %v4500
    %7060 = vmatprep.subr.mxu0 0.0
    %7061 = vmatpush1.msra.mxu0 %v4497
    %7062 = vmatprep.subr.mxu0 0.0
    %7063 = vmatpush1.msra.mxu0 %v4494
    %7064 = vmatprep.subr.mxu0 0.0
    %7065 = vmatpush1.msra.mxu0 %v4491
    %7066 = vmatprep.subr.mxu0 0.0
    %7067 = vmatpush1.msra.mxu0 %v4488
    %7068 = vmatprep.subr.mxu0 0.0
    %7069 = vmatpush1.msra.mxu0 %v4485
    %7070 = vmatprep.subr.mxu0 0.0
    %7071 = vmatpush1.msra.mxu0 %v4482
    %7072 = vmatprep.subr.mxu0 0.0
    %7073 = vmatpush2.msra.mxu0 0.0
    %7074 = vmatprep.subr.mxu0 0.0
    %7075 = vmatpush2.msra.mxu0 0.0
    %7076 = vmatprep.subr.mxu0 0.0
    %7077 = vmatpush2.msra.mxu0 0.0
    %7078 = vmatprep.subr.mxu0 0.0
    %7079 = vmatpush2.msra.mxu0 0.0
    %7080 = vmatprep.subr.mxu0 0.0
    %7081 = vmatpush2.msra.mxu0 0.0
    %7082 = vmatprep.subr.mxu0 0.0
    %7083 = vmatpush2.msra.mxu0 0.0
    %7084 = vmatprep.subr.mxu0 0.0
    %7085 = vmatpush2.msra.mxu0 0.0
    %7086 = vmatprep.subr.mxu0 0.0
    %7087 = vmatpush2.msra.mxu0 0.0
    %7088 = vmatprep.subr.mxu0 0.0
    %7089 = vmatpush2.msra.mxu0 0.0
    %7090 = vmatprep.subr.mxu0 0.0
    %7091 = vmatpush2.msra.mxu0 0.0
    %7092 = vmatprep.subr.mxu0 0.0
    %7093 = vmatpush2.msra.mxu0 0.0
    %7094 = vmatprep.subr.mxu0 0.0
    %7095 = vmatpush2.msra.mxu0 0.0
    %7096 = vmatprep.subr.mxu0 0.0
    %7097 = vmatpush2.msra.mxu0 0.0
    %7098 = vmatprep.subr.mxu0 0.0
    %7099 = vmatpush2.msra.mxu0 0.0
    %7100 = vmatprep.subr.mxu0 0.0
    %7101 = vmatpush2.msra.mxu0 0.0
    %7102 = vmatprep.subr.mxu0 0.0
    %7103 = vmatpush2.msra.mxu0 0.0
    %7104 = vmatprep.mubr.f32.mxu0 0.0
    %7105 = vmatmul.mubr.f32.gmra.mxu0 %v6967
    %v7106 = vpop.f32.mrf.mxu0
    %v7107 = vadd.f32 %v4597, %v7106
    %v7108 = vpop.f32.mrf.mxu0
    %7109 = vdwg.mxu0
    %7110 = vmatprep.subr.mxu0 %v4575
    %7111 = vmatpush1.msra.mxu0 %v4574
    %7112 = vmatprep.subr.mxu0 %v4572
    %7113 = vmatpush1.msra.mxu0 %v4571
    %7114 = vmatprep.subr.mxu0 %v4569
    %7115 = vmatpush1.msra.mxu0 %v4568
    %7116 = vmatprep.subr.mxu0 %v4566
    %7117 = vmatpush1.msra.mxu0 %v4565
    %7118 = vmatprep.subr.mxu0 %v4563
    %7119 = vmatpush1.msra.mxu0 %v4562
    %7120 = vmatprep.subr.mxu0 %v4560
    %7121 = vmatpush1.msra.mxu0 %v4559
    %7122 = vmatprep.subr.mxu0 %v4557
    %7123 = vmatpush1.msra.mxu0 %v4556
    %7124 = vmatprep.subr.mxu0 %v4554
    %7125 = vmatpush1.msra.mxu0 %v4553
    %7126 = vmatprep.subr.mxu0 %v4551
    %7127 = vmatpush1.msra.mxu0 %v4550
    %7128 = vmatprep.subr.mxu0 %v4548
    %7129 = vmatpush1.msra.mxu0 %v4547
    %7130 = vmatprep.subr.mxu0 %v4545
    %7131 = vmatpush1.msra.mxu0 %v4544
    %7132 = vmatprep.subr.mxu0 %v4542
    %7133 = vmatpush1.msra.mxu0 %v4541
    %7134 = vmatprep.subr.mxu0 %v4539
    %7135 = vmatpush1.msra.mxu0 %v4538
    %7136 = vmatprep.subr.mxu0 %v4536
    %7137 = vmatpush1.msra.mxu0 %v4535
    %7138 = vmatprep.subr.mxu0 %v4533
    %7139 = vmatpush1.msra.mxu0 %v4532
    %7140 = vmatprep.subr.mxu0 %v4530
    %7141 = vmatpush1.msra.mxu0 %v4529
    %7142 = vmatprep.subr.mxu0 0.0
    %7143 = vmatpush2.msra.mxu0 0.0
    %7144 = vmatprep.subr.mxu0 0.0
    %7145 = vmatpush2.msra.mxu0 0.0
    %7146 = vmatprep.subr.mxu0 0.0
    %7147 = vmatpush2.msra.mxu0 0.0
    %7148 = vmatprep.subr.mxu0 0.0
    %7149 = vmatpush2.msra.mxu0 0.0
    %7150 = vmatprep.subr.mxu0 0.0
    %7151 = vmatpush2.msra.mxu0 0.0
    %7152 = vmatprep.subr.mxu0 0.0
    %7153 = vmatpush2.msra.mxu0 0.0
    %7154 = vmatprep.subr.mxu0 0.0
    %7155 = vmatpush2.msra.mxu0 0.0
    %7156 = vmatprep.subr.mxu0 0.0
    %7157 = vmatpush2.msra.mxu0 0.0
    %7158 = vmatprep.subr.mxu0 0.0
    %7159 = vmatpush2.msra.mxu0 0.0
    %7160 = vmatprep.subr.mxu0 0.0
    %7161 = vmatpush2.msra.mxu0 0.0
    %7162 = vmatprep.subr.mxu0 0.0
    %7163 = vmatpush2.msra.mxu0 0.0
    %7164 = vmatprep.subr.mxu0 0.0
    %7165 = vmatpush2.msra.mxu0 0.0
    %7166 = vmatprep.subr.mxu0 0.0
    %7167 = vmatpush2.msra.mxu0 0.0
    %7168 = vmatprep.subr.mxu0 0.0
    %7169 = vmatpush2.msra.mxu0 0.0
    %7170 = vmatprep.subr.mxu0 0.0
    %7171 = vmatpush2.msra.mxu0 0.0
    %7172 = vmatprep.subr.mxu0 0.0
    %7173 = vmatpush2.msra.mxu0 0.0
    %7174 = vmatprep.mubr.f32.mxu0 0.0
    %7175 = vmatmul.mubr.f32.gmra.mxu0 %v6968
    %v7176 = vpop.f32.mrf.mxu0
    %v7177 = vadd.f32 %v4746, %v7176
    %v7178 = vpop.f32.mrf.mxu0
    %v7179 = vadd.f32 %v4750, %v7178
    %7180 = vdwg.mxu0
    %7181 = vmatprep.subr.mxu0 0.0
    %7182 = vmatpush1.msra.mxu0 %v4576
    %7183 = vmatprep.subr.mxu0 0.0
    %7184 = vmatpush1.msra.mxu0 %v4573
    %7185 = vmatprep.subr.mxu0 0.0
    %7186 = vmatpush1.msra.mxu0 %v4570
    %7187 = vmatprep.subr.mxu0 0.0
    %7188 = vmatpush1.msra.mxu0 %v4567
    %7189 = vmatprep.subr.mxu0 0.0
    %7190 = vmatpush1.msra.mxu0 %v4564
    %7191 = vmatprep.subr.mxu0 0.0
    %7192 = vmatpush1.msra.mxu0 %v4561
    %7193 = vmatprep.subr.mxu0 0.0
    %7194 = vmatpush1.msra.mxu0 %v4558
    %7195 = vmatprep.subr.mxu0 0.0
    %7196 = vmatpush1.msra.mxu0 %v4555
    %7197 = vmatprep.subr.mxu0 0.0
    %7198 = vmatpush1.msra.mxu0 %v4552
    %7199 = vmatprep.subr.mxu0 0.0
    %7200 = vmatpush1.msra.mxu0 %v4549
    %7201 = vmatprep.subr.mxu0 0.0
    %7202 = vmatpush1.msra.mxu0 %v4546
    %7203 = vmatprep.subr.mxu0 0.0
    %7204 = vmatpush1.msra.mxu0 %v4543
    %7205 = vmatprep.subr.mxu0 0.0
    %7206 = vmatpush1.msra.mxu0 %v4540
    %7207 = vmatprep.subr.mxu0 0.0
    %7208 = vmatpush1.msra.mxu0 %v4537
    %7209 = vmatprep.subr.mxu0 0.0
    %7210 = vmatpush1.msra.mxu0 %v4534
    %7211 = vmatprep.subr.mxu0 0.0
    %7212 = vmatpush1.msra.mxu0 %v4531
    %7213 = vmatprep.subr.mxu0 0.0
    %7214 = vmatpush2.msra.mxu0 0.0
    %7215 = vmatprep.subr.mxu0 0.0
    %7216 = vmatpush2.msra.mxu0 0.0
    %7217 = vmatprep.subr.mxu0 0.0
    %7218 = vmatpush2.msra.mxu0 0.0
    %7219 = vmatprep.subr.mxu0 0.0
    %7220 = vmatpush2.msra.mxu0 0.0
    %7221 = vmatprep.subr.mxu0 0.0
    %7222 = vmatpush2.msra.mxu0 0.0
    %7223 = vmatprep.subr.mxu0 0.0
    %7224 = vmatpush2.msra.mxu0 0.0
    %7225 = vmatprep.subr.mxu0 0.0
    %7226 = vmatpush2.msra.mxu0 0.0
    %7227 = vmatprep.subr.mxu0 0.0
    %7228 = vmatpush2.msra.mxu0 0.0
    %7229 = vmatprep.subr.mxu0 0.0
    %7230 = vmatpush2.msra.mxu0 0.0
    %7231 = vmatprep.subr.mxu0 0.0
    %7232 = vmatpush2.msra.mxu0 0.0
    %7233 = vmatprep.subr.mxu0 0.0
    %7234 = vmatpush2.msra.mxu0 0.0
    %7235 = vmatprep.subr.mxu0 0.0
    %7236 = vmatpush2.msra.mxu0 0.0
    %7237 = vmatprep.subr.mxu0 0.0
    %7238 = vmatpush2.msra.mxu0 0.0
    %7239 = vmatprep.subr.mxu0 0.0
    %7240 = vmatpush2.msra.mxu0 0.0
    %7241 = vmatprep.subr.mxu0 0.0
    %7242 = vmatpush2.msra.mxu0 0.0
    %7243 = vmatprep.subr.mxu0 0.0
    %7244 = vmatpush2.msra.mxu0 0.0
    %7245 = vmatprep.mubr.f32.mxu0 0.0
    %7246 = vmatmul.mubr.f32.gmra.mxu0 %v6968
    %v7247 = vpop.f32.mrf.mxu0
    %v7248 = vadd.f32 %v4754, %v7247
    %v7249 = vpop.f32.mrf.mxu0
    %7250 = vdwg.mxu0
    %v7251 = vld [vmem:[%s3656] sm:$0xff]
    %v7252 = vld [vmem:[%s3656 + $0x8] sm:$0xff]
    %v7253 = vld [vmem:[%s3656 + $0x10] sm:$0xff]
    %v7254 = vadd.f32 %v7251, %v7036
    %v7255 = vxor.u32 %v7254, 2147483648
    %v7256 = vmul.f32 %v7255, 1.442695
    %v7257 = vpow.pop %v7256
    %v7258 = vadd.f32 %v7257, 1.0
    %v7259 = vrcp.pop %v7258
    %v7260 = vmul.f32 1.0, %v7259
    %v7261 = vadd.f32 %v7252, %v7038
    %v7262 = vxor.u32 %v7261, 2147483648
    %v7263 = vmul.f32 %v7262, 1.442695
    %v7264 = vpow.pop %v7263
    %v7265 = vadd.f32 %v7264, 1.0
    %v7266 = vrcp.pop %v7265
    %v7267 = vmul.f32 1.0, %v7266
    %v7268 = vmul.f32 %v7260, %v7107
    %v7269 = vadd.f32 %v7253, %v7268
    %v7270 = vtanh.pop %v7269
    %v7271 = vsub.f32 1.0, %v7267
    %v7272 = vmul.f32 %v7271, %v7270
    %v7273 = vmul.f32 %v7267, %v6967
    %v7274 = vadd.f32 %v7272, %v7273
    %v7275 = vld [vmem:[%s3682] sm:$0xff]
    %v7276 = vld [vmem:[%s3682 + $0x8] sm:$0xff]
    %v7277 = vld [vmem:[%s3682 + $0x10] sm:$0xff]
    %v7278 = vadd.f32 %v7275, %v7177
    %v7279 = vxor.u32 %v7278, 2147483648
    %v7280 = vmul.f32 %v7279, 1.442695
    %v7281 = vpow.pop %v7280
    %v7282 = vadd.f32 %v7281, 1.0
    %v7283 = vrcp.pop %v7282
    %v7284 = vmul.f32 1.0, %v7283
    %v7285 = vadd.f32 %v7276, %v7179
    %v7286 = vxor.u32 %v7285, 2147483648
    %v7287 = vmul.f32 %v7286, 1.442695
    %v7288 = vpow.pop %v7287
    %v7289 = vadd.f32 %v7288, 1.0
    %v7290 = vrcp.pop %v7289
    %v7291 = vmul.f32 1.0, %v7290
    %v7292 = vmul.f32 %v7284, %v7248
    %v7293 = vadd.f32 %v7277, %v7292
    %v7294 = vtanh.pop %v7293
    %v7295 = vsub.f32 1.0, %v7291
    %v7296 = vmul.f32 %v7295, %v7294
    %v7297 = vmul.f32 %v7291, %v6968
    %v7298 = vadd.f32 %v7296, %v7297
    %7299 = vst [vmem:[#allocation7] sm:$0xff] %v7274
    %7300 = vst [vmem:[#allocation8] sm:$0xff] %v7298
    %7301 = vst [vmem:[%s3709] sm:$0xff] %v7274
    %7302 = vst [vmem:[#allocation4] sm:$0xff] %v7298
    %v7303 = vld [vmem:[#allocation7] sm:$0xff]
    %s7304 = scalar_lea.vmem [#allocation19], 16
    %7305 = vst [vmem:[%s7304] sm:$0xff] %v7303
    %v7306 = vld [vmem:[#allocation8] sm:$0xff]
    %s7307 = scalar_lea.vmem [#allocation19], 24
    %7308 = vst [vmem:[%s7307] sm:$0xff] %v7306
    %v7309 = vld [vmem:[#allocation3] sm:$0xff]
    %v7310 = vld [vmem:[#allocation3 + $0x8] sm:$0xff]
    %v7311 = vld [vmem:[#allocation3 + $0x10] sm:$0xff]
    %v7312 = vld [vmem:[#allocation3 + $0x18] sm:$0xff]
    %v7313 = vld [vmem:[#allocation3 + $0x20] sm:$0xff]
    %v7314 = vld [vmem:[#allocation3 + $0x28] sm:$0xff]
    %v7315 = vld [vmem:[#allocation3 + $0x30] sm:$0xff]
    %v7316 = vld [vmem:[#allocation3 + $0x38] sm:$0xff]
    %v7317 = vld [vmem:[#allocation4] sm:$0xff]
    %v7318 = vld [vmem:[#allocation4 + $0x8] sm:$0xff]
    %v7319 = vld [vmem:[#allocation4 + $0x10] sm:$0xff]
    %v7320 = vld [vmem:[#allocation4 + $0x18] sm:$0xff]
    %v7321 = vld [vmem:[#allocation4 + $0x20] sm:$0xff]
    %v7322 = vld [vmem:[#allocation4 + $0x28] sm:$0xff]
    %v7323 = vld [vmem:[#allocation4 + $0x30] sm:$0xff]
    %v7324 = vld [vmem:[#allocation4 + $0x38] sm:$0xff]
    %v7325 = vadd.f32 %v7309, %v7317
    %v7326 = vadd.f32 %v7310, %v7318
    %v7327 = vadd.f32 %v7311, %v7319
    %v7328 = vadd.f32 %v7312, %v7320
    %v7329 = vadd.f32 %v7313, %v7321
    %v7330 = vadd.f32 %v7314, %v7322
    %v7331 = vadd.f32 %v7315, %v7323
    %v7332 = vadd.f32 %v7316, %v7324
    %7333 = vst [vmem:[#allocation18] sm:$0xff] %v7325
    %7334 = vst [vmem:[#allocation18 + $0x8] sm:$0xff] %v7326
    %7335 = vst [vmem:[#allocation18 + $0x10] sm:$0xff] %v7327
    %7336 = vst [vmem:[#allocation18 + $0x18] sm:$0xff] %v7328
    %7337 = vst [vmem:[#allocation18 + $0x20] sm:$0xff] %v7329
    %7338 = vst [vmem:[#allocation18 + $0x28] sm:$0xff] %v7330
    %7339 = vst [vmem:[#allocation18 + $0x30] sm:$0xff] %v7331
    %7340 = vst [vmem:[#allocation18 + $0x38] sm:$0xff] %v7332
    // Predicated region
    $region42: #{tpu_custom_call.1} parent=1 // pred_check
      _
    $region43: #{tpu_custom_call.1} parent=1 // pred_check_branch
      %7342 = sbr.rel (0) target = $region45
    $region44: #{tpu_custom_call.1} parent=1 // pred_region
      %s7344 = ssub.s32 1024, 1024
      %7345 = vsyncadd [#allocation11], %s7344
      %s7346 = sshll.u32 [#allocation18], 4
      %s7347 = int_to_ptr.vmem [resolvable:$true] %s7346
      %7352 = dma.vmem_to_hbm [thread:$0]  %s7347, 1024, %s5, [#allocation11], 128, 128, 8
    $region45: #{tpu_custom_call.1} parent=1 // pred_fallthru
      _
    // Predicated region
    $region46: #{tpu_custom_call.1} parent=1 // pred_check
      _
    $region47: #{tpu_custom_call.1} parent=1 // pred_check_branch
      %7354 = sbr.rel (0) target = $region49
    $region48: #{tpu_custom_call.1} parent=1 // pred_region
      %s7356 = ssub.s32 512, 512
      %7357 = vsyncadd [#allocation20], %s7356
      %s7358 = sshll.u32 [#allocation19], 4
      %s7359 = int_to_ptr.vmem [resolvable:$true] %s7358
      %7364 = dma.vmem_to_hbm [thread:$0]  %s7359, 512, %s6, [#allocation20], 128, 128, 8
    $region49: #{tpu_custom_call.1} parent=1 // pred_fallthru
      _
    // Predicated region
    $region50: #{tpu_custom_call.1} parent=1 // pred_check
      _
    $region51: #{tpu_custom_call.1} parent=1 // pred_check_branch
      %7366 = sbr.rel (0) target = $region53
    $region52: #{tpu_custom_call.1} parent=1 // pred_region
      %7367 = dma.done [#allocation11], 1024
    $region53: #{tpu_custom_call.1} parent=1 // pred_fallthru
      _
    // Predicated region
    $region54: #{tpu_custom_call.1} parent=1 // pred_check
      _
    $region55: #{tpu_custom_call.1} parent=1 // pred_check_branch
      %7369 = sbr.rel (0) target = $region57
    $region56: #{tpu_custom_call.1} parent=1 // pred_region
      %7370 = dma.done [#allocation20], 512
    $region57: #{tpu_custom_call.1} parent=1 // pred_fallthru
      _
    %7371 = vsyncpa [#allocation10], 1
    %7372 = vsyncpa [#allocation13], 1
    %7373 = vsyncpa [#allocation16], 1
    %7374 = vsyncpa [#allocation11], 1
    %7375 = vsyncpa [#allocation20], 1

</llo_original>
